<compile_context>
chip_gen: v7x
topology: tpu7x:2x2x1
jax: 0.10.0
libtpu: 0.0.40
codegen_flags: <defaults>
</compile_context>

<pallas_src>
import jax
import jax.numpy as jnp
from jax.experimental import pallas as pl
from jax.experimental.pallas import tpu as pltpu

PLANES = 60
WINDOW_SIZES = (4, 8, 16)
SHIFTS = 4

VMEM_LIMIT = 32 << 20   # safe on all chips (v5e/v6e: 128 MiB phys, v7x: 64 MiB phys)


def _cp(*sem):
    return pltpu.CompilerParams(dimension_semantics=sem,
                                vmem_limit_bytes=VMEM_LIMIT)


# --------------------------- tiling helpers ----------------------------------

def pick_tm(m, cap=1024, min_steps=4):
    """Row tile: <= cap (so lane-padded (tm,128) f32 blocks stay small), prefer
    >= min_steps grid steps (megacore sharding + pipeline overlap), else >=2."""
    cands = (1024, 512, 256, 128, 64, 32, 16, 8)
    for t in cands:
        if t <= cap and m % t == 0 and m // t >= min_steps:
            return t
    for t in cands:
        if t <= cap and m % t == 0 and m // t >= 2:
            return t
    for t in cands:
        if m % t == 0:
            return t
    return m


def pick_bw(nw, t, budget_bytes=12 << 20):
    """Windows per attention grid step, counting PHYSICAL (lane-padded) VMEM:
    cc=20 pads to 128 lanes, the f32 score tile pads its last dim to >=128,
    and the pipelined q/k/v/out blocks are double-buffered."""
    lane = 128
    s_lane = max(t, lane)
    per_win = (3 * 2 * t * lane * 2      # q, k, v bf16 blocks, double-buffered
               + 2 * t * lane * 2        # out bf16 block, double-buffered
               + 3 * t * s_lane * 4      # score / exp / normalized-p f32 copies
               + t * s_lane * 2          # p cast to bf16 for the PV matmul
               + 2 * t * lane * 4)       # f32 headroom (relayouts, accum)
    cap = max(1, budget_bytes // per_win)
    best = None
    for d in range(1, nw + 1):           # prefer >= 2 grid steps (both v7x TCs)
        if nw % d == 0 and d <= cap and nw // d >= 2:
            best = d
    if best is None:                     # otherwise largest batch that fits
        for d in range(1, nw + 1):
            if nw % d == 0 and d <= cap:
                best = d
    return best or 1


# --------------------------- Pallas kernels ----------------------------------

def _ln_kernel(x_ref, g_ref, b_ref, o_ref):
    # LayerNorm over the channel (last) dimension, per pixel row.
    x = x_ref[...].astype(jnp.float32)
    u = jnp.mean(x, axis=-1, keepdims=True)
    xc = x - u
    s = jnp.mean(xc * xc, axis=-1, keepdims=True)
    o_ref[...] = (xc * jax.lax.rsqrt(s + 1e-5) * g_ref[...]
                  + b_ref[...]).astype(o_ref.dtype)


def layernorm_channel(x2d, gamma, beta, out_dtype=jnp.bfloat16):
    M, C = x2d.shape
    tm = pick_tm(M)
    return pl.pallas_call(
        _ln_kernel,
        out_shape=jax.ShapeDtypeStruct((M, C), out_dtype),
        grid=(M // tm,),
        in_specs=[pl.BlockSpec((tm, C), lambda i: (i, 0)),
                  pl.BlockSpec((1, C), lambda i: (0, 0)),
                  pl.BlockSpec((1, C), lambda i: (0, 0))],
        out_specs=pl.BlockSpec((tm, C), lambda i: (i, 0)),
        compiler_params=_cp("parallel"),
    )(x2d, gamma.reshape(1, C), beta.reshape(1, C))


def _left_fused_kernel(xs_ref, x_ref, scw_ref, scb_ref, c1w_ref, c1b_ref,
                       dw_ref, db_ref, c2w_ref, c2b_ref, g2_ref, b2_ref,
                       a_ref, r_ref):
    # Fused left branch: shift-conv 1x1 + ReLU -> ResBlock -> t + 0.2*o2 ->
    # a = left + x, plus the right-branch LayerNormChannel(a) -> r (bf16).
    def mm(act, w_ref):
        # bf16 MXU operands, f32 accumulation (no-op cast if already bf16).
        return jnp.dot(act.astype(jnp.bfloat16), w_ref[...],
                       preferred_element_type=jnp.float32)

    def lrelu(z):
        return jnp.where(z >= 0, z, 0.2 * z)

    x = x_ref[...].astype(jnp.float32)

    t = jnp.maximum(mm(xs_ref[...], scw_ref) + scb_ref[...], 0.0)  # shift-conv + ReLU
    o1 = lrelu(mm(t, c1w_ref) + c1b_ref[...])                      # c1 + LeakyReLU(0.2)
    comb = mm(o1, dw_ref) + db_ref[...]                            # [d1 | d1+d2], one matmul
    o2 = mm(lrelu(comb), c2w_ref) + c2b_ref[...]                   # c2(act(.))
    a = t + 0.2 * o2 + x                                           # ResBlock res + outer res
    a_ref[...] = a.astype(a_ref.dtype)

    # LayerNormChannel for the right branch (fused -> no extra HBM round trip).
    u = jnp.mean(a, axis=-1, keepdims=True)
    ac = a - u
    s = jnp.mean(ac * ac, axis=-1, keepdims=True)
    r_ref[...] = (ac * jax.lax.rsqrt(s + 1e-5) * g2_ref[...]
                  + b2_ref[...]).astype(r_ref.dtype)


def left_branch(x2d, shifted2d, p):
    M, C = x2d.shape
    tm = pick_tm(M)
    bf16 = jnp.bfloat16
    # Fold concat([d1, d1+d2]) into a single (C,C) weight (no concatenate, no
    # 30-lane masked stores).
    dcomb_w = jnp.concatenate([p["d1_w"], p["d1_w"] + p["d2_w"]], axis=1).astype(bf16)
    dcomb_b = jnp.concatenate([p["d1_b"], p["d1_b"] + p["d2_b"]]).reshape(1, C)

    row = pl.BlockSpec((tm, C), lambda i: (i, 0))
    wsp = pl.BlockSpec((C, C), lambda i: (0, 0))
    vsp = pl.BlockSpec((1, C), lambda i: (0, 0))

    return pl.pallas_call(
        _left_fused_kernel,
        out_shape=(jax.ShapeDtypeStruct((M, C), jnp.float32),    # a (residual base)
                   jax.ShapeDtypeStruct((M, C), jnp.bfloat16)),  # r = LN2(a), MXU operand
        grid=(M // tm,),
        in_specs=[row, row, wsp, vsp, wsp, vsp, wsp, vsp, wsp, vsp, vsp, vsp],
        out_specs=(row, row),
        compiler_params=_cp("parallel"),
    )(shifted2d, x2d,
      p["sc_w"].astype(bf16), p["sc_b"].reshape(1, C),
      p["c1_w"].astype(bf16), p["c1_b"].reshape(1, C),
      dcomb_w, dcomb_b,
      p["c2_w"].astype(bf16), p["c2_b"].reshape(1, C),
      p["ln2_g"].reshape(1, C), p["ln2_b"].reshape(1, C))


def _pi_kernel(x_ref, w_ref, b_ref, t_ref, sum_ref, sq_ref):
    # project_inp 1x1 conv (C -> 2C).  BatchNorm batch statistics are emitted
    # as PER-STEP partial sums (own output rows) so the grid stays fully
    # parallel (v7x megacore) — no resident accumulators, no sequential axis.
    y = jnp.dot(x_ref[...].astype(jnp.bfloat16), w_ref[...],
                preferred_element_type=jnp.float32) + b_ref[...]
    t_ref[...] = y.astype(t_ref.dtype)
    ps = jnp.sum(y, axis=0, keepdims=True)
    pq = jnp.sum(y * y, axis=0, keepdims=True)
    sum_ref[...] = jnp.broadcast_to(ps, sum_ref.shape)   # row 0 is read back
    sq_ref[...] = jnp.broadcast_to(pq, sq_ref.shape)


def project_inp(x2d, w, b):
    M, C = x2d.shape
    C2 = w.shape[1]
    tm = pick_tm(M)
    nsteps = M // tm
    t, psum, psq = pl.pallas_call(
        _pi_kernel,
        out_shape=(jax.ShapeDtypeStruct((M, C2), jnp.bfloat16),
                   jax.ShapeDtypeStruct((nsteps * 8, C2), jnp.float32),
                   jax.ShapeDtypeStruct((nsteps * 8, C2), jnp.float32)),
        grid=(nsteps,),
        in_specs=[pl.BlockSpec((tm, C), lambda i: (i, 0)),
                  pl.BlockSpec((C, C2), lambda i: (0, 0)),
                  pl.BlockSpec((1, C2), lambda i: (0, 0))],
        out_specs=(pl.BlockSpec((tm, C2), lambda i: (i, 0)),
                   pl.BlockSpec((8, C2), lambda i: (i, 0)),
                   pl.BlockSpec((8, C2), lambda i: (i, 0))),
        compiler_params=_cp("parallel"),
    )(x2d, w.astype(jnp.bfloat16), b.reshape(1, C2))
    # Tiny reduction over (nsteps, 2C) in plain JAX.
    tsum = psum.reshape(nsteps, 8, C2)[:, 0].sum(axis=0)
    tsq = psq.reshape(nsteps, 8, C2)[:, 0].sum(axis=0)
    return t, tsum, tsq


def _attn_kernel(q_ref, k_ref, v_ref, o_ref):
    # softmax(q @ k^T) @ v for a batch of windows.  q, k, v arrive as three
    # separate contiguous bf16 blocks (three pipelined DMAs per step).
    # No 1/sqrt(d) scaling (matches the reference GMSA).
    s = jnp.einsum('bqd,bkd->bqk', q_ref[...], k_ref[...],
                   preferred_element_type=jnp.float32)
    s = s - jnp.max(s, axis=-1, keepdims=True)
    ps = jnp.exp(s)
    ps = ps * pl.reciprocal(jnp.sum(ps, axis=-1, keepdims=True), approx=True)
    y = jnp.einsum('bqk,bkd->bqd', ps.astype(jnp.bfloat16), v_ref[...],
                   preferred_element_type=jnp.float32)
    o_ref[...] = y.astype(o_ref.dtype)


def window_attention(q, k, v):
    NW, T, cc = q.shape
    bw = pick_bw(NW, T)
    blk = pl.BlockSpec((bw, T, cc), lambda i: (i, 0, 0))
    return pl.pallas_call(
        _attn_kernel,
        out_shape=jax.ShapeDtypeStruct((NW, T, cc), jnp.bfloat16),
        grid=(NW // bw,),
        in_specs=[blk, blk, blk],
        out_specs=blk,
        compiler_params=_cp("parallel"),
    )(q, k, v)


def _po_kernel(y_ref, a_ref, w_ref, b_ref, o_ref):
    # project_out 1x1 conv + fused final residual (a + right(a)).
    g = jnp.dot(y_ref[...].astype(jnp.bfloat16), w_ref[...],
                preferred_element_type=jnp.float32) + b_ref[...]
    o_ref[...] = (a_ref[...] + g).astype(o_ref.dtype)


def project_out_residual(y2d, a2d, w, b):
    M, C = a2d.shape
    tm = pick_tm(M)
    return pl.pallas_call(
        _po_kernel,
        out_shape=jax.ShapeDtypeStruct((M, C), jnp.float32),
        grid=(M // tm,),
        in_specs=[pl.BlockSpec((tm, C), lambda i: (i, 0)),
                  pl.BlockSpec((tm, C), lambda i: (i, 0)),
                  pl.BlockSpec((C, C), lambda i: (0, 0)),
                  pl.BlockSpec((1, C), lambda i: (0, 0))],
        out_specs=pl.BlockSpec((tm, C), lambda i: (i, 0)),
        compiler_params=_cp("parallel"),
    )(y2d, a2d, w.astype(jnp.bfloat16), b.reshape(1, C))


# --------------------------- glue (data movement) ----------------------------

def shift_feat(x_nhwc, g):
    # Grouped +/-1 pixel spatial shift (zero-padded) of C//5 channel groups.
    B, H, W, C = x_nhwc.shape
    xp = jnp.pad(x_nhwc, ((0, 0), (1, 1), (1, 1), (0, 0)))

    def win(dh, dw, lo, hi):
        return xp[:, 1 + dh:1 + dh + H, 1 + dw:1 + dw + W, lo:hi]

    parts = [win(0, 1, 0, g), win(0, -1, g, 2 * g), win(1, 0, 2 * g, 3 * g),
             win(-1, 0, 3 * g, 4 * g), x_nhwc[..., 4 * g:]]
    return jnp.concatenate(parts, axis=-1)


def _regroup(t3, target_b):
    # einops: 'b (c r) h -> (b r) c h'  /  '(b r) c h -> b (c r) h'
    Bt, St, Ct = t3.shape
    if Bt < target_b:
        r = target_b // Bt
        t3 = t3.reshape(Bt, St // r, r, Ct)
        t3 = jnp.transpose(t3, (0, 2, 1, 3)).reshape(Bt * r, St // r, Ct)
    else:
        r = Bt // target_b
        t3 = t3.reshape(Bt // r, r, St, Ct)
        t3 = jnp.transpose(t3, (0, 2, 1, 3)).reshape(Bt // r, St * r, Ct)
    return t3


# --------------------------- GMSA --------------------------------------------

def gmsa_forward(r2d, a2d, p, B, H, W, shifts=SHIFTS, window_sizes=WINDOW_SIZES):
    M, C = a2d.shape
    C2 = 2 * C

    # project_inp: 1x1 conv (C -> 2C) with BatchNorm2d batch statistics fused
    # into the same kernel (training-mode stats, matching the torch default).
    t, tsum, tsq = project_inp(r2d, p["pi_w"], p["pi_b"])
    mu = tsum / M
    var = jnp.maximum(tsq / M - mu * mu, 0.0)
    scale = p["bn_g"] * jax.lax.rsqrt(var + 1e-5)
    shift = p["bn_b"] - mu * scale
    # Per-channel affine; XLA fuses this elementwise op into the window
    # partition transposes below (bf16 result halves that traffic too).
    t = (t * scale + shift).astype(jnp.bfloat16)

    x4 = t.reshape(B, H, W, C2)
    split = C2 // 3
    cc = split // 2
    qss, vss = [], []
    for idd in range(3):
        ws = window_sizes[idd]
        el = x4[..., idd * split:(idd + 1) * split]
        if shifts > 0:
            el = jnp.roll(el, shift=(-ws // 2, -ws // 2), axis=(1, 2))
        nh, nw = H // ws, W // ws
        el = el.reshape(B, nh, ws, nw, ws, split)
        el = jnp.transpose(el, (0, 1, 3, 2, 4, 5)).reshape(B * nh * nw, ws * ws, split)
        qss.append(el[..., :cc])
        vss.append(el[..., cc:])

    idx = [0, 1, 2, 1, 2, 0, 2, 0, 1]
    atnss = []
    for i in range(0, 9, 3):
        q = qss[idx[i]]
        k = _regroup(qss[idx[i + 1]], q.shape[0])
        v = _regroup(vss[idx[i + 2]], q.shape[0])
        atnss.append(window_attention(q, k, v))   # three contiguous bf16 inputs

    ys = []
    for idd in range(3):
        ws = window_sizes[idd]
        nh, nw = H // ws, W // ws
        y = atnss[idd].reshape(B, nh, nw, ws, ws, cc)
        y = jnp.transpose(y, (0, 1, 3, 2, 4, 5)).reshape(B, H, W, cc)
        if shifts > 0:
            y = jnp.roll(y, shift=(ws // 2, ws // 2), axis=(1, 2))
        ys.append(y)
    y2d = jnp.concatenate(ys, axis=-1).reshape(M, C)

    # project_out + fused "a + right(a)" residual.
    return project_out_residual(y2d, a2d, p["po_w"], p["po_b"])


# --------------------------- ELCS --------------------------------------------

def elcs_forward(x_nchw, p):
    B, C, H, W = x_nchw.shape
    x = jnp.transpose(x_nchw, (0, 2, 3, 1))   # NHWC -> channels in the lane dim
    M = B * H * W
    x2d = x.reshape(M, C)

    # ---- left branch ----
    ln1 = layernorm_channel(x2d, p["ln1_g"], p["ln1_b"])   # bf16 (MXU operand)
    # TODO(synk): ShiftConv2d1x1 is not defined in the reference snippet; using the
    # standard ELAN/OmniSR definition (zero-padded +/-1 pixel shift of C//5 channel
    # groups followed by a dense 1x1 conv).  The pad/slice/concat is pure data
    # movement (single XLA copy); the dense conv is fused into the kernel below.
    shifted = shift_feat(ln1.reshape(B, H, W, C), C // 5).reshape(M, C)

    # Fused: shift-conv + ReLU -> ResBlock -> 0.2*res -> +x -> LN2 (right pre-norm)
    a2d, r2d = left_branch(x2d, shifted, p)

    # ---- right branch: GMSA on LN2(a), final residual fused in project_out ----
    out2d = gmsa_forward(r2d, a2d, p, B, H, W)
    return jnp.transpose(out2d.reshape(B, H, W, C), (0, 3, 1, 2))


# --------------------------- params & main ------------------------------------

def init_params(key, c=PLANES):
    ks = jax.random.split(key, 7)

    def w(k, shape, fan_in):
        bound = 1.0 / (fan_in ** 0.5)
        return jax.random.uniform(k, shape, jnp.float32, -bound, bound)

    return {
        "ln1_g": jnp.ones((c,), jnp.float32), "ln1_b": jnp.zeros((c,), jnp.float32),
        "sc_w": w(ks[0], (c, c), c), "sc_b": jnp.zeros((c,), jnp.float32),
        "c1_w": w(ks[1], (c, c), c), "c1_b": jnp.zeros((c,), jnp.float32),
        "d1_w": w(ks[2], (c, c // 2), c), "d1_b": jnp.zeros((c // 2,), jnp.float32),
        "d2_w": w(ks[3], (c, c // 2), c), "d2_b": jnp.zeros((c // 2,), jnp.float32),
        "c2_w": w(ks[4], (c, c), c), "c2_b": jnp.zeros((c,), jnp.float32),
        "ln2_g": jnp.ones((c,), jnp.float32), "ln2_b": jnp.zeros((c,), jnp.float32),
        "pi_w": w(ks[5], (c, 2 * c), c), "pi_b": jnp.zeros((2 * c,), jnp.float32),
        "bn_g": jnp.ones((2 * c,), jnp.float32), "bn_b": jnp.zeros((2 * c,), jnp.float32),
        "po_w": w(ks[6], (c, c), c), "po_b": jnp.zeros((c,), jnp.float32),
    }


if __name__ == "__main__":
    key = jax.random.PRNGKey(0)
    kx, kp = jax.random.split(key)
    # B=2, C=60 (module default), H=W=16 (must be divisible by the largest window, 16)
    x = jax.random.normal(kx, (2, PLANES, 16, 16), jnp.float32)
    params = init_params(kp)

    fwd = jax.jit(elcs_forward)
    out = fwd(x, params)
    jax.block_until_ready(out)
    assert out.shape == x.shape and out.dtype == x.dtype
    print("KERNEL_OK")
</pallas_src>

<mosaic_0001>
module attributes {stable_mosaic.version = 11 : i64} {
  func.func @_ln_kernel(%arg0: i32, %arg1: memref<128x60xf32, #tpu.memory_space<vmem>>, %arg2: memref<1x60xf32, #tpu.memory_space<vmem>>, %arg3: memref<1x60xf32, #tpu.memory_space<vmem>>, %arg4: memref<128x60xbf16, #tpu.memory_space<vmem>>) attributes {dimension_semantics = [#tpu.dimension_semantics<parallel>], iteration_bounds = array<i64: 4>, scalar_prefetch = 0 : i64, scratch_operands = 0 : i64, tpu.core_type = #tpu.core_type<tc>, window_params = [{transform_indices = @transform_0, window_bounds = array<i64: 128, 60>}, {pipeline_mode = #tpu.pipeline_mode<synchronous>, transform_indices = @transform_1, window_bounds = array<i64: 1, 60>}, {pipeline_mode = #tpu.pipeline_mode<synchronous>, transform_indices = @transform_2, window_bounds = array<i64: 1, 60>}, {transform_indices = @transform_3, window_bounds = array<i64: 128, 60>}]} {
    %c0 = arith.constant 0 : index
    %c0_0 = arith.constant 0 : index
    %0 = vector.load %arg1[%c0, %c0_0] : memref<128x60xf32, #tpu.memory_space<vmem>>, vector<128x60xf32>
    %cst = arith.constant dense<0.000000e+00> : vector<128xf32>
    %1 = vector.multi_reduction <add>, %0, %cst [1] : vector<128x60xf32> to vector<128xf32>
    %2 = vector.shape_cast %1 : vector<128xf32> to vector<128x1xf32>
    %cst_1 = arith.constant 6.000000e+01 : f32
    %3 = vector.broadcast %cst_1 : f32 to vector<128x1xf32>
    %4 = arith.divf %2, %3 : vector<128x1xf32>
    %5 = vector.broadcast %4 : vector<128x1xf32> to vector<128x60xf32>
    %6 = arith.subf %0, %5 : vector<128x60xf32>
    %7 = arith.mulf %6, %6 : vector<128x60xf32>
    %cst_2 = arith.constant dense<0.000000e+00> : vector<128xf32>
    %8 = vector.multi_reduction <add>, %7, %cst_2 [1] : vector<128x60xf32> to vector<128xf32>
    %9 = vector.shape_cast %8 : vector<128xf32> to vector<128x1xf32>
    %cst_3 = arith.constant 6.000000e+01 : f32
    %10 = vector.broadcast %cst_3 : f32 to vector<128x1xf32>
    %11 = arith.divf %9, %10 : vector<128x1xf32>
    %cst_4 = arith.constant 9.99999974E-6 : f32
    %12 = vector.broadcast %cst_4 : f32 to vector<128x1xf32>
    %13 = arith.addf %11, %12 : vector<128x1xf32>
    %14 = math.rsqrt %13 : vector<128x1xf32>
    %15 = vector.broadcast %14 : vector<128x1xf32> to vector<128x60xf32>
    %16 = arith.mulf %6, %15 : vector<128x60xf32>
    %c0_5 = arith.constant 0 : index
    %c0_6 = arith.constant 0 : index
    %17 = vector.load %arg2[%c0_5, %c0_6] : memref<1x60xf32, #tpu.memory_space<vmem>>, vector<1x60xf32>
    %18 = vector.broadcast %17 : vector<1x60xf32> to vector<128x60xf32>
    %19 = arith.mulf %16, %18 : vector<128x60xf32>
    %c0_7 = arith.constant 0 : index
    %c0_8 = arith.constant 0 : index
    %20 = vector.load %arg3[%c0_7, %c0_8] : memref<1x60xf32, #tpu.memory_space<vmem>>, vector<1x60xf32>
    %21 = vector.broadcast %20 : vector<1x60xf32> to vector<128x60xf32>
    %22 = arith.addf %19, %21 : vector<128x60xf32>
    %23 = arith.truncf %22 : vector<128x60xf32> to vector<128x60xbf16>
    %c0_9 = arith.constant 0 : index
    %c0_10 = arith.constant 0 : index
    %24 = vector.load %arg4[%c0_9, %c0_10] : memref<128x60xbf16, #tpu.memory_space<vmem>>, vector<128x60xbf16>
    tpu.vector_store %arg4[%c0_9, %c0_10], %23 {strides = array<i32>} : memref<128x60xbf16, #tpu.memory_space<vmem>>, vector<128x60xbf16>,
    return
  }
  func.func @transform_0(%arg0: i32) -> (i32, i32) {
    %c0_i32 = arith.constant 0 : i32
    %c0_i32_0 = arith.constant 0 : i32
    return %arg0, %c0_i32 : i32, i32
  }
  func.func @transform_1(%arg0: i32) -> (i32, i32) {
    %c0_i32 = arith.constant 0 : i32
    %c0_i32_0 = arith.constant 0 : i32
    %c0_i32_1 = arith.constant 0 : i32
    return %c0_i32, %c0_i32_0 : i32, i32
  }
  func.func @transform_2(%arg0: i32) -> (i32, i32) {
    %c0_i32 = arith.constant 0 : i32
    %c0_i32_0 = arith.constant 0 : i32
    %c0_i32_1 = arith.constant 0 : i32
    return %c0_i32, %c0_i32_0 : i32, i32
  }
  func.func @transform_3(%arg0: i32) -> (i32, i32) {
    %c0_i32 = arith.constant 0 : i32
    %c0_i32_0 = arith.constant 0 : i32
    return %arg0, %c0_i32 : i32, i32
  }
}

module attributes {stable_mosaic.version = 11 : i64} {
  func.func @_left_fused_kernel(%arg0: i32, %arg1: memref<128x60xbf16, #tpu.memory_space<vmem>>, %arg2: memref<128x60xf32, #tpu.memory_space<vmem>>, %arg3: memref<60x60xbf16, #tpu.memory_space<vmem>>, %arg4: memref<1x60xf32, #tpu.memory_space<vmem>>, %arg5: memref<60x60xbf16, #tpu.memory_space<vmem>>, %arg6: memref<1x60xf32, #tpu.memory_space<vmem>>, %arg7: memref<60x60xbf16, #tpu.memory_space<vmem>>, %arg8: memref<1x60xf32, #tpu.memory_space<vmem>>, %arg9: memref<60x60xbf16, #tpu.memory_space<vmem>>, %arg10: memref<1x60xf32, #tpu.memory_space<vmem>>, %arg11: memref<1x60xf32, #tpu.memory_space<vmem>>, %arg12: memref<1x60xf32, #tpu.memory_space<vmem>>, %arg13: memref<128x60xf32, #tpu.memory_space<vmem>>, %arg14: memref<128x60xbf16, #tpu.memory_space<vmem>>) attributes {dimension_semantics = [#tpu.dimension_semantics<parallel>], iteration_bounds = array<i64: 4>, scalar_prefetch = 0 : i64, scratch_operands = 0 : i64, tpu.core_type = #tpu.core_type<tc>, window_params = [{transform_indices = @transform_0, window_bounds = array<i64: 128, 60>}, {transform_indices = @transform_1, window_bounds = array<i64: 128, 60>}, {pipeline_mode = #tpu.pipeline_mode<synchronous>, transform_indices = @transform_2, window_bounds = array<i64: 60, 60>}, {pipeline_mode = #tpu.pipeline_mode<synchronous>, transform_indices = @transform_3, window_bounds = array<i64: 1, 60>}, {pipeline_mode = #tpu.pipeline_mode<synchronous>, transform_indices = @transform_4, window_bounds = array<i64: 60, 60>}, {pipeline_mode = #tpu.pipeline_mode<synchronous>, transform_indices = @transform_5, window_bounds = array<i64: 1, 60>}, {pipeline_mode = #tpu.pipeline_mode<synchronous>, transform_indices = @transform_6, window_bounds = array<i64: 60, 60>}, {pipeline_mode = #tpu.pipeline_mode<synchronous>, transform_indices = @transform_7, window_bounds = array<i64: 1, 60>}, {pipeline_mode = #tpu.pipeline_mode<synchronous>, transform_indices = @transform_8, window_bounds = array<i64: 60, 60>}, {pipeline_mode = #tpu.pipeline_mode<synchronous>, transform_indices = @transform_9, window_bounds = array<i64: 1, 60>}, {pipeline_mode = #tpu.pipeline_mode<synchronous>, transform_indices = @transform_10, window_bounds = array<i64: 1, 60>}, {pipeline_mode = #tpu.pipeline_mode<synchronous>, transform_indices = @transform_11, window_bounds = array<i64: 1, 60>}, {transform_indices = @transform_12, window_bounds = array<i64: 128, 60>}, {transform_indices = @transform_13, window_bounds = array<i64: 128, 60>}]} {
    %c0 = arith.constant 0 : index
    %c0_0 = arith.constant 0 : index
    %0 = vector.load %arg2[%c0, %c0_0] : memref<128x60xf32, #tpu.memory_space<vmem>>, vector<128x60xf32>
    %c0_1 = arith.constant 0 : index
    %c0_2 = arith.constant 0 : index
    %1 = vector.load %arg1[%c0_1, %c0_2] : memref<128x60xbf16, #tpu.memory_space<vmem>>, vector<128x60xbf16>
    %c0_3 = arith.constant 0 : index
    %c0_4 = arith.constant 0 : index
    %2 = vector.load %arg3[%c0_3, %c0_4] : memref<60x60xbf16, #tpu.memory_space<vmem>>, vector<60x60xbf16>
    %cst = arith.constant dense<0.000000e+00> : vector<128x60xf32>
    %3 = tpu.matmul %1, %2, %cst {dimension_numbers = #tpu.dot_dimension_numbers<[1], [0], [0], [1], [0, 0, 1, 1], [], []>} : vector<128x60xbf16>, vector<60x60xbf16>, vector<128x60xf32> -> vector<128x60xf32>
    %c0_5 = arith.constant 0 : index
    %c0_6 = arith.constant 0 : index
    %4 = vector.load %arg4[%c0_5, %c0_6] : memref<1x60xf32, #tpu.memory_space<vmem>>, vector<1x60xf32>
    %5 = vector.broadcast %4 : vector<1x60xf32> to vector<128x60xf32>
    %6 = arith.addf %3, %5 : vector<128x60xf32>
    %cst_7 = arith.constant 0.000000e+00 : f32
    %7 = vector.broadcast %cst_7 : f32 to vector<128x60xf32>
    %8 = arith.maximumf %6, %7 : vector<128x60xf32>
    %9 = arith.truncf %8 : vector<128x60xf32> to vector<128x60xbf16>
    %c0_8 = arith.constant 0 : index
    %c0_9 = arith.constant 0 : index
    %10 = vector.load %arg5[%c0_8, %c0_9] : memref<60x60xbf16, #tpu.memory_space<vmem>>, vector<60x60xbf16>
    %cst_10 = arith.constant dense<0.000000e+00> : vector<128x60xf32>
    %11 = tpu.matmul %9, %10, %cst_10 {dimension_numbers = #tpu.dot_dimension_numbers<[1], [0], [0], [1], [0, 0, 1, 1], [], []>} : vector<128x60xbf16>, vector<60x60xbf16>, vector<128x60xf32> -> vector<128x60xf32>
    %c0_11 = arith.constant 0 : index
    %c0_12 = arith.constant 0 : index
    %12 = vector.load %arg6[%c0_11, %c0_12] : memref<1x60xf32, #tpu.memory_space<vmem>>, vector<1x60xf32>
    %13 = vector.broadcast %12 : vector<1x60xf32> to vector<128x60xf32>
    %14 = arith.addf %11, %13 : vector<128x60xf32>
    %cst_13 = arith.constant 0.000000e+00 : f32
    %15 = vector.broadcast %cst_13 : f32 to vector<128x60xf32>
    %16 = arith.cmpf oge, %14, %15 : vector<128x60xf32>
    %cst_14 = arith.constant 2.000000e-01 : f32
    %17 = vector.broadcast %cst_14 : f32 to vector<128x60xf32>
    %18 = arith.mulf %17, %14 : vector<128x60xf32>
    %19 = arith.select %16, %14, %18 : vector<128x60xi1>, vector<128x60xf32>
    %20 = arith.truncf %19 : vector<128x60xf32> to vector<128x60xbf16>
    %c0_15 = arith.constant 0 : index
    %c0_16 = arith.constant 0 : index
    %21 = vector.load %arg7[%c0_15, %c0_16] : memref<60x60xbf16, #tpu.memory_space<vmem>>, vector<60x60xbf16>
    %cst_17 = arith.constant dense<0.000000e+00> : vector<128x60xf32>
    %22 = tpu.matmul %20, %21, %cst_17 {dimension_numbers = #tpu.dot_dimension_numbers<[1], [0], [0], [1], [0, 0, 1, 1], [], []>} : vector<128x60xbf16>, vector<60x60xbf16>, vector<128x60xf32> -> vector<128x60xf32>
    %c0_18 = arith.constant 0 : index
    %c0_19 = arith.constant 0 : index
    %23 = vector.load %arg8[%c0_18, %c0_19] : memref<1x60xf32, #tpu.memory_space<vmem>>, vector<1x60xf32>
    %24 = vector.broadcast %23 : vector<1x60xf32> to vector<128x60xf32>
    %25 = arith.addf %22, %24 : vector<128x60xf32>
    %cst_20 = arith.constant 0.000000e+00 : f32
    %26 = vector.broadcast %cst_20 : f32 to vector<128x60xf32>
    %27 = arith.cmpf oge, %25, %26 : vector<128x60xf32>
    %cst_21 = arith.constant 2.000000e-01 : f32
    %28 = vector.broadcast %cst_21 : f32 to vector<128x60xf32>
    %29 = arith.mulf %28, %25 : vector<128x60xf32>
    %30 = arith.select %27, %25, %29 : vector<128x60xi1>, vector<128x60xf32>
    %31 = arith.truncf %30 : vector<128x60xf32> to vector<128x60xbf16>
    %c0_22 = arith.constant 0 : index
    %c0_23 = arith.constant 0 : index
    %32 = vector.load %arg9[%c0_22, %c0_23] : memref<60x60xbf16, #tpu.memory_space<vmem>>, vector<60x60xbf16>
    %cst_24 = arith.constant dense<0.000000e+00> : vector<128x60xf32>
    %33 = tpu.matmul %31, %32, %cst_24 {dimension_numbers = #tpu.dot_dimension_numbers<[1], [0], [0], [1], [0, 0, 1, 1], [], []>} : vector<128x60xbf16>, vector<60x60xbf16>, vector<128x60xf32> -> vector<128x60xf32>
    %c0_25 = arith.constant 0 : index
    %c0_26 = arith.constant 0 : index
    %34 = vector.load %arg10[%c0_25, %c0_26] : memref<1x60xf32, #tpu.memory_space<vmem>>, vector<1x60xf32>
    %35 = vector.broadcast %34 : vector<1x60xf32> to vector<128x60xf32>
    %36 = arith.addf %33, %35 : vector<128x60xf32>
    %cst_27 = arith.constant 2.000000e-01 : f32
    %37 = vector.broadcast %cst_27 : f32 to vector<128x60xf32>
    %38 = arith.mulf %37, %36 : vector<128x60xf32>
    %39 = arith.addf %8, %38 : vector<128x60xf32>
    %40 = arith.addf %39, %0 : vector<128x60xf32>
    %c0_28 = arith.constant 0 : index
    %c0_29 = arith.constant 0 : index
    %41 = vector.load %arg13[%c0_28, %c0_29] : memref<128x60xf32, #tpu.memory_space<vmem>>, vector<128x60xf32>
    tpu.vector_store %arg13[%c0_28, %c0_29], %40 {strides = array<i32>} : memref<128x60xf32, #tpu.memory_space<vmem>>, vector<128x60xf32>,
    %cst_30 = arith.constant dense<0.000000e+00> : vector<128xf32>
    %42 = vector.multi_reduction <add>, %40, %cst_30 [1] : vector<128x60xf32> to vector<128xf32>
    %43 = vector.shape_cast %42 : vector<128xf32> to vector<128x1xf32>
    %cst_31 = arith.constant 6.000000e+01 : f32
    %44 = vector.broadcast %cst_31 : f32 to vector<128x1xf32>
    %45 = arith.divf %43, %44 : vector<128x1xf32>
    %46 = vector.broadcast %45 : vector<128x1xf32> to vector<128x60xf32>
    %47 = arith.subf %40, %46 : vector<128x60xf32>
    %48 = arith.mulf %47, %47 : vector<128x60xf32>
    %cst_32 = arith.constant dense<0.000000e+00> : vector<128xf32>
    %49 = vector.multi_reduction <add>, %48, %cst_32 [1] : vector<128x60xf32> to vector<128xf32>
    %50 = vector.shape_cast %49 : vector<128xf32> to vector<128x1xf32>
    %cst_33 = arith.constant 6.000000e+01 : f32
    %51 = vector.broadcast %cst_33 : f32 to vector<128x1xf32>
    %52 = arith.divf %50, %51 : vector<128x1xf32>
    %cst_34 = arith.constant 9.99999974E-6 : f32
    %53 = vector.broadcast %cst_34 : f32 to vector<128x1xf32>
    %54 = arith.addf %52, %53 : vector<128x1xf32>
    %55 = math.rsqrt %54 : vector<128x1xf32>
    %56 = vector.broadcast %55 : vector<128x1xf32> to vector<128x60xf32>
    %57 = arith.mulf %47, %56 : vector<128x60xf32>
    %c0_35 = arith.constant 0 : index
    %c0_36 = arith.constant 0 : index
    %58 = vector.load %arg11[%c0_35, %c0_36] : memref<1x60xf32, #tpu.memory_space<vmem>>, vector<1x60xf32>
    %59 = vector.broadcast %58 : vector<1x60xf32> to vector<128x60xf32>
    %60 = arith.mulf %57, %59 : vector<128x60xf32>
    %c0_37 = arith.constant 0 : index
    %c0_38 = arith.constant 0 : index
    %61 = vector.load %arg12[%c0_37, %c0_38] : memref<1x60xf32, #tpu.memory_space<vmem>>, vector<1x60xf32>
    %62 = vector.broadcast %61 : vector<1x60xf32> to vector<128x60xf32>
    %63 = arith.addf %60, %62 : vector<128x60xf32>
    %64 = arith.truncf %63 : vector<128x60xf32> to vector<128x60xbf16>
    %c0_39 = arith.constant 0 : index
    %c0_40 = arith.constant 0 : index
    %65 = vector.load %arg14[%c0_39, %c0_40] : memref<128x60xbf16, #tpu.memory_space<vmem>>, vector<128x60xbf16>
    tpu.vector_store %arg14[%c0_39, %c0_40], %64 {strides = array<i32>} : memref<128x60xbf16, #tpu.memory_space<vmem>>, vector<128x60xbf16>,
    return
  }
  func.func @transform_0(%arg0: i32) -> (i32, i32) {
    %c0_i32 = arith.constant 0 : i32
    %c0_i32_0 = arith.constant 0 : i32
    return %arg0, %c0_i32 : i32, i32
  }
  func.func @transform_1(%arg0: i32) -> (i32, i32) {
    %c0_i32 = arith.constant 0 : i32
    %c0_i32_0 = arith.constant 0 : i32
    return %arg0, %c0_i32 : i32, i32
  }
  func.func @transform_2(%arg0: i32) -> (i32, i32) {
    %c0_i32 = arith.constant 0 : i32
    %c0_i32_0 = arith.constant 0 : i32
    %c0_i32_1 = arith.constant 0 : i32
    return %c0_i32, %c0_i32_0 : i32, i32
  }
  func.func @transform_3(%arg0: i32) -> (i32, i32) {
    %c0_i32 = arith.constant 0 : i32
    %c0_i32_0 = arith.constant 0 : i32
    %c0_i32_1 = arith.constant 0 : i32
    return %c0_i32, %c0_i32_0 : i32, i32
  }
  func.func @transform_4(%arg0: i32) -> (i32, i32) {
    %c0_i32 = arith.constant 0 : i32
    %c0_i32_0 = arith.constant 0 : i32
    %c0_i32_1 = arith.constant 0 : i32
    return %c0_i32, %c0_i32_0 : i32, i32
  }
  func.func @transform_5(%arg0: i32) -> (i32, i32) {
    %c0_i32 = arith.constant 0 : i32
    %c0_i32_0 = arith.constant 0 : i32
    %c0_i32_1 = arith.constant 0 : i32
    return %c0_i32, %c0_i32_0 : i32, i32
  }
  func.func @transform_6(%arg0: i32) -> (i32, i32) {
    %c0_i32 = arith.constant 0 : i32
    %c0_i32_0 = arith.constant 0 : i32
    %c0_i32_1 = arith.constant 0 : i32
    return %c0_i32, %c0_i32_0 : i32, i32
  }
  func.func @transform_7(%arg0: i32) -> (i32, i32) {
    %c0_i32 = arith.constant 0 : i32
    %c0_i32_0 = arith.constant 0 : i32
    %c0_i32_1 = arith.constant 0 : i32
    return %c0_i32, %c0_i32_0 : i32, i32
  }
  func.func @transform_8(%arg0: i32) -> (i32, i32) {
    %c0_i32 = arith.constant 0 : i32
    %c0_i32_0 = arith.constant 0 : i32
    %c0_i32_1 = arith.constant 0 : i32
    return %c0_i32, %c0_i32_0 : i32, i32
  }
  func.func @transform_9(%arg0: i32) -> (i32, i32) {
    %c0_i32 = arith.constant 0 : i32
    %c0_i32_0 = arith.constant 0 : i32
    %c0_i32_1 = arith.constant 0 : i32
    return %c0_i32, %c0_i32_0 : i32, i32
  }
  func.func @transform_10(%arg0: i32) -> (i32, i32) {
    %c0_i32 = arith.constant 0 : i32
    %c0_i32_0 = arith.constant 0 : i32
    %c0_i32_1 = arith.constant 0 : i32
    return %c0_i32, %c0_i32_0 : i32, i32
  }
  func.func @transform_11(%arg0: i32) -> (i32, i32) {
    %c0_i32 = arith.constant 0 : i32
    %c0_i32_0 = arith.constant 0 : i32
    %c0_i32_1 = arith.constant 0 : i32
    return %c0_i32, %c0_i32_0 : i32, i32
  }
  func.func @transform_12(%arg0: i32) -> (i32, i32) {
    %c0_i32 = arith.constant 0 : i32
    %c0_i32_0 = arith.constant 0 : i32
    return %arg0, %c0_i32 : i32, i32
  }
  func.func @transform_13(%arg0: i32) -> (i32, i32) {
    %c0_i32 = arith.constant 0 : i32
    %c0_i32_0 = arith.constant 0 : i32
    return %arg0, %c0_i32 : i32, i32
  }
}

module attributes {stable_mosaic.version = 11 : i64} {
  func.func @_pi_kernel(%arg0: i32, %arg1: memref<128x60xbf16, #tpu.memory_space<vmem>>, %arg2: memref<60x120xbf16, #tpu.memory_space<vmem>>, %arg3: memref<1x120xf32, #tpu.memory_space<vmem>>, %arg4: memref<128x120xbf16, #tpu.memory_space<vmem>>, %arg5: memref<8x120xf32, #tpu.memory_space<vmem>>, %arg6: memref<8x120xf32, #tpu.memory_space<vmem>>) attributes {dimension_semantics = [#tpu.dimension_semantics<parallel>], iteration_bounds = array<i64: 4>, scalar_prefetch = 0 : i64, scratch_operands = 0 : i64, tpu.core_type = #tpu.core_type<tc>, window_params = [{transform_indices = @transform_0, window_bounds = array<i64: 128, 60>}, {pipeline_mode = #tpu.pipeline_mode<synchronous>, transform_indices = @transform_1, window_bounds = array<i64: 60, 120>}, {pipeline_mode = #tpu.pipeline_mode<synchronous>, transform_indices = @transform_2, window_bounds = array<i64: 1, 120>}, {transform_indices = @transform_3, window_bounds = array<i64: 128, 120>}, {transform_indices = @transform_4, window_bounds = array<i64: 8, 120>}, {transform_indices = @transform_5, window_bounds = array<i64: 8, 120>}]} {
    %c0 = arith.constant 0 : index
    %c0_0 = arith.constant 0 : index
    %0 = vector.load %arg1[%c0, %c0_0] : memref<128x60xbf16, #tpu.memory_space<vmem>>, vector<128x60xbf16>
    %c0_1 = arith.constant 0 : index
    %c0_2 = arith.constant 0 : index
    %1 = vector.load %arg2[%c0_1, %c0_2] : memref<60x120xbf16, #tpu.memory_space<vmem>>, vector<60x120xbf16>
    %cst = arith.constant dense<0.000000e+00> : vector<128x120xf32>
    %2 = tpu.matmul %0, %1, %cst {dimension_numbers = #tpu.dot_dimension_numbers<[1], [0], [0], [1], [0, 0, 1, 1], [], []>} : vector<128x60xbf16>, vector<60x120xbf16>, vector<128x120xf32> -> vector<128x120xf32>
    %c0_3 = arith.constant 0 : index
    %c0_4 = arith.constant 0 : index
    %3 = vector.load %arg3[%c0_3, %c0_4] : memref<1x120xf32, #tpu.memory_space<vmem>>, vector<1x120xf32>
    %4 = vector.broadcast %3 : vector<1x120xf32> to vector<128x120xf32>
    %5 = arith.addf %2, %4 : vector<128x120xf32>
    %6 = arith.truncf %5 : vector<128x120xf32> to vector<128x120xbf16>
    %c0_5 = arith.constant 0 : index
    %c0_6 = arith.constant 0 : index
    %7 = vector.load %arg4[%c0_5, %c0_6] : memref<128x120xbf16, #tpu.memory_space<vmem>>, vector<128x120xbf16>
    tpu.vector_store %arg4[%c0_5, %c0_6], %6 {strides = array<i32>} : memref<128x120xbf16, #tpu.memory_space<vmem>>, vector<128x120xbf16>,
    %cst_7 = arith.constant dense<0.000000e+00> : vector<120xf32>
    %8 = vector.multi_reduction <add>, %5, %cst_7 [0] : vector<128x120xf32> to vector<120xf32>
    %9 = vector.shape_cast %8 : vector<120xf32> to vector<1x120xf32>
    %10 = arith.mulf %5, %5 : vector<128x120xf32>
    %cst_8 = arith.constant dense<0.000000e+00> : vector<120xf32>
    %11 = vector.multi_reduction <add>, %10, %cst_8 [0] : vector<128x120xf32> to vector<120xf32>
    %12 = vector.shape_cast %11 : vector<120xf32> to vector<1x120xf32>
    %13 = vector.shape_cast %9 : vector<1x120xf32> to vector<1x120xf32>
    %14 = vector.broadcast %13 : vector<1x120xf32> to vector<8x120xf32>
    %c0_9 = arith.constant 0 : index
    %c0_10 = arith.constant 0 : index
    %15 = vector.load %arg5[%c0_9, %c0_10] : memref<8x120xf32, #tpu.memory_space<vmem>>, vector<8x120xf32>
    tpu.vector_store %arg5[%c0_9, %c0_10], %14 {strides = array<i32>} : memref<8x120xf32, #tpu.memory_space<vmem>>, vector<8x120xf32>,
    %16 = vector.shape_cast %12 : vector<1x120xf32> to vector<1x120xf32>
    %17 = vector.broadcast %16 : vector<1x120xf32> to vector<8x120xf32>
    %c0_11 = arith.constant 0 : index
    %c0_12 = arith.constant 0 : index
    %18 = vector.load %arg6[%c0_11, %c0_12] : memref<8x120xf32, #tpu.memory_space<vmem>>, vector<8x120xf32>
    tpu.vector_store %arg6[%c0_11, %c0_12], %17 {strides = array<i32>} : memref<8x120xf32, #tpu.memory_space<vmem>>, vector<8x120xf32>,
    return
  }
  func.func @transform_0(%arg0: i32) -> (i32, i32) {
    %c0_i32 = arith.constant 0 : i32
    %c0_i32_0 = arith.constant 0 : i32
    return %arg0, %c0_i32 : i32, i32
  }
  func.func @transform_1(%arg0: i32) -> (i32, i32) {
    %c0_i32 = arith.constant 0 : i32
    %c0_i32_0 = arith.constant 0 : i32
    %c0_i32_1 = arith.constant 0 : i32
    return %c0_i32, %c0_i32_0 : i32, i32
  }
  func.func @transform_2(%arg0: i32) -> (i32, i32) {
    %c0_i32 = arith.constant 0 : i32
    %c0_i32_0 = arith.constant 0 : i32
    %c0_i32_1 = arith.constant 0 : i32
    return %c0_i32, %c0_i32_0 : i32, i32
  }
  func.func @transform_3(%arg0: i32) -> (i32, i32) {
    %c0_i32 = arith.constant 0 : i32
    %c0_i32_0 = arith.constant 0 : i32
    return %arg0, %c0_i32 : i32, i32
  }
  func.func @transform_4(%arg0: i32) -> (i32, i32) {
    %c0_i32 = arith.constant 0 : i32
    %c0_i32_0 = arith.constant 0 : i32
    return %arg0, %c0_i32 : i32, i32
  }
  func.func @transform_5(%arg0: i32) -> (i32, i32) {
    %c0_i32 = arith.constant 0 : i32
    %c0_i32_0 = arith.constant 0 : i32
    return %arg0, %c0_i32 : i32, i32
  }
}

module attributes {stable_mosaic.version = 11 : i64} {
  func.func @_attn_kernel(%arg0: i32, %arg1: memref<1x256x20xbf16, #tpu.memory_space<vmem>>, %arg2: memref<1x256x20xbf16, #tpu.memory_space<vmem>>, %arg3: memref<1x256x20xbf16, #tpu.memory_space<vmem>>, %arg4: memref<1x256x20xbf16, #tpu.memory_space<vmem>>) attributes {dimension_semantics = [#tpu.dimension_semantics<parallel>], iteration_bounds = array<i64: 2>, scalar_prefetch = 0 : i64, scratch_operands = 0 : i64, tpu.core_type = #tpu.core_type<tc>, window_params = [{transform_indices = @transform_0, window_bounds = array<i64: 1, 256, 20>}, {transform_indices = @transform_1, window_bounds = array<i64: 1, 256, 20>}, {transform_indices = @transform_2, window_bounds = array<i64: 1, 256, 20>}, {transform_indices = @transform_3, window_bounds = array<i64: 1, 256, 20>}]} {
    %c0 = arith.constant 0 : index
    %c0_0 = arith.constant 0 : index
    %c0_1 = arith.constant 0 : index
    %0 = vector.load %arg1[%c0, %c0_0, %c0_1] : memref<1x256x20xbf16, #tpu.memory_space<vmem>>, vector<1x256x20xbf16>
    %c0_2 = arith.constant 0 : index
    %c0_3 = arith.constant 0 : index
    %c0_4 = arith.constant 0 : index
    %1 = vector.load %arg2[%c0_2, %c0_3, %c0_4] : memref<1x256x20xbf16, #tpu.memory_space<vmem>>, vector<1x256x20xbf16>
    "tpu.trace_start"() <{level = 10 : i32, message = "bqd,bkd->bqk"}> : () -> ()
    %cst = arith.constant dense<0.000000e+00> : vector<1x256x256xf32>
    %2 = tpu.matmul %0, %1, %cst {dimension_numbers = #tpu.dot_dimension_numbers<[2], [2], [1], [1], [0, 0, 0, 1, 1, 1], [0], [0]>} : vector<1x256x20xbf16>, vector<1x256x20xbf16>, vector<1x256x256xf32> -> vector<1x256x256xf32>
    "tpu.trace_stop"() : () -> ()
    %cst_5 = arith.constant dense<0xFF800000> : vector<1x256xf32>
    %3 = vector.multi_reduction <maximumf>, %2, %cst_5 [2] : vector<1x256x256xf32> to vector<1x256xf32>
    %4 = vector.shape_cast %3 : vector<1x256xf32> to vector<1x256x1xf32>
    %5 = vector.broadcast %4 : vector<1x256x1xf32> to vector<1x256x256xf32>
    %6 = arith.subf %2, %5 : vector<1x256x256xf32>
    %7 = math.exp %6 : vector<1x256x256xf32>
    %cst_6 = arith.constant dense<0.000000e+00> : vector<1x256xf32>
    %8 = vector.multi_reduction <add>, %7, %cst_6 [2] : vector<1x256x256xf32> to vector<1x256xf32>
    %9 = vector.shape_cast %8 : vector<1x256xf32> to vector<1x256x1xf32>
    %10 = tpu.reciprocal %9 {approx = true} : vector<1x256x1xf32> -> vector<1x256x1xf32>
    %11 = vector.broadcast %10 : vector<1x256x1xf32> to vector<1x256x256xf32>
    %12 = arith.mulf %7, %11 : vector<1x256x256xf32>
    %13 = arith.truncf %12 : vector<1x256x256xf32> to vector<1x256x256xbf16>
    %c0_7 = arith.constant 0 : index
    %c0_8 = arith.constant 0 : index
    %c0_9 = arith.constant 0 : index
    %14 = vector.load %arg3[%c0_7, %c0_8, %c0_9] : memref<1x256x20xbf16, #tpu.memory_space<vmem>>, vector<1x256x20xbf16>
    "tpu.trace_start"() <{level = 10 : i32, message = "bqk,bkd->bqd"}> : () -> ()
    %cst_10 = arith.constant dense<0.000000e+00> : vector<1x256x20xf32>
    %15 = tpu.matmul %13, %14, %cst_10 {dimension_numbers = #tpu.dot_dimension_numbers<[2], [1], [1], [2], [0, 0, 0, 1, 1, 2], [0], [0]>} : vector<1x256x256xbf16>, vector<1x256x20xbf16>, vector<1x256x20xf32> -> vector<1x256x20xf32>
    "tpu.trace_stop"() : () -> ()
    %16 = arith.truncf %15 : vector<1x256x20xf32> to vector<1x256x20xbf16>
    %c0_11 = arith.constant 0 : index
    %c0_12 = arith.constant 0 : index
    %c0_13 = arith.constant 0 : index
    %17 = vector.load %arg4[%c0_11, %c0_12, %c0_13] : memref<1x256x20xbf16, #tpu.memory_space<vmem>>, vector<1x256x20xbf16>
    tpu.vector_store %arg4[%c0_11, %c0_12, %c0_13], %16 {strides = array<i32>} : memref<1x256x20xbf16, #tpu.memory_space<vmem>>, vector<1x256x20xbf16>,
    return
  }
  func.func @transform_0(%arg0: i32) -> (i32, i32, i32) {
    %c0_i32 = arith.constant 0 : i32
    %c0_i32_0 = arith.constant 0 : i32
    %c0_i32_1 = arith.constant 0 : i32
    return %arg0, %c0_i32, %c0_i32_0 : i32, i32, i32
  }
  func.func @transform_1(%arg0: i32) -> (i32, i32, i32) {
    %c0_i32 = arith.constant 0 : i32
    %c0_i32_0 = arith.constant 0 : i32
    %c0_i32_1 = arith.constant 0 : i32
    return %arg0, %c0_i32, %c0_i32_0 : i32, i32, i32
  }
  func.func @transform_2(%arg0: i32) -> (i32, i32, i32) {
    %c0_i32 = arith.constant 0 : i32
    %c0_i32_0 = arith.constant 0 : i32
    %c0_i32_1 = arith.constant 0 : i32
    return %arg0, %c0_i32, %c0_i32_0 : i32, i32, i32
  }
  func.func @transform_3(%arg0: i32) -> (i32, i32, i32) {
    %c0_i32 = arith.constant 0 : i32
    %c0_i32_0 = arith.constant 0 : i32
    %c0_i32_1 = arith.constant 0 : i32
    return %arg0, %c0_i32, %c0_i32_0 : i32, i32, i32
  }
}

module attributes {stable_mosaic.version = 11 : i64} {
  func.func @_attn_kernel(%arg0: i32, %arg1: memref<4x64x20xbf16, #tpu.memory_space<vmem>>, %arg2: memref<4x64x20xbf16, #tpu.memory_space<vmem>>, %arg3: memref<4x64x20xbf16, #tpu.memory_space<vmem>>, %arg4: memref<4x64x20xbf16, #tpu.memory_space<vmem>>) attributes {dimension_semantics = [#tpu.dimension_semantics<parallel>], iteration_bounds = array<i64: 2>, scalar_prefetch = 0 : i64, scratch_operands = 0 : i64, tpu.core_type = #tpu.core_type<tc>, window_params = [{transform_indices = @transform_0, window_bounds = array<i64: 4, 64, 20>}, {transform_indices = @transform_1, window_bounds = array<i64: 4, 64, 20>}, {transform_indices = @transform_2, window_bounds = array<i64: 4, 64, 20>}, {transform_indices = @transform_3, window_bounds = array<i64: 4, 64, 20>}]} {
    %c0 = arith.constant 0 : index
    %c0_0 = arith.constant 0 : index
    %c0_1 = arith.constant 0 : index
    %0 = vector.load %arg1[%c0, %c0_0, %c0_1] : memref<4x64x20xbf16, #tpu.memory_space<vmem>>, vector<4x64x20xbf16>
    %c0_2 = arith.constant 0 : index
    %c0_3 = arith.constant 0 : index
    %c0_4 = arith.constant 0 : index
    %1 = vector.load %arg2[%c0_2, %c0_3, %c0_4] : memref<4x64x20xbf16, #tpu.memory_space<vmem>>, vector<4x64x20xbf16>
    "tpu.trace_start"() <{level = 10 : i32, message = "bqd,bkd->bqk"}> : () -> ()
    %cst = arith.constant dense<0.000000e+00> : vector<4x64x64xf32>
    %2 = tpu.matmul %0, %1, %cst {dimension_numbers = #tpu.dot_dimension_numbers<[2], [2], [1], [1], [0, 0, 0, 1, 1, 1], [0], [0]>} : vector<4x64x20xbf16>, vector<4x64x20xbf16>, vector<4x64x64xf32> -> vector<4x64x64xf32>
    "tpu.trace_stop"() : () -> ()
    %cst_5 = arith.constant dense<0xFF800000> : vector<4x64xf32>
    %3 = vector.multi_reduction <maximumf>, %2, %cst_5 [2] : vector<4x64x64xf32> to vector<4x64xf32>
    %4 = vector.shape_cast %3 : vector<4x64xf32> to vector<4x64x1xf32>
    %5 = vector.broadcast %4 : vector<4x64x1xf32> to vector<4x64x64xf32>
    %6 = arith.subf %2, %5 : vector<4x64x64xf32>
    %7 = math.exp %6 : vector<4x64x64xf32>
    %cst_6 = arith.constant dense<0.000000e+00> : vector<4x64xf32>
    %8 = vector.multi_reduction <add>, %7, %cst_6 [2] : vector<4x64x64xf32> to vector<4x64xf32>
    %9 = vector.shape_cast %8 : vector<4x64xf32> to vector<4x64x1xf32>
    %10 = tpu.reciprocal %9 {approx = true} : vector<4x64x1xf32> -> vector<4x64x1xf32>
    %11 = vector.broadcast %10 : vector<4x64x1xf32> to vector<4x64x64xf32>
    %12 = arith.mulf %7, %11 : vector<4x64x64xf32>
    %13 = arith.truncf %12 : vector<4x64x64xf32> to vector<4x64x64xbf16>
    %c0_7 = arith.constant 0 : index
    %c0_8 = arith.constant 0 : index
    %c0_9 = arith.constant 0 : index
    %14 = vector.load %arg3[%c0_7, %c0_8, %c0_9] : memref<4x64x20xbf16, #tpu.memory_space<vmem>>, vector<4x64x20xbf16>
    "tpu.trace_start"() <{level = 10 : i32, message = "bqk,bkd->bqd"}> : () -> ()
    %cst_10 = arith.constant dense<0.000000e+00> : vector<4x64x20xf32>
    %15 = tpu.matmul %13, %14, %cst_10 {dimension_numbers = #tpu.dot_dimension_numbers<[2], [1], [1], [2], [0, 0, 0, 1, 1, 2], [0], [0]>} : vector<4x64x64xbf16>, vector<4x64x20xbf16>, vector<4x64x20xf32> -> vector<4x64x20xf32>
    "tpu.trace_stop"() : () -> ()
    %16 = arith.truncf %15 : vector<4x64x20xf32> to vector<4x64x20xbf16>
    %c0_11 = arith.constant 0 : index
    %c0_12 = arith.constant 0 : index
    %c0_13 = arith.constant 0 : index
    %17 = vector.load %arg4[%c0_11, %c0_12, %c0_13] : memref<4x64x20xbf16, #tpu.memory_space<vmem>>, vector<4x64x20xbf16>
    tpu.vector_store %arg4[%c0_11, %c0_12, %c0_13], %16 {strides = array<i32>} : memref<4x64x20xbf16, #tpu.memory_space<vmem>>, vector<4x64x20xbf16>,
    return
  }
  func.func @transform_0(%arg0: i32) -> (i32, i32, i32) {
    %c0_i32 = arith.constant 0 : i32
    %c0_i32_0 = arith.constant 0 : i32
    %c0_i32_1 = arith.constant 0 : i32
    return %arg0, %c0_i32, %c0_i32_0 : i32, i32, i32
  }
  func.func @transform_1(%arg0: i32) -> (i32, i32, i32) {
    %c0_i32 = arith.constant 0 : i32
    %c0_i32_0 = arith.constant 0 : i32
    %c0_i32_1 = arith.constant 0 : i32
    return %arg0, %c0_i32, %c0_i32_0 : i32, i32, i32
  }
  func.func @transform_2(%arg0: i32) -> (i32, i32, i32) {
    %c0_i32 = arith.constant 0 : i32
    %c0_i32_0 = arith.constant 0 : i32
    %c0_i32_1 = arith.constant 0 : i32
    return %arg0, %c0_i32, %c0_i32_0 : i32, i32, i32
  }
  func.func @transform_3(%arg0: i32) -> (i32, i32, i32) {
    %c0_i32 = arith.constant 0 : i32
    %c0_i32_0 = arith.constant 0 : i32
    %c0_i32_1 = arith.constant 0 : i32
    return %arg0, %c0_i32, %c0_i32_0 : i32, i32, i32
  }
}

module attributes {stable_mosaic.version = 11 : i64} {
  func.func @_attn_kernel(%arg0: i32, %arg1: memref<16x16x20xbf16, #tpu.memory_space<vmem>>, %arg2: memref<16x16x20xbf16, #tpu.memory_space<vmem>>, %arg3: memref<16x16x20xbf16, #tpu.memory_space<vmem>>, %arg4: memref<16x16x20xbf16, #tpu.memory_space<vmem>>) attributes {dimension_semantics = [#tpu.dimension_semantics<parallel>], iteration_bounds = array<i64: 2>, scalar_prefetch = 0 : i64, scratch_operands = 0 : i64, tpu.core_type = #tpu.core_type<tc>, window_params = [{transform_indices = @transform_0, window_bounds = array<i64: 16, 16, 20>}, {transform_indices = @transform_1, window_bounds = array<i64: 16, 16, 20>}, {transform_indices = @transform_2, window_bounds = array<i64: 16, 16, 20>}, {transform_indices = @transform_3, window_bounds = array<i64: 16, 16, 20>}]} {
    %c0 = arith.constant 0 : index
    %c0_0 = arith.constant 0 : index
    %c0_1 = arith.constant 0 : index
    %0 = vector.load %arg1[%c0, %c0_0, %c0_1] : memref<16x16x20xbf16, #tpu.memory_space<vmem>>, vector<16x16x20xbf16>
    %c0_2 = arith.constant 0 : index
    %c0_3 = arith.constant 0 : index
    %c0_4 = arith.constant 0 : index
    %1 = vector.load %arg2[%c0_2, %c0_3, %c0_4] : memref<16x16x20xbf16, #tpu.memory_space<vmem>>, vector<16x16x20xbf16>
    "tpu.trace_start"() <{level = 10 : i32, message = "bqd,bkd->bqk"}> : () -> ()
    %cst = arith.constant dense<0.000000e+00> : vector<16x16x16xf32>
    %2 = tpu.matmul %0, %1, %cst {dimension_numbers = #tpu.dot_dimension_numbers<[2], [2], [1], [1], [0, 0, 0, 1, 1, 1], [0], [0]>} : vector<16x16x20xbf16>, vector<16x16x20xbf16>, vector<16x16x16xf32> -> vector<16x16x16xf32>
    "tpu.trace_stop"() : () -> ()
    %cst_5 = arith.constant dense<0xFF800000> : vector<16x16xf32>
    %3 = vector.multi_reduction <maximumf>, %2, %cst_5 [2] : vector<16x16x16xf32> to vector<16x16xf32>
    %4 = vector.shape_cast %3 : vector<16x16xf32> to vector<16x16x1xf32>
    %5 = vector.broadcast %4 : vector<16x16x1xf32> to vector<16x16x16xf32>
    %6 = arith.subf %2, %5 : vector<16x16x16xf32>
    %7 = math.exp %6 : vector<16x16x16xf32>
    %cst_6 = arith.constant dense<0.000000e+00> : vector<16x16xf32>
    %8 = vector.multi_reduction <add>, %7, %cst_6 [2] : vector<16x16x16xf32> to vector<16x16xf32>
    %9 = vector.shape_cast %8 : vector<16x16xf32> to vector<16x16x1xf32>
    %10 = tpu.reciprocal %9 {approx = true} : vector<16x16x1xf32> -> vector<16x16x1xf32>
    %11 = vector.broadcast %10 : vector<16x16x1xf32> to vector<16x16x16xf32>
    %12 = arith.mulf %7, %11 : vector<16x16x16xf32>
    %13 = arith.truncf %12 : vector<16x16x16xf32> to vector<16x16x16xbf16>
    %c0_7 = arith.constant 0 : index
    %c0_8 = arith.constant 0 : index
    %c0_9 = arith.constant 0 : index
    %14 = vector.load %arg3[%c0_7, %c0_8, %c0_9] : memref<16x16x20xbf16, #tpu.memory_space<vmem>>, vector<16x16x20xbf16>
    "tpu.trace_start"() <{level = 10 : i32, message = "bqk,bkd->bqd"}> : () -> ()
    %cst_10 = arith.constant dense<0.000000e+00> : vector<16x16x20xf32>
    %15 = tpu.matmul %13, %14, %cst_10 {dimension_numbers = #tpu.dot_dimension_numbers<[2], [1], [1], [2], [0, 0, 0, 1, 1, 2], [0], [0]>} : vector<16x16x16xbf16>, vector<16x16x20xbf16>, vector<16x16x20xf32> -> vector<16x16x20xf32>
    "tpu.trace_stop"() : () -> ()
    %16 = arith.truncf %15 : vector<16x16x20xf32> to vector<16x16x20xbf16>
    %c0_11 = arith.constant 0 : index
    %c0_12 = arith.constant 0 : index
    %c0_13 = arith.constant 0 : index
    %17 = vector.load %arg4[%c0_11, %c0_12, %c0_13] : memref<16x16x20xbf16, #tpu.memory_space<vmem>>, vector<16x16x20xbf16>
    tpu.vector_store %arg4[%c0_11, %c0_12, %c0_13], %16 {strides = array<i32>} : memref<16x16x20xbf16, #tpu.memory_space<vmem>>, vector<16x16x20xbf16>,
    return
  }
  func.func @transform_0(%arg0: i32) -> (i32, i32, i32) {
    %c0_i32 = arith.constant 0 : i32
    %c0_i32_0 = arith.constant 0 : i32
    %c0_i32_1 = arith.constant 0 : i32
    return %arg0, %c0_i32, %c0_i32_0 : i32, i32, i32
  }
  func.func @transform_1(%arg0: i32) -> (i32, i32, i32) {
    %c0_i32 = arith.constant 0 : i32
    %c0_i32_0 = arith.constant 0 : i32
    %c0_i32_1 = arith.constant 0 : i32
    return %arg0, %c0_i32, %c0_i32_0 : i32, i32, i32
  }
  func.func @transform_2(%arg0: i32) -> (i32, i32, i32) {
    %c0_i32 = arith.constant 0 : i32
    %c0_i32_0 = arith.constant 0 : i32
    %c0_i32_1 = arith.constant 0 : i32
    return %arg0, %c0_i32, %c0_i32_0 : i32, i32, i32
  }
  func.func @transform_3(%arg0: i32) -> (i32, i32, i32) {
    %c0_i32 = arith.constant 0 : i32
    %c0_i32_0 = arith.constant 0 : i32
    %c0_i32_1 = arith.constant 0 : i32
    return %arg0, %c0_i32, %c0_i32_0 : i32, i32, i32
  }
}

module attributes {stable_mosaic.version = 11 : i64} {
  func.func @_po_kernel(%arg0: i32, %arg1: memref<128x60xbf16, #tpu.memory_space<vmem>>, %arg2: memref<128x60xf32, #tpu.memory_space<vmem>>, %arg3: memref<60x60xbf16, #tpu.memory_space<vmem>>, %arg4: memref<1x60xf32, #tpu.memory_space<vmem>>, %arg5: memref<128x60xf32, #tpu.memory_space<vmem>>) attributes {dimension_semantics = [#tpu.dimension_semantics<parallel>], iteration_bounds = array<i64: 4>, scalar_prefetch = 0 : i64, scratch_operands = 0 : i64, tpu.core_type = #tpu.core_type<tc>, window_params = [{transform_indices = @transform_0, window_bounds = array<i64: 128, 60>}, {transform_indices = @transform_1, window_bounds = array<i64: 128, 60>}, {pipeline_mode = #tpu.pipeline_mode<synchronous>, transform_indices = @transform_2, window_bounds = array<i64: 60, 60>}, {pipeline_mode = #tpu.pipeline_mode<synchronous>, transform_indices = @transform_3, window_bounds = array<i64: 1, 60>}, {transform_indices = @transform_4, window_bounds = array<i64: 128, 60>}]} {
    %c0 = arith.constant 0 : index
    %c0_0 = arith.constant 0 : index
    %0 = vector.load %arg1[%c0, %c0_0] : memref<128x60xbf16, #tpu.memory_space<vmem>>, vector<128x60xbf16>
    %c0_1 = arith.constant 0 : index
    %c0_2 = arith.constant 0 : index
    %1 = vector.load %arg3[%c0_1, %c0_2] : memref<60x60xbf16, #tpu.memory_space<vmem>>, vector<60x60xbf16>
    %cst = arith.constant dense<0.000000e+00> : vector<128x60xf32>
    %2 = tpu.matmul %0, %1, %cst {dimension_numbers = #tpu.dot_dimension_numbers<[1], [0], [0], [1], [0, 0, 1, 1], [], []>} : vector<128x60xbf16>, vector<60x60xbf16>, vector<128x60xf32> -> vector<128x60xf32>
    %c0_3 = arith.constant 0 : index
    %c0_4 = arith.constant 0 : index
    %3 = vector.load %arg4[%c0_3, %c0_4] : memref<1x60xf32, #tpu.memory_space<vmem>>, vector<1x60xf32>
    %4 = vector.broadcast %3 : vector<1x60xf32> to vector<128x60xf32>
    %5 = arith.addf %2, %4 : vector<128x60xf32>
    %c0_5 = arith.constant 0 : index
    %c0_6 = arith.constant 0 : index
    %6 = vector.load %arg2[%c0_5, %c0_6] : memref<128x60xf32, #tpu.memory_space<vmem>>, vector<128x60xf32>
    %7 = arith.addf %6, %5 : vector<128x60xf32>
    %c0_7 = arith.constant 0 : index
    %c0_8 = arith.constant 0 : index
    %8 = vector.load %arg5[%c0_7, %c0_8] : memref<128x60xf32, #tpu.memory_space<vmem>>, vector<128x60xf32>
    tpu.vector_store %arg5[%c0_7, %c0_8], %7 {strides = array<i32>} : memref<128x60xf32, #tpu.memory_space<vmem>>, vector<128x60xf32>,
    return
  }
  func.func @transform_0(%arg0: i32) -> (i32, i32) {
    %c0_i32 = arith.constant 0 : i32
    %c0_i32_0 = arith.constant 0 : i32
    return %arg0, %c0_i32 : i32, i32
  }
  func.func @transform_1(%arg0: i32) -> (i32, i32) {
    %c0_i32 = arith.constant 0 : i32
    %c0_i32_0 = arith.constant 0 : i32
    return %arg0, %c0_i32 : i32, i32
  }
  func.func @transform_2(%arg0: i32) -> (i32, i32) {
    %c0_i32 = arith.constant 0 : i32
    %c0_i32_0 = arith.constant 0 : i32
    %c0_i32_1 = arith.constant 0 : i32
    return %c0_i32, %c0_i32_0 : i32, i32
  }
  func.func @transform_3(%arg0: i32) -> (i32, i32) {
    %c0_i32 = arith.constant 0 : i32
    %c0_i32_0 = arith.constant 0 : i32
    %c0_i32_1 = arith.constant 0 : i32
    return %c0_i32, %c0_i32_0 : i32, i32
  }
  func.func @transform_4(%arg0: i32) -> (i32, i32) {
    %c0_i32 = arith.constant 0 : i32
    %c0_i32_0 = arith.constant 0 : i32
    return %arg0, %c0_i32 : i32, i32
  }
}

</mosaic_0001>

<llo_original>
// kernel: elcs_forward.7
$region0: #{elcs_forward.7}
  #allocation0 [shape = 'u32[]', space=smem, size = 0x4, offset = 0x4, fixed_abs, tag = 'smem constant byte address 0x4 - core index']
  #allocation1 [shape = 'u32[144,128]{1,0:T(1,128)}', space=vmem, size = 0x12000, scoped, tag = 'internal scratch']
  %s0 = inlined_call_operand.hbm [shape: f32[512,60], index: 0, kind: input, shape index: {}]
  %s1 = inlined_call_operand.vmem [shape: f32[1,60], index: 1, kind: input, shape index: {}]
  %s2 = inlined_call_operand.vmem [shape: f32[1,60], index: 2, kind: input, shape index: {}]
  %s3 = inlined_call_operand.vmem [shape: bf16[512,60], index: 3, kind: output, shape index: {}]
  %s4 = sld [smem:[#allocation0]]
  $region49: #{elcs_forward.7} parent=0
    _
  %s6 = ssub.s32 1, %s4
  %s7 = scalar_select 0, %s6, %s4
  $region1: #{elcs_forward.7} parent=0
    #allocation2 [shape = 'u8[131072]{0}', space=vmem, size = 0x20000, scoped, tag = 'input window, operand 0']
    #allocation3 [shape = 's32[2]{0}', space=sflag, size = 0x8, scoped, tag = 'scoped memory for elcs_forward.7']
    %8 = vsyncpa [#allocation3], 0
    %s9 = scalar_lea.sflag [#allocation3], 1
    %10 = vsyncpa %s9, 0
    loop: start=0, step=1, limit=6
    $region2: #{elcs_forward.7} parent=1 // loop_pre_header
      _
    $region3: #{elcs_forward.7} parent=1 // loop_header
      %s12 = sphi 0, %s16
      %p13 = scmp.ge.s32.totalorder %s12, 6
      %s22 = sphi 0, %s24
      %s25 = sphi 0, %s22
      %s26 = sphi 0, %s25
      %s42 = sphi 0, %s26
      %s46 = sphi 0, %s46
      %s48 = sphi 0, %s46
      %s49 = sphi 0, %s48
      %s63 = sphi 0, %s49
      %s67 = sphi 0, %s67
      %s69 = sphi 0, %s67
      %s70 = sphi 0, %s69
      %s84 = sphi 0, %s70
      %s90 = sphi 0, %s92
      %s93 = sphi 0, %s90
      %s94 = sphi 0, %s93
      %s110 = sphi 0, %s94
    $region4: #{elcs_forward.7} parent=1 // loop_header_branch
      %15 = sbr.rel (%p13) target = $region8
    $region5: #{elcs_forward.7} parent=1 // loop_body
      %s17 = ssub.s32 %s12, 1
      %s18 = ssub.s32 %s12, 2
      %s19 = sadd.s32 %s12, 1
      %s20 = ssub.s32 %s12, %s19
      %p21 = scmp.eq.s32.totalorder %s20, 0
      %s23 = sadd.s32 %s22, 1
      %s24 = scalar_select %p21, %s22, %s23
      %p27 = pneg %p21
      %p28 = scmp.eq.s32.totalorder %s12, 3
      %p29 = por %p27, %p28
      %p30 = scmp.ne.s32.totalorder %s22, %s25
      %p31 = scmp.eq.s32.totalorder %s12, 0
      %p32 = por %p30, %p31
      %p33 = scmp.ne.s32.totalorder %s22, %s25
      %p34 = scmp.eq.s32.totalorder %s17, 3
      %p35 = por %p33, %p34
      %p36 = scmp.ne.s32.totalorder %s25, %s26
      %p37 = scmp.eq.s32.totalorder %s17, 0
      %p38 = por %p36, %p37
      %p39 = scmp.ne.s32.totalorder %s25, %s26
      %p40 = scmp.eq.s32.totalorder %s18, 3
      %p41 = por %p39, %p40
      %p43 = scmp.ne.s32.totalorder %s26, %s42
      %p44 = scmp.eq.s32.totalorder %s18, 0
      %p45 = por %p43, %p44
      %s47 = sadd.s32 %s46, 1
      %p50 = scmp.eq.s32.totalorder %s12, 3
      %p51 = scmp.ne.s32.totalorder %s46, %s48
      %p52 = scmp.eq.s32.totalorder %s12, 0
      %p53 = por %p51, %p52
      %p54 = scmp.ne.s32.totalorder %s46, %s48
      %p55 = scmp.eq.s32.totalorder %s17, 3
      %p56 = por %p54, %p55
      %p57 = scmp.ne.s32.totalorder %s48, %s49
      %p58 = scmp.eq.s32.totalorder %s17, 0
      %p59 = por %p57, %p58
      %p60 = scmp.ne.s32.totalorder %s48, %s49
      %p61 = scmp.eq.s32.totalorder %s18, 3
      %p62 = por %p60, %p61
      %p64 = scmp.ne.s32.totalorder %s49, %s63
      %p65 = scmp.eq.s32.totalorder %s18, 0
      %p66 = por %p64, %p65
      %s68 = sadd.s32 %s67, 1
      %p71 = scmp.eq.s32.totalorder %s12, 3
      %p72 = scmp.ne.s32.totalorder %s67, %s69
      %p73 = scmp.eq.s32.totalorder %s12, 0
      %p74 = por %p72, %p73
      %p75 = scmp.ne.s32.totalorder %s67, %s69
      %p76 = scmp.eq.s32.totalorder %s17, 3
      %p77 = por %p75, %p76
      %p78 = scmp.ne.s32.totalorder %s69, %s70
      %p79 = scmp.eq.s32.totalorder %s17, 0
      %p80 = por %p78, %p79
      %p81 = scmp.ne.s32.totalorder %s69, %s70
      %p82 = scmp.eq.s32.totalorder %s18, 3
      %p83 = por %p81, %p82
      %p85 = scmp.ne.s32.totalorder %s70, %s84
      %p86 = scmp.eq.s32.totalorder %s18, 0
      %p87 = por %p85, %p86
      %s88 = ssub.s32 %s12, %s19
      %p89 = scmp.eq.s32.totalorder %s88, 0
      %s91 = sadd.s32 %s90, 1
      %s92 = scalar_select %p89, %s90, %s91
      %p95 = pneg %p89
      %p96 = scmp.eq.s32.totalorder %s12, 3
      %p97 = por %p95, %p96
      %p98 = scmp.ne.s32.totalorder %s90, %s93
      %p99 = scmp.eq.s32.totalorder %s12, 0
      %p100 = por %p98, %p99
      %p101 = scmp.ne.s32.totalorder %s90, %s93
      %p102 = scmp.eq.s32.totalorder %s17, 3
      %p103 = por %p101, %p102
      %p104 = scmp.ne.s32.totalorder %s93, %s94
      %p105 = scmp.eq.s32.totalorder %s17, 0
      %p106 = por %p104, %p105
      %p107 = scmp.ne.s32.totalorder %s93, %s94
      %p108 = scmp.eq.s32.totalorder %s18, 3
      %p109 = por %p107, %p108
      %p111 = scmp.ne.s32.totalorder %s94, %s110
      %p112 = scmp.eq.s32.totalorder %s18, 0
      %p113 = por %p111, %p112
      %p114 = scmp.le.s32.totalorder 1, %s12
      %p115 = scmp.lt.s32.totalorder %s12, 5
      %p116 = pnand %p114, %p115
      %p117 = pneg %p116
      // Predicated region
      $region9: #{elcs_forward.7} parent=5 // pred_check
        _
      $region10: #{elcs_forward.7} parent=5 // pred_check_branch
        %119 = sbr.rel (%p116) target = $region12
      $region11: #{elcs_forward.7} parent=5 // pred_region
        %s120 = ssub.s32 %s12, 1
        // Predicated region
        $region13: #{elcs_forward.7} parent=11 // pred_check
          %p121 = pneg %p59
        $region14: #{elcs_forward.7} parent=11 // pred_check_branch
          %123 = sbr.rel (%p121) target = $region16
        $region15: #{elcs_forward.7} parent=11 // pred_region
          _
        $region16: #{elcs_forward.7} parent=11 // pred_fallthru
          _
        // Predicated region
        $region17: #{elcs_forward.7} parent=11 // pred_check
          %p124 = pneg %p80
        $region18: #{elcs_forward.7} parent=11 // pred_check_branch
          %126 = sbr.rel (%p124) target = $region20
        $region19: #{elcs_forward.7} parent=11 // pred_region
          _
        $region20: #{elcs_forward.7} parent=11 // pred_fallthru
          _
      $region12: #{elcs_forward.7} parent=5 // pred_fallthru
        _
      %p127 = scmp.lt.s32.totalorder %s12, 4
      // Predicated region
      $region21: #{elcs_forward.7} parent=5 // pred_check
        %p128 = pneg %p127
      $region22: #{elcs_forward.7} parent=5 // pred_check_branch
        %130 = sbr.rel (%p128) target = $region24
      $region23: #{elcs_forward.7} parent=5 // pred_region
        // Predicated region
        $region25: #{elcs_forward.7} parent=23 // pred_check
          %p131 = pneg %p32
        $region26: #{elcs_forward.7} parent=23 // pred_check_branch
          %133 = sbr.rel (%p131) target = $region28
        $region27: #{elcs_forward.7} parent=23 // pred_region
          %s134 = sand.u32 %s22, 1
          %s135 = scalar_lea.sflag [#allocation3], %s134
          %s136 = sand.u32 %s22, 1
          %s137 = smul.addr %s136, 128
          %s138 = scalar_lea.vmem [#allocation2], %s137
          %s139 = smul.u32 16, %s12
          %s141 = ssub.s32 2048, 2048
          %142 = vsyncadd %s135, %s141
          %s143 = smul.addr %s139, 128
          %s144 = scalar_lea.hbm %s0, %s143
          %s145 = sshll.u32 %s138, 4
          %s146 = int_to_ptr.vmem [resolvable:$true] %s145
          %151 = dma.hbm_to_vmem [thread:$0]  %s144, 2048, %s146, %s135, 128, 128, 8
        $region28: #{elcs_forward.7} parent=23 // pred_fallthru
          _
      $region24: #{elcs_forward.7} parent=5 // pred_fallthru
        _
      %p152 = scmp.le.s32.totalorder 1, %s12
      %p153 = scmp.lt.s32.totalorder %s12, 5
      %p154 = pnand %p152, %p153
      %p155 = pneg %p154
      // Predicated region
      $region29: #{elcs_forward.7} parent=5 // pred_check
        _
      $region30: #{elcs_forward.7} parent=5 // pred_check_branch
        %157 = sbr.rel (%p154) target = $region32
      $region31: #{elcs_forward.7} parent=5 // pred_region
        %s158 = ssub.s32 %s12, 1
        %s159 = sand.u32 %s25, 1
        %s160 = scalar_lea.sflag [#allocation3], %s159
        %s161 = sand.u32 %s25, 1
        %s162 = smul.addr %s161, 128
        %s163 = scalar_lea.vmem [#allocation2], %s162
        // Predicated region
        $region33: #{elcs_forward.7} parent=31 // pred_check
          %p164 = pneg %p38
        $region34: #{elcs_forward.7} parent=31 // pred_check_branch
          %166 = sbr.rel (%p164) target = $region36
        $region35: #{elcs_forward.7} parent=31 // pred_region
          %167 = dma.done %s160, 2048
        $region36: #{elcs_forward.7} parent=31 // pred_fallthru
          _
        %s168 = sand.u32 %s25, 1
        %s169 = scalar_lea.sflag [#allocation3], %s168
        %s170 = sand.u32 %s25, 1
        %s171 = smul.addr %s170, 128
        %s172 = scalar_lea.vmem [#allocation2], %s171
        %p173 = pneg %p38
        %p174 = pneg %p35
        %p175 = pneg %p59
        %p176 = pneg %p56
        %p177 = pneg %p80
        %p178 = pneg %p77
        %p179 = pneg %p106
        %p180 = pneg %p103
        %s181 = smul.u32 16, %s17
        %p182 = scmp.lt.s32.totalorder %s181, 63
        %s183 = scalar_select %p182, %s181, 63
        %s184 = smul.addr %s183, 4
        %s185 = scalar_lea.vmem %s3, %s184
        %s186 = smul.u32 16, %s17
        %s187 = smul.u32 16, %s17
        %p188 = scmp.lt.s32.totalorder %s187, 63
        %s189 = scalar_select %p188, %s187, 63
        %s190 = smul.addr %s189, 4
        %s191 = scalar_lea.vmem %s3, %s190
        %s192 = smul.u32 16, %s17
        %v193 = vld [vmem:[%s163] sm:$0xff]
        %v194 = vld [vmem:[%s163 + $0x8] sm:$0xff]
        %v195 = vld [vmem:[%s163 + $0x10] sm:$0xff]
        %v196 = vld [vmem:[%s163 + $0x18] sm:$0xff]
        %v197 = vld [vmem:[%s163 + $0x20] sm:$0xff]
        %v198 = vld [vmem:[%s163 + $0x28] sm:$0xff]
        %v199 = vld [vmem:[%s163 + $0x30] sm:$0xff]
        %v200 = vld [vmem:[%s163 + $0x38] sm:$0xff]
        %v201 = vld [vmem:[%s163 + $0x40] sm:$0xff]
        %v202 = vld [vmem:[%s163 + $0x48] sm:$0xff]
        %v203 = vld [vmem:[%s163 + $0x50] sm:$0xff]
        %v204 = vld [vmem:[%s163 + $0x58] sm:$0xff]
        %v205 = vld [vmem:[%s163 + $0x60] sm:$0xff]
        %v206 = vld [vmem:[%s163 + $0x68] sm:$0xff]
        %v207 = vld [vmem:[%s163 + $0x70] sm:$0xff]
        %v208 = vld [vmem:[%s163 + $0x78] sm:$0xff]
        %vm209 = vcmask 490496
        %v210 = vsel %vm209, %v193, 0.0
        %211 = vadd.xlane.f32.xlu0 %v210
        %v212 = vpop.xlane.xlu0 %211
        %v213 = vsel %vm209, %v194, 0.0
        %214 = vadd.xlane.f32.xlu0 %v213
        %v215 = vpop.xlane.xlu0 %214
        %v216 = vsel %vm209, %v195, 0.0
        %217 = vadd.xlane.f32.xlu0 %v216
        %v218 = vpop.xlane.xlu0 %217
        %v219 = vsel %vm209, %v196, 0.0
        %220 = vadd.xlane.f32.xlu0 %v219
        %v221 = vpop.xlane.xlu0 %220
        %v222 = vsel %vm209, %v197, 0.0
        %223 = vadd.xlane.f32.xlu0 %v222
        %v224 = vpop.xlane.xlu0 %223
        %v225 = vsel %vm209, %v198, 0.0
        %226 = vadd.xlane.f32.xlu0 %v225
        %v227 = vpop.xlane.xlu0 %226
        %v228 = vsel %vm209, %v199, 0.0
        %229 = vadd.xlane.f32.xlu0 %v228
        %v230 = vpop.xlane.xlu0 %229
        %v231 = vsel %vm209, %v200, 0.0
        %232 = vadd.xlane.f32.xlu0 %v231
        %v233 = vpop.xlane.xlu0 %232
        %v234 = vsel %vm209, %v201, 0.0
        %235 = vadd.xlane.f32.xlu0 %v234
        %v236 = vpop.xlane.xlu0 %235
        %v237 = vsel %vm209, %v202, 0.0
        %238 = vadd.xlane.f32.xlu0 %v237
        %v239 = vpop.xlane.xlu0 %238
        %v240 = vsel %vm209, %v203, 0.0
        %241 = vadd.xlane.f32.xlu0 %v240
        %v242 = vpop.xlane.xlu0 %241
        %v243 = vsel %vm209, %v204, 0.0
        %244 = vadd.xlane.f32.xlu0 %v243
        %v245 = vpop.xlane.xlu0 %244
        %v246 = vsel %vm209, %v205, 0.0
        %247 = vadd.xlane.f32.xlu0 %v246
        %v248 = vpop.xlane.xlu0 %247
        %v249 = vsel %vm209, %v206, 0.0
        %250 = vadd.xlane.f32.xlu0 %v249
        %v251 = vpop.xlane.xlu0 %250
        %v252 = vsel %vm209, %v207, 0.0
        %253 = vadd.xlane.f32.xlu0 %v252
        %v254 = vpop.xlane.xlu0 %253
        %v255 = vsel %vm209, %v208, 0.0
        %256 = vadd.xlane.f32.xlu0 %v255
        %v257 = vpop.xlane.xlu0 %256
        %v258 = vrcp.pop 60.0
        %v259 = vmul.f32 %v212, %v258
        %v260 = vmul.f32 %v215, %v258
        %v261 = vmul.f32 %v218, %v258
        %v262 = vmul.f32 %v221, %v258
        %v263 = vmul.f32 %v224, %v258
        %v264 = vmul.f32 %v227, %v258
        %v265 = vmul.f32 %v230, %v258
        %v266 = vmul.f32 %v233, %v258
        %v267 = vmul.f32 %v236, %v258
        %v268 = vmul.f32 %v239, %v258
        %v269 = vmul.f32 %v242, %v258
        %v270 = vmul.f32 %v245, %v258
        %v271 = vmul.f32 %v248, %v258
        %v272 = vmul.f32 %v251, %v258
        %v273 = vmul.f32 %v254, %v258
        %v274 = vmul.f32 %v257, %v258
        %v275 = vsub.f32 %v193, %v259
        %v276 = vsub.f32 %v194, %v260
        %v277 = vsub.f32 %v195, %v261
        %v278 = vsub.f32 %v196, %v262
        %v279 = vsub.f32 %v197, %v263
        %v280 = vsub.f32 %v198, %v264
        %v281 = vsub.f32 %v199, %v265
        %v282 = vsub.f32 %v200, %v266
        %v283 = vsub.f32 %v201, %v267
        %v284 = vsub.f32 %v202, %v268
        %v285 = vsub.f32 %v203, %v269
        %v286 = vsub.f32 %v204, %v270
        %v287 = vsub.f32 %v205, %v271
        %v288 = vsub.f32 %v206, %v272
        %v289 = vsub.f32 %v207, %v273
        %v290 = vsub.f32 %v208, %v274
        %v291 = vmul.f32 %v275, %v275
        %v292 = vmul.f32 %v276, %v276
        %v293 = vmul.f32 %v277, %v277
        %v294 = vmul.f32 %v278, %v278
        %v295 = vmul.f32 %v279, %v279
        %v296 = vmul.f32 %v280, %v280
        %v297 = vmul.f32 %v281, %v281
        %v298 = vmul.f32 %v282, %v282
        %v299 = vmul.f32 %v283, %v283
        %v300 = vmul.f32 %v284, %v284
        %v301 = vmul.f32 %v285, %v285
        %v302 = vmul.f32 %v286, %v286
        %v303 = vmul.f32 %v287, %v287
        %v304 = vmul.f32 %v288, %v288
        %v305 = vmul.f32 %v289, %v289
        %v306 = vmul.f32 %v290, %v290
        %v307 = vsel %vm209, %v291, 0.0
        %308 = vadd.xlane.f32.xlu0 %v307
        %v309 = vpop.xlane.xlu0 %308
        %v310 = vsel %vm209, %v292, 0.0
        %311 = vadd.xlane.f32.xlu0 %v310
        %v312 = vpop.xlane.xlu0 %311
        %v313 = vsel %vm209, %v293, 0.0
        %314 = vadd.xlane.f32.xlu0 %v313
        %v315 = vpop.xlane.xlu0 %314
        %v316 = vsel %vm209, %v294, 0.0
        %317 = vadd.xlane.f32.xlu0 %v316
        %v318 = vpop.xlane.xlu0 %317
        %v319 = vsel %vm209, %v295, 0.0
        %320 = vadd.xlane.f32.xlu0 %v319
        %v321 = vpop.xlane.xlu0 %320
        %v322 = vsel %vm209, %v296, 0.0
        %323 = vadd.xlane.f32.xlu0 %v322
        %v324 = vpop.xlane.xlu0 %323
        %v325 = vsel %vm209, %v297, 0.0
        %326 = vadd.xlane.f32.xlu0 %v325
        %v327 = vpop.xlane.xlu0 %326
        %v328 = vsel %vm209, %v298, 0.0
        %329 = vadd.xlane.f32.xlu0 %v328
        %v330 = vpop.xlane.xlu0 %329
        %v331 = vsel %vm209, %v299, 0.0
        %332 = vadd.xlane.f32.xlu0 %v331
        %v333 = vpop.xlane.xlu0 %332
        %v334 = vsel %vm209, %v300, 0.0
        %335 = vadd.xlane.f32.xlu0 %v334
        %v336 = vpop.xlane.xlu0 %335
        %v337 = vsel %vm209, %v301, 0.0
        %338 = vadd.xlane.f32.xlu0 %v337
        %v339 = vpop.xlane.xlu0 %338
        %v340 = vsel %vm209, %v302, 0.0
        %341 = vadd.xlane.f32.xlu0 %v340
        %v342 = vpop.xlane.xlu0 %341
        %v343 = vsel %vm209, %v303, 0.0
        %344 = vadd.xlane.f32.xlu0 %v343
        %v345 = vpop.xlane.xlu0 %344
        %v346 = vsel %vm209, %v304, 0.0
        %347 = vadd.xlane.f32.xlu0 %v346
        %v348 = vpop.xlane.xlu0 %347
        %v349 = vsel %vm209, %v305, 0.0
        %350 = vadd.xlane.f32.xlu0 %v349
        %v351 = vpop.xlane.xlu0 %350
        %v352 = vsel %vm209, %v306, 0.0
        %353 = vadd.xlane.f32.xlu0 %v352
        %v354 = vpop.xlane.xlu0 %353
        %v355 = vmul.f32 %v309, %v258
        %v356 = vmul.f32 %v312, %v258
        %v357 = vmul.f32 %v315, %v258
        %v358 = vmul.f32 %v318, %v258
        %v359 = vmul.f32 %v321, %v258
        %v360 = vmul.f32 %v324, %v258
        %v361 = vmul.f32 %v327, %v258
        %v362 = vmul.f32 %v330, %v258
        %v363 = vmul.f32 %v333, %v258
        %v364 = vmul.f32 %v336, %v258
        %v365 = vmul.f32 %v339, %v258
        %v366 = vmul.f32 %v342, %v258
        %v367 = vmul.f32 %v345, %v258
        %v368 = vmul.f32 %v348, %v258
        %v369 = vmul.f32 %v351, %v258
        %v370 = vmul.f32 %v354, %v258
        %v371 = vadd.f32 %v355, 1e-05
        %v372 = vadd.f32 %v356, 1e-05
        %v373 = vadd.f32 %v357, 1e-05
        %v374 = vadd.f32 %v358, 1e-05
        %v375 = vadd.f32 %v359, 1e-05
        %v376 = vadd.f32 %v360, 1e-05
        %v377 = vadd.f32 %v361, 1e-05
        %v378 = vadd.f32 %v362, 1e-05
        %v379 = vadd.f32 %v363, 1e-05
        %v380 = vadd.f32 %v364, 1e-05
        %v381 = vadd.f32 %v365, 1e-05
        %v382 = vadd.f32 %v366, 1e-05
        %v383 = vadd.f32 %v367, 1e-05
        %v384 = vadd.f32 %v368, 1e-05
        %v385 = vadd.f32 %v369, 1e-05
        %v386 = vadd.f32 %v370, 1e-05
        %v387 = vrsqrt.pop %v371
        %v388 = vrsqrt.pop %v372
        %v389 = vrsqrt.pop %v373
        %v390 = vrsqrt.pop %v374
        %v391 = vrsqrt.pop %v375
        %v392 = vrsqrt.pop %v376
        %v393 = vrsqrt.pop %v377
        %v394 = vrsqrt.pop %v378
        %v395 = vrsqrt.pop %v379
        %v396 = vrsqrt.pop %v380
        %v397 = vrsqrt.pop %v381
        %v398 = vrsqrt.pop %v382
        %v399 = vrsqrt.pop %v383
        %v400 = vrsqrt.pop %v384
        %v401 = vrsqrt.pop %v385
        %v402 = vrsqrt.pop %v386
        %v403 = vmul.f32 %v275, %v387
        %v404 = vmul.f32 %v276, %v388
        %v405 = vmul.f32 %v277, %v389
        %v406 = vmul.f32 %v278, %v390
        %v407 = vmul.f32 %v279, %v391
        %v408 = vmul.f32 %v280, %v392
        %v409 = vmul.f32 %v281, %v393
        %v410 = vmul.f32 %v282, %v394
        %v411 = vmul.f32 %v283, %v395
        %v412 = vmul.f32 %v284, %v396
        %v413 = vmul.f32 %v285, %v397
        %v414 = vmul.f32 %v286, %v398
        %v415 = vmul.f32 %v287, %v399
        %v416 = vmul.f32 %v288, %v400
        %v417 = vmul.f32 %v289, %v401
        %v418 = vmul.f32 %v290, %v402
        %v419 = vld [vmem:[%s1] sm:$0x1]
        %v421 = vlaneseq
        %v422 = vshrl.u32 %v421, 7
        %v423 = vsub.s32 0, %v422
        %v424 = vrot.slane %v419, %v423
        %v426 = vmul.f32 %v403, %v424
        %v427 = vmul.f32 %v404, %v424
        %v428 = vmul.f32 %v405, %v424
        %v429 = vmul.f32 %v406, %v424
        %v430 = vmul.f32 %v407, %v424
        %v431 = vmul.f32 %v408, %v424
        %v432 = vmul.f32 %v409, %v424
        %v433 = vmul.f32 %v410, %v424
        %v434 = vmul.f32 %v411, %v424
        %v435 = vmul.f32 %v412, %v424
        %v436 = vmul.f32 %v413, %v424
        %v437 = vmul.f32 %v414, %v424
        %v438 = vmul.f32 %v415, %v424
        %v439 = vmul.f32 %v416, %v424
        %v440 = vmul.f32 %v417, %v424
        %v441 = vmul.f32 %v418, %v424
        %v442 = vld [vmem:[%s2] sm:$0x1]
        %v444 = vlaneseq
        %v445 = vshrl.u32 %v444, 7
        %v446 = vsub.s32 0, %v445
        %v447 = vrot.slane %v442, %v446
        %v449 = vadd.f32 %v426, %v447
        %v450 = vadd.f32 %v427, %v447
        %v451 = vadd.f32 %v428, %v447
        %v452 = vadd.f32 %v429, %v447
        %v453 = vadd.f32 %v430, %v447
        %v454 = vadd.f32 %v431, %v447
        %v455 = vadd.f32 %v432, %v447
        %v456 = vadd.f32 %v433, %v447
        %v457 = vadd.f32 %v434, %v447
        %v458 = vadd.f32 %v435, %v447
        %v459 = vadd.f32 %v436, %v447
        %v460 = vadd.f32 %v437, %v447
        %v461 = vadd.f32 %v438, %v447
        %v462 = vadd.f32 %v439, %v447
        %v463 = vadd.f32 %v440, %v447
        %v464 = vadd.f32 %v441, %v447
        %v465 = vpack.c.bf16 %v450, %v449
        %v466 = vpack.c.bf16 %v452, %v451
        %v467 = vpack.c.bf16 %v454, %v453
        %v468 = vpack.c.bf16 %v456, %v455
        %v469 = vpack.c.bf16 %v458, %v457
        %v470 = vpack.c.bf16 %v460, %v459
        %v471 = vpack.c.bf16 %v462, %v461
        %v472 = vpack.c.bf16 %v464, %v463
        %v481 = vunpack.c.l.b16 %v465
        %v482 = vunpack.c.h.b16 %v465
        %v483 = vunpack.c.l.b16 %v466
        %v484 = vunpack.c.h.b16 %v466
        %v485 = vunpack.c.l.b16 %v467
        %v486 = vunpack.c.h.b16 %v467
        %v487 = vunpack.c.l.b16 %v468
        %v488 = vunpack.c.h.b16 %v468
        %v489 = vunpack.c.l.b16 %v469
        %v490 = vunpack.c.h.b16 %v469
        %v491 = vunpack.c.l.b16 %v470
        %v492 = vunpack.c.h.b16 %v470
        %v493 = vunpack.c.l.b16 %v471
        %v494 = vunpack.c.h.b16 %v471
        %v495 = vunpack.c.l.b16 %v472
        %v496 = vunpack.c.h.b16 %v472
        %v497 = vpack.c.b16 %v481, %v481
        %v498 = vpack.c.b16 %v482, %v482
        %v499 = vpack.c.b16 %v483, %v483
        %v500 = vpack.c.b16 %v484, %v484
        %v501 = vpack.c.b16 %v485, %v485
        %v502 = vpack.c.b16 %v486, %v486
        %v503 = vpack.c.b16 %v487, %v487
        %v504 = vpack.c.b16 %v488, %v488
        %v505 = vpack.c.b16 %v489, %v489
        %v506 = vpack.c.b16 %v490, %v490
        %v507 = vpack.c.b16 %v491, %v491
        %v508 = vpack.c.b16 %v492, %v492
        %v509 = vpack.c.b16 %v493, %v493
        %v510 = vpack.c.b16 %v494, %v494
        %v511 = vpack.c.b16 %v495, %v495
        %v512 = vpack.c.b16 %v496, %v496
        %vm529 = vcmask 486400
        %530 = vst.msk [vmem:[%s191] sm:$0xf] %vm529, %v497
        %531 = vst.msk [vmem:[%s191 + $0x4] sm:$0xf] %vm529, %v498
        %532 = vst.msk [vmem:[%s191 + $0x8] sm:$0xf] %vm529, %v499
        %533 = vst.msk [vmem:[%s191 + $0xc] sm:$0xf] %vm529, %v500
        %534 = vst.msk [vmem:[%s191 + $0x10] sm:$0xf] %vm529, %v501
        %535 = vst.msk [vmem:[%s191 + $0x14] sm:$0xf] %vm529, %v502
        %536 = vst.msk [vmem:[%s191 + $0x18] sm:$0xf] %vm529, %v503
        %537 = vst.msk [vmem:[%s191 + $0x1c] sm:$0xf] %vm529, %v504
        %538 = vst.msk [vmem:[%s191 + $0x20] sm:$0xf] %vm529, %v505
        %539 = vst.msk [vmem:[%s191 + $0x24] sm:$0xf] %vm529, %v506
        %540 = vst.msk [vmem:[%s191 + $0x28] sm:$0xf] %vm529, %v507
        %541 = vst.msk [vmem:[%s191 + $0x2c] sm:$0xf] %vm529, %v508
        %542 = vst.msk [vmem:[%s191 + $0x30] sm:$0xf] %vm529, %v509
        %543 = vst.msk [vmem:[%s191 + $0x34] sm:$0xf] %vm529, %v510
        %544 = vst.msk [vmem:[%s191 + $0x38] sm:$0xf] %vm529, %v511
        %545 = vst.msk [vmem:[%s191 + $0x3c] sm:$0xf] %vm529, %v512
        %s546 = smul.u32 16, %s17
        %p547 = scmp.lt.s32.totalorder %s546, 63
        %s548 = scalar_select %p547, %s546, 63
        %s549 = smul.addr %s548, 4
        %s550 = scalar_lea.vmem %s3, %s549
        // Predicated region
        $region37: #{elcs_forward.7} parent=31 // pred_check
          %p551 = pneg %p103
        $region38: #{elcs_forward.7} parent=31 // pred_check_branch
          %553 = sbr.rel (%p551) target = $region40
        $region39: #{elcs_forward.7} parent=31 // pred_region
          %s554 = smul.u32 16, %s17
        $region40: #{elcs_forward.7} parent=31 // pred_fallthru
          _
      $region32: #{elcs_forward.7} parent=5 // pred_fallthru
        _
      %p555 = scmp.le.s32.totalorder 2, %s12
      // Predicated region
      $region41: #{elcs_forward.7} parent=5 // pred_check
        %p556 = pneg %p555
      $region42: #{elcs_forward.7} parent=5 // pred_check_branch
        %558 = sbr.rel (%p556) target = $region44
      $region43: #{elcs_forward.7} parent=5 // pred_region
        %s559 = ssub.s32 %s12, 2
        // Predicated region
        $region45: #{elcs_forward.7} parent=43 // pred_check
          %p560 = pneg %p109
        $region46: #{elcs_forward.7} parent=43 // pred_check_branch
          %562 = sbr.rel (%p560) target = $region48
        $region47: #{elcs_forward.7} parent=43 // pred_region
          %s563 = smul.u32 16, %s18
          %p564 = scmp.lt.s32.totalorder %s563, 63
          %s565 = scalar_select %p564, %s563, 63
          %s566 = smul.addr %s565, 4
          %s567 = scalar_lea.vmem %s3, %s566
        $region48: #{elcs_forward.7} parent=43 // pred_fallthru
          _
      $region44: #{elcs_forward.7} parent=5 // pred_fallthru
        _
    $region6: #{elcs_forward.7} parent=1 // loop_footer
      %s16 = sadd.s32 1, %s12
    $region7: #{elcs_forward.7} parent=1 // loop_footer_branch
      %11 = sbr.rel target = $region3
    $region8: #{elcs_forward.7} parent=1 // loop_exit
      _
    %568 = vsyncpa [#allocation3], 1
    %s569 = scalar_lea.sflag [#allocation3], 1
    %570 = vsyncpa %s569, 1

// kernel: elcs_forward.8
$region0: #{elcs_forward.8}
  #allocation0 [shape = 'u32[]', space=smem, size = 0x4, offset = 0x4, fixed_abs, tag = 'smem constant byte address 0x4 - core index']
  #allocation1 [shape = 'u32[144,128]{1,0:T(1,128)}', space=vmem, size = 0x12000, scoped, tag = 'internal scratch']
  %s0 = inlined_call_operand.vmem [shape: bf16[512,60], index: 0, kind: input, shape index: {}]
  %s1 = inlined_call_operand.vmem [shape: f32[512,60], index: 1, kind: input, shape index: {}]
  %s2 = inlined_call_operand.vmem [shape: bf16[60,60], index: 2, kind: input, shape index: {}]
  %s3 = inlined_call_operand.vmem [shape: f32[1,60], index: 3, kind: input, shape index: {}]
  %s4 = inlined_call_operand.vmem [shape: bf16[60,60], index: 4, kind: input, shape index: {}]
  %s5 = inlined_call_operand.vmem [shape: f32[1,60], index: 5, kind: input, shape index: {}]
  %s6 = inlined_call_operand.vmem [shape: bf16[60,60], index: 6, kind: input, shape index: {}]
  %s7 = inlined_call_operand.vmem [shape: f32[1,60], index: 7, kind: input, shape index: {}]
  %s8 = inlined_call_operand.vmem [shape: bf16[60,60], index: 8, kind: input, shape index: {}]
  %s9 = inlined_call_operand.vmem [shape: f32[1,60], index: 9, kind: input, shape index: {}]
  %s10 = inlined_call_operand.vmem [shape: f32[1,60], index: 10, kind: input, shape index: {}]
  %s11 = inlined_call_operand.vmem [shape: f32[1,60], index: 11, kind: input, shape index: {}]
  %s12 = inlined_call_operand.vmem [shape: f32[512,60], index: 12, kind: output, shape index: {0}]
  %s13 = inlined_call_operand.vmem [shape: bf16[512,60], index: 13, kind: output, shape index: {1}]
  %14 = xla_tuple %s12, %s13
  %s15 = sld [smem:[#allocation0]]
  $region89: #{elcs_forward.8} parent=0
    _
  %s17 = ssub.s32 1, %s15
  %s18 = scalar_select 0, %s17, %s15
  loop: start=0, step=1, limit=6
  $region2: #{elcs_forward.8} parent=0 // loop_pre_header
    _
  $region3: #{elcs_forward.8} parent=0 // loop_header
    %s20 = sphi 0, %s24
    %p21 = scmp.ge.s32.totalorder %s20, 6
    %s30 = sphi 0, %s32
    %s33 = sphi 0, %s30
    %s34 = sphi 0, %s33
    %s50 = sphi 0, %s34
    %s56 = sphi 0, %s58
    %s59 = sphi 0, %s56
    %s60 = sphi 0, %s59
    %s76 = sphi 0, %s60
    %s80 = sphi 0, %s80
    %s82 = sphi 0, %s80
    %s83 = sphi 0, %s82
    %s97 = sphi 0, %s83
    %s101 = sphi 0, %s101
    %s103 = sphi 0, %s101
    %s104 = sphi 0, %s103
    %s118 = sphi 0, %s104
    %s122 = sphi 0, %s122
    %s124 = sphi 0, %s122
    %s125 = sphi 0, %s124
    %s139 = sphi 0, %s125
    %s143 = sphi 0, %s143
    %s145 = sphi 0, %s143
    %s146 = sphi 0, %s145
    %s160 = sphi 0, %s146
    %s164 = sphi 0, %s164
    %s166 = sphi 0, %s164
    %s167 = sphi 0, %s166
    %s181 = sphi 0, %s167
    %s185 = sphi 0, %s185
    %s187 = sphi 0, %s185
    %s188 = sphi 0, %s187
    %s202 = sphi 0, %s188
    %s206 = sphi 0, %s206
    %s208 = sphi 0, %s206
    %s209 = sphi 0, %s208
    %s223 = sphi 0, %s209
    %s227 = sphi 0, %s227
    %s229 = sphi 0, %s227
    %s230 = sphi 0, %s229
    %s244 = sphi 0, %s230
    %s248 = sphi 0, %s248
    %s250 = sphi 0, %s248
    %s251 = sphi 0, %s250
    %s265 = sphi 0, %s251
    %s269 = sphi 0, %s269
    %s271 = sphi 0, %s269
    %s272 = sphi 0, %s271
    %s286 = sphi 0, %s272
    %s292 = sphi 0, %s294
    %s295 = sphi 0, %s292
    %s296 = sphi 0, %s295
    %s312 = sphi 0, %s296
    %s318 = sphi 0, %s320
    %s321 = sphi 0, %s318
    %s322 = sphi 0, %s321
    %s338 = sphi 0, %s322
  $region4: #{elcs_forward.8} parent=0 // loop_header_branch
    %23 = sbr.rel (%p21) target = $region8
  $region5: #{elcs_forward.8} parent=0 // loop_body
    %s25 = ssub.s32 %s20, 1
    %s26 = ssub.s32 %s20, 2
    %s27 = sadd.s32 %s20, 1
    %s28 = ssub.s32 %s20, %s27
    %p29 = scmp.eq.s32.totalorder %s28, 0
    %s31 = sadd.s32 %s30, 1
    %s32 = scalar_select %p29, %s30, %s31
    %p35 = pneg %p29
    %p36 = scmp.eq.s32.totalorder %s20, 3
    %p37 = por %p35, %p36
    %p38 = scmp.ne.s32.totalorder %s30, %s33
    %p39 = scmp.eq.s32.totalorder %s20, 0
    %p40 = por %p38, %p39
    %p41 = scmp.ne.s32.totalorder %s30, %s33
    %p42 = scmp.eq.s32.totalorder %s25, 3
    %p43 = por %p41, %p42
    %p44 = scmp.ne.s32.totalorder %s33, %s34
    %p45 = scmp.eq.s32.totalorder %s25, 0
    %p46 = por %p44, %p45
    %p47 = scmp.ne.s32.totalorder %s33, %s34
    %p48 = scmp.eq.s32.totalorder %s26, 3
    %p49 = por %p47, %p48
    %p51 = scmp.ne.s32.totalorder %s34, %s50
    %p52 = scmp.eq.s32.totalorder %s26, 0
    %p53 = por %p51, %p52
    %s54 = ssub.s32 %s20, %s27
    %p55 = scmp.eq.s32.totalorder %s54, 0
    %s57 = sadd.s32 %s56, 1
    %s58 = scalar_select %p55, %s56, %s57
    %p61 = pneg %p55
    %p62 = scmp.eq.s32.totalorder %s20, 3
    %p63 = por %p61, %p62
    %p64 = scmp.ne.s32.totalorder %s56, %s59
    %p65 = scmp.eq.s32.totalorder %s20, 0
    %p66 = por %p64, %p65
    %p67 = scmp.ne.s32.totalorder %s56, %s59
    %p68 = scmp.eq.s32.totalorder %s25, 3
    %p69 = por %p67, %p68
    %p70 = scmp.ne.s32.totalorder %s59, %s60
    %p71 = scmp.eq.s32.totalorder %s25, 0
    %p72 = por %p70, %p71
    %p73 = scmp.ne.s32.totalorder %s59, %s60
    %p74 = scmp.eq.s32.totalorder %s26, 3
    %p75 = por %p73, %p74
    %p77 = scmp.ne.s32.totalorder %s60, %s76
    %p78 = scmp.eq.s32.totalorder %s26, 0
    %p79 = por %p77, %p78
    %s81 = sadd.s32 %s80, 1
    %p84 = scmp.eq.s32.totalorder %s20, 3
    %p85 = scmp.ne.s32.totalorder %s80, %s82
    %p86 = scmp.eq.s32.totalorder %s20, 0
    %p87 = por %p85, %p86
    %p88 = scmp.ne.s32.totalorder %s80, %s82
    %p89 = scmp.eq.s32.totalorder %s25, 3
    %p90 = por %p88, %p89
    %p91 = scmp.ne.s32.totalorder %s82, %s83
    %p92 = scmp.eq.s32.totalorder %s25, 0
    %p93 = por %p91, %p92
    %p94 = scmp.ne.s32.totalorder %s82, %s83
    %p95 = scmp.eq.s32.totalorder %s26, 3
    %p96 = por %p94, %p95
    %p98 = scmp.ne.s32.totalorder %s83, %s97
    %p99 = scmp.eq.s32.totalorder %s26, 0
    %p100 = por %p98, %p99
    %s102 = sadd.s32 %s101, 1
    %p105 = scmp.eq.s32.totalorder %s20, 3
    %p106 = scmp.ne.s32.totalorder %s101, %s103
    %p107 = scmp.eq.s32.totalorder %s20, 0
    %p108 = por %p106, %p107
    %p109 = scmp.ne.s32.totalorder %s101, %s103
    %p110 = scmp.eq.s32.totalorder %s25, 3
    %p111 = por %p109, %p110
    %p112 = scmp.ne.s32.totalorder %s103, %s104
    %p113 = scmp.eq.s32.totalorder %s25, 0
    %p114 = por %p112, %p113
    %p115 = scmp.ne.s32.totalorder %s103, %s104
    %p116 = scmp.eq.s32.totalorder %s26, 3
    %p117 = por %p115, %p116
    %p119 = scmp.ne.s32.totalorder %s104, %s118
    %p120 = scmp.eq.s32.totalorder %s26, 0
    %p121 = por %p119, %p120
    %s123 = sadd.s32 %s122, 1
    %p126 = scmp.eq.s32.totalorder %s20, 3
    %p127 = scmp.ne.s32.totalorder %s122, %s124
    %p128 = scmp.eq.s32.totalorder %s20, 0
    %p129 = por %p127, %p128
    %p130 = scmp.ne.s32.totalorder %s122, %s124
    %p131 = scmp.eq.s32.totalorder %s25, 3
    %p132 = por %p130, %p131
    %p133 = scmp.ne.s32.totalorder %s124, %s125
    %p134 = scmp.eq.s32.totalorder %s25, 0
    %p135 = por %p133, %p134
    %p136 = scmp.ne.s32.totalorder %s124, %s125
    %p137 = scmp.eq.s32.totalorder %s26, 3
    %p138 = por %p136, %p137
    %p140 = scmp.ne.s32.totalorder %s125, %s139
    %p141 = scmp.eq.s32.totalorder %s26, 0
    %p142 = por %p140, %p141
    %s144 = sadd.s32 %s143, 1
    %p147 = scmp.eq.s32.totalorder %s20, 3
    %p148 = scmp.ne.s32.totalorder %s143, %s145
    %p149 = scmp.eq.s32.totalorder %s20, 0
    %p150 = por %p148, %p149
    %p151 = scmp.ne.s32.totalorder %s143, %s145
    %p152 = scmp.eq.s32.totalorder %s25, 3
    %p153 = por %p151, %p152
    %p154 = scmp.ne.s32.totalorder %s145, %s146
    %p155 = scmp.eq.s32.totalorder %s25, 0
    %p156 = por %p154, %p155
    %p157 = scmp.ne.s32.totalorder %s145, %s146
    %p158 = scmp.eq.s32.totalorder %s26, 3
    %p159 = por %p157, %p158
    %p161 = scmp.ne.s32.totalorder %s146, %s160
    %p162 = scmp.eq.s32.totalorder %s26, 0
    %p163 = por %p161, %p162
    %s165 = sadd.s32 %s164, 1
    %p168 = scmp.eq.s32.totalorder %s20, 3
    %p169 = scmp.ne.s32.totalorder %s164, %s166
    %p170 = scmp.eq.s32.totalorder %s20, 0
    %p171 = por %p169, %p170
    %p172 = scmp.ne.s32.totalorder %s164, %s166
    %p173 = scmp.eq.s32.totalorder %s25, 3
    %p174 = por %p172, %p173
    %p175 = scmp.ne.s32.totalorder %s166, %s167
    %p176 = scmp.eq.s32.totalorder %s25, 0
    %p177 = por %p175, %p176
    %p178 = scmp.ne.s32.totalorder %s166, %s167
    %p179 = scmp.eq.s32.totalorder %s26, 3
    %p180 = por %p178, %p179
    %p182 = scmp.ne.s32.totalorder %s167, %s181
    %p183 = scmp.eq.s32.totalorder %s26, 0
    %p184 = por %p182, %p183
    %s186 = sadd.s32 %s185, 1
    %p189 = scmp.eq.s32.totalorder %s20, 3
    %p190 = scmp.ne.s32.totalorder %s185, %s187
    %p191 = scmp.eq.s32.totalorder %s20, 0
    %p192 = por %p190, %p191
    %p193 = scmp.ne.s32.totalorder %s185, %s187
    %p194 = scmp.eq.s32.totalorder %s25, 3
    %p195 = por %p193, %p194
    %p196 = scmp.ne.s32.totalorder %s187, %s188
    %p197 = scmp.eq.s32.totalorder %s25, 0
    %p198 = por %p196, %p197
    %p199 = scmp.ne.s32.totalorder %s187, %s188
    %p200 = scmp.eq.s32.totalorder %s26, 3
    %p201 = por %p199, %p200
    %p203 = scmp.ne.s32.totalorder %s188, %s202
    %p204 = scmp.eq.s32.totalorder %s26, 0
    %p205 = por %p203, %p204
    %s207 = sadd.s32 %s206, 1
    %p210 = scmp.eq.s32.totalorder %s20, 3
    %p211 = scmp.ne.s32.totalorder %s206, %s208
    %p212 = scmp.eq.s32.totalorder %s20, 0
    %p213 = por %p211, %p212
    %p214 = scmp.ne.s32.totalorder %s206, %s208
    %p215 = scmp.eq.s32.totalorder %s25, 3
    %p216 = por %p214, %p215
    %p217 = scmp.ne.s32.totalorder %s208, %s209
    %p218 = scmp.eq.s32.totalorder %s25, 0
    %p219 = por %p217, %p218
    %p220 = scmp.ne.s32.totalorder %s208, %s209
    %p221 = scmp.eq.s32.totalorder %s26, 3
    %p222 = por %p220, %p221
    %p224 = scmp.ne.s32.totalorder %s209, %s223
    %p225 = scmp.eq.s32.totalorder %s26, 0
    %p226 = por %p224, %p225
    %s228 = sadd.s32 %s227, 1
    %p231 = scmp.eq.s32.totalorder %s20, 3
    %p232 = scmp.ne.s32.totalorder %s227, %s229
    %p233 = scmp.eq.s32.totalorder %s20, 0
    %p234 = por %p232, %p233
    %p235 = scmp.ne.s32.totalorder %s227, %s229
    %p236 = scmp.eq.s32.totalorder %s25, 3
    %p237 = por %p235, %p236
    %p238 = scmp.ne.s32.totalorder %s229, %s230
    %p239 = scmp.eq.s32.totalorder %s25, 0
    %p240 = por %p238, %p239
    %p241 = scmp.ne.s32.totalorder %s229, %s230
    %p242 = scmp.eq.s32.totalorder %s26, 3
    %p243 = por %p241, %p242
    %p245 = scmp.ne.s32.totalorder %s230, %s244
    %p246 = scmp.eq.s32.totalorder %s26, 0
    %p247 = por %p245, %p246
    %s249 = sadd.s32 %s248, 1
    %p252 = scmp.eq.s32.totalorder %s20, 3
    %p253 = scmp.ne.s32.totalorder %s248, %s250
    %p254 = scmp.eq.s32.totalorder %s20, 0
    %p255 = por %p253, %p254
    %p256 = scmp.ne.s32.totalorder %s248, %s250
    %p257 = scmp.eq.s32.totalorder %s25, 3
    %p258 = por %p256, %p257
    %p259 = scmp.ne.s32.totalorder %s250, %s251
    %p260 = scmp.eq.s32.totalorder %s25, 0
    %p261 = por %p259, %p260
    %p262 = scmp.ne.s32.totalorder %s250, %s251
    %p263 = scmp.eq.s32.totalorder %s26, 3
    %p264 = por %p262, %p263
    %p266 = scmp.ne.s32.totalorder %s251, %s265
    %p267 = scmp.eq.s32.totalorder %s26, 0
    %p268 = por %p266, %p267
    %s270 = sadd.s32 %s269, 1
    %p273 = scmp.eq.s32.totalorder %s20, 3
    %p274 = scmp.ne.s32.totalorder %s269, %s271
    %p275 = scmp.eq.s32.totalorder %s20, 0
    %p276 = por %p274, %p275
    %p277 = scmp.ne.s32.totalorder %s269, %s271
    %p278 = scmp.eq.s32.totalorder %s25, 3
    %p279 = por %p277, %p278
    %p280 = scmp.ne.s32.totalorder %s271, %s272
    %p281 = scmp.eq.s32.totalorder %s25, 0
    %p282 = por %p280, %p281
    %p283 = scmp.ne.s32.totalorder %s271, %s272
    %p284 = scmp.eq.s32.totalorder %s26, 3
    %p285 = por %p283, %p284
    %p287 = scmp.ne.s32.totalorder %s272, %s286
    %p288 = scmp.eq.s32.totalorder %s26, 0
    %p289 = por %p287, %p288
    %s290 = ssub.s32 %s20, %s27
    %p291 = scmp.eq.s32.totalorder %s290, 0
    %s293 = sadd.s32 %s292, 1
    %s294 = scalar_select %p291, %s292, %s293
    %p297 = pneg %p291
    %p298 = scmp.eq.s32.totalorder %s20, 3
    %p299 = por %p297, %p298
    %p300 = scmp.ne.s32.totalorder %s292, %s295
    %p301 = scmp.eq.s32.totalorder %s20, 0
    %p302 = por %p300, %p301
    %p303 = scmp.ne.s32.totalorder %s292, %s295
    %p304 = scmp.eq.s32.totalorder %s25, 3
    %p305 = por %p303, %p304
    %p306 = scmp.ne.s32.totalorder %s295, %s296
    %p307 = scmp.eq.s32.totalorder %s25, 0
    %p308 = por %p306, %p307
    %p309 = scmp.ne.s32.totalorder %s295, %s296
    %p310 = scmp.eq.s32.totalorder %s26, 3
    %p311 = por %p309, %p310
    %p313 = scmp.ne.s32.totalorder %s296, %s312
    %p314 = scmp.eq.s32.totalorder %s26, 0
    %p315 = por %p313, %p314
    %s316 = ssub.s32 %s20, %s27
    %p317 = scmp.eq.s32.totalorder %s316, 0
    %s319 = sadd.s32 %s318, 1
    %s320 = scalar_select %p317, %s318, %s319
    %p323 = pneg %p317
    %p324 = scmp.eq.s32.totalorder %s20, 3
    %p325 = por %p323, %p324
    %p326 = scmp.ne.s32.totalorder %s318, %s321
    %p327 = scmp.eq.s32.totalorder %s20, 0
    %p328 = por %p326, %p327
    %p329 = scmp.ne.s32.totalorder %s318, %s321
    %p330 = scmp.eq.s32.totalorder %s25, 3
    %p331 = por %p329, %p330
    %p332 = scmp.ne.s32.totalorder %s321, %s322
    %p333 = scmp.eq.s32.totalorder %s25, 0
    %p334 = por %p332, %p333
    %p335 = scmp.ne.s32.totalorder %s321, %s322
    %p336 = scmp.eq.s32.totalorder %s26, 3
    %p337 = por %p335, %p336
    %p339 = scmp.ne.s32.totalorder %s322, %s338
    %p340 = scmp.eq.s32.totalorder %s26, 0
    %p341 = por %p339, %p340
    %p342 = scmp.le.s32.totalorder 1, %s20
    %p343 = scmp.lt.s32.totalorder %s20, 5
    %p344 = pnand %p342, %p343
    %p345 = pneg %p344
    // Predicated region
    $region9: #{elcs_forward.8} parent=5 // pred_check
      _
    $region10: #{elcs_forward.8} parent=5 // pred_check_branch
      %347 = sbr.rel (%p344) target = $region12
    $region11: #{elcs_forward.8} parent=5 // pred_region
      %s348 = ssub.s32 %s20, 1
      // Predicated region
      $region13: #{elcs_forward.8} parent=11 // pred_check
        %p349 = pneg %p93
      $region14: #{elcs_forward.8} parent=11 // pred_check_branch
        %351 = sbr.rel (%p349) target = $region16
      $region15: #{elcs_forward.8} parent=11 // pred_region
        _
      $region16: #{elcs_forward.8} parent=11 // pred_fallthru
        _
      // Predicated region
      $region17: #{elcs_forward.8} parent=11 // pred_check
        %p352 = pneg %p114
      $region18: #{elcs_forward.8} parent=11 // pred_check_branch
        %354 = sbr.rel (%p352) target = $region20
      $region19: #{elcs_forward.8} parent=11 // pred_region
        _
      $region20: #{elcs_forward.8} parent=11 // pred_fallthru
        _
      // Predicated region
      $region21: #{elcs_forward.8} parent=11 // pred_check
        %p355 = pneg %p135
      $region22: #{elcs_forward.8} parent=11 // pred_check_branch
        %357 = sbr.rel (%p355) target = $region24
      $region23: #{elcs_forward.8} parent=11 // pred_region
        _
      $region24: #{elcs_forward.8} parent=11 // pred_fallthru
        _
      // Predicated region
      $region25: #{elcs_forward.8} parent=11 // pred_check
        %p358 = pneg %p156
      $region26: #{elcs_forward.8} parent=11 // pred_check_branch
        %360 = sbr.rel (%p358) target = $region28
      $region27: #{elcs_forward.8} parent=11 // pred_region
        _
      $region28: #{elcs_forward.8} parent=11 // pred_fallthru
        _
      // Predicated region
      $region29: #{elcs_forward.8} parent=11 // pred_check
        %p361 = pneg %p177
      $region30: #{elcs_forward.8} parent=11 // pred_check_branch
        %363 = sbr.rel (%p361) target = $region32
      $region31: #{elcs_forward.8} parent=11 // pred_region
        _
      $region32: #{elcs_forward.8} parent=11 // pred_fallthru
        _
      // Predicated region
      $region33: #{elcs_forward.8} parent=11 // pred_check
        %p364 = pneg %p198
      $region34: #{elcs_forward.8} parent=11 // pred_check_branch
        %366 = sbr.rel (%p364) target = $region36
      $region35: #{elcs_forward.8} parent=11 // pred_region
        _
      $region36: #{elcs_forward.8} parent=11 // pred_fallthru
        _
      // Predicated region
      $region37: #{elcs_forward.8} parent=11 // pred_check
        %p367 = pneg %p219
      $region38: #{elcs_forward.8} parent=11 // pred_check_branch
        %369 = sbr.rel (%p367) target = $region40
      $region39: #{elcs_forward.8} parent=11 // pred_region
        _
      $region40: #{elcs_forward.8} parent=11 // pred_fallthru
        _
      // Predicated region
      $region41: #{elcs_forward.8} parent=11 // pred_check
        %p370 = pneg %p240
      $region42: #{elcs_forward.8} parent=11 // pred_check_branch
        %372 = sbr.rel (%p370) target = $region44
      $region43: #{elcs_forward.8} parent=11 // pred_region
        _
      $region44: #{elcs_forward.8} parent=11 // pred_fallthru
        _
      // Predicated region
      $region45: #{elcs_forward.8} parent=11 // pred_check
        %p373 = pneg %p261
      $region46: #{elcs_forward.8} parent=11 // pred_check_branch
        %375 = sbr.rel (%p373) target = $region48
      $region47: #{elcs_forward.8} parent=11 // pred_region
        _
      $region48: #{elcs_forward.8} parent=11 // pred_fallthru
        _
      // Predicated region
      $region49: #{elcs_forward.8} parent=11 // pred_check
        %p376 = pneg %p282
      $region50: #{elcs_forward.8} parent=11 // pred_check_branch
        %378 = sbr.rel (%p376) target = $region52
      $region51: #{elcs_forward.8} parent=11 // pred_region
        _
      $region52: #{elcs_forward.8} parent=11 // pred_fallthru
        _
    $region12: #{elcs_forward.8} parent=5 // pred_fallthru
      _
    %p379 = scmp.lt.s32.totalorder %s20, 4
    // Predicated region
    $region53: #{elcs_forward.8} parent=5 // pred_check
      %p380 = pneg %p379
    $region54: #{elcs_forward.8} parent=5 // pred_check_branch
      %382 = sbr.rel (%p380) target = $region56
    $region55: #{elcs_forward.8} parent=5 // pred_region
      // Predicated region
      $region57: #{elcs_forward.8} parent=55 // pred_check
        %p383 = pneg %p40
      $region58: #{elcs_forward.8} parent=55 // pred_check_branch
        %385 = sbr.rel (%p383) target = $region60
      $region59: #{elcs_forward.8} parent=55 // pred_region
        %s386 = smul.u32 16, %s20
        %p387 = scmp.lt.s32.totalorder %s386, 63
        %s388 = scalar_select %p387, %s386, 63
        %s389 = smul.addr %s388, 4
        %s390 = scalar_lea.vmem %s0, %s389
        %s391 = smul.u32 16, %s20
      $region60: #{elcs_forward.8} parent=55 // pred_fallthru
        _
      // Predicated region
      $region61: #{elcs_forward.8} parent=55 // pred_check
        %p392 = pneg %p66
      $region62: #{elcs_forward.8} parent=55 // pred_check_branch
        %394 = sbr.rel (%p392) target = $region64
      $region63: #{elcs_forward.8} parent=55 // pred_region
        %s395 = smul.u32 16, %s20
        %p396 = scmp.lt.s32.totalorder %s395, 63
        %s397 = scalar_select %p396, %s395, 63
        %s398 = smul.addr %s397, 8
        %s399 = scalar_lea.vmem %s1, %s398
        %s400 = smul.u32 16, %s20
      $region64: #{elcs_forward.8} parent=55 // pred_fallthru
        _
    $region56: #{elcs_forward.8} parent=5 // pred_fallthru
      _
    %p401 = scmp.le.s32.totalorder 1, %s20
    %p402 = scmp.lt.s32.totalorder %s20, 5
    %p403 = pnand %p401, %p402
    %p404 = pneg %p403
    // Predicated region
    $region65: #{elcs_forward.8} parent=5 // pred_check
      _
    $region66: #{elcs_forward.8} parent=5 // pred_check_branch
      %406 = sbr.rel (%p403) target = $region68
    $region67: #{elcs_forward.8} parent=5 // pred_region
      %s407 = ssub.s32 %s20, 1
      %s408 = smul.u32 16, %s25
      %p409 = scmp.lt.s32.totalorder %s408, 63
      %s410 = scalar_select %p409, %s408, 63
      %s411 = smul.addr %s410, 4
      %s412 = scalar_lea.vmem %s0, %s411
      %p413 = pneg %p46
      %p414 = pneg %p43
      %s415 = smul.u32 16, %s25
      %p416 = scmp.lt.s32.totalorder %s415, 63
      %s417 = scalar_select %p416, %s415, 63
      %s418 = smul.addr %s417, 8
      %s419 = scalar_lea.vmem %s1, %s418
      %p420 = pneg %p72
      %p421 = pneg %p69
      %p422 = pneg %p93
      %p423 = pneg %p90
      %p424 = pneg %p114
      %p425 = pneg %p111
      %p426 = pneg %p135
      %p427 = pneg %p132
      %p428 = pneg %p156
      %p429 = pneg %p153
      %p430 = pneg %p177
      %p431 = pneg %p174
      %p432 = pneg %p198
      %p433 = pneg %p195
      %p434 = pneg %p219
      %p435 = pneg %p216
      %p436 = pneg %p240
      %p437 = pneg %p237
      %p438 = pneg %p261
      %p439 = pneg %p258
      %p440 = pneg %p282
      %p441 = pneg %p279
      %p442 = pneg %p308
      %p443 = pneg %p305
      %s444 = smul.u32 16, %s25
      %p445 = scmp.lt.s32.totalorder %s444, 63
      %s446 = scalar_select %p445, %s444, 63
      %s447 = smul.addr %s446, 8
      %s448 = scalar_lea.vmem %s12, %s447
      %p449 = pneg %p334
      %p450 = pneg %p331
      %s451 = smul.u32 16, %s25
      %p452 = scmp.lt.s32.totalorder %s451, 63
      %s453 = scalar_select %p452, %s451, 63
      %s454 = smul.addr %s453, 4
      %s455 = scalar_lea.vmem %s13, %s454
      %s456 = smul.u32 16, %s25
      %p457 = scmp.lt.s32.totalorder %s456, 63
      %s458 = scalar_select %p457, %s456, 63
      %s459 = smul.addr %s458, 4
      %s460 = scalar_lea.vmem %s0, %s459
      %s461 = smul.u32 16, %s25
      %s462 = smul.u32 16, %s25
      %p463 = scmp.lt.s32.totalorder %s462, 63
      %s464 = scalar_select %p463, %s462, 63
      %s465 = smul.addr %s464, 8
      %s466 = scalar_lea.vmem %s1, %s465
      %s467 = smul.u32 16, %s25
      %s468 = smul.u32 16, %s25
      %p469 = scmp.lt.s32.totalorder %s468, 63
      %s470 = scalar_select %p469, %s468, 63
      %s471 = smul.addr %s470, 8
      %s472 = scalar_lea.vmem %s12, %s471
      %s473 = smul.u32 16, %s25
      %s474 = smul.u32 16, %s25
      %p475 = scmp.lt.s32.totalorder %s474, 63
      %s476 = scalar_select %p475, %s474, 63
      %s477 = smul.addr %s476, 4
      %s478 = scalar_lea.vmem %s13, %s477
      %s479 = smul.u32 16, %s25
      %v481 = vld [vmem:[%s466] sm:$0xff]
      %v482 = vld [vmem:[%s466 + $0x8] sm:$0xff]
      %v483 = vld [vmem:[%s466 + $0x10] sm:$0xff]
      %v484 = vld [vmem:[%s466 + $0x18] sm:$0xff]
      %v485 = vld [vmem:[%s466 + $0x20] sm:$0xff]
      %v486 = vld [vmem:[%s466 + $0x28] sm:$0xff]
      %v487 = vld [vmem:[%s466 + $0x30] sm:$0xff]
      %v488 = vld [vmem:[%s466 + $0x38] sm:$0xff]
      %v489 = vld [vmem:[%s466 + $0x40] sm:$0xff]
      %v490 = vld [vmem:[%s466 + $0x48] sm:$0xff]
      %v491 = vld [vmem:[%s466 + $0x50] sm:$0xff]
      %v492 = vld [vmem:[%s466 + $0x58] sm:$0xff]
      %v493 = vld [vmem:[%s466 + $0x60] sm:$0xff]
      %v494 = vld [vmem:[%s466 + $0x68] sm:$0xff]
      %v495 = vld [vmem:[%s466 + $0x70] sm:$0xff]
      %v496 = vld [vmem:[%s466 + $0x78] sm:$0xff]
      %v497 = vld [vmem:[%s460] sm:$0xf]
      %v498 = vld [vmem:[%s460 + $0x4] sm:$0xf]
      %v499 = vld [vmem:[%s460 + $0x8] sm:$0xf]
      %v500 = vld [vmem:[%s460 + $0xc] sm:$0xf]
      %v501 = vld [vmem:[%s460 + $0x10] sm:$0xf]
      %v502 = vld [vmem:[%s460 + $0x14] sm:$0xf]
      %v503 = vld [vmem:[%s460 + $0x18] sm:$0xf]
      %v504 = vld [vmem:[%s460 + $0x1c] sm:$0xf]
      %v505 = vld [vmem:[%s460 + $0x20] sm:$0xf]
      %v506 = vld [vmem:[%s460 + $0x24] sm:$0xf]
      %v507 = vld [vmem:[%s460 + $0x28] sm:$0xf]
      %v508 = vld [vmem:[%s460 + $0x2c] sm:$0xf]
      %v509 = vld [vmem:[%s460 + $0x30] sm:$0xf]
      %v510 = vld [vmem:[%s460 + $0x34] sm:$0xf]
      %v511 = vld [vmem:[%s460 + $0x38] sm:$0xf]
      %v512 = vld [vmem:[%s460 + $0x3c] sm:$0xf]
      %v513 = vld [vmem:[%s2] sm:$0xf]
      %v514 = vld [vmem:[%s2 + $0x4] sm:$0xf]
      %v515 = vld [vmem:[%s2 + $0x8] sm:$0xf]
      %v516 = vld [vmem:[%s2 + $0xc] sm:$0xf]
      %v517 = vld [vmem:[%s2 + $0x10] sm:$0xf]
      %v518 = vld [vmem:[%s2 + $0x14] sm:$0xf]
      %v519 = vld [vmem:[%s2 + $0x18] sm:$0xf]
      %v520 = vld [vmem:[%s2 + $0x1c] sm:$0x3]
      %v521 = vld [vmem:[%s3] sm:$0x1]
      %v523 = vlaneseq
      %v524 = vshrl.u32 %v523, 7
      %v525 = vsub.s32 0, %v524
      %v526 = vrot.slane %v521, %v525
      %v544 = vunpack.c.l.b16 %v497
      %v545 = vunpack.c.l.b16 %v498
      %v546 = vunpack.c.l.b16 %v499
      %v547 = vunpack.c.l.b16 %v500
      %v548 = vunpack.c.l.b16 %v501
      %v549 = vunpack.c.l.b16 %v502
      %v550 = vunpack.c.l.b16 %v503
      %v551 = vunpack.c.l.b16 %v504
      %v552 = vunpack.c.l.b16 %v505
      %v553 = vunpack.c.l.b16 %v506
      %v554 = vunpack.c.l.b16 %v507
      %v555 = vunpack.c.l.b16 %v508
      %v556 = vunpack.c.l.b16 %v509
      %v557 = vunpack.c.l.b16 %v510
      %v558 = vunpack.c.l.b16 %v511
      %v559 = vunpack.c.l.b16 %v512
      %v560 = vpack.c.b16 %v545, %v544
      %v561 = vpack.c.b16 %v547, %v546
      %v562 = vpack.c.b16 %v549, %v548
      %v563 = vpack.c.b16 %v551, %v550
      %v564 = vpack.c.b16 %v553, %v552
      %v565 = vpack.c.b16 %v555, %v554
      %v566 = vpack.c.b16 %v557, %v556
      %v567 = vpack.c.b16 %v559, %v558
      %v576 = vunpack.c.l.b16 %v513
      %v577 = vunpack.c.l.b16 %v514
      %v578 = vunpack.c.l.b16 %v515
      %v579 = vunpack.c.l.b16 %v516
      %v580 = vunpack.c.l.b16 %v517
      %v581 = vunpack.c.l.b16 %v518
      %v582 = vunpack.c.l.b16 %v519
      %v583 = vunpack.c.l.b16 %v520
      %v584 = vpack.c.b16 %v577, %v576
      %v585 = vpack.c.b16 %v579, %v578
      %v586 = vpack.c.b16 %v581, %v580
      %v587 = vpack.c.b16 %v583, %v582
      %vm591 = vcmask 490496
      %v593 = vsel %vm591, %v560, 0
      %v596 = vsel %vm591, %v561, 0
      %v599 = vsel %vm591, %v562, 0
      %v602 = vsel %vm591, %v563, 0
      %v605 = vsel %vm591, %v564, 0
      %v608 = vsel %vm591, %v565, 0
      %v611 = vsel %vm591, %v566, 0
      %v614 = vsel %vm591, %v567, 0
      %vm616 = vcmask 1045504
      %v618 = vsel %vm616, %v587, 0
      %620 = vmatprep.subr.bf16.mxu0 0
      %621 = vmatpush1.bf16.msra.mxu0 %v584
      %622 = vmatprep.subr.bf16.mxu0 0
      %623 = vmatpush1.bf16.msra.mxu0 %v585
      %624 = vmatprep.subr.bf16.mxu0 0
      %625 = vmatpush1.bf16.msra.mxu0 %v586
      %626 = vmatprep.subr.bf16.mxu0 0
      %627 = vmatpush1.bf16.msra.mxu0 %v618
      %628 = vmatprep.subr.bf16.mxu0 0
      %629 = vmatpush1.bf16.msra.mxu0 0
      %630 = vmatprep.subr.bf16.mxu0 0
      %631 = vmatpush1.bf16.msra.mxu0 0
      %632 = vmatprep.subr.bf16.mxu0 0
      %633 = vmatpush1.bf16.msra.mxu0 0
      %634 = vmatprep.subr.bf16.mxu0 0
      %635 = vmatpush1.bf16.msra.mxu0 0
      %636 = vmatprep.subr.bf16.mxu0 0
      %637 = vmatpush1.bf16.msra.mxu0 0
      %638 = vmatprep.subr.bf16.mxu0 0
      %639 = vmatpush1.bf16.msra.mxu0 0
      %640 = vmatprep.subr.bf16.mxu0 0
      %641 = vmatpush1.bf16.msra.mxu0 0
      %642 = vmatprep.subr.bf16.mxu0 0
      %643 = vmatpush1.bf16.msra.mxu0 0
      %644 = vmatprep.subr.bf16.mxu0 0
      %645 = vmatpush1.bf16.msra.mxu0 0
      %646 = vmatprep.subr.bf16.mxu0 0
      %647 = vmatpush1.bf16.msra.mxu0 0
      %648 = vmatprep.subr.bf16.mxu0 0
      %649 = vmatpush1.bf16.msra.mxu0 0
      %650 = vmatprep.subr.bf16.mxu0 0
      %651 = vmatpush1.bf16.msra.mxu0 0
      %652 = vmatprep.mubr.bf16.mxu0 0
      %653 = vmatmul.mubr.bf16.gmra.mrb[0].mxu0 %v593
      %v654 = vpop.f32.mrb[0].mxu0
      %v655 = vadd.f32 %v526, %v654
      %v656 = vpop.f32.mrb[0].mxu0
      %v657 = vpop.f32.mrb[0].mxu0
      %v658 = vadd.f32 %v526, %v657
      %v659 = vpop.f32.mrb[0].mxu0
      %660 = vmatprep.mubr.bf16.mxu0 0
      %661 = vmatmul.mubr.bf16.gmra.mrb[0].mxu0 %v596
      %v662 = vpop.f32.mrb[0].mxu0
      %v663 = vadd.f32 %v526, %v662
      %v664 = vpop.f32.mrb[0].mxu0
      %v665 = vpop.f32.mrb[0].mxu0
      %v666 = vadd.f32 %v526, %v665
      %v667 = vpop.f32.mrb[0].mxu0
      %668 = vmatprep.mubr.bf16.mxu0 0
      %669 = vmatmul.mubr.bf16.gmra.mrb[0].mxu0 %v599
      %v670 = vpop.f32.mrb[0].mxu0
      %v671 = vadd.f32 %v526, %v670
      %v672 = vpop.f32.mrb[0].mxu0
      %v673 = vpop.f32.mrb[0].mxu0
      %v674 = vadd.f32 %v526, %v673
      %v675 = vpop.f32.mrb[0].mxu0
      %676 = vmatprep.mubr.bf16.mxu0 0
      %677 = vmatmul.mubr.bf16.gmra.mrb[0].mxu0 %v602
      %v678 = vpop.f32.mrb[0].mxu0
      %v679 = vadd.f32 %v526, %v678
      %v680 = vpop.f32.mrb[0].mxu0
      %v681 = vpop.f32.mrb[0].mxu0
      %v682 = vadd.f32 %v526, %v681
      %v683 = vpop.f32.mrb[0].mxu0
      %684 = vmatprep.mubr.bf16.mxu0 0
      %685 = vmatmul.mubr.bf16.gmra.mrb[0].mxu0 %v605
      %v686 = vpop.f32.mrb[0].mxu0
      %v687 = vadd.f32 %v526, %v686
      %v688 = vpop.f32.mrb[0].mxu0
      %v689 = vpop.f32.mrb[0].mxu0
      %v690 = vadd.f32 %v526, %v689
      %v691 = vpop.f32.mrb[0].mxu0
      %692 = vmatprep.mubr.bf16.mxu0 0
      %693 = vmatmul.mubr.bf16.gmra.mrb[0].mxu0 %v608
      %v694 = vpop.f32.mrb[0].mxu0
      %v695 = vadd.f32 %v526, %v694
      %v696 = vpop.f32.mrb[0].mxu0
      %v697 = vpop.f32.mrb[0].mxu0
      %v698 = vadd.f32 %v526, %v697
      %v699 = vpop.f32.mrb[0].mxu0
      %700 = vmatprep.mubr.bf16.mxu0 0
      %701 = vmatmul.mubr.bf16.gmra.mrb[0].mxu0 %v611
      %v702 = vpop.f32.mrb[0].mxu0
      %v703 = vadd.f32 %v526, %v702
      %v704 = vpop.f32.mrb[0].mxu0
      %v705 = vpop.f32.mrb[0].mxu0
      %v706 = vadd.f32 %v526, %v705
      %v707 = vpop.f32.mrb[0].mxu0
      %708 = vmatprep.mubr.bf16.mxu0 0
      %709 = vmatmul.mubr.bf16.gmra.mrb[0].mxu0 %v614
      %v710 = vpop.f32.mrb[0].mxu0
      %v711 = vadd.f32 %v526, %v710
      %v712 = vpop.f32.mrb[0].mxu0
      %v713 = vpop.f32.mrb[0].mxu0
      %v714 = vadd.f32 %v526, %v713
      %v715 = vpop.f32.mrb[0].mxu0
      %716 = vdwg.mxu0
      %v717 = vmax.f32 %v655, 0.0
      %v718 = vmax.f32 %v658, 0.0
      %v719 = vmax.f32 %v663, 0.0
      %v720 = vmax.f32 %v666, 0.0
      %v721 = vmax.f32 %v671, 0.0
      %v722 = vmax.f32 %v674, 0.0
      %v723 = vmax.f32 %v679, 0.0
      %v724 = vmax.f32 %v682, 0.0
      %v725 = vmax.f32 %v687, 0.0
      %v726 = vmax.f32 %v690, 0.0
      %v727 = vmax.f32 %v695, 0.0
      %v728 = vmax.f32 %v698, 0.0
      %v729 = vmax.f32 %v703, 0.0
      %v730 = vmax.f32 %v706, 0.0
      %v731 = vmax.f32 %v711, 0.0
      %v732 = vmax.f32 %v714, 0.0
      %v733 = vpack.c.bf16 %v718, %v717
      %v734 = vpack.c.bf16 %v720, %v719
      %v735 = vpack.c.bf16 %v722, %v721
      %v736 = vpack.c.bf16 %v724, %v723
      %v737 = vpack.c.bf16 %v726, %v725
      %v738 = vpack.c.bf16 %v728, %v727
      %v739 = vpack.c.bf16 %v730, %v729
      %v740 = vpack.c.bf16 %v732, %v731
      %v741 = vld [vmem:[%s4] sm:$0xf]
      %v742 = vld [vmem:[%s4 + $0x4] sm:$0xf]
      %v743 = vld [vmem:[%s4 + $0x8] sm:$0xf]
      %v744 = vld [vmem:[%s4 + $0xc] sm:$0xf]
      %v745 = vld [vmem:[%s4 + $0x10] sm:$0xf]
      %v746 = vld [vmem:[%s4 + $0x14] sm:$0xf]
      %v747 = vld [vmem:[%s4 + $0x18] sm:$0xf]
      %v748 = vld [vmem:[%s4 + $0x1c] sm:$0x3]
      %v749 = vld [vmem:[%s5] sm:$0x1]
      %v751 = vlaneseq
      %v752 = vshrl.u32 %v751, 7
      %v753 = vsub.s32 0, %v752
      %v754 = vrot.slane %v749, %v753
      %v764 = vunpack.c.l.b16 %v741
      %v765 = vunpack.c.l.b16 %v742
      %v766 = vunpack.c.l.b16 %v743
      %v767 = vunpack.c.l.b16 %v744
      %v768 = vunpack.c.l.b16 %v745
      %v769 = vunpack.c.l.b16 %v746
      %v770 = vunpack.c.l.b16 %v747
      %v771 = vunpack.c.l.b16 %v748
      %v772 = vpack.c.b16 %v765, %v764
      %v773 = vpack.c.b16 %v767, %v766
      %v774 = vpack.c.b16 %v769, %v768
      %v775 = vpack.c.b16 %v771, %v770
      %v780 = vsel %vm591, %v733, 0
      %v783 = vsel %vm591, %v734, 0
      %v786 = vsel %vm591, %v735, 0
      %v789 = vsel %vm591, %v736, 0
      %v792 = vsel %vm591, %v737, 0
      %v795 = vsel %vm591, %v738, 0
      %v798 = vsel %vm591, %v739, 0
      %v801 = vsel %vm591, %v740, 0
      %v804 = vsel %vm616, %v775, 0
      %806 = vmatprep.subr.bf16.mxu0 0
      %807 = vmatpush1.bf16.msra.mxu0 %v772
      %808 = vmatprep.subr.bf16.mxu0 0
      %809 = vmatpush1.bf16.msra.mxu0 %v773
      %810 = vmatprep.subr.bf16.mxu0 0
      %811 = vmatpush1.bf16.msra.mxu0 %v774
      %812 = vmatprep.subr.bf16.mxu0 0
      %813 = vmatpush1.bf16.msra.mxu0 %v804
      %814 = vmatprep.subr.bf16.mxu0 0
      %815 = vmatpush1.bf16.msra.mxu0 0
      %816 = vmatprep.subr.bf16.mxu0 0
      %817 = vmatpush1.bf16.msra.mxu0 0
      %818 = vmatprep.subr.bf16.mxu0 0
      %819 = vmatpush1.bf16.msra.mxu0 0
      %820 = vmatprep.subr.bf16.mxu0 0
      %821 = vmatpush1.bf16.msra.mxu0 0
      %822 = vmatprep.subr.bf16.mxu0 0
      %823 = vmatpush1.bf16.msra.mxu0 0
      %824 = vmatprep.subr.bf16.mxu0 0
      %825 = vmatpush1.bf16.msra.mxu0 0
      %826 = vmatprep.subr.bf16.mxu0 0
      %827 = vmatpush1.bf16.msra.mxu0 0
      %828 = vmatprep.subr.bf16.mxu0 0
      %829 = vmatpush1.bf16.msra.mxu0 0
      %830 = vmatprep.subr.bf16.mxu0 0
      %831 = vmatpush1.bf16.msra.mxu0 0
      %832 = vmatprep.subr.bf16.mxu0 0
      %833 = vmatpush1.bf16.msra.mxu0 0
      %834 = vmatprep.subr.bf16.mxu0 0
      %835 = vmatpush1.bf16.msra.mxu0 0
      %836 = vmatprep.subr.bf16.mxu0 0
      %837 = vmatpush1.bf16.msra.mxu0 0
      %838 = vmatprep.mubr.bf16.mxu0 0
      %839 = vmatmul.mubr.bf16.gmra.mrb[0].mxu0 %v780
      %v840 = vpop.f32.mrb[0].mxu0
      %v841 = vadd.f32 %v754, %v840
      %v842 = vpop.f32.mrb[0].mxu0
      %v843 = vpop.f32.mrb[0].mxu0
      %v844 = vadd.f32 %v754, %v843
      %v845 = vpop.f32.mrb[0].mxu0
      %846 = vmatprep.mubr.bf16.mxu0 0
      %847 = vmatmul.mubr.bf16.gmra.mrb[0].mxu0 %v783
      %v848 = vpop.f32.mrb[0].mxu0
      %v849 = vadd.f32 %v754, %v848
      %v850 = vpop.f32.mrb[0].mxu0
      %v851 = vpop.f32.mrb[0].mxu0
      %v852 = vadd.f32 %v754, %v851
      %v853 = vpop.f32.mrb[0].mxu0
      %854 = vmatprep.mubr.bf16.mxu0 0
      %855 = vmatmul.mubr.bf16.gmra.mrb[0].mxu0 %v786
      %v856 = vpop.f32.mrb[0].mxu0
      %v857 = vadd.f32 %v754, %v856
      %v858 = vpop.f32.mrb[0].mxu0
      %v859 = vpop.f32.mrb[0].mxu0
      %v860 = vadd.f32 %v754, %v859
      %v861 = vpop.f32.mrb[0].mxu0
      %862 = vmatprep.mubr.bf16.mxu0 0
      %863 = vmatmul.mubr.bf16.gmra.mrb[0].mxu0 %v789
      %v864 = vpop.f32.mrb[0].mxu0
      %v865 = vadd.f32 %v754, %v864
      %v866 = vpop.f32.mrb[0].mxu0
      %v867 = vpop.f32.mrb[0].mxu0
      %v868 = vadd.f32 %v754, %v867
      %v869 = vpop.f32.mrb[0].mxu0
      %870 = vmatprep.mubr.bf16.mxu0 0
      %871 = vmatmul.mubr.bf16.gmra.mrb[0].mxu0 %v792
      %v872 = vpop.f32.mrb[0].mxu0
      %v873 = vadd.f32 %v754, %v872
      %v874 = vpop.f32.mrb[0].mxu0
      %v875 = vpop.f32.mrb[0].mxu0
      %v876 = vadd.f32 %v754, %v875
      %v877 = vpop.f32.mrb[0].mxu0
      %878 = vmatprep.mubr.bf16.mxu0 0
      %879 = vmatmul.mubr.bf16.gmra.mrb[0].mxu0 %v795
      %v880 = vpop.f32.mrb[0].mxu0
      %v881 = vadd.f32 %v754, %v880
      %v882 = vpop.f32.mrb[0].mxu0
      %v883 = vpop.f32.mrb[0].mxu0
      %v884 = vadd.f32 %v754, %v883
      %v885 = vpop.f32.mrb[0].mxu0
      %886 = vmatprep.mubr.bf16.mxu0 0
      %887 = vmatmul.mubr.bf16.gmra.mrb[0].mxu0 %v798
      %v888 = vpop.f32.mrb[0].mxu0
      %v889 = vadd.f32 %v754, %v888
      %v890 = vpop.f32.mrb[0].mxu0
      %v891 = vpop.f32.mrb[0].mxu0
      %v892 = vadd.f32 %v754, %v891
      %v893 = vpop.f32.mrb[0].mxu0
      %894 = vmatprep.mubr.bf16.mxu0 0
      %895 = vmatmul.mubr.bf16.gmra.mrb[0].mxu0 %v801
      %v896 = vpop.f32.mrb[0].mxu0
      %v897 = vadd.f32 %v754, %v896
      %v898 = vpop.f32.mrb[0].mxu0
      %v899 = vpop.f32.mrb[0].mxu0
      %v900 = vadd.f32 %v754, %v899
      %v901 = vpop.f32.mrb[0].mxu0
      %902 = vdwg.mxu0
      %vm903 = vcmp.ge.f32.partialorder %v841, 0.0
      %vm904 = vcmp.ge.f32.partialorder %v844, 0.0
      %vm905 = vcmp.ge.f32.partialorder %v849, 0.0
      %vm906 = vcmp.ge.f32.partialorder %v852, 0.0
      %vm907 = vcmp.ge.f32.partialorder %v857, 0.0
      %vm908 = vcmp.ge.f32.partialorder %v860, 0.0
      %vm909 = vcmp.ge.f32.partialorder %v865, 0.0
      %vm910 = vcmp.ge.f32.partialorder %v868, 0.0
      %vm911 = vcmp.ge.f32.partialorder %v873, 0.0
      %vm912 = vcmp.ge.f32.partialorder %v876, 0.0
      %vm913 = vcmp.ge.f32.partialorder %v881, 0.0
      %vm914 = vcmp.ge.f32.partialorder %v884, 0.0
      %vm915 = vcmp.ge.f32.partialorder %v889, 0.0
      %vm916 = vcmp.ge.f32.partialorder %v892, 0.0
      %vm917 = vcmp.ge.f32.partialorder %v897, 0.0
      %vm918 = vcmp.ge.f32.partialorder %v900, 0.0
      %v919 = vmul.f32 %v841, 0.2
      %v920 = vmul.f32 %v844, 0.2
      %v921 = vmul.f32 %v849, 0.2
      %v922 = vmul.f32 %v852, 0.2
      %v923 = vmul.f32 %v857, 0.2
      %v924 = vmul.f32 %v860, 0.2
      %v925 = vmul.f32 %v865, 0.2
      %v926 = vmul.f32 %v868, 0.2
      %v927 = vmul.f32 %v873, 0.2
      %v928 = vmul.f32 %v876, 0.2
      %v929 = vmul.f32 %v881, 0.2
      %v930 = vmul.f32 %v884, 0.2
      %v931 = vmul.f32 %v889, 0.2
      %v932 = vmul.f32 %v892, 0.2
      %v933 = vmul.f32 %v897, 0.2
      %v934 = vmul.f32 %v900, 0.2
      %v935 = vsel %vm903, %v841, %v919
      %v936 = vsel %vm904, %v844, %v920
      %v937 = vsel %vm905, %v849, %v921
      %v938 = vsel %vm906, %v852, %v922
      %v939 = vsel %vm907, %v857, %v923
      %v940 = vsel %vm908, %v860, %v924
      %v941 = vsel %vm909, %v865, %v925
      %v942 = vsel %vm910, %v868, %v926
      %v943 = vsel %vm911, %v873, %v927
      %v944 = vsel %vm912, %v876, %v928
      %v945 = vsel %vm913, %v881, %v929
      %v946 = vsel %vm914, %v884, %v930
      %v947 = vsel %vm915, %v889, %v931
      %v948 = vsel %vm916, %v892, %v932
      %v949 = vsel %vm917, %v897, %v933
      %v950 = vsel %vm918, %v900, %v934
      %v951 = vpack.c.bf16 %v936, %v935
      %v952 = vpack.c.bf16 %v938, %v937
      %v953 = vpack.c.bf16 %v940, %v939
      %v954 = vpack.c.bf16 %v942, %v941
      %v955 = vpack.c.bf16 %v944, %v943
      %v956 = vpack.c.bf16 %v946, %v945
      %v957 = vpack.c.bf16 %v948, %v947
      %v958 = vpack.c.bf16 %v950, %v949
      %v959 = vld [vmem:[%s6] sm:$0xf]
      %v960 = vld [vmem:[%s6 + $0x4] sm:$0xf]
      %v961 = vld [vmem:[%s6 + $0x8] sm:$0xf]
      %v962 = vld [vmem:[%s6 + $0xc] sm:$0xf]
      %v963 = vld [vmem:[%s6 + $0x10] sm:$0xf]
      %v964 = vld [vmem:[%s6 + $0x14] sm:$0xf]
      %v965 = vld [vmem:[%s6 + $0x18] sm:$0xf]
      %v966 = vld [vmem:[%s6 + $0x1c] sm:$0x3]
      %v967 = vld [vmem:[%s7] sm:$0x1]
      %v969 = vlaneseq
      %v970 = vshrl.u32 %v969, 7
      %v971 = vsub.s32 0, %v970
      %v972 = vrot.slane %v967, %v971
      %v982 = vunpack.c.l.b16 %v959
      %v983 = vunpack.c.l.b16 %v960
      %v984 = vunpack.c.l.b16 %v961
      %v985 = vunpack.c.l.b16 %v962
      %v986 = vunpack.c.l.b16 %v963
      %v987 = vunpack.c.l.b16 %v964
      %v988 = vunpack.c.l.b16 %v965
      %v989 = vunpack.c.l.b16 %v966
      %v990 = vpack.c.b16 %v983, %v982
      %v991 = vpack.c.b16 %v985, %v984
      %v992 = vpack.c.b16 %v987, %v986
      %v993 = vpack.c.b16 %v989, %v988
      %v998 = vsel %vm591, %v951, 0
      %v1001 = vsel %vm591, %v952, 0
      %v1004 = vsel %vm591, %v953, 0
      %v1007 = vsel %vm591, %v954, 0
      %v1010 = vsel %vm591, %v955, 0
      %v1013 = vsel %vm591, %v956, 0
      %v1016 = vsel %vm591, %v957, 0
      %v1019 = vsel %vm591, %v958, 0
      %v1022 = vsel %vm616, %v993, 0
      %1024 = vmatprep.subr.bf16.mxu0 0
      %1025 = vmatpush1.bf16.msra.mxu0 %v990
      %1026 = vmatprep.subr.bf16.mxu0 0
      %1027 = vmatpush1.bf16.msra.mxu0 %v991
      %1028 = vmatprep.subr.bf16.mxu0 0
      %1029 = vmatpush1.bf16.msra.mxu0 %v992
      %1030 = vmatprep.subr.bf16.mxu0 0
      %1031 = vmatpush1.bf16.msra.mxu0 %v1022
      %1032 = vmatprep.subr.bf16.mxu0 0
      %1033 = vmatpush1.bf16.msra.mxu0 0
      %1034 = vmatprep.subr.bf16.mxu0 0
      %1035 = vmatpush1.bf16.msra.mxu0 0
      %1036 = vmatprep.subr.bf16.mxu0 0
      %1037 = vmatpush1.bf16.msra.mxu0 0
      %1038 = vmatprep.subr.bf16.mxu0 0
      %1039 = vmatpush1.bf16.msra.mxu0 0
      %1040 = vmatprep.subr.bf16.mxu0 0
      %1041 = vmatpush1.bf16.msra.mxu0 0
      %1042 = vmatprep.subr.bf16.mxu0 0
      %1043 = vmatpush1.bf16.msra.mxu0 0
      %1044 = vmatprep.subr.bf16.mxu0 0
      %1045 = vmatpush1.bf16.msra.mxu0 0
      %1046 = vmatprep.subr.bf16.mxu0 0
      %1047 = vmatpush1.bf16.msra.mxu0 0
      %1048 = vmatprep.subr.bf16.mxu0 0
      %1049 = vmatpush1.bf16.msra.mxu0 0
      %1050 = vmatprep.subr.bf16.mxu0 0
      %1051 = vmatpush1.bf16.msra.mxu0 0
      %1052 = vmatprep.subr.bf16.mxu0 0
      %1053 = vmatpush1.bf16.msra.mxu0 0
      %1054 = vmatprep.subr.bf16.mxu0 0
      %1055 = vmatpush1.bf16.msra.mxu0 0
      %1056 = vmatprep.mubr.bf16.mxu0 0
      %1057 = vmatmul.mubr.bf16.gmra.mrb[0].mxu0 %v998
      %v1058 = vpop.f32.mrb[0].mxu0
      %v1059 = vadd.f32 %v972, %v1058
      %v1060 = vpop.f32.mrb[0].mxu0
      %v1061 = vpop.f32.mrb[0].mxu0
      %v1062 = vadd.f32 %v972, %v1061
      %v1063 = vpop.f32.mrb[0].mxu0
      %1064 = vmatprep.mubr.bf16.mxu0 0
      %1065 = vmatmul.mubr.bf16.gmra.mrb[0].mxu0 %v1001
      %v1066 = vpop.f32.mrb[0].mxu0
      %v1067 = vadd.f32 %v972, %v1066
      %v1068 = vpop.f32.mrb[0].mxu0
      %v1069 = vpop.f32.mrb[0].mxu0
      %v1070 = vadd.f32 %v972, %v1069
      %v1071 = vpop.f32.mrb[0].mxu0
      %1072 = vmatprep.mubr.bf16.mxu0 0
      %1073 = vmatmul.mubr.bf16.gmra.mrb[0].mxu0 %v1004
      %v1074 = vpop.f32.mrb[0].mxu0
      %v1075 = vadd.f32 %v972, %v1074
      %v1076 = vpop.f32.mrb[0].mxu0
      %v1077 = vpop.f32.mrb[0].mxu0
      %v1078 = vadd.f32 %v972, %v1077
      %v1079 = vpop.f32.mrb[0].mxu0
      %1080 = vmatprep.mubr.bf16.mxu0 0
      %1081 = vmatmul.mubr.bf16.gmra.mrb[0].mxu0 %v1007
      %v1082 = vpop.f32.mrb[0].mxu0
      %v1083 = vadd.f32 %v972, %v1082
      %v1084 = vpop.f32.mrb[0].mxu0
      %v1085 = vpop.f32.mrb[0].mxu0
      %v1086 = vadd.f32 %v972, %v1085
      %v1087 = vpop.f32.mrb[0].mxu0
      %1088 = vmatprep.mubr.bf16.mxu0 0
      %1089 = vmatmul.mubr.bf16.gmra.mrb[0].mxu0 %v1010
      %v1090 = vpop.f32.mrb[0].mxu0
      %v1091 = vadd.f32 %v972, %v1090
      %v1092 = vpop.f32.mrb[0].mxu0
      %v1093 = vpop.f32.mrb[0].mxu0
      %v1094 = vadd.f32 %v972, %v1093
      %v1095 = vpop.f32.mrb[0].mxu0
      %1096 = vmatprep.mubr.bf16.mxu0 0
      %1097 = vmatmul.mubr.bf16.gmra.mrb[0].mxu0 %v1013
      %v1098 = vpop.f32.mrb[0].mxu0
      %v1099 = vadd.f32 %v972, %v1098
      %v1100 = vpop.f32.mrb[0].mxu0
      %v1101 = vpop.f32.mrb[0].mxu0
      %v1102 = vadd.f32 %v972, %v1101
      %v1103 = vpop.f32.mrb[0].mxu0
      %1104 = vmatprep.mubr.bf16.mxu0 0
      %1105 = vmatmul.mubr.bf16.gmra.mrb[0].mxu0 %v1016
      %v1106 = vpop.f32.mrb[0].mxu0
      %v1107 = vadd.f32 %v972, %v1106
      %v1108 = vpop.f32.mrb[0].mxu0
      %v1109 = vpop.f32.mrb[0].mxu0
      %v1110 = vadd.f32 %v972, %v1109
      %v1111 = vpop.f32.mrb[0].mxu0
      %1112 = vmatprep.mubr.bf16.mxu0 0
      %1113 = vmatmul.mubr.bf16.gmra.mrb[0].mxu0 %v1019
      %v1114 = vpop.f32.mrb[0].mxu0
      %v1115 = vadd.f32 %v972, %v1114
      %v1116 = vpop.f32.mrb[0].mxu0
      %v1117 = vpop.f32.mrb[0].mxu0
      %v1118 = vadd.f32 %v972, %v1117
      %v1119 = vpop.f32.mrb[0].mxu0
      %1120 = vdwg.mxu0
      %vm1121 = vcmp.ge.f32.partialorder %v1059, 0.0
      %vm1122 = vcmp.ge.f32.partialorder %v1062, 0.0
      %vm1123 = vcmp.ge.f32.partialorder %v1067, 0.0
      %vm1124 = vcmp.ge.f32.partialorder %v1070, 0.0
      %vm1125 = vcmp.ge.f32.partialorder %v1075, 0.0
      %vm1126 = vcmp.ge.f32.partialorder %v1078, 0.0
      %vm1127 = vcmp.ge.f32.partialorder %v1083, 0.0
      %vm1128 = vcmp.ge.f32.partialorder %v1086, 0.0
      %vm1129 = vcmp.ge.f32.partialorder %v1091, 0.0
      %vm1130 = vcmp.ge.f32.partialorder %v1094, 0.0
      %vm1131 = vcmp.ge.f32.partialorder %v1099, 0.0
      %vm1132 = vcmp.ge.f32.partialorder %v1102, 0.0
      %vm1133 = vcmp.ge.f32.partialorder %v1107, 0.0
      %vm1134 = vcmp.ge.f32.partialorder %v1110, 0.0
      %vm1135 = vcmp.ge.f32.partialorder %v1115, 0.0
      %vm1136 = vcmp.ge.f32.partialorder %v1118, 0.0
      %v1137 = vmul.f32 %v1059, 0.2
      %v1138 = vmul.f32 %v1062, 0.2
      %v1139 = vmul.f32 %v1067, 0.2
      %v1140 = vmul.f32 %v1070, 0.2
      %v1141 = vmul.f32 %v1075, 0.2
      %v1142 = vmul.f32 %v1078, 0.2
      %v1143 = vmul.f32 %v1083, 0.2
      %v1144 = vmul.f32 %v1086, 0.2
      %v1145 = vmul.f32 %v1091, 0.2
      %v1146 = vmul.f32 %v1094, 0.2
      %v1147 = vmul.f32 %v1099, 0.2
      %v1148 = vmul.f32 %v1102, 0.2
      %v1149 = vmul.f32 %v1107, 0.2
      %v1150 = vmul.f32 %v1110, 0.2
      %v1151 = vmul.f32 %v1115, 0.2
      %v1152 = vmul.f32 %v1118, 0.2
      %v1153 = vsel %vm1121, %v1059, %v1137
      %v1154 = vsel %vm1122, %v1062, %v1138
      %v1155 = vsel %vm1123, %v1067, %v1139
      %v1156 = vsel %vm1124, %v1070, %v1140
      %v1157 = vsel %vm1125, %v1075, %v1141
      %v1158 = vsel %vm1126, %v1078, %v1142
      %v1159 = vsel %vm1127, %v1083, %v1143
      %v1160 = vsel %vm1128, %v1086, %v1144
      %v1161 = vsel %vm1129, %v1091, %v1145
      %v1162 = vsel %vm1130, %v1094, %v1146
      %v1163 = vsel %vm1131, %v1099, %v1147
      %v1164 = vsel %vm1132, %v1102, %v1148
      %v1165 = vsel %vm1133, %v1107, %v1149
      %v1166 = vsel %vm1134, %v1110, %v1150
      %v1167 = vsel %vm1135, %v1115, %v1151
      %v1168 = vsel %vm1136, %v1118, %v1152
      %v1169 = vpack.c.bf16 %v1154, %v1153
      %v1170 = vpack.c.bf16 %v1156, %v1155
      %v1171 = vpack.c.bf16 %v1158, %v1157
      %v1172 = vpack.c.bf16 %v1160, %v1159
      %v1173 = vpack.c.bf16 %v1162, %v1161
      %v1174 = vpack.c.bf16 %v1164, %v1163
      %v1175 = vpack.c.bf16 %v1166, %v1165
      %v1176 = vpack.c.bf16 %v1168, %v1167
      %v1177 = vld [vmem:[%s8] sm:$0xf]
      %v1178 = vld [vmem:[%s8 + $0x4] sm:$0xf]
      %v1179 = vld [vmem:[%s8 + $0x8] sm:$0xf]
      %v1180 = vld [vmem:[%s8 + $0xc] sm:$0xf]
      %v1181 = vld [vmem:[%s8 + $0x10] sm:$0xf]
      %v1182 = vld [vmem:[%s8 + $0x14] sm:$0xf]
      %v1183 = vld [vmem:[%s8 + $0x18] sm:$0xf]
      %v1184 = vld [vmem:[%s8 + $0x1c] sm:$0x3]
      %v1185 = vld [vmem:[%s9] sm:$0x1]
      %v1187 = vlaneseq
      %v1188 = vshrl.u32 %v1187, 7
      %v1189 = vsub.s32 0, %v1188
      %v1190 = vrot.slane %v1185, %v1189
      %v1200 = vunpack.c.l.b16 %v1177
      %v1201 = vunpack.c.l.b16 %v1178
      %v1202 = vunpack.c.l.b16 %v1179
      %v1203 = vunpack.c.l.b16 %v1180
      %v1204 = vunpack.c.l.b16 %v1181
      %v1205 = vunpack.c.l.b16 %v1182
      %v1206 = vunpack.c.l.b16 %v1183
      %v1207 = vunpack.c.l.b16 %v1184
      %v1208 = vpack.c.b16 %v1201, %v1200
      %v1209 = vpack.c.b16 %v1203, %v1202
      %v1210 = vpack.c.b16 %v1205, %v1204
      %v1211 = vpack.c.b16 %v1207, %v1206
      %v1216 = vsel %vm591, %v1169, 0
      %v1219 = vsel %vm591, %v1170, 0
      %v1222 = vsel %vm591, %v1171, 0
      %v1225 = vsel %vm591, %v1172, 0
      %v1228 = vsel %vm591, %v1173, 0
      %v1231 = vsel %vm591, %v1174, 0
      %v1234 = vsel %vm591, %v1175, 0
      %v1237 = vsel %vm591, %v1176, 0
      %v1240 = vsel %vm616, %v1211, 0
      %1242 = vmatprep.subr.bf16.mxu0 0
      %1243 = vmatpush1.bf16.msra.mxu0 %v1208
      %1244 = vmatprep.subr.bf16.mxu0 0
      %1245 = vmatpush1.bf16.msra.mxu0 %v1209
      %1246 = vmatprep.subr.bf16.mxu0 0
      %1247 = vmatpush1.bf16.msra.mxu0 %v1210
      %1248 = vmatprep.subr.bf16.mxu0 0
      %1249 = vmatpush1.bf16.msra.mxu0 %v1240
      %1250 = vmatprep.subr.bf16.mxu0 0
      %1251 = vmatpush1.bf16.msra.mxu0 0
      %1252 = vmatprep.subr.bf16.mxu0 0
      %1253 = vmatpush1.bf16.msra.mxu0 0
      %1254 = vmatprep.subr.bf16.mxu0 0
      %1255 = vmatpush1.bf16.msra.mxu0 0
      %1256 = vmatprep.subr.bf16.mxu0 0
      %1257 = vmatpush1.bf16.msra.mxu0 0
      %1258 = vmatprep.subr.bf16.mxu0 0
      %1259 = vmatpush1.bf16.msra.mxu0 0
      %1260 = vmatprep.subr.bf16.mxu0 0
      %1261 = vmatpush1.bf16.msra.mxu0 0
      %1262 = vmatprep.subr.bf16.mxu0 0
      %1263 = vmatpush1.bf16.msra.mxu0 0
      %1264 = vmatprep.subr.bf16.mxu0 0
      %1265 = vmatpush1.bf16.msra.mxu0 0
      %1266 = vmatprep.subr.bf16.mxu0 0
      %1267 = vmatpush1.bf16.msra.mxu0 0
      %1268 = vmatprep.subr.bf16.mxu0 0
      %1269 = vmatpush1.bf16.msra.mxu0 0
      %1270 = vmatprep.subr.bf16.mxu0 0
      %1271 = vmatpush1.bf16.msra.mxu0 0
      %1272 = vmatprep.subr.bf16.mxu0 0
      %1273 = vmatpush1.bf16.msra.mxu0 0
      %1274 = vmatprep.mubr.bf16.mxu0 0
      %1275 = vmatmul.mubr.bf16.gmra.mrb[0].mxu0 %v1216
      %v1276 = vpop.f32.mrb[0].mxu0
      %v1277 = vadd.f32 %v1190, %v1276
      %v1278 = vpop.f32.mrb[0].mxu0
      %v1279 = vpop.f32.mrb[0].mxu0
      %v1280 = vadd.f32 %v1190, %v1279
      %v1281 = vpop.f32.mrb[0].mxu0
      %1282 = vmatprep.mubr.bf16.mxu0 0
      %1283 = vmatmul.mubr.bf16.gmra.mrb[0].mxu0 %v1219
      %v1284 = vpop.f32.mrb[0].mxu0
      %v1285 = vadd.f32 %v1190, %v1284
      %v1286 = vpop.f32.mrb[0].mxu0
      %v1287 = vpop.f32.mrb[0].mxu0
      %v1288 = vadd.f32 %v1190, %v1287
      %v1289 = vpop.f32.mrb[0].mxu0
      %1290 = vmatprep.mubr.bf16.mxu0 0
      %1291 = vmatmul.mubr.bf16.gmra.mrb[0].mxu0 %v1222
      %v1292 = vpop.f32.mrb[0].mxu0
      %v1293 = vadd.f32 %v1190, %v1292
      %v1294 = vpop.f32.mrb[0].mxu0
      %v1295 = vpop.f32.mrb[0].mxu0
      %v1296 = vadd.f32 %v1190, %v1295
      %v1297 = vpop.f32.mrb[0].mxu0
      %1298 = vmatprep.mubr.bf16.mxu0 0
      %1299 = vmatmul.mubr.bf16.gmra.mrb[0].mxu0 %v1225
      %v1300 = vpop.f32.mrb[0].mxu0
      %v1301 = vadd.f32 %v1190, %v1300
      %v1302 = vpop.f32.mrb[0].mxu0
      %v1303 = vpop.f32.mrb[0].mxu0
      %v1304 = vadd.f32 %v1190, %v1303
      %v1305 = vpop.f32.mrb[0].mxu0
      %1306 = vmatprep.mubr.bf16.mxu0 0
      %1307 = vmatmul.mubr.bf16.gmra.mrb[0].mxu0 %v1228
      %v1308 = vpop.f32.mrb[0].mxu0
      %v1309 = vadd.f32 %v1190, %v1308
      %v1310 = vpop.f32.mrb[0].mxu0
      %v1311 = vpop.f32.mrb[0].mxu0
      %v1312 = vadd.f32 %v1190, %v1311
      %v1313 = vpop.f32.mrb[0].mxu0
      %1314 = vmatprep.mubr.bf16.mxu0 0
      %1315 = vmatmul.mubr.bf16.gmra.mrb[0].mxu0 %v1231
      %v1316 = vpop.f32.mrb[0].mxu0
      %v1317 = vadd.f32 %v1190, %v1316
      %v1318 = vpop.f32.mrb[0].mxu0
      %v1319 = vpop.f32.mrb[0].mxu0
      %v1320 = vadd.f32 %v1190, %v1319
      %v1321 = vpop.f32.mrb[0].mxu0
      %1322 = vmatprep.mubr.bf16.mxu0 0
      %1323 = vmatmul.mubr.bf16.gmra.mrb[0].mxu0 %v1234
      %v1324 = vpop.f32.mrb[0].mxu0
      %v1325 = vadd.f32 %v1190, %v1324
      %v1326 = vpop.f32.mrb[0].mxu0
      %v1327 = vpop.f32.mrb[0].mxu0
      %v1328 = vadd.f32 %v1190, %v1327
      %v1329 = vpop.f32.mrb[0].mxu0
      %1330 = vmatprep.mubr.bf16.mxu0 0
      %1331 = vmatmul.mubr.bf16.gmra.mrb[0].mxu0 %v1237
      %v1332 = vpop.f32.mrb[0].mxu0
      %v1333 = vadd.f32 %v1190, %v1332
      %v1334 = vpop.f32.mrb[0].mxu0
      %v1335 = vpop.f32.mrb[0].mxu0
      %v1336 = vadd.f32 %v1190, %v1335
      %v1337 = vpop.f32.mrb[0].mxu0
      %1338 = vdwg.mxu0
      %v1339 = vmul.f32 %v1277, 0.2
      %v1340 = vmul.f32 %v1280, 0.2
      %v1341 = vmul.f32 %v1285, 0.2
      %v1342 = vmul.f32 %v1288, 0.2
      %v1343 = vmul.f32 %v1293, 0.2
      %v1344 = vmul.f32 %v1296, 0.2
      %v1345 = vmul.f32 %v1301, 0.2
      %v1346 = vmul.f32 %v1304, 0.2
      %v1347 = vmul.f32 %v1309, 0.2
      %v1348 = vmul.f32 %v1312, 0.2
      %v1349 = vmul.f32 %v1317, 0.2
      %v1350 = vmul.f32 %v1320, 0.2
      %v1351 = vmul.f32 %v1325, 0.2
      %v1352 = vmul.f32 %v1328, 0.2
      %v1353 = vmul.f32 %v1333, 0.2
      %v1354 = vmul.f32 %v1336, 0.2
      %v1355 = vadd.f32 %v717, %v1339
      %v1356 = vadd.f32 %v718, %v1340
      %v1357 = vadd.f32 %v719, %v1341
      %v1358 = vadd.f32 %v720, %v1342
      %v1359 = vadd.f32 %v721, %v1343
      %v1360 = vadd.f32 %v722, %v1344
      %v1361 = vadd.f32 %v723, %v1345
      %v1362 = vadd.f32 %v724, %v1346
      %v1363 = vadd.f32 %v725, %v1347
      %v1364 = vadd.f32 %v726, %v1348
      %v1365 = vadd.f32 %v727, %v1349
      %v1366 = vadd.f32 %v728, %v1350
      %v1367 = vadd.f32 %v729, %v1351
      %v1368 = vadd.f32 %v730, %v1352
      %v1369 = vadd.f32 %v731, %v1353
      %v1370 = vadd.f32 %v732, %v1354
      %v1371 = vadd.f32 %v1355, %v481
      %v1372 = vadd.f32 %v1356, %v482
      %v1373 = vadd.f32 %v1357, %v483
      %v1374 = vadd.f32 %v1358, %v484
      %v1375 = vadd.f32 %v1359, %v485
      %v1376 = vadd.f32 %v1360, %v486
      %v1377 = vadd.f32 %v1361, %v487
      %v1378 = vadd.f32 %v1362, %v488
      %v1379 = vadd.f32 %v1363, %v489
      %v1380 = vadd.f32 %v1364, %v490
      %v1381 = vadd.f32 %v1365, %v491
      %v1382 = vadd.f32 %v1366, %v492
      %v1383 = vadd.f32 %v1367, %v493
      %v1384 = vadd.f32 %v1368, %v494
      %v1385 = vadd.f32 %v1369, %v495
      %v1386 = vadd.f32 %v1370, %v496
      %1387 = vst.msk [vmem:[%s472] sm:$0xff] %vm591, %v1371
      %1388 = vst.msk [vmem:[%s472 + $0x8] sm:$0xff] %vm591, %v1372
      %1389 = vst.msk [vmem:[%s472 + $0x10] sm:$0xff] %vm591, %v1373
      %1390 = vst.msk [vmem:[%s472 + $0x18] sm:$0xff] %vm591, %v1374
      %1391 = vst.msk [vmem:[%s472 + $0x20] sm:$0xff] %vm591, %v1375
      %1392 = vst.msk [vmem:[%s472 + $0x28] sm:$0xff] %vm591, %v1376
      %1393 = vst.msk [vmem:[%s472 + $0x30] sm:$0xff] %vm591, %v1377
      %1394 = vst.msk [vmem:[%s472 + $0x38] sm:$0xff] %vm591, %v1378
      %1395 = vst.msk [vmem:[%s472 + $0x40] sm:$0xff] %vm591, %v1379
      %1396 = vst.msk [vmem:[%s472 + $0x48] sm:$0xff] %vm591, %v1380
      %1397 = vst.msk [vmem:[%s472 + $0x50] sm:$0xff] %vm591, %v1381
      %1398 = vst.msk [vmem:[%s472 + $0x58] sm:$0xff] %vm591, %v1382
      %1399 = vst.msk [vmem:[%s472 + $0x60] sm:$0xff] %vm591, %v1383
      %1400 = vst.msk [vmem:[%s472 + $0x68] sm:$0xff] %vm591, %v1384
      %1401 = vst.msk [vmem:[%s472 + $0x70] sm:$0xff] %vm591, %v1385
      %1402 = vst.msk [vmem:[%s472 + $0x78] sm:$0xff] %vm591, %v1386
      %v1403 = vsel %vm591, %v1371, 0.0
      %1404 = vadd.xlane.f32.xlu0 %v1403
      %v1405 = vpop.xlane.xlu0 %1404
      %v1406 = vsel %vm591, %v1372, 0.0
      %1407 = vadd.xlane.f32.xlu0 %v1406
      %v1408 = vpop.xlane.xlu0 %1407
      %v1409 = vsel %vm591, %v1373, 0.0
      %1410 = vadd.xlane.f32.xlu0 %v1409
      %v1411 = vpop.xlane.xlu0 %1410
      %v1412 = vsel %vm591, %v1374, 0.0
      %1413 = vadd.xlane.f32.xlu0 %v1412
      %v1414 = vpop.xlane.xlu0 %1413
      %v1415 = vsel %vm591, %v1375, 0.0
      %1416 = vadd.xlane.f32.xlu0 %v1415
      %v1417 = vpop.xlane.xlu0 %1416
      %v1418 = vsel %vm591, %v1376, 0.0
      %1419 = vadd.xlane.f32.xlu0 %v1418
      %v1420 = vpop.xlane.xlu0 %1419
      %v1421 = vsel %vm591, %v1377, 0.0
      %1422 = vadd.xlane.f32.xlu0 %v1421
      %v1423 = vpop.xlane.xlu0 %1422
      %v1424 = vsel %vm591, %v1378, 0.0
      %1425 = vadd.xlane.f32.xlu0 %v1424
      %v1426 = vpop.xlane.xlu0 %1425
      %v1427 = vsel %vm591, %v1379, 0.0
      %1428 = vadd.xlane.f32.xlu0 %v1427
      %v1429 = vpop.xlane.xlu0 %1428
      %v1430 = vsel %vm591, %v1380, 0.0
      %1431 = vadd.xlane.f32.xlu0 %v1430
      %v1432 = vpop.xlane.xlu0 %1431
      %v1433 = vsel %vm591, %v1381, 0.0
      %1434 = vadd.xlane.f32.xlu0 %v1433
      %v1435 = vpop.xlane.xlu0 %1434
      %v1436 = vsel %vm591, %v1382, 0.0
      %1437 = vadd.xlane.f32.xlu0 %v1436
      %v1438 = vpop.xlane.xlu0 %1437
      %v1439 = vsel %vm591, %v1383, 0.0
      %1440 = vadd.xlane.f32.xlu0 %v1439
      %v1441 = vpop.xlane.xlu0 %1440
      %v1442 = vsel %vm591, %v1384, 0.0
      %1443 = vadd.xlane.f32.xlu0 %v1442
      %v1444 = vpop.xlane.xlu0 %1443
      %v1445 = vsel %vm591, %v1385, 0.0
      %1446 = vadd.xlane.f32.xlu0 %v1445
      %v1447 = vpop.xlane.xlu0 %1446
      %v1448 = vsel %vm591, %v1386, 0.0
      %1449 = vadd.xlane.f32.xlu0 %v1448
      %v1450 = vpop.xlane.xlu0 %1449
      %v1451 = vrcp.pop 60.0
      %v1452 = vmul.f32 %v1405, %v1451
      %v1453 = vmul.f32 %v1408, %v1451
      %v1454 = vmul.f32 %v1411, %v1451
      %v1455 = vmul.f32 %v1414, %v1451
      %v1456 = vmul.f32 %v1417, %v1451
      %v1457 = vmul.f32 %v1420, %v1451
      %v1458 = vmul.f32 %v1423, %v1451
      %v1459 = vmul.f32 %v1426, %v1451
      %v1460 = vmul.f32 %v1429, %v1451
      %v1461 = vmul.f32 %v1432, %v1451
      %v1462 = vmul.f32 %v1435, %v1451
      %v1463 = vmul.f32 %v1438, %v1451
      %v1464 = vmul.f32 %v1441, %v1451
      %v1465 = vmul.f32 %v1444, %v1451
      %v1466 = vmul.f32 %v1447, %v1451
      %v1467 = vmul.f32 %v1450, %v1451
      %v1468 = vsub.f32 %v1371, %v1452
      %v1469 = vsub.f32 %v1372, %v1453
      %v1470 = vsub.f32 %v1373, %v1454
      %v1471 = vsub.f32 %v1374, %v1455
      %v1472 = vsub.f32 %v1375, %v1456
      %v1473 = vsub.f32 %v1376, %v1457
      %v1474 = vsub.f32 %v1377, %v1458
      %v1475 = vsub.f32 %v1378, %v1459
      %v1476 = vsub.f32 %v1379, %v1460
      %v1477 = vsub.f32 %v1380, %v1461
      %v1478 = vsub.f32 %v1381, %v1462
      %v1479 = vsub.f32 %v1382, %v1463
      %v1480 = vsub.f32 %v1383, %v1464
      %v1481 = vsub.f32 %v1384, %v1465
      %v1482 = vsub.f32 %v1385, %v1466
      %v1483 = vsub.f32 %v1386, %v1467
      %v1484 = vmul.f32 %v1468, %v1468
      %v1485 = vmul.f32 %v1469, %v1469
      %v1486 = vmul.f32 %v1470, %v1470
      %v1487 = vmul.f32 %v1471, %v1471
      %v1488 = vmul.f32 %v1472, %v1472
      %v1489 = vmul.f32 %v1473, %v1473
      %v1490 = vmul.f32 %v1474, %v1474
      %v1491 = vmul.f32 %v1475, %v1475
      %v1492 = vmul.f32 %v1476, %v1476
      %v1493 = vmul.f32 %v1477, %v1477
      %v1494 = vmul.f32 %v1478, %v1478
      %v1495 = vmul.f32 %v1479, %v1479
      %v1496 = vmul.f32 %v1480, %v1480
      %v1497 = vmul.f32 %v1481, %v1481
      %v1498 = vmul.f32 %v1482, %v1482
      %v1499 = vmul.f32 %v1483, %v1483
      %v1500 = vsel %vm591, %v1484, 0.0
      %1501 = vadd.xlane.f32.xlu0 %v1500
      %v1502 = vpop.xlane.xlu0 %1501
      %v1503 = vsel %vm591, %v1485, 0.0
      %1504 = vadd.xlane.f32.xlu0 %v1503
      %v1505 = vpop.xlane.xlu0 %1504
      %v1506 = vsel %vm591, %v1486, 0.0
      %1507 = vadd.xlane.f32.xlu0 %v1506
      %v1508 = vpop.xlane.xlu0 %1507
      %v1509 = vsel %vm591, %v1487, 0.0
      %1510 = vadd.xlane.f32.xlu0 %v1509
      %v1511 = vpop.xlane.xlu0 %1510
      %v1512 = vsel %vm591, %v1488, 0.0
      %1513 = vadd.xlane.f32.xlu0 %v1512
      %v1514 = vpop.xlane.xlu0 %1513
      %v1515 = vsel %vm591, %v1489, 0.0
      %1516 = vadd.xlane.f32.xlu0 %v1515
      %v1517 = vpop.xlane.xlu0 %1516
      %v1518 = vsel %vm591, %v1490, 0.0
      %1519 = vadd.xlane.f32.xlu0 %v1518
      %v1520 = vpop.xlane.xlu0 %1519
      %v1521 = vsel %vm591, %v1491, 0.0
      %1522 = vadd.xlane.f32.xlu0 %v1521
      %v1523 = vpop.xlane.xlu0 %1522
      %v1524 = vsel %vm591, %v1492, 0.0
      %1525 = vadd.xlane.f32.xlu0 %v1524
      %v1526 = vpop.xlane.xlu0 %1525
      %v1527 = vsel %vm591, %v1493, 0.0
      %1528 = vadd.xlane.f32.xlu0 %v1527
      %v1529 = vpop.xlane.xlu0 %1528
      %v1530 = vsel %vm591, %v1494, 0.0
      %1531 = vadd.xlane.f32.xlu0 %v1530
      %v1532 = vpop.xlane.xlu0 %1531
      %v1533 = vsel %vm591, %v1495, 0.0
      %1534 = vadd.xlane.f32.xlu0 %v1533
      %v1535 = vpop.xlane.xlu0 %1534
      %v1536 = vsel %vm591, %v1496, 0.0
      %1537 = vadd.xlane.f32.xlu0 %v1536
      %v1538 = vpop.xlane.xlu0 %1537
      %v1539 = vsel %vm591, %v1497, 0.0
      %1540 = vadd.xlane.f32.xlu0 %v1539
      %v1541 = vpop.xlane.xlu0 %1540
      %v1542 = vsel %vm591, %v1498, 0.0
      %1543 = vadd.xlane.f32.xlu0 %v1542
      %v1544 = vpop.xlane.xlu0 %1543
      %v1545 = vsel %vm591, %v1499, 0.0
      %1546 = vadd.xlane.f32.xlu0 %v1545
      %v1547 = vpop.xlane.xlu0 %1546
      %v1548 = vmul.f32 %v1502, %v1451
      %v1549 = vmul.f32 %v1505, %v1451
      %v1550 = vmul.f32 %v1508, %v1451
      %v1551 = vmul.f32 %v1511, %v1451
      %v1552 = vmul.f32 %v1514, %v1451
      %v1553 = vmul.f32 %v1517, %v1451
      %v1554 = vmul.f32 %v1520, %v1451
      %v1555 = vmul.f32 %v1523, %v1451
      %v1556 = vmul.f32 %v1526, %v1451
      %v1557 = vmul.f32 %v1529, %v1451
      %v1558 = vmul.f32 %v1532, %v1451
      %v1559 = vmul.f32 %v1535, %v1451
      %v1560 = vmul.f32 %v1538, %v1451
      %v1561 = vmul.f32 %v1541, %v1451
      %v1562 = vmul.f32 %v1544, %v1451
      %v1563 = vmul.f32 %v1547, %v1451
      %v1564 = vadd.f32 %v1548, 1e-05
      %v1565 = vadd.f32 %v1549, 1e-05
      %v1566 = vadd.f32 %v1550, 1e-05
      %v1567 = vadd.f32 %v1551, 1e-05
      %v1568 = vadd.f32 %v1552, 1e-05
      %v1569 = vadd.f32 %v1553, 1e-05
      %v1570 = vadd.f32 %v1554, 1e-05
      %v1571 = vadd.f32 %v1555, 1e-05
      %v1572 = vadd.f32 %v1556, 1e-05
      %v1573 = vadd.f32 %v1557, 1e-05
      %v1574 = vadd.f32 %v1558, 1e-05
      %v1575 = vadd.f32 %v1559, 1e-05
      %v1576 = vadd.f32 %v1560, 1e-05
      %v1577 = vadd.f32 %v1561, 1e-05
      %v1578 = vadd.f32 %v1562, 1e-05
      %v1579 = vadd.f32 %v1563, 1e-05
      %v1580 = vrsqrt.pop %v1564
      %v1581 = vrsqrt.pop %v1565
      %v1582 = vrsqrt.pop %v1566
      %v1583 = vrsqrt.pop %v1567
      %v1584 = vrsqrt.pop %v1568
      %v1585 = vrsqrt.pop %v1569
      %v1586 = vrsqrt.pop %v1570
      %v1587 = vrsqrt.pop %v1571
      %v1588 = vrsqrt.pop %v1572
      %v1589 = vrsqrt.pop %v1573
      %v1590 = vrsqrt.pop %v1574
      %v1591 = vrsqrt.pop %v1575
      %v1592 = vrsqrt.pop %v1576
      %v1593 = vrsqrt.pop %v1577
      %v1594 = vrsqrt.pop %v1578
      %v1595 = vrsqrt.pop %v1579
      %v1596 = vmul.f32 %v1468, %v1580
      %v1597 = vmul.f32 %v1469, %v1581
      %v1598 = vmul.f32 %v1470, %v1582
      %v1599 = vmul.f32 %v1471, %v1583
      %v1600 = vmul.f32 %v1472, %v1584
      %v1601 = vmul.f32 %v1473, %v1585
      %v1602 = vmul.f32 %v1474, %v1586
      %v1603 = vmul.f32 %v1475, %v1587
      %v1604 = vmul.f32 %v1476, %v1588
      %v1605 = vmul.f32 %v1477, %v1589
      %v1606 = vmul.f32 %v1478, %v1590
      %v1607 = vmul.f32 %v1479, %v1591
      %v1608 = vmul.f32 %v1480, %v1592
      %v1609 = vmul.f32 %v1481, %v1593
      %v1610 = vmul.f32 %v1482, %v1594
      %v1611 = vmul.f32 %v1483, %v1595
      %v1612 = vld [vmem:[%s10] sm:$0x1]
      %v1614 = vlaneseq
      %v1615 = vshrl.u32 %v1614, 7
      %v1616 = vsub.s32 0, %v1615
      %v1617 = vrot.slane %v1612, %v1616
      %v1619 = vmul.f32 %v1596, %v1617
      %v1620 = vmul.f32 %v1597, %v1617
      %v1621 = vmul.f32 %v1598, %v1617
      %v1622 = vmul.f32 %v1599, %v1617
      %v1623 = vmul.f32 %v1600, %v1617
      %v1624 = vmul.f32 %v1601, %v1617
      %v1625 = vmul.f32 %v1602, %v1617
      %v1626 = vmul.f32 %v1603, %v1617
      %v1627 = vmul.f32 %v1604, %v1617
      %v1628 = vmul.f32 %v1605, %v1617
      %v1629 = vmul.f32 %v1606, %v1617
      %v1630 = vmul.f32 %v1607, %v1617
      %v1631 = vmul.f32 %v1608, %v1617
      %v1632 = vmul.f32 %v1609, %v1617
      %v1633 = vmul.f32 %v1610, %v1617
      %v1634 = vmul.f32 %v1611, %v1617
      %v1635 = vld [vmem:[%s11] sm:$0x1]
      %v1637 = vlaneseq
      %v1638 = vshrl.u32 %v1637, 7
      %v1639 = vsub.s32 0, %v1638
      %v1640 = vrot.slane %v1635, %v1639
      %v1642 = vadd.f32 %v1619, %v1640
      %v1643 = vadd.f32 %v1620, %v1640
      %v1644 = vadd.f32 %v1621, %v1640
      %v1645 = vadd.f32 %v1622, %v1640
      %v1646 = vadd.f32 %v1623, %v1640
      %v1647 = vadd.f32 %v1624, %v1640
      %v1648 = vadd.f32 %v1625, %v1640
      %v1649 = vadd.f32 %v1626, %v1640
      %v1650 = vadd.f32 %v1627, %v1640
      %v1651 = vadd.f32 %v1628, %v1640
      %v1652 = vadd.f32 %v1629, %v1640
      %v1653 = vadd.f32 %v1630, %v1640
      %v1654 = vadd.f32 %v1631, %v1640
      %v1655 = vadd.f32 %v1632, %v1640
      %v1656 = vadd.f32 %v1633, %v1640
      %v1657 = vadd.f32 %v1634, %v1640
      %v1658 = vpack.c.bf16 %v1643, %v1642
      %v1659 = vpack.c.bf16 %v1645, %v1644
      %v1660 = vpack.c.bf16 %v1647, %v1646
      %v1661 = vpack.c.bf16 %v1649, %v1648
      %v1662 = vpack.c.bf16 %v1651, %v1650
      %v1663 = vpack.c.bf16 %v1653, %v1652
      %v1664 = vpack.c.bf16 %v1655, %v1654
      %v1665 = vpack.c.bf16 %v1657, %v1656
      %v1674 = vunpack.c.l.b16 %v1658
      %v1675 = vunpack.c.h.b16 %v1658
      %v1676 = vunpack.c.l.b16 %v1659
      %v1677 = vunpack.c.h.b16 %v1659
      %v1678 = vunpack.c.l.b16 %v1660
      %v1679 = vunpack.c.h.b16 %v1660
      %v1680 = vunpack.c.l.b16 %v1661
      %v1681 = vunpack.c.h.b16 %v1661
      %v1682 = vunpack.c.l.b16 %v1662
      %v1683 = vunpack.c.h.b16 %v1662
      %v1684 = vunpack.c.l.b16 %v1663
      %v1685 = vunpack.c.h.b16 %v1663
      %v1686 = vunpack.c.l.b16 %v1664
      %v1687 = vunpack.c.h.b16 %v1664
      %v1688 = vunpack.c.l.b16 %v1665
      %v1689 = vunpack.c.h.b16 %v1665
      %v1690 = vpack.c.b16 %v1674, %v1674
      %v1691 = vpack.c.b16 %v1675, %v1675
      %v1692 = vpack.c.b16 %v1676, %v1676
      %v1693 = vpack.c.b16 %v1677, %v1677
      %v1694 = vpack.c.b16 %v1678, %v1678
      %v1695 = vpack.c.b16 %v1679, %v1679
      %v1696 = vpack.c.b16 %v1680, %v1680
      %v1697 = vpack.c.b16 %v1681, %v1681
      %v1698 = vpack.c.b16 %v1682, %v1682
      %v1699 = vpack.c.b16 %v1683, %v1683
      %v1700 = vpack.c.b16 %v1684, %v1684
      %v1701 = vpack.c.b16 %v1685, %v1685
      %v1702 = vpack.c.b16 %v1686, %v1686
      %v1703 = vpack.c.b16 %v1687, %v1687
      %v1704 = vpack.c.b16 %v1688, %v1688
      %v1705 = vpack.c.b16 %v1689, %v1689
      %vm1722 = vcmask 486400
      %1723 = vst.msk [vmem:[%s478] sm:$0xf] %vm1722, %v1690
      %1724 = vst.msk [vmem:[%s478 + $0x4] sm:$0xf] %vm1722, %v1691
      %1725 = vst.msk [vmem:[%s478 + $0x8] sm:$0xf] %vm1722, %v1692
      %1726 = vst.msk [vmem:[%s478 + $0xc] sm:$0xf] %vm1722, %v1693
      %1727 = vst.msk [vmem:[%s478 + $0x10] sm:$0xf] %vm1722, %v1694
      %1728 = vst.msk [vmem:[%s478 + $0x14] sm:$0xf] %vm1722, %v1695
      %1729 = vst.msk [vmem:[%s478 + $0x18] sm:$0xf] %vm1722, %v1696
      %1730 = vst.msk [vmem:[%s478 + $0x1c] sm:$0xf] %vm1722, %v1697
      %1731 = vst.msk [vmem:[%s478 + $0x20] sm:$0xf] %vm1722, %v1698
      %1732 = vst.msk [vmem:[%s478 + $0x24] sm:$0xf] %vm1722, %v1699
      %1733 = vst.msk [vmem:[%s478 + $0x28] sm:$0xf] %vm1722, %v1700
      %1734 = vst.msk [vmem:[%s478 + $0x2c] sm:$0xf] %vm1722, %v1701
      %1735 = vst.msk [vmem:[%s478 + $0x30] sm:$0xf] %vm1722, %v1702
      %1736 = vst.msk [vmem:[%s478 + $0x34] sm:$0xf] %vm1722, %v1703
      %1737 = vst.msk [vmem:[%s478 + $0x38] sm:$0xf] %vm1722, %v1704
      %1738 = vst.msk [vmem:[%s478 + $0x3c] sm:$0xf] %vm1722, %v1705
      %s1739 = smul.u32 16, %s25
      %p1740 = scmp.lt.s32.totalorder %s1739, 63
      %s1741 = scalar_select %p1740, %s1739, 63
      %s1742 = smul.addr %s1741, 8
      %s1743 = scalar_lea.vmem %s12, %s1742
      %s1744 = smul.u32 16, %s25
      %p1745 = scmp.lt.s32.totalorder %s1744, 63
      %s1746 = scalar_select %p1745, %s1744, 63
      %s1747 = smul.addr %s1746, 4
      %s1748 = scalar_lea.vmem %s13, %s1747
      // Predicated region
      $region69: #{elcs_forward.8} parent=67 // pred_check
        %p1749 = pneg %p305
      $region70: #{elcs_forward.8} parent=67 // pred_check_branch
        %1751 = sbr.rel (%p1749) target = $region72
      $region71: #{elcs_forward.8} parent=67 // pred_region
        %s1752 = smul.u32 16, %s25
      $region72: #{elcs_forward.8} parent=67 // pred_fallthru
        _
      // Predicated region
      $region73: #{elcs_forward.8} parent=67 // pred_check
        %p1753 = pneg %p331
      $region74: #{elcs_forward.8} parent=67 // pred_check_branch
        %1755 = sbr.rel (%p1753) target = $region76
      $region75: #{elcs_forward.8} parent=67 // pred_region
        %s1756 = smul.u32 16, %s25
      $region76: #{elcs_forward.8} parent=67 // pred_fallthru
        _
    $region68: #{elcs_forward.8} parent=5 // pred_fallthru
      _
    %p1757 = scmp.le.s32.totalorder 2, %s20
    // Predicated region
    $region77: #{elcs_forward.8} parent=5 // pred_check
      %p1758 = pneg %p1757
    $region78: #{elcs_forward.8} parent=5 // pred_check_branch
      %1760 = sbr.rel (%p1758) target = $region80
    $region79: #{elcs_forward.8} parent=5 // pred_region
      %s1761 = ssub.s32 %s20, 2
      // Predicated region
      $region81: #{elcs_forward.8} parent=79 // pred_check
        %p1762 = pneg %p311
      $region82: #{elcs_forward.8} parent=79 // pred_check_branch
        %1764 = sbr.rel (%p1762) target = $region84
      $region83: #{elcs_forward.8} parent=79 // pred_region
        %s1765 = smul.u32 16, %s26
        %p1766 = scmp.lt.s32.totalorder %s1765, 63
        %s1767 = scalar_select %p1766, %s1765, 63
        %s1768 = smul.addr %s1767, 8
        %s1769 = scalar_lea.vmem %s12, %s1768
      $region84: #{elcs_forward.8} parent=79 // pred_fallthru
        _
      // Predicated region
      $region85: #{elcs_forward.8} parent=79 // pred_check
        %p1770 = pneg %p337
      $region86: #{elcs_forward.8} parent=79 // pred_check_branch
        %1772 = sbr.rel (%p1770) target = $region88
      $region87: #{elcs_forward.8} parent=79 // pred_region
        %s1773 = smul.u32 16, %s26
        %p1774 = scmp.lt.s32.totalorder %s1773, 63
        %s1775 = scalar_select %p1774, %s1773, 63
        %s1776 = smul.addr %s1775, 4
        %s1777 = scalar_lea.vmem %s13, %s1776
      $region88: #{elcs_forward.8} parent=79 // pred_fallthru
        _
    $region80: #{elcs_forward.8} parent=5 // pred_fallthru
      _
  $region6: #{elcs_forward.8} parent=0 // loop_footer
    %s24 = sadd.s32 1, %s20
  $region7: #{elcs_forward.8} parent=0 // loop_footer_branch
    %19 = sbr.rel target = $region3
  $region8: #{elcs_forward.8} parent=0 // loop_exit
    _

// kernel: elcs_forward.9
$region0: #{elcs_forward.9}
  #allocation0 [shape = 'u32[]', space=smem, size = 0x4, offset = 0x4, fixed_abs, tag = 'smem constant byte address 0x4 - core index']
  #allocation1 [shape = 'u32[144,128]{1,0:T(1,128)}', space=vmem, size = 0x12000, scoped, tag = 'internal scratch']
  %s0 = inlined_call_operand.vmem [shape: bf16[512,60], index: 0, kind: input, shape index: {}]
  %s1 = inlined_call_operand.vmem [shape: bf16[60,120], index: 1, kind: input, shape index: {}]
  %s2 = inlined_call_operand.vmem [shape: f32[1,120], index: 2, kind: input, shape index: {}]
  %s3 = inlined_call_operand.vmem [shape: bf16[512,120], index: 3, kind: output, shape index: {0}]
  %s4 = inlined_call_operand.vmem [shape: f32[32,120], index: 4, kind: output, shape index: {1}]
  %s5 = inlined_call_operand.vmem [shape: f32[32,120], index: 5, kind: output, shape index: {2}]
  %6 = xla_tuple %s3, %s4, %s5
  %s7 = sld [smem:[#allocation0]]
  $region61: #{elcs_forward.9} parent=0
    _
  %s9 = ssub.s32 1, %s7
  %s10 = scalar_select 0, %s9, %s7
  loop: start=0, step=1, limit=6
  $region2: #{elcs_forward.9} parent=0 // loop_pre_header
    _
  $region3: #{elcs_forward.9} parent=0 // loop_header
    %s12 = sphi 0, %s16
    %p13 = scmp.ge.s32.totalorder %s12, 6
    %s22 = sphi 0, %s24
    %s25 = sphi 0, %s22
    %s26 = sphi 0, %s25
    %s42 = sphi 0, %s26
    %s46 = sphi 0, %s46
    %s48 = sphi 0, %s46
    %s49 = sphi 0, %s48
    %s63 = sphi 0, %s49
    %s67 = sphi 0, %s67
    %s69 = sphi 0, %s67
    %s70 = sphi 0, %s69
    %s84 = sphi 0, %s70
    %s90 = sphi 0, %s92
    %s93 = sphi 0, %s90
    %s94 = sphi 0, %s93
    %s110 = sphi 0, %s94
    %s116 = sphi 0, %s118
    %s119 = sphi 0, %s116
    %s120 = sphi 0, %s119
    %s136 = sphi 0, %s120
    %s142 = sphi 0, %s144
    %s145 = sphi 0, %s142
    %s146 = sphi 0, %s145
    %s162 = sphi 0, %s146
  $region4: #{elcs_forward.9} parent=0 // loop_header_branch
    %15 = sbr.rel (%p13) target = $region8
  $region5: #{elcs_forward.9} parent=0 // loop_body
    %s17 = ssub.s32 %s12, 1
    %s18 = ssub.s32 %s12, 2
    %s19 = sadd.s32 %s12, 1
    %s20 = ssub.s32 %s12, %s19
    %p21 = scmp.eq.s32.totalorder %s20, 0
    %s23 = sadd.s32 %s22, 1
    %s24 = scalar_select %p21, %s22, %s23
    %p27 = pneg %p21
    %p28 = scmp.eq.s32.totalorder %s12, 3
    %p29 = por %p27, %p28
    %p30 = scmp.ne.s32.totalorder %s22, %s25
    %p31 = scmp.eq.s32.totalorder %s12, 0
    %p32 = por %p30, %p31
    %p33 = scmp.ne.s32.totalorder %s22, %s25
    %p34 = scmp.eq.s32.totalorder %s17, 3
    %p35 = por %p33, %p34
    %p36 = scmp.ne.s32.totalorder %s25, %s26
    %p37 = scmp.eq.s32.totalorder %s17, 0
    %p38 = por %p36, %p37
    %p39 = scmp.ne.s32.totalorder %s25, %s26
    %p40 = scmp.eq.s32.totalorder %s18, 3
    %p41 = por %p39, %p40
    %p43 = scmp.ne.s32.totalorder %s26, %s42
    %p44 = scmp.eq.s32.totalorder %s18, 0
    %p45 = por %p43, %p44
    %s47 = sadd.s32 %s46, 1
    %p50 = scmp.eq.s32.totalorder %s12, 3
    %p51 = scmp.ne.s32.totalorder %s46, %s48
    %p52 = scmp.eq.s32.totalorder %s12, 0
    %p53 = por %p51, %p52
    %p54 = scmp.ne.s32.totalorder %s46, %s48
    %p55 = scmp.eq.s32.totalorder %s17, 3
    %p56 = por %p54, %p55
    %p57 = scmp.ne.s32.totalorder %s48, %s49
    %p58 = scmp.eq.s32.totalorder %s17, 0
    %p59 = por %p57, %p58
    %p60 = scmp.ne.s32.totalorder %s48, %s49
    %p61 = scmp.eq.s32.totalorder %s18, 3
    %p62 = por %p60, %p61
    %p64 = scmp.ne.s32.totalorder %s49, %s63
    %p65 = scmp.eq.s32.totalorder %s18, 0
    %p66 = por %p64, %p65
    %s68 = sadd.s32 %s67, 1
    %p71 = scmp.eq.s32.totalorder %s12, 3
    %p72 = scmp.ne.s32.totalorder %s67, %s69
    %p73 = scmp.eq.s32.totalorder %s12, 0
    %p74 = por %p72, %p73
    %p75 = scmp.ne.s32.totalorder %s67, %s69
    %p76 = scmp.eq.s32.totalorder %s17, 3
    %p77 = por %p75, %p76
    %p78 = scmp.ne.s32.totalorder %s69, %s70
    %p79 = scmp.eq.s32.totalorder %s17, 0
    %p80 = por %p78, %p79
    %p81 = scmp.ne.s32.totalorder %s69, %s70
    %p82 = scmp.eq.s32.totalorder %s18, 3
    %p83 = por %p81, %p82
    %p85 = scmp.ne.s32.totalorder %s70, %s84
    %p86 = scmp.eq.s32.totalorder %s18, 0
    %p87 = por %p85, %p86
    %s88 = ssub.s32 %s12, %s19
    %p89 = scmp.eq.s32.totalorder %s88, 0
    %s91 = sadd.s32 %s90, 1
    %s92 = scalar_select %p89, %s90, %s91
    %p95 = pneg %p89
    %p96 = scmp.eq.s32.totalorder %s12, 3
    %p97 = por %p95, %p96
    %p98 = scmp.ne.s32.totalorder %s90, %s93
    %p99 = scmp.eq.s32.totalorder %s12, 0
    %p100 = por %p98, %p99
    %p101 = scmp.ne.s32.totalorder %s90, %s93
    %p102 = scmp.eq.s32.totalorder %s17, 3
    %p103 = por %p101, %p102
    %p104 = scmp.ne.s32.totalorder %s93, %s94
    %p105 = scmp.eq.s32.totalorder %s17, 0
    %p106 = por %p104, %p105
    %p107 = scmp.ne.s32.totalorder %s93, %s94
    %p108 = scmp.eq.s32.totalorder %s18, 3
    %p109 = por %p107, %p108
    %p111 = scmp.ne.s32.totalorder %s94, %s110
    %p112 = scmp.eq.s32.totalorder %s18, 0
    %p113 = por %p111, %p112
    %s114 = ssub.s32 %s12, %s19
    %p115 = scmp.eq.s32.totalorder %s114, 0
    %s117 = sadd.s32 %s116, 1
    %s118 = scalar_select %p115, %s116, %s117
    %p121 = pneg %p115
    %p122 = scmp.eq.s32.totalorder %s12, 3
    %p123 = por %p121, %p122
    %p124 = scmp.ne.s32.totalorder %s116, %s119
    %p125 = scmp.eq.s32.totalorder %s12, 0
    %p126 = por %p124, %p125
    %p127 = scmp.ne.s32.totalorder %s116, %s119
    %p128 = scmp.eq.s32.totalorder %s17, 3
    %p129 = por %p127, %p128
    %p130 = scmp.ne.s32.totalorder %s119, %s120
    %p131 = scmp.eq.s32.totalorder %s17, 0
    %p132 = por %p130, %p131
    %p133 = scmp.ne.s32.totalorder %s119, %s120
    %p134 = scmp.eq.s32.totalorder %s18, 3
    %p135 = por %p133, %p134
    %p137 = scmp.ne.s32.totalorder %s120, %s136
    %p138 = scmp.eq.s32.totalorder %s18, 0
    %p139 = por %p137, %p138
    %s140 = ssub.s32 %s12, %s19
    %p141 = scmp.eq.s32.totalorder %s140, 0
    %s143 = sadd.s32 %s142, 1
    %s144 = scalar_select %p141, %s142, %s143
    %p147 = pneg %p141
    %p148 = scmp.eq.s32.totalorder %s12, 3
    %p149 = por %p147, %p148
    %p150 = scmp.ne.s32.totalorder %s142, %s145
    %p151 = scmp.eq.s32.totalorder %s12, 0
    %p152 = por %p150, %p151
    %p153 = scmp.ne.s32.totalorder %s142, %s145
    %p154 = scmp.eq.s32.totalorder %s17, 3
    %p155 = por %p153, %p154
    %p156 = scmp.ne.s32.totalorder %s145, %s146
    %p157 = scmp.eq.s32.totalorder %s17, 0
    %p158 = por %p156, %p157
    %p159 = scmp.ne.s32.totalorder %s145, %s146
    %p160 = scmp.eq.s32.totalorder %s18, 3
    %p161 = por %p159, %p160
    %p163 = scmp.ne.s32.totalorder %s146, %s162
    %p164 = scmp.eq.s32.totalorder %s18, 0
    %p165 = por %p163, %p164
    %p166 = scmp.le.s32.totalorder 1, %s12
    %p167 = scmp.lt.s32.totalorder %s12, 5
    %p168 = pnand %p166, %p167
    %p169 = pneg %p168
    // Predicated region
    $region9: #{elcs_forward.9} parent=5 // pred_check
      _
    $region10: #{elcs_forward.9} parent=5 // pred_check_branch
      %171 = sbr.rel (%p168) target = $region12
    $region11: #{elcs_forward.9} parent=5 // pred_region
      %s172 = ssub.s32 %s12, 1
      // Predicated region
      $region13: #{elcs_forward.9} parent=11 // pred_check
        %p173 = pneg %p59
      $region14: #{elcs_forward.9} parent=11 // pred_check_branch
        %175 = sbr.rel (%p173) target = $region16
      $region15: #{elcs_forward.9} parent=11 // pred_region
        _
      $region16: #{elcs_forward.9} parent=11 // pred_fallthru
        _
      // Predicated region
      $region17: #{elcs_forward.9} parent=11 // pred_check
        %p176 = pneg %p80
      $region18: #{elcs_forward.9} parent=11 // pred_check_branch
        %178 = sbr.rel (%p176) target = $region20
      $region19: #{elcs_forward.9} parent=11 // pred_region
        _
      $region20: #{elcs_forward.9} parent=11 // pred_fallthru
        _
    $region12: #{elcs_forward.9} parent=5 // pred_fallthru
      _
    %p179 = scmp.lt.s32.totalorder %s12, 4
    // Predicated region
    $region21: #{elcs_forward.9} parent=5 // pred_check
      %p180 = pneg %p179
    $region22: #{elcs_forward.9} parent=5 // pred_check_branch
      %182 = sbr.rel (%p180) target = $region24
    $region23: #{elcs_forward.9} parent=5 // pred_region
      // Predicated region
      $region25: #{elcs_forward.9} parent=23 // pred_check
        %p183 = pneg %p32
      $region26: #{elcs_forward.9} parent=23 // pred_check_branch
        %185 = sbr.rel (%p183) target = $region28
      $region27: #{elcs_forward.9} parent=23 // pred_region
        %s186 = smul.u32 16, %s12
        %p187 = scmp.lt.s32.totalorder %s186, 63
        %s188 = scalar_select %p187, %s186, 63
        %s189 = smul.addr %s188, 4
        %s190 = scalar_lea.vmem %s0, %s189
        %s191 = smul.u32 16, %s12
      $region28: #{elcs_forward.9} parent=23 // pred_fallthru
        _
    $region24: #{elcs_forward.9} parent=5 // pred_fallthru
      _
    %p192 = scmp.le.s32.totalorder 1, %s12
    %p193 = scmp.lt.s32.totalorder %s12, 5
    %p194 = pnand %p192, %p193
    %p195 = pneg %p194
    // Predicated region
    $region29: #{elcs_forward.9} parent=5 // pred_check
      _
    $region30: #{elcs_forward.9} parent=5 // pred_check_branch
      %197 = sbr.rel (%p194) target = $region32
    $region31: #{elcs_forward.9} parent=5 // pred_region
      %s198 = ssub.s32 %s12, 1
      %s199 = smul.u32 16, %s17
      %p200 = scmp.lt.s32.totalorder %s199, 63
      %s201 = scalar_select %p200, %s199, 63
      %s202 = smul.addr %s201, 4
      %s203 = scalar_lea.vmem %s0, %s202
      %p204 = pneg %p38
      %p205 = pneg %p35
      %p206 = pneg %p59
      %p207 = pneg %p56
      %p208 = pneg %p80
      %p209 = pneg %p77
      %p210 = pneg %p106
      %p211 = pneg %p103
      %s212 = smul.u32 16, %s17
      %p213 = scmp.lt.s32.totalorder %s212, 63
      %s214 = scalar_select %p213, %s212, 63
      %s215 = smul.addr %s214, 4
      %s216 = scalar_lea.vmem %s3, %s215
      %p217 = pneg %p132
      %p218 = pneg %p129
      %p219 = scmp.lt.s32.totalorder %s17, 3
      %s220 = scalar_select %p219, %s17, 3
      %s221 = smul.addr %s220, 8
      %s222 = scalar_lea.vmem %s4, %s221
      %p223 = pneg %p158
      %p224 = pneg %p155
      %p225 = scmp.lt.s32.totalorder %s17, 3
      %s226 = scalar_select %p225, %s17, 3
      %s227 = smul.addr %s226, 8
      %s228 = scalar_lea.vmem %s5, %s227
      %s229 = smul.u32 16, %s17
      %p230 = scmp.lt.s32.totalorder %s229, 63
      %s231 = scalar_select %p230, %s229, 63
      %s232 = smul.addr %s231, 4
      %s233 = scalar_lea.vmem %s0, %s232
      %s234 = smul.u32 16, %s17
      %s235 = smul.u32 16, %s17
      %p236 = scmp.lt.s32.totalorder %s235, 63
      %s237 = scalar_select %p236, %s235, 63
      %s238 = smul.addr %s237, 4
      %s239 = scalar_lea.vmem %s3, %s238
      %s240 = smul.u32 16, %s17
      %p241 = scmp.lt.s32.totalorder %s17, 3
      %s242 = scalar_select %p241, %s17, 3
      %s243 = smul.addr %s242, 8
      %s244 = scalar_lea.vmem %s4, %s243
      %p245 = scmp.lt.s32.totalorder %s17, 3
      %s246 = scalar_select %p245, %s17, 3
      %s247 = smul.addr %s246, 8
      %s248 = scalar_lea.vmem %s5, %s247
      %v250 = vld [vmem:[%s233] sm:$0xf]
      %v251 = vld [vmem:[%s233 + $0x4] sm:$0xf]
      %v252 = vld [vmem:[%s233 + $0x8] sm:$0xf]
      %v253 = vld [vmem:[%s233 + $0xc] sm:$0xf]
      %v254 = vld [vmem:[%s233 + $0x10] sm:$0xf]
      %v255 = vld [vmem:[%s233 + $0x14] sm:$0xf]
      %v256 = vld [vmem:[%s233 + $0x18] sm:$0xf]
      %v257 = vld [vmem:[%s233 + $0x1c] sm:$0xf]
      %v258 = vld [vmem:[%s233 + $0x20] sm:$0xf]
      %v259 = vld [vmem:[%s233 + $0x24] sm:$0xf]
      %v260 = vld [vmem:[%s233 + $0x28] sm:$0xf]
      %v261 = vld [vmem:[%s233 + $0x2c] sm:$0xf]
      %v262 = vld [vmem:[%s233 + $0x30] sm:$0xf]
      %v263 = vld [vmem:[%s233 + $0x34] sm:$0xf]
      %v264 = vld [vmem:[%s233 + $0x38] sm:$0xf]
      %v265 = vld [vmem:[%s233 + $0x3c] sm:$0xf]
      %v266 = vld [vmem:[%s1] sm:$0xf]
      %v267 = vld [vmem:[%s1 + $0x4] sm:$0xf]
      %v268 = vld [vmem:[%s1 + $0x8] sm:$0xf]
      %v269 = vld [vmem:[%s1 + $0xc] sm:$0xf]
      %v270 = vld [vmem:[%s1 + $0x10] sm:$0xf]
      %v271 = vld [vmem:[%s1 + $0x14] sm:$0xf]
      %v272 = vld [vmem:[%s1 + $0x18] sm:$0xf]
      %v273 = vld [vmem:[%s1 + $0x1c] sm:$0x3]
      %v274 = vld [vmem:[%s2] sm:$0x1]
      %v276 = vlaneseq
      %v277 = vshrl.u32 %v276, 7
      %v278 = vsub.s32 0, %v277
      %v279 = vrot.slane %v274, %v278
      %v297 = vunpack.c.l.b16 %v250
      %v298 = vunpack.c.l.b16 %v251
      %v299 = vunpack.c.l.b16 %v252
      %v300 = vunpack.c.l.b16 %v253
      %v301 = vunpack.c.l.b16 %v254
      %v302 = vunpack.c.l.b16 %v255
      %v303 = vunpack.c.l.b16 %v256
      %v304 = vunpack.c.l.b16 %v257
      %v305 = vunpack.c.l.b16 %v258
      %v306 = vunpack.c.l.b16 %v259
      %v307 = vunpack.c.l.b16 %v260
      %v308 = vunpack.c.l.b16 %v261
      %v309 = vunpack.c.l.b16 %v262
      %v310 = vunpack.c.l.b16 %v263
      %v311 = vunpack.c.l.b16 %v264
      %v312 = vunpack.c.l.b16 %v265
      %v313 = vpack.c.b16 %v298, %v297
      %v314 = vpack.c.b16 %v300, %v299
      %v315 = vpack.c.b16 %v302, %v301
      %v316 = vpack.c.b16 %v304, %v303
      %v317 = vpack.c.b16 %v306, %v305
      %v318 = vpack.c.b16 %v308, %v307
      %v319 = vpack.c.b16 %v310, %v309
      %v320 = vpack.c.b16 %v312, %v311
      %v329 = vunpack.c.l.b16 %v266
      %v330 = vunpack.c.l.b16 %v267
      %v331 = vunpack.c.l.b16 %v268
      %v332 = vunpack.c.l.b16 %v269
      %v333 = vunpack.c.l.b16 %v270
      %v334 = vunpack.c.l.b16 %v271
      %v335 = vunpack.c.l.b16 %v272
      %v336 = vunpack.c.l.b16 %v273
      %v337 = vpack.c.b16 %v330, %v329
      %v338 = vpack.c.b16 %v332, %v331
      %v339 = vpack.c.b16 %v334, %v333
      %v340 = vpack.c.b16 %v336, %v335
      %vm344 = vcmask 490496
      %v346 = vsel %vm344, %v313, 0
      %v349 = vsel %vm344, %v314, 0
      %v352 = vsel %vm344, %v315, 0
      %v355 = vsel %vm344, %v316, 0
      %v358 = vsel %vm344, %v317, 0
      %v361 = vsel %vm344, %v318, 0
      %v364 = vsel %vm344, %v319, 0
      %v367 = vsel %vm344, %v320, 0
      %vm369 = vcmask 1045504
      %v371 = vsel %vm369, %v340, 0
      %373 = vmatprep.subr.bf16.mxu0 0
      %374 = vmatpush1.bf16.msra.mxu0 %v337
      %375 = vmatprep.subr.bf16.mxu0 0
      %376 = vmatpush1.bf16.msra.mxu0 %v338
      %377 = vmatprep.subr.bf16.mxu0 0
      %378 = vmatpush1.bf16.msra.mxu0 %v339
      %379 = vmatprep.subr.bf16.mxu0 0
      %380 = vmatpush1.bf16.msra.mxu0 %v371
      %381 = vmatprep.subr.bf16.mxu0 0
      %382 = vmatpush1.bf16.msra.mxu0 0
      %383 = vmatprep.subr.bf16.mxu0 0
      %384 = vmatpush1.bf16.msra.mxu0 0
      %385 = vmatprep.subr.bf16.mxu0 0
      %386 = vmatpush1.bf16.msra.mxu0 0
      %387 = vmatprep.subr.bf16.mxu0 0
      %388 = vmatpush1.bf16.msra.mxu0 0
      %389 = vmatprep.subr.bf16.mxu0 0
      %390 = vmatpush1.bf16.msra.mxu0 0
      %391 = vmatprep.subr.bf16.mxu0 0
      %392 = vmatpush1.bf16.msra.mxu0 0
      %393 = vmatprep.subr.bf16.mxu0 0
      %394 = vmatpush1.bf16.msra.mxu0 0
      %395 = vmatprep.subr.bf16.mxu0 0
      %396 = vmatpush1.bf16.msra.mxu0 0
      %397 = vmatprep.subr.bf16.mxu0 0
      %398 = vmatpush1.bf16.msra.mxu0 0
      %399 = vmatprep.subr.bf16.mxu0 0
      %400 = vmatpush1.bf16.msra.mxu0 0
      %401 = vmatprep.subr.bf16.mxu0 0
      %402 = vmatpush1.bf16.msra.mxu0 0
      %403 = vmatprep.subr.bf16.mxu0 0
      %404 = vmatpush1.bf16.msra.mxu0 0
      %405 = vmatprep.mubr.bf16.mxu0 0
      %406 = vmatmul.mubr.bf16.gmra.mrb[0].mxu0 %v346
      %v407 = vpop.f32.mrb[0].mxu0
      %v408 = vadd.f32 %v279, %v407
      %v409 = vpop.f32.mrb[0].mxu0
      %v410 = vpop.f32.mrb[0].mxu0
      %v411 = vadd.f32 %v279, %v410
      %v412 = vpop.f32.mrb[0].mxu0
      %413 = vmatprep.mubr.bf16.mxu0 0
      %414 = vmatmul.mubr.bf16.gmra.mrb[0].mxu0 %v349
      %v415 = vpop.f32.mrb[0].mxu0
      %v416 = vadd.f32 %v279, %v415
      %v417 = vpop.f32.mrb[0].mxu0
      %v418 = vpop.f32.mrb[0].mxu0
      %v419 = vadd.f32 %v279, %v418
      %v420 = vpop.f32.mrb[0].mxu0
      %421 = vmatprep.mubr.bf16.mxu0 0
      %422 = vmatmul.mubr.bf16.gmra.mrb[0].mxu0 %v352
      %v423 = vpop.f32.mrb[0].mxu0
      %v424 = vadd.f32 %v279, %v423
      %v425 = vpop.f32.mrb[0].mxu0
      %v426 = vpop.f32.mrb[0].mxu0
      %v427 = vadd.f32 %v279, %v426
      %v428 = vpop.f32.mrb[0].mxu0
      %429 = vmatprep.mubr.bf16.mxu0 0
      %430 = vmatmul.mubr.bf16.gmra.mrb[0].mxu0 %v355
      %v431 = vpop.f32.mrb[0].mxu0
      %v432 = vadd.f32 %v279, %v431
      %v433 = vpop.f32.mrb[0].mxu0
      %v434 = vpop.f32.mrb[0].mxu0
      %v435 = vadd.f32 %v279, %v434
      %v436 = vpop.f32.mrb[0].mxu0
      %437 = vmatprep.mubr.bf16.mxu0 0
      %438 = vmatmul.mubr.bf16.gmra.mrb[0].mxu0 %v358
      %v439 = vpop.f32.mrb[0].mxu0
      %v440 = vadd.f32 %v279, %v439
      %v441 = vpop.f32.mrb[0].mxu0
      %v442 = vpop.f32.mrb[0].mxu0
      %v443 = vadd.f32 %v279, %v442
      %v444 = vpop.f32.mrb[0].mxu0
      %445 = vmatprep.mubr.bf16.mxu0 0
      %446 = vmatmul.mubr.bf16.gmra.mrb[0].mxu0 %v361
      %v447 = vpop.f32.mrb[0].mxu0
      %v448 = vadd.f32 %v279, %v447
      %v449 = vpop.f32.mrb[0].mxu0
      %v450 = vpop.f32.mrb[0].mxu0
      %v451 = vadd.f32 %v279, %v450
      %v452 = vpop.f32.mrb[0].mxu0
      %453 = vmatprep.mubr.bf16.mxu0 0
      %454 = vmatmul.mubr.bf16.gmra.mrb[0].mxu0 %v364
      %v455 = vpop.f32.mrb[0].mxu0
      %v456 = vadd.f32 %v279, %v455
      %v457 = vpop.f32.mrb[0].mxu0
      %v458 = vpop.f32.mrb[0].mxu0
      %v459 = vadd.f32 %v279, %v458
      %v460 = vpop.f32.mrb[0].mxu0
      %461 = vmatprep.mubr.bf16.mxu0 0
      %462 = vmatmul.mubr.bf16.gmra.mrb[0].mxu0 %v367
      %v463 = vpop.f32.mrb[0].mxu0
      %v464 = vadd.f32 %v279, %v463
      %v465 = vpop.f32.mrb[0].mxu0
      %v466 = vpop.f32.mrb[0].mxu0
      %v467 = vadd.f32 %v279, %v466
      %v468 = vpop.f32.mrb[0].mxu0
      %469 = vdwg.mxu0
      %v470 = vpack.c.bf16 %v411, %v408
      %v471 = vpack.c.bf16 %v419, %v416
      %v472 = vpack.c.bf16 %v427, %v424
      %v473 = vpack.c.bf16 %v435, %v432
      %v474 = vpack.c.bf16 %v443, %v440
      %v475 = vpack.c.bf16 %v451, %v448
      %v476 = vpack.c.bf16 %v459, %v456
      %v477 = vpack.c.bf16 %v467, %v464
      %v486 = vunpack.c.l.b16 %v470
      %v487 = vunpack.c.h.b16 %v470
      %v488 = vunpack.c.l.b16 %v471
      %v489 = vunpack.c.h.b16 %v471
      %v490 = vunpack.c.l.b16 %v472
      %v491 = vunpack.c.h.b16 %v472
      %v492 = vunpack.c.l.b16 %v473
      %v493 = vunpack.c.h.b16 %v473
      %v494 = vunpack.c.l.b16 %v474
      %v495 = vunpack.c.h.b16 %v474
      %v496 = vunpack.c.l.b16 %v475
      %v497 = vunpack.c.h.b16 %v475
      %v498 = vunpack.c.l.b16 %v476
      %v499 = vunpack.c.h.b16 %v476
      %v500 = vunpack.c.l.b16 %v477
      %v501 = vunpack.c.h.b16 %v477
      %v502 = vpack.c.b16 %v486, %v486
      %v503 = vpack.c.b16 %v487, %v487
      %v504 = vpack.c.b16 %v488, %v488
      %v505 = vpack.c.b16 %v489, %v489
      %v506 = vpack.c.b16 %v490, %v490
      %v507 = vpack.c.b16 %v491, %v491
      %v508 = vpack.c.b16 %v492, %v492
      %v509 = vpack.c.b16 %v493, %v493
      %v510 = vpack.c.b16 %v494, %v494
      %v511 = vpack.c.b16 %v495, %v495
      %v512 = vpack.c.b16 %v496, %v496
      %v513 = vpack.c.b16 %v497, %v497
      %v514 = vpack.c.b16 %v498, %v498
      %v515 = vpack.c.b16 %v499, %v499
      %v516 = vpack.c.b16 %v500, %v500
      %v517 = vpack.c.b16 %v501, %v501
      %vm534 = vcmask 977920
      %535 = vst.msk [vmem:[%s239] sm:$0xf] %vm534, %v502
      %536 = vst.msk [vmem:[%s239 + $0x4] sm:$0xf] %vm534, %v503
      %537 = vst.msk [vmem:[%s239 + $0x8] sm:$0xf] %vm534, %v504
      %538 = vst.msk [vmem:[%s239 + $0xc] sm:$0xf] %vm534, %v505
      %539 = vst.msk [vmem:[%s239 + $0x10] sm:$0xf] %vm534, %v506
      %540 = vst.msk [vmem:[%s239 + $0x14] sm:$0xf] %vm534, %v507
      %541 = vst.msk [vmem:[%s239 + $0x18] sm:$0xf] %vm534, %v508
      %542 = vst.msk [vmem:[%s239 + $0x1c] sm:$0xf] %vm534, %v509
      %543 = vst.msk [vmem:[%s239 + $0x20] sm:$0xf] %vm534, %v510
      %544 = vst.msk [vmem:[%s239 + $0x24] sm:$0xf] %vm534, %v511
      %545 = vst.msk [vmem:[%s239 + $0x28] sm:$0xf] %vm534, %v512
      %546 = vst.msk [vmem:[%s239 + $0x2c] sm:$0xf] %vm534, %v513
      %547 = vst.msk [vmem:[%s239 + $0x30] sm:$0xf] %vm534, %v514
      %548 = vst.msk [vmem:[%s239 + $0x34] sm:$0xf] %vm534, %v515
      %549 = vst.msk [vmem:[%s239 + $0x38] sm:$0xf] %vm534, %v516
      %550 = vst.msk [vmem:[%s239 + $0x3c] sm:$0xf] %vm534, %v517
      %vm551 = vcmask 982016
      %v552 = vsel %vm551, %v408, 0.0
      %v553 = vsel %vm551, %v411, 0.0
      %v554 = vadd.f32 %v552, %v553
      %v555 = vsel %vm551, %v416, 0.0
      %v556 = vadd.f32 %v554, %v555
      %v557 = vsel %vm551, %v419, 0.0
      %v558 = vadd.f32 %v556, %v557
      %v559 = vsel %vm551, %v424, 0.0
      %v560 = vadd.f32 %v558, %v559
      %v561 = vsel %vm551, %v427, 0.0
      %v562 = vadd.f32 %v560, %v561
      %v563 = vsel %vm551, %v432, 0.0
      %v564 = vadd.f32 %v562, %v563
      %v565 = vsel %vm551, %v435, 0.0
      %v566 = vadd.f32 %v564, %v565
      %v567 = vsel %vm551, %v440, 0.0
      %v568 = vadd.f32 %v566, %v567
      %v569 = vsel %vm551, %v443, 0.0
      %v570 = vadd.f32 %v568, %v569
      %v571 = vsel %vm551, %v448, 0.0
      %v572 = vadd.f32 %v570, %v571
      %v573 = vsel %vm551, %v451, 0.0
      %v574 = vadd.f32 %v572, %v573
      %v575 = vsel %vm551, %v456, 0.0
      %v576 = vadd.f32 %v574, %v575
      %v577 = vsel %vm551, %v459, 0.0
      %v578 = vadd.f32 %v576, %v577
      %v579 = vsel %vm551, %v464, 0.0
      %v580 = vadd.f32 %v578, %v579
      %v581 = vsel %vm551, %v467, 0.0
      %v582 = vadd.f32 %v580, %v581
      %v583 = vrot.slane %v582, 4
      %v584 = vadd.f32 %v582, %v583
      %v585 = vrot.slane %v584, 2
      %v586 = vadd.f32 %v584, %v585
      %v587 = vrot.slane %v586, 1
      %v588 = vadd.f32 %v586, %v587
      %v589 = vmul.f32 %v408, %v408
      %v590 = vmul.f32 %v411, %v411
      %v591 = vmul.f32 %v416, %v416
      %v592 = vmul.f32 %v419, %v419
      %v593 = vmul.f32 %v424, %v424
      %v594 = vmul.f32 %v427, %v427
      %v595 = vmul.f32 %v432, %v432
      %v596 = vmul.f32 %v435, %v435
      %v597 = vmul.f32 %v440, %v440
      %v598 = vmul.f32 %v443, %v443
      %v599 = vmul.f32 %v448, %v448
      %v600 = vmul.f32 %v451, %v451
      %v601 = vmul.f32 %v456, %v456
      %v602 = vmul.f32 %v459, %v459
      %v603 = vmul.f32 %v464, %v464
      %v604 = vmul.f32 %v467, %v467
      %v605 = vsel %vm551, %v589, 0.0
      %v606 = vsel %vm551, %v590, 0.0
      %v607 = vadd.f32 %v605, %v606
      %v608 = vsel %vm551, %v591, 0.0
      %v609 = vadd.f32 %v607, %v608
      %v610 = vsel %vm551, %v592, 0.0
      %v611 = vadd.f32 %v609, %v610
      %v612 = vsel %vm551, %v593, 0.0
      %v613 = vadd.f32 %v611, %v612
      %v614 = vsel %vm551, %v594, 0.0
      %v615 = vadd.f32 %v613, %v614
      %v616 = vsel %vm551, %v595, 0.0
      %v617 = vadd.f32 %v615, %v616
      %v618 = vsel %vm551, %v596, 0.0
      %v619 = vadd.f32 %v617, %v618
      %v620 = vsel %vm551, %v597, 0.0
      %v621 = vadd.f32 %v619, %v620
      %v622 = vsel %vm551, %v598, 0.0
      %v623 = vadd.f32 %v621, %v622
      %v624 = vsel %vm551, %v599, 0.0
      %v625 = vadd.f32 %v623, %v624
      %v626 = vsel %vm551, %v600, 0.0
      %v627 = vadd.f32 %v625, %v626
      %v628 = vsel %vm551, %v601, 0.0
      %v629 = vadd.f32 %v627, %v628
      %v630 = vsel %vm551, %v602, 0.0
      %v631 = vadd.f32 %v629, %v630
      %v632 = vsel %vm551, %v603, 0.0
      %v633 = vadd.f32 %v631, %v632
      %v634 = vsel %vm551, %v604, 0.0
      %v635 = vadd.f32 %v633, %v634
      %v636 = vrot.slane %v635, 4
      %v637 = vadd.f32 %v635, %v636
      %v638 = vrot.slane %v637, 2
      %v639 = vadd.f32 %v637, %v638
      %v640 = vrot.slane %v639, 1
      %v641 = vadd.f32 %v639, %v640
      %642 = vst.msk [vmem:[%s244] sm:$0xff] %vm551, %v588
      %643 = vst.msk [vmem:[%s248] sm:$0xff] %vm551, %v641
      %s644 = smul.u32 16, %s17
      %p645 = scmp.lt.s32.totalorder %s644, 63
      %s646 = scalar_select %p645, %s644, 63
      %s647 = smul.addr %s646, 4
      %s648 = scalar_lea.vmem %s3, %s647
      %p649 = scmp.lt.s32.totalorder %s17, 3
      %s650 = scalar_select %p649, %s17, 3
      %s651 = smul.addr %s650, 8
      %s652 = scalar_lea.vmem %s4, %s651
      %p653 = scmp.lt.s32.totalorder %s17, 3
      %s654 = scalar_select %p653, %s17, 3
      %s655 = smul.addr %s654, 8
      %s656 = scalar_lea.vmem %s5, %s655
      // Predicated region
      $region33: #{elcs_forward.9} parent=31 // pred_check
        %p657 = pneg %p103
      $region34: #{elcs_forward.9} parent=31 // pred_check_branch
        %659 = sbr.rel (%p657) target = $region36
      $region35: #{elcs_forward.9} parent=31 // pred_region
        %s660 = smul.u32 16, %s17
      $region36: #{elcs_forward.9} parent=31 // pred_fallthru
        _
      // Predicated region
      $region37: #{elcs_forward.9} parent=31 // pred_check
        %p661 = pneg %p129
      $region38: #{elcs_forward.9} parent=31 // pred_check_branch
        %663 = sbr.rel (%p661) target = $region40
      $region39: #{elcs_forward.9} parent=31 // pred_region
        _
      $region40: #{elcs_forward.9} parent=31 // pred_fallthru
        _
      // Predicated region
      $region41: #{elcs_forward.9} parent=31 // pred_check
        %p664 = pneg %p155
      $region42: #{elcs_forward.9} parent=31 // pred_check_branch
        %666 = sbr.rel (%p664) target = $region44
      $region43: #{elcs_forward.9} parent=31 // pred_region
        _
      $region44: #{elcs_forward.9} parent=31 // pred_fallthru
        _
    $region32: #{elcs_forward.9} parent=5 // pred_fallthru
      _
    %p667 = scmp.le.s32.totalorder 2, %s12
    // Predicated region
    $region45: #{elcs_forward.9} parent=5 // pred_check
      %p668 = pneg %p667
    $region46: #{elcs_forward.9} parent=5 // pred_check_branch
      %670 = sbr.rel (%p668) target = $region48
    $region47: #{elcs_forward.9} parent=5 // pred_region
      %s671 = ssub.s32 %s12, 2
      // Predicated region
      $region49: #{elcs_forward.9} parent=47 // pred_check
        %p672 = pneg %p109
      $region50: #{elcs_forward.9} parent=47 // pred_check_branch
        %674 = sbr.rel (%p672) target = $region52
      $region51: #{elcs_forward.9} parent=47 // pred_region
        %s675 = smul.u32 16, %s18
        %p676 = scmp.lt.s32.totalorder %s675, 63
        %s677 = scalar_select %p676, %s675, 63
        %s678 = smul.addr %s677, 4
        %s679 = scalar_lea.vmem %s3, %s678
      $region52: #{elcs_forward.9} parent=47 // pred_fallthru
        _
      // Predicated region
      $region53: #{elcs_forward.9} parent=47 // pred_check
        %p680 = pneg %p135
      $region54: #{elcs_forward.9} parent=47 // pred_check_branch
        %682 = sbr.rel (%p680) target = $region56
      $region55: #{elcs_forward.9} parent=47 // pred_region
        %p683 = scmp.lt.s32.totalorder %s18, 3
        %s684 = scalar_select %p683, %s18, 3
        %s685 = smul.addr %s684, 8
        %s686 = scalar_lea.vmem %s4, %s685
      $region56: #{elcs_forward.9} parent=47 // pred_fallthru
        _
      // Predicated region
      $region57: #{elcs_forward.9} parent=47 // pred_check
        %p687 = pneg %p161
      $region58: #{elcs_forward.9} parent=47 // pred_check_branch
        %689 = sbr.rel (%p687) target = $region60
      $region59: #{elcs_forward.9} parent=47 // pred_region
        %p690 = scmp.lt.s32.totalorder %s18, 3
        %s691 = scalar_select %p690, %s18, 3
        %s692 = smul.addr %s691, 8
        %s693 = scalar_lea.vmem %s5, %s692
      $region60: #{elcs_forward.9} parent=47 // pred_fallthru
        _
    $region48: #{elcs_forward.9} parent=5 // pred_fallthru
      _
  $region6: #{elcs_forward.9} parent=0 // loop_footer
    %s16 = sadd.s32 1, %s12
  $region7: #{elcs_forward.9} parent=0 // loop_footer_branch
    %11 = sbr.rel target = $region3
  $region8: #{elcs_forward.9} parent=0 // loop_exit
    _

// kernel: elcs_forward.12
$region0: #{elcs_forward.12}
  #allocation0 [shape = 'u32[]', space=smem, size = 0x4, offset = 0x4, fixed_abs, tag = 'smem constant byte address 0x4 - core index']
  #allocation1 [shape = 'u32[144,128]{1,0:T(1,128)}', space=vmem, size = 0x12000, scoped, tag = 'internal scratch']
  %s0 = inlined_call_operand.vmem [shape: bf16[2,256,20], index: 0, kind: input, shape index: {}]
  %s1 = inlined_call_operand.vmem [shape: bf16[2,256,20], index: 1, kind: input, shape index: {}]
  %s2 = inlined_call_operand.vmem [shape: bf16[2,256,20], index: 2, kind: input, shape index: {}]
  %s3 = inlined_call_operand.vmem [shape: bf16[2,256,20], index: 3, kind: output, shape index: {}]
  %s4 = sld [smem:[#allocation0]]
  $region45: #{elcs_forward.12} parent=0
    _
  %s6 = ssub.s32 1, %s4
  %s7 = scalar_select 0, %s6, %s4
  loop: start=0, step=1, limit=4
  $region2: #{elcs_forward.12} parent=0 // loop_pre_header
    _
  $region3: #{elcs_forward.12} parent=0 // loop_header
    %s9 = sphi 0, %s13
    %p10 = scmp.ge.s32.totalorder %s9, 4
    %s19 = sphi 0, %s21
    %s22 = sphi 0, %s19
    %s23 = sphi 0, %s22
    %s39 = sphi 0, %s23
    %s45 = sphi 0, %s47
    %s48 = sphi 0, %s45
    %s49 = sphi 0, %s48
    %s65 = sphi 0, %s49
    %s71 = sphi 0, %s73
    %s74 = sphi 0, %s71
    %s75 = sphi 0, %s74
    %s91 = sphi 0, %s75
    %s97 = sphi 0, %s99
    %s100 = sphi 0, %s97
    %s101 = sphi 0, %s100
    %s117 = sphi 0, %s101
  $region4: #{elcs_forward.12} parent=0 // loop_header_branch
    %12 = sbr.rel (%p10) target = $region8
  $region5: #{elcs_forward.12} parent=0 // loop_body
    %s14 = ssub.s32 %s9, 1
    %s15 = ssub.s32 %s9, 2
    %s16 = sadd.s32 %s9, 1
    %s17 = ssub.s32 %s9, %s16
    %p18 = scmp.eq.s32.totalorder %s17, 0
    %s20 = sadd.s32 %s19, 1
    %s21 = scalar_select %p18, %s19, %s20
    %p24 = pneg %p18
    %p25 = scmp.eq.s32.totalorder %s9, 1
    %p26 = por %p24, %p25
    %p27 = scmp.ne.s32.totalorder %s19, %s22
    %p28 = scmp.eq.s32.totalorder %s9, 0
    %p29 = por %p27, %p28
    %p30 = scmp.ne.s32.totalorder %s19, %s22
    %p31 = scmp.eq.s32.totalorder %s14, 1
    %p32 = por %p30, %p31
    %p33 = scmp.ne.s32.totalorder %s22, %s23
    %p34 = scmp.eq.s32.totalorder %s14, 0
    %p35 = por %p33, %p34
    %p36 = scmp.ne.s32.totalorder %s22, %s23
    %p37 = scmp.eq.s32.totalorder %s15, 1
    %p38 = por %p36, %p37
    %p40 = scmp.ne.s32.totalorder %s23, %s39
    %p41 = scmp.eq.s32.totalorder %s15, 0
    %p42 = por %p40, %p41
    %s43 = ssub.s32 %s9, %s16
    %p44 = scmp.eq.s32.totalorder %s43, 0
    %s46 = sadd.s32 %s45, 1
    %s47 = scalar_select %p44, %s45, %s46
    %p50 = pneg %p44
    %p51 = scmp.eq.s32.totalorder %s9, 1
    %p52 = por %p50, %p51
    %p53 = scmp.ne.s32.totalorder %s45, %s48
    %p54 = scmp.eq.s32.totalorder %s9, 0
    %p55 = por %p53, %p54
    %p56 = scmp.ne.s32.totalorder %s45, %s48
    %p57 = scmp.eq.s32.totalorder %s14, 1
    %p58 = por %p56, %p57
    %p59 = scmp.ne.s32.totalorder %s48, %s49
    %p60 = scmp.eq.s32.totalorder %s14, 0
    %p61 = por %p59, %p60
    %p62 = scmp.ne.s32.totalorder %s48, %s49
    %p63 = scmp.eq.s32.totalorder %s15, 1
    %p64 = por %p62, %p63
    %p66 = scmp.ne.s32.totalorder %s49, %s65
    %p67 = scmp.eq.s32.totalorder %s15, 0
    %p68 = por %p66, %p67
    %s69 = ssub.s32 %s9, %s16
    %p70 = scmp.eq.s32.totalorder %s69, 0
    %s72 = sadd.s32 %s71, 1
    %s73 = scalar_select %p70, %s71, %s72
    %p76 = pneg %p70
    %p77 = scmp.eq.s32.totalorder %s9, 1
    %p78 = por %p76, %p77
    %p79 = scmp.ne.s32.totalorder %s71, %s74
    %p80 = scmp.eq.s32.totalorder %s9, 0
    %p81 = por %p79, %p80
    %p82 = scmp.ne.s32.totalorder %s71, %s74
    %p83 = scmp.eq.s32.totalorder %s14, 1
    %p84 = por %p82, %p83
    %p85 = scmp.ne.s32.totalorder %s74, %s75
    %p86 = scmp.eq.s32.totalorder %s14, 0
    %p87 = por %p85, %p86
    %p88 = scmp.ne.s32.totalorder %s74, %s75
    %p89 = scmp.eq.s32.totalorder %s15, 1
    %p90 = por %p88, %p89
    %p92 = scmp.ne.s32.totalorder %s75, %s91
    %p93 = scmp.eq.s32.totalorder %s15, 0
    %p94 = por %p92, %p93
    %s95 = ssub.s32 %s9, %s16
    %p96 = scmp.eq.s32.totalorder %s95, 0
    %s98 = sadd.s32 %s97, 1
    %s99 = scalar_select %p96, %s97, %s98
    %p102 = pneg %p96
    %p103 = scmp.eq.s32.totalorder %s9, 1
    %p104 = por %p102, %p103
    %p105 = scmp.ne.s32.totalorder %s97, %s100
    %p106 = scmp.eq.s32.totalorder %s9, 0
    %p107 = por %p105, %p106
    %p108 = scmp.ne.s32.totalorder %s97, %s100
    %p109 = scmp.eq.s32.totalorder %s14, 1
    %p110 = por %p108, %p109
    %p111 = scmp.ne.s32.totalorder %s100, %s101
    %p112 = scmp.eq.s32.totalorder %s14, 0
    %p113 = por %p111, %p112
    %p114 = scmp.ne.s32.totalorder %s100, %s101
    %p115 = scmp.eq.s32.totalorder %s15, 1
    %p116 = por %p114, %p115
    %p118 = scmp.ne.s32.totalorder %s101, %s117
    %p119 = scmp.eq.s32.totalorder %s15, 0
    %p120 = por %p118, %p119
    %p121 = scmp.le.s32.totalorder 1, %s9
    %p122 = scmp.lt.s32.totalorder %s9, 3
    %p123 = pnand %p121, %p122
    %p124 = pneg %p123
    // Predicated region
    $region9: #{elcs_forward.12} parent=5 // pred_check
      _
    $region10: #{elcs_forward.12} parent=5 // pred_check_branch
      %126 = sbr.rel (%p123) target = $region12
    $region11: #{elcs_forward.12} parent=5 // pred_region
      %s127 = ssub.s32 %s9, 1
    $region12: #{elcs_forward.12} parent=5 // pred_fallthru
      _
    %p128 = scmp.lt.s32.totalorder %s9, 2
    // Predicated region
    $region13: #{elcs_forward.12} parent=5 // pred_check
      %p129 = pneg %p128
    $region14: #{elcs_forward.12} parent=5 // pred_check_branch
      %131 = sbr.rel (%p129) target = $region16
    $region15: #{elcs_forward.12} parent=5 // pred_region
      // Predicated region
      $region17: #{elcs_forward.12} parent=15 // pred_check
        %p132 = pneg %p29
      $region18: #{elcs_forward.12} parent=15 // pred_check_branch
        %134 = sbr.rel (%p132) target = $region20
      $region19: #{elcs_forward.12} parent=15 // pred_region
        %p135 = scmp.lt.s32.totalorder %s9, 1
        %s136 = scalar_select %p135, %s9, 1
        %s137 = smul.addr %s136, 32
        %s138 = smul.addr %s137, 4
        %s139 = scalar_lea.vmem %s0, %s138
      $region20: #{elcs_forward.12} parent=15 // pred_fallthru
        _
      // Predicated region
      $region21: #{elcs_forward.12} parent=15 // pred_check
        %p140 = pneg %p55
      $region22: #{elcs_forward.12} parent=15 // pred_check_branch
        %142 = sbr.rel (%p140) target = $region24
      $region23: #{elcs_forward.12} parent=15 // pred_region
        %p143 = scmp.lt.s32.totalorder %s9, 1
        %s144 = scalar_select %p143, %s9, 1
        %s145 = smul.addr %s144, 32
        %s146 = smul.addr %s145, 4
        %s147 = scalar_lea.vmem %s1, %s146
      $region24: #{elcs_forward.12} parent=15 // pred_fallthru
        _
      // Predicated region
      $region25: #{elcs_forward.12} parent=15 // pred_check
        %p148 = pneg %p81
      $region26: #{elcs_forward.12} parent=15 // pred_check_branch
        %150 = sbr.rel (%p148) target = $region28
      $region27: #{elcs_forward.12} parent=15 // pred_region
        %p151 = scmp.lt.s32.totalorder %s9, 1
        %s152 = scalar_select %p151, %s9, 1
        %s153 = smul.addr %s152, 32
        %s154 = smul.addr %s153, 4
        %s155 = scalar_lea.vmem %s2, %s154
      $region28: #{elcs_forward.12} parent=15 // pred_fallthru
        _
    $region16: #{elcs_forward.12} parent=5 // pred_fallthru
      _
    %p156 = scmp.le.s32.totalorder 1, %s9
    %p157 = scmp.lt.s32.totalorder %s9, 3
    %p158 = pnand %p156, %p157
    %p159 = pneg %p158
    // Predicated region
    $region29: #{elcs_forward.12} parent=5 // pred_check
      _
    $region30: #{elcs_forward.12} parent=5 // pred_check_branch
      %161 = sbr.rel (%p158) target = $region32
    $region31: #{elcs_forward.12} parent=5 // pred_region
      %s162 = ssub.s32 %s9, 1
      %p163 = scmp.lt.s32.totalorder %s14, 1
      %s164 = scalar_select %p163, %s14, 1
      %s165 = smul.addr %s164, 32
      %s166 = smul.addr %s165, 4
      %s167 = scalar_lea.vmem %s0, %s166
      %p168 = pneg %p35
      %p169 = pneg %p32
      %p170 = scmp.lt.s32.totalorder %s14, 1
      %s171 = scalar_select %p170, %s14, 1
      %s172 = smul.addr %s171, 32
      %s173 = smul.addr %s172, 4
      %s174 = scalar_lea.vmem %s1, %s173
      %p175 = pneg %p61
      %p176 = pneg %p58
      %p177 = scmp.lt.s32.totalorder %s14, 1
      %s178 = scalar_select %p177, %s14, 1
      %s179 = smul.addr %s178, 32
      %s180 = smul.addr %s179, 4
      %s181 = scalar_lea.vmem %s2, %s180
      %p182 = pneg %p87
      %p183 = pneg %p84
      %p184 = pneg %p113
      %p185 = pneg %p110
      %p186 = scmp.lt.s32.totalorder %s14, 1
      %s187 = scalar_select %p186, %s14, 1
      %s188 = smul.addr %s187, 32
      %s189 = smul.addr %s188, 4
      %s190 = scalar_lea.vmem %s3, %s189
      %p191 = scmp.lt.s32.totalorder %s14, 1
      %s192 = scalar_select %p191, %s14, 1
      %s193 = smul.addr %s192, 32
      %s194 = smul.addr %s193, 4
      %s195 = scalar_lea.vmem %s0, %s194
      %p196 = scmp.lt.s32.totalorder %s14, 1
      %s197 = scalar_select %p196, %s14, 1
      %s198 = smul.addr %s197, 32
      %s199 = smul.addr %s198, 4
      %s200 = scalar_lea.vmem %s1, %s199
      %p201 = scmp.lt.s32.totalorder %s14, 1
      %s202 = scalar_select %p201, %s14, 1
      %s203 = smul.addr %s202, 32
      %s204 = smul.addr %s203, 4
      %s205 = scalar_lea.vmem %s2, %s204
      %p206 = scmp.lt.s32.totalorder %s14, 1
      %s207 = scalar_select %p206, %s14, 1
      %s208 = smul.addr %s207, 32
      %s209 = smul.addr %s208, 4
      %s210 = scalar_lea.vmem %s3, %s209
      %v212 = vld [vmem:[%s195] sm:$0xf]
      %v213 = vld [vmem:[%s195 + $0x4] sm:$0xf]
      %v214 = vld [vmem:[%s195 + $0x8] sm:$0xf]
      %v215 = vld [vmem:[%s195 + $0xc] sm:$0xf]
      %v216 = vld [vmem:[%s195 + $0x10] sm:$0xf]
      %v217 = vld [vmem:[%s195 + $0x14] sm:$0xf]
      %v218 = vld [vmem:[%s195 + $0x18] sm:$0xf]
      %v219 = vld [vmem:[%s195 + $0x1c] sm:$0xf]
      %v220 = vld [vmem:[%s195 + $0x20] sm:$0xf]
      %v221 = vld [vmem:[%s195 + $0x24] sm:$0xf]
      %v222 = vld [vmem:[%s195 + $0x28] sm:$0xf]
      %v223 = vld [vmem:[%s195 + $0x2c] sm:$0xf]
      %v224 = vld [vmem:[%s195 + $0x30] sm:$0xf]
      %v225 = vld [vmem:[%s195 + $0x34] sm:$0xf]
      %v226 = vld [vmem:[%s195 + $0x38] sm:$0xf]
      %v227 = vld [vmem:[%s195 + $0x3c] sm:$0xf]
      %v228 = vld [vmem:[%s195 + $0x40] sm:$0xf]
      %v229 = vld [vmem:[%s195 + $0x44] sm:$0xf]
      %v230 = vld [vmem:[%s195 + $0x48] sm:$0xf]
      %v231 = vld [vmem:[%s195 + $0x4c] sm:$0xf]
      %v232 = vld [vmem:[%s195 + $0x50] sm:$0xf]
      %v233 = vld [vmem:[%s195 + $0x54] sm:$0xf]
      %v234 = vld [vmem:[%s195 + $0x58] sm:$0xf]
      %v235 = vld [vmem:[%s195 + $0x5c] sm:$0xf]
      %v236 = vld [vmem:[%s195 + $0x60] sm:$0xf]
      %v237 = vld [vmem:[%s195 + $0x64] sm:$0xf]
      %v238 = vld [vmem:[%s195 + $0x68] sm:$0xf]
      %v239 = vld [vmem:[%s195 + $0x6c] sm:$0xf]
      %v240 = vld [vmem:[%s195 + $0x70] sm:$0xf]
      %v241 = vld [vmem:[%s195 + $0x74] sm:$0xf]
      %v242 = vld [vmem:[%s195 + $0x78] sm:$0xf]
      %v243 = vld [vmem:[%s195 + $0x7c] sm:$0xf]
      %v244 = vld [vmem:[%s200] sm:$0xf]
      %v245 = vld [vmem:[%s200 + $0x4] sm:$0xf]
      %v246 = vld [vmem:[%s200 + $0x8] sm:$0xf]
      %v247 = vld [vmem:[%s200 + $0xc] sm:$0xf]
      %v248 = vld [vmem:[%s200 + $0x10] sm:$0xf]
      %v249 = vld [vmem:[%s200 + $0x14] sm:$0xf]
      %v250 = vld [vmem:[%s200 + $0x18] sm:$0xf]
      %v251 = vld [vmem:[%s200 + $0x1c] sm:$0xf]
      %v252 = vld [vmem:[%s200 + $0x20] sm:$0xf]
      %v253 = vld [vmem:[%s200 + $0x24] sm:$0xf]
      %v254 = vld [vmem:[%s200 + $0x28] sm:$0xf]
      %v255 = vld [vmem:[%s200 + $0x2c] sm:$0xf]
      %v256 = vld [vmem:[%s200 + $0x30] sm:$0xf]
      %v257 = vld [vmem:[%s200 + $0x34] sm:$0xf]
      %v258 = vld [vmem:[%s200 + $0x38] sm:$0xf]
      %v259 = vld [vmem:[%s200 + $0x3c] sm:$0xf]
      %v260 = vld [vmem:[%s200 + $0x40] sm:$0xf]
      %v261 = vld [vmem:[%s200 + $0x44] sm:$0xf]
      %v262 = vld [vmem:[%s200 + $0x48] sm:$0xf]
      %v263 = vld [vmem:[%s200 + $0x4c] sm:$0xf]
      %v264 = vld [vmem:[%s200 + $0x50] sm:$0xf]
      %v265 = vld [vmem:[%s200 + $0x54] sm:$0xf]
      %v266 = vld [vmem:[%s200 + $0x58] sm:$0xf]
      %v267 = vld [vmem:[%s200 + $0x5c] sm:$0xf]
      %v268 = vld [vmem:[%s200 + $0x60] sm:$0xf]
      %v269 = vld [vmem:[%s200 + $0x64] sm:$0xf]
      %v270 = vld [vmem:[%s200 + $0x68] sm:$0xf]
      %v271 = vld [vmem:[%s200 + $0x6c] sm:$0xf]
      %v272 = vld [vmem:[%s200 + $0x70] sm:$0xf]
      %v273 = vld [vmem:[%s200 + $0x74] sm:$0xf]
      %v274 = vld [vmem:[%s200 + $0x78] sm:$0xf]
      %v275 = vld [vmem:[%s200 + $0x7c] sm:$0xf]
      %v308 = vunpack.c.l.b16 %v212
      %v309 = vunpack.c.l.b16 %v213
      %v310 = vunpack.c.l.b16 %v214
      %v311 = vunpack.c.l.b16 %v215
      %v312 = vunpack.c.l.b16 %v216
      %v313 = vunpack.c.l.b16 %v217
      %v314 = vunpack.c.l.b16 %v218
      %v315 = vunpack.c.l.b16 %v219
      %v316 = vunpack.c.l.b16 %v220
      %v317 = vunpack.c.l.b16 %v221
      %v318 = vunpack.c.l.b16 %v222
      %v319 = vunpack.c.l.b16 %v223
      %v320 = vunpack.c.l.b16 %v224
      %v321 = vunpack.c.l.b16 %v225
      %v322 = vunpack.c.l.b16 %v226
      %v323 = vunpack.c.l.b16 %v227
      %v324 = vunpack.c.l.b16 %v228
      %v325 = vunpack.c.l.b16 %v229
      %v326 = vunpack.c.l.b16 %v230
      %v327 = vunpack.c.l.b16 %v231
      %v328 = vunpack.c.l.b16 %v232
      %v329 = vunpack.c.l.b16 %v233
      %v330 = vunpack.c.l.b16 %v234
      %v331 = vunpack.c.l.b16 %v235
      %v332 = vunpack.c.l.b16 %v236
      %v333 = vunpack.c.l.b16 %v237
      %v334 = vunpack.c.l.b16 %v238
      %v335 = vunpack.c.l.b16 %v239
      %v336 = vunpack.c.l.b16 %v240
      %v337 = vunpack.c.l.b16 %v241
      %v338 = vunpack.c.l.b16 %v242
      %v339 = vunpack.c.l.b16 %v243
      %v340 = vpack.c.b16 %v309, %v308
      %v341 = vpack.c.b16 %v311, %v310
      %v342 = vpack.c.b16 %v313, %v312
      %v343 = vpack.c.b16 %v315, %v314
      %v344 = vpack.c.b16 %v317, %v316
      %v345 = vpack.c.b16 %v319, %v318
      %v346 = vpack.c.b16 %v321, %v320
      %v347 = vpack.c.b16 %v323, %v322
      %v348 = vpack.c.b16 %v325, %v324
      %v349 = vpack.c.b16 %v327, %v326
      %v350 = vpack.c.b16 %v329, %v328
      %v351 = vpack.c.b16 %v331, %v330
      %v352 = vpack.c.b16 %v333, %v332
      %v353 = vpack.c.b16 %v335, %v334
      %v354 = vpack.c.b16 %v337, %v336
      %v355 = vpack.c.b16 %v339, %v338
      %v388 = vunpack.c.l.b16 %v244
      %v389 = vunpack.c.l.b16 %v245
      %v390 = vunpack.c.l.b16 %v246
      %v391 = vunpack.c.l.b16 %v247
      %v392 = vunpack.c.l.b16 %v248
      %v393 = vunpack.c.l.b16 %v249
      %v394 = vunpack.c.l.b16 %v250
      %v395 = vunpack.c.l.b16 %v251
      %v396 = vunpack.c.l.b16 %v252
      %v397 = vunpack.c.l.b16 %v253
      %v398 = vunpack.c.l.b16 %v254
      %v399 = vunpack.c.l.b16 %v255
      %v400 = vunpack.c.l.b16 %v256
      %v401 = vunpack.c.l.b16 %v257
      %v402 = vunpack.c.l.b16 %v258
      %v403 = vunpack.c.l.b16 %v259
      %v404 = vunpack.c.l.b16 %v260
      %v405 = vunpack.c.l.b16 %v261
      %v406 = vunpack.c.l.b16 %v262
      %v407 = vunpack.c.l.b16 %v263
      %v408 = vunpack.c.l.b16 %v264
      %v409 = vunpack.c.l.b16 %v265
      %v410 = vunpack.c.l.b16 %v266
      %v411 = vunpack.c.l.b16 %v267
      %v412 = vunpack.c.l.b16 %v268
      %v413 = vunpack.c.l.b16 %v269
      %v414 = vunpack.c.l.b16 %v270
      %v415 = vunpack.c.l.b16 %v271
      %v416 = vunpack.c.l.b16 %v272
      %v417 = vunpack.c.l.b16 %v273
      %v418 = vunpack.c.l.b16 %v274
      %v419 = vunpack.c.l.b16 %v275
      %v420 = vpack.c.b16 %v389, %v388
      %v421 = vpack.c.b16 %v391, %v390
      %v422 = vpack.c.b16 %v393, %v392
      %v423 = vpack.c.b16 %v395, %v394
      %v424 = vpack.c.b16 %v397, %v396
      %v425 = vpack.c.b16 %v399, %v398
      %v426 = vpack.c.b16 %v401, %v400
      %v427 = vpack.c.b16 %v403, %v402
      %v428 = vpack.c.b16 %v405, %v404
      %v429 = vpack.c.b16 %v407, %v406
      %v430 = vpack.c.b16 %v409, %v408
      %v431 = vpack.c.b16 %v411, %v410
      %v432 = vpack.c.b16 %v413, %v412
      %v433 = vpack.c.b16 %v415, %v414
      %v434 = vpack.c.b16 %v417, %v416
      %v435 = vpack.c.b16 %v419, %v418
      %vm436 = vcmask 162816
      %v438 = vsel %vm436, %v340, 0
      %v441 = vsel %vm436, %v341, 0
      %v444 = vsel %vm436, %v342, 0
      %v447 = vsel %vm436, %v343, 0
      %v450 = vsel %vm436, %v344, 0
      %v453 = vsel %vm436, %v345, 0
      %v456 = vsel %vm436, %v346, 0
      %v459 = vsel %vm436, %v347, 0
      %v462 = vsel %vm436, %v348, 0
      %v465 = vsel %vm436, %v349, 0
      %v468 = vsel %vm436, %v350, 0
      %v471 = vsel %vm436, %v351, 0
      %v474 = vsel %vm436, %v352, 0
      %v477 = vsel %vm436, %v353, 0
      %v480 = vsel %vm436, %v354, 0
      %v483 = vsel %vm436, %v355, 0
      %v486 = vsel %vm436, %v420, 0
      %v489 = vsel %vm436, %v421, 0
      %v492 = vsel %vm436, %v422, 0
      %v495 = vsel %vm436, %v423, 0
      %v498 = vsel %vm436, %v424, 0
      %v501 = vsel %vm436, %v425, 0
      %v504 = vsel %vm436, %v426, 0
      %v507 = vsel %vm436, %v427, 0
      %v510 = vsel %vm436, %v428, 0
      %v513 = vsel %vm436, %v429, 0
      %v516 = vsel %vm436, %v430, 0
      %v519 = vsel %vm436, %v431, 0
      %v522 = vsel %vm436, %v432, 0
      %v525 = vsel %vm436, %v433, 0
      %v528 = vsel %vm436, %v434, 0
      %v531 = vsel %vm436, %v435, 0
      %533 = vmatprep.subr.bf16.mxu0 0
      %534 = vmatpush1.bf16.xpose.msra.mxu0 %v486
      %535 = vmatprep.subr.bf16.mxu0 0
      %536 = vmatpush1.bf16.xpose.msra.mxu0 %v489
      %537 = vmatprep.subr.bf16.mxu0 0
      %538 = vmatpush1.bf16.xpose.msra.mxu0 %v492
      %539 = vmatprep.subr.bf16.mxu0 0
      %540 = vmatpush1.bf16.xpose.msra.mxu0 %v495
      %541 = vmatprep.subr.bf16.mxu0 0
      %542 = vmatpush1.bf16.xpose.msra.mxu0 %v498
      %543 = vmatprep.subr.bf16.mxu0 0
      %544 = vmatpush1.bf16.xpose.msra.mxu0 %v501
      %545 = vmatprep.subr.bf16.mxu0 0
      %546 = vmatpush1.bf16.xpose.msra.mxu0 %v504
      %547 = vmatprep.subr.bf16.mxu0 0
      %548 = vmatpush1.bf16.xpose.msra.mxu0 %v507
      %549 = vmatprep.subr.bf16.mxu0 0
      %550 = vmatpush1.bf16.xpose.msra.mxu0 %v510
      %551 = vmatprep.subr.bf16.mxu0 0
      %552 = vmatpush1.bf16.xpose.msra.mxu0 %v513
      %553 = vmatprep.subr.bf16.mxu0 0
      %554 = vmatpush1.bf16.xpose.msra.mxu0 %v516
      %555 = vmatprep.subr.bf16.mxu0 0
      %556 = vmatpush1.bf16.xpose.msra.mxu0 %v519
      %557 = vmatprep.subr.bf16.mxu0 0
      %558 = vmatpush1.bf16.xpose.msra.mxu0 %v522
      %559 = vmatprep.subr.bf16.mxu0 0
      %560 = vmatpush1.bf16.xpose.msra.mxu0 %v525
      %561 = vmatprep.subr.bf16.mxu0 0
      %562 = vmatpush1.bf16.xpose.msra.mxu0 %v528
      %563 = vmatprep.subr.bf16.mxu0 0
      %564 = vmatpush1.bf16.xpose.msra.mxu0 %v531
      %565 = vmatprep.mubr.bf16.mxu0 0
      %566 = vmatmul.mubr.bf16.gmra.mrb[0].mxu0 %v438
      %v567 = vpop.f32.mrb[0].mxu0
      %v568 = vadd.f32 0.0, %v567
      %v569 = vpop.f32.mrb[0].mxu0
      %v570 = vadd.f32 0.0, %v569
      %v571 = vpop.f32.mrb[0].mxu0
      %v572 = vadd.f32 0.0, %v571
      %v573 = vpop.f32.mrb[0].mxu0
      %v574 = vadd.f32 0.0, %v573
      %575 = vmatprep.mubr.bf16.mxu0 0
      %576 = vmatmul.mubr.bf16.gmra.mrb[0].mxu0 %v441
      %v577 = vpop.f32.mrb[0].mxu0
      %v578 = vadd.f32 0.0, %v577
      %v579 = vpop.f32.mrb[0].mxu0
      %v580 = vadd.f32 0.0, %v579
      %v581 = vpop.f32.mrb[0].mxu0
      %v582 = vadd.f32 0.0, %v581
      %v583 = vpop.f32.mrb[0].mxu0
      %v584 = vadd.f32 0.0, %v583
      %585 = vmatprep.mubr.bf16.mxu0 0
      %586 = vmatmul.mubr.bf16.gmra.mrb[0].mxu0 %v444
      %v587 = vpop.f32.mrb[0].mxu0
      %v588 = vadd.f32 0.0, %v587
      %v589 = vpop.f32.mrb[0].mxu0
      %v590 = vadd.f32 0.0, %v589
      %v591 = vpop.f32.mrb[0].mxu0
      %v592 = vadd.f32 0.0, %v591
      %v593 = vpop.f32.mrb[0].mxu0
      %v594 = vadd.f32 0.0, %v593
      %595 = vmatprep.mubr.bf16.mxu0 0
      %596 = vmatmul.mubr.bf16.gmra.mrb[0].mxu0 %v447
      %v597 = vpop.f32.mrb[0].mxu0
      %v598 = vadd.f32 0.0, %v597
      %v599 = vpop.f32.mrb[0].mxu0
      %v600 = vadd.f32 0.0, %v599
      %v601 = vpop.f32.mrb[0].mxu0
      %v602 = vadd.f32 0.0, %v601
      %v603 = vpop.f32.mrb[0].mxu0
      %v604 = vadd.f32 0.0, %v603
      %605 = vmatprep.mubr.bf16.mxu0 0
      %606 = vmatmul.mubr.bf16.gmra.mrb[0].mxu0 %v450
      %v607 = vpop.f32.mrb[0].mxu0
      %v608 = vadd.f32 0.0, %v607
      %v609 = vpop.f32.mrb[0].mxu0
      %v610 = vadd.f32 0.0, %v609
      %v611 = vpop.f32.mrb[0].mxu0
      %v612 = vadd.f32 0.0, %v611
      %v613 = vpop.f32.mrb[0].mxu0
      %v614 = vadd.f32 0.0, %v613
      %615 = vmatprep.mubr.bf16.mxu0 0
      %616 = vmatmul.mubr.bf16.gmra.mrb[0].mxu0 %v453
      %v617 = vpop.f32.mrb[0].mxu0
      %v618 = vadd.f32 0.0, %v617
      %v619 = vpop.f32.mrb[0].mxu0
      %v620 = vadd.f32 0.0, %v619
      %v621 = vpop.f32.mrb[0].mxu0
      %v622 = vadd.f32 0.0, %v621
      %v623 = vpop.f32.mrb[0].mxu0
      %v624 = vadd.f32 0.0, %v623
      %625 = vmatprep.mubr.bf16.mxu0 0
      %626 = vmatmul.mubr.bf16.gmra.mrb[0].mxu0 %v456
      %v627 = vpop.f32.mrb[0].mxu0
      %v628 = vadd.f32 0.0, %v627
      %v629 = vpop.f32.mrb[0].mxu0
      %v630 = vadd.f32 0.0, %v629
      %v631 = vpop.f32.mrb[0].mxu0
      %v632 = vadd.f32 0.0, %v631
      %v633 = vpop.f32.mrb[0].mxu0
      %v634 = vadd.f32 0.0, %v633
      %635 = vmatprep.mubr.bf16.mxu0 0
      %636 = vmatmul.mubr.bf16.gmra.mrb[0].mxu0 %v459
      %v637 = vpop.f32.mrb[0].mxu0
      %v638 = vadd.f32 0.0, %v637
      %v639 = vpop.f32.mrb[0].mxu0
      %v640 = vadd.f32 0.0, %v639
      %v641 = vpop.f32.mrb[0].mxu0
      %v642 = vadd.f32 0.0, %v641
      %v643 = vpop.f32.mrb[0].mxu0
      %v644 = vadd.f32 0.0, %v643
      %645 = vmatprep.mubr.bf16.mxu0 0
      %646 = vmatmul.mubr.bf16.gmra.mrb[0].mxu0 %v462
      %v647 = vpop.f32.mrb[0].mxu0
      %v648 = vadd.f32 0.0, %v647
      %v649 = vpop.f32.mrb[0].mxu0
      %v650 = vadd.f32 0.0, %v649
      %v651 = vpop.f32.mrb[0].mxu0
      %v652 = vadd.f32 0.0, %v651
      %v653 = vpop.f32.mrb[0].mxu0
      %v654 = vadd.f32 0.0, %v653
      %655 = vmatprep.mubr.bf16.mxu0 0
      %656 = vmatmul.mubr.bf16.gmra.mrb[0].mxu0 %v465
      %v657 = vpop.f32.mrb[0].mxu0
      %v658 = vadd.f32 0.0, %v657
      %v659 = vpop.f32.mrb[0].mxu0
      %v660 = vadd.f32 0.0, %v659
      %v661 = vpop.f32.mrb[0].mxu0
      %v662 = vadd.f32 0.0, %v661
      %v663 = vpop.f32.mrb[0].mxu0
      %v664 = vadd.f32 0.0, %v663
      %665 = vmatprep.mubr.bf16.mxu0 0
      %666 = vmatmul.mubr.bf16.gmra.mrb[0].mxu0 %v468
      %v667 = vpop.f32.mrb[0].mxu0
      %v668 = vadd.f32 0.0, %v667
      %v669 = vpop.f32.mrb[0].mxu0
      %v670 = vadd.f32 0.0, %v669
      %v671 = vpop.f32.mrb[0].mxu0
      %v672 = vadd.f32 0.0, %v671
      %v673 = vpop.f32.mrb[0].mxu0
      %v674 = vadd.f32 0.0, %v673
      %675 = vmatprep.mubr.bf16.mxu0 0
      %676 = vmatmul.mubr.bf16.gmra.mrb[0].mxu0 %v471
      %v677 = vpop.f32.mrb[0].mxu0
      %v678 = vadd.f32 0.0, %v677
      %v679 = vpop.f32.mrb[0].mxu0
      %v680 = vadd.f32 0.0, %v679
      %v681 = vpop.f32.mrb[0].mxu0
      %v682 = vadd.f32 0.0, %v681
      %v683 = vpop.f32.mrb[0].mxu0
      %v684 = vadd.f32 0.0, %v683
      %685 = vmatprep.mubr.bf16.mxu0 0
      %686 = vmatmul.mubr.bf16.gmra.mrb[0].mxu0 %v474
      %v687 = vpop.f32.mrb[0].mxu0
      %v688 = vadd.f32 0.0, %v687
      %v689 = vpop.f32.mrb[0].mxu0
      %v690 = vadd.f32 0.0, %v689
      %v691 = vpop.f32.mrb[0].mxu0
      %v692 = vadd.f32 0.0, %v691
      %v693 = vpop.f32.mrb[0].mxu0
      %v694 = vadd.f32 0.0, %v693
      %695 = vmatprep.mubr.bf16.mxu0 0
      %696 = vmatmul.mubr.bf16.gmra.mrb[0].mxu0 %v477
      %v697 = vpop.f32.mrb[0].mxu0
      %v698 = vadd.f32 0.0, %v697
      %v699 = vpop.f32.mrb[0].mxu0
      %v700 = vadd.f32 0.0, %v699
      %v701 = vpop.f32.mrb[0].mxu0
      %v702 = vadd.f32 0.0, %v701
      %v703 = vpop.f32.mrb[0].mxu0
      %v704 = vadd.f32 0.0, %v703
      %705 = vmatprep.mubr.bf16.mxu0 0
      %706 = vmatmul.mubr.bf16.gmra.mrb[0].mxu0 %v480
      %v707 = vpop.f32.mrb[0].mxu0
      %v708 = vadd.f32 0.0, %v707
      %v709 = vpop.f32.mrb[0].mxu0
      %v710 = vadd.f32 0.0, %v709
      %v711 = vpop.f32.mrb[0].mxu0
      %v712 = vadd.f32 0.0, %v711
      %v713 = vpop.f32.mrb[0].mxu0
      %v714 = vadd.f32 0.0, %v713
      %715 = vmatprep.mubr.bf16.mxu0 0
      %716 = vmatmul.mubr.bf16.gmra.mrb[0].mxu0 %v483
      %v717 = vpop.f32.mrb[0].mxu0
      %v718 = vadd.f32 0.0, %v717
      %v719 = vpop.f32.mrb[0].mxu0
      %v720 = vadd.f32 0.0, %v719
      %v721 = vpop.f32.mrb[0].mxu0
      %v722 = vadd.f32 0.0, %v721
      %v723 = vpop.f32.mrb[0].mxu0
      %v724 = vadd.f32 0.0, %v723
      %725 = vdwg.mxu0
      %v726 = vmax.f32 %v568, %v570
      %727 = vmax.xlane.f32.xlu0 %v726
      %v728 = vpop.xlane.xlu0 %727
      %v729 = vmax.f32 %v572, %v574
      %730 = vmax.xlane.f32.xlu0 %v729
      %v731 = vpop.xlane.xlu0 %730
      %v732 = vmax.f32 %v578, %v580
      %733 = vmax.xlane.f32.xlu0 %v732
      %v734 = vpop.xlane.xlu0 %733
      %v735 = vmax.f32 %v582, %v584
      %736 = vmax.xlane.f32.xlu0 %v735
      %v737 = vpop.xlane.xlu0 %736
      %v738 = vmax.f32 %v588, %v590
      %739 = vmax.xlane.f32.xlu0 %v738
      %v740 = vpop.xlane.xlu0 %739
      %v741 = vmax.f32 %v592, %v594
      %742 = vmax.xlane.f32.xlu0 %v741
      %v743 = vpop.xlane.xlu0 %742
      %v744 = vmax.f32 %v598, %v600
      %745 = vmax.xlane.f32.xlu0 %v744
      %v746 = vpop.xlane.xlu0 %745
      %v747 = vmax.f32 %v602, %v604
      %748 = vmax.xlane.f32.xlu0 %v747
      %v749 = vpop.xlane.xlu0 %748
      %v750 = vmax.f32 %v608, %v610
      %751 = vmax.xlane.f32.xlu0 %v750
      %v752 = vpop.xlane.xlu0 %751
      %v753 = vmax.f32 %v612, %v614
      %754 = vmax.xlane.f32.xlu0 %v753
      %v755 = vpop.xlane.xlu0 %754
      %v756 = vmax.f32 %v618, %v620
      %757 = vmax.xlane.f32.xlu0 %v756
      %v758 = vpop.xlane.xlu0 %757
      %v759 = vmax.f32 %v622, %v624
      %760 = vmax.xlane.f32.xlu0 %v759
      %v761 = vpop.xlane.xlu0 %760
      %v762 = vmax.f32 %v628, %v630
      %763 = vmax.xlane.f32.xlu0 %v762
      %v764 = vpop.xlane.xlu0 %763
      %v765 = vmax.f32 %v632, %v634
      %766 = vmax.xlane.f32.xlu0 %v765
      %v767 = vpop.xlane.xlu0 %766
      %v768 = vmax.f32 %v638, %v640
      %769 = vmax.xlane.f32.xlu0 %v768
      %v770 = vpop.xlane.xlu0 %769
      %v771 = vmax.f32 %v642, %v644
      %772 = vmax.xlane.f32.xlu0 %v771
      %v773 = vpop.xlane.xlu0 %772
      %v774 = vmax.f32 %v648, %v650
      %775 = vmax.xlane.f32.xlu0 %v774
      %v776 = vpop.xlane.xlu0 %775
      %v777 = vmax.f32 %v652, %v654
      %778 = vmax.xlane.f32.xlu0 %v777
      %v779 = vpop.xlane.xlu0 %778
      %v780 = vmax.f32 %v658, %v660
      %781 = vmax.xlane.f32.xlu0 %v780
      %v782 = vpop.xlane.xlu0 %781
      %v783 = vmax.f32 %v662, %v664
      %784 = vmax.xlane.f32.xlu0 %v783
      %v785 = vpop.xlane.xlu0 %784
      %v786 = vmax.f32 %v668, %v670
      %787 = vmax.xlane.f32.xlu0 %v786
      %v788 = vpop.xlane.xlu0 %787
      %v789 = vmax.f32 %v672, %v674
      %790 = vmax.xlane.f32.xlu0 %v789
      %v791 = vpop.xlane.xlu0 %790
      %v792 = vmax.f32 %v678, %v680
      %793 = vmax.xlane.f32.xlu0 %v792
      %v794 = vpop.xlane.xlu0 %793
      %v795 = vmax.f32 %v682, %v684
      %796 = vmax.xlane.f32.xlu0 %v795
      %v797 = vpop.xlane.xlu0 %796
      %v798 = vmax.f32 %v688, %v690
      %799 = vmax.xlane.f32.xlu0 %v798
      %v800 = vpop.xlane.xlu0 %799
      %v801 = vmax.f32 %v692, %v694
      %802 = vmax.xlane.f32.xlu0 %v801
      %v803 = vpop.xlane.xlu0 %802
      %v804 = vmax.f32 %v698, %v700
      %805 = vmax.xlane.f32.xlu0 %v804
      %v806 = vpop.xlane.xlu0 %805
      %v807 = vmax.f32 %v702, %v704
      %808 = vmax.xlane.f32.xlu0 %v807
      %v809 = vpop.xlane.xlu0 %808
      %v810 = vmax.f32 %v708, %v710
      %811 = vmax.xlane.f32.xlu0 %v810
      %v812 = vpop.xlane.xlu0 %811
      %v813 = vmax.f32 %v712, %v714
      %814 = vmax.xlane.f32.xlu0 %v813
      %v815 = vpop.xlane.xlu0 %814
      %v816 = vmax.f32 %v718, %v720
      %817 = vmax.xlane.f32.xlu0 %v816
      %v818 = vpop.xlane.xlu0 %817
      %v819 = vmax.f32 %v722, %v724
      %820 = vmax.xlane.f32.xlu0 %v819
      %v821 = vpop.xlane.xlu0 %820
      %v822 = vsub.f32 %v568, %v728
      %v823 = vsub.f32 %v570, %v728
      %v824 = vsub.f32 %v572, %v731
      %v825 = vsub.f32 %v574, %v731
      %v826 = vsub.f32 %v578, %v734
      %v827 = vsub.f32 %v580, %v734
      %v828 = vsub.f32 %v582, %v737
      %v829 = vsub.f32 %v584, %v737
      %v830 = vsub.f32 %v588, %v740
      %v831 = vsub.f32 %v590, %v740
      %v832 = vsub.f32 %v592, %v743
      %v833 = vsub.f32 %v594, %v743
      %v834 = vsub.f32 %v598, %v746
      %v835 = vsub.f32 %v600, %v746
      %v836 = vsub.f32 %v602, %v749
      %v837 = vsub.f32 %v604, %v749
      %v838 = vsub.f32 %v608, %v752
      %v839 = vsub.f32 %v610, %v752
      %v840 = vsub.f32 %v612, %v755
      %v841 = vsub.f32 %v614, %v755
      %v842 = vsub.f32 %v618, %v758
      %v843 = vsub.f32 %v620, %v758
      %v844 = vsub.f32 %v622, %v761
      %v845 = vsub.f32 %v624, %v761
      %v846 = vsub.f32 %v628, %v764
      %v847 = vsub.f32 %v630, %v764
      %v848 = vsub.f32 %v632, %v767
      %v849 = vsub.f32 %v634, %v767
      %v850 = vsub.f32 %v638, %v770
      %v851 = vsub.f32 %v640, %v770
      %v852 = vsub.f32 %v642, %v773
      %v853 = vsub.f32 %v644, %v773
      %v854 = vsub.f32 %v648, %v776
      %v855 = vsub.f32 %v650, %v776
      %v856 = vsub.f32 %v652, %v779
      %v857 = vsub.f32 %v654, %v779
      %v858 = vsub.f32 %v658, %v782
      %v859 = vsub.f32 %v660, %v782
      %v860 = vsub.f32 %v662, %v785
      %v861 = vsub.f32 %v664, %v785
      %v862 = vsub.f32 %v668, %v788
      %v863 = vsub.f32 %v670, %v788
      %v864 = vsub.f32 %v672, %v791
      %v865 = vsub.f32 %v674, %v791
      %v866 = vsub.f32 %v678, %v794
      %v867 = vsub.f32 %v680, %v794
      %v868 = vsub.f32 %v682, %v797
      %v869 = vsub.f32 %v684, %v797
      %v870 = vsub.f32 %v688, %v800
      %v871 = vsub.f32 %v690, %v800
      %v872 = vsub.f32 %v692, %v803
      %v873 = vsub.f32 %v694, %v803
      %v874 = vsub.f32 %v698, %v806
      %v875 = vsub.f32 %v700, %v806
      %v876 = vsub.f32 %v702, %v809
      %v877 = vsub.f32 %v704, %v809
      %v878 = vsub.f32 %v708, %v812
      %v879 = vsub.f32 %v710, %v812
      %v880 = vsub.f32 %v712, %v815
      %v881 = vsub.f32 %v714, %v815
      %v882 = vsub.f32 %v718, %v818
      %v883 = vsub.f32 %v720, %v818
      %v884 = vsub.f32 %v722, %v821
      %v885 = vsub.f32 %v724, %v821
      %v886 = vmul.f32 %v822, 1.442695
      %v887 = vpow.pop %v886
      %v888 = vmul.f32 %v823, 1.442695
      %v889 = vpow.pop %v888
      %v890 = vmul.f32 %v824, 1.442695
      %v891 = vpow.pop %v890
      %v892 = vmul.f32 %v825, 1.442695
      %v893 = vpow.pop %v892
      %v894 = vmul.f32 %v826, 1.442695
      %v895 = vpow.pop %v894
      %v896 = vmul.f32 %v827, 1.442695
      %v897 = vpow.pop %v896
      %v898 = vmul.f32 %v828, 1.442695
      %v899 = vpow.pop %v898
      %v900 = vmul.f32 %v829, 1.442695
      %v901 = vpow.pop %v900
      %v902 = vmul.f32 %v830, 1.442695
      %v903 = vpow.pop %v902
      %v904 = vmul.f32 %v831, 1.442695
      %v905 = vpow.pop %v904
      %v906 = vmul.f32 %v832, 1.442695
      %v907 = vpow.pop %v906
      %v908 = vmul.f32 %v833, 1.442695
      %v909 = vpow.pop %v908
      %v910 = vmul.f32 %v834, 1.442695
      %v911 = vpow.pop %v910
      %v912 = vmul.f32 %v835, 1.442695
      %v913 = vpow.pop %v912
      %v914 = vmul.f32 %v836, 1.442695
      %v915 = vpow.pop %v914
      %v916 = vmul.f32 %v837, 1.442695
      %v917 = vpow.pop %v916
      %v918 = vmul.f32 %v838, 1.442695
      %v919 = vpow.pop %v918
      %v920 = vmul.f32 %v839, 1.442695
      %v921 = vpow.pop %v920
      %v922 = vmul.f32 %v840, 1.442695
      %v923 = vpow.pop %v922
      %v924 = vmul.f32 %v841, 1.442695
      %v925 = vpow.pop %v924
      %v926 = vmul.f32 %v842, 1.442695
      %v927 = vpow.pop %v926
      %v928 = vmul.f32 %v843, 1.442695
      %v929 = vpow.pop %v928
      %v930 = vmul.f32 %v844, 1.442695
      %v931 = vpow.pop %v930
      %v932 = vmul.f32 %v845, 1.442695
      %v933 = vpow.pop %v932
      %v934 = vmul.f32 %v846, 1.442695
      %v935 = vpow.pop %v934
      %v936 = vmul.f32 %v847, 1.442695
      %v937 = vpow.pop %v936
      %v938 = vmul.f32 %v848, 1.442695
      %v939 = vpow.pop %v938
      %v940 = vmul.f32 %v849, 1.442695
      %v941 = vpow.pop %v940
      %v942 = vmul.f32 %v850, 1.442695
      %v943 = vpow.pop %v942
      %v944 = vmul.f32 %v851, 1.442695
      %v945 = vpow.pop %v944
      %v946 = vmul.f32 %v852, 1.442695
      %v947 = vpow.pop %v946
      %v948 = vmul.f32 %v853, 1.442695
      %v949 = vpow.pop %v948
      %v950 = vmul.f32 %v854, 1.442695
      %v951 = vpow.pop %v950
      %v952 = vmul.f32 %v855, 1.442695
      %v953 = vpow.pop %v952
      %v954 = vmul.f32 %v856, 1.442695
      %v955 = vpow.pop %v954
      %v956 = vmul.f32 %v857, 1.442695
      %v957 = vpow.pop %v956
      %v958 = vmul.f32 %v858, 1.442695
      %v959 = vpow.pop %v958
      %v960 = vmul.f32 %v859, 1.442695
      %v961 = vpow.pop %v960
      %v962 = vmul.f32 %v860, 1.442695
      %v963 = vpow.pop %v962
      %v964 = vmul.f32 %v861, 1.442695
      %v965 = vpow.pop %v964
      %v966 = vmul.f32 %v862, 1.442695
      %v967 = vpow.pop %v966
      %v968 = vmul.f32 %v863, 1.442695
      %v969 = vpow.pop %v968
      %v970 = vmul.f32 %v864, 1.442695
      %v971 = vpow.pop %v970
      %v972 = vmul.f32 %v865, 1.442695
      %v973 = vpow.pop %v972
      %v974 = vmul.f32 %v866, 1.442695
      %v975 = vpow.pop %v974
      %v976 = vmul.f32 %v867, 1.442695
      %v977 = vpow.pop %v976
      %v978 = vmul.f32 %v868, 1.442695
      %v979 = vpow.pop %v978
      %v980 = vmul.f32 %v869, 1.442695
      %v981 = vpow.pop %v980
      %v982 = vmul.f32 %v870, 1.442695
      %v983 = vpow.pop %v982
      %v984 = vmul.f32 %v871, 1.442695
      %v985 = vpow.pop %v984
      %v986 = vmul.f32 %v872, 1.442695
      %v987 = vpow.pop %v986
      %v988 = vmul.f32 %v873, 1.442695
      %v989 = vpow.pop %v988
      %v990 = vmul.f32 %v874, 1.442695
      %v991 = vpow.pop %v990
      %v992 = vmul.f32 %v875, 1.442695
      %v993 = vpow.pop %v992
      %v994 = vmul.f32 %v876, 1.442695
      %v995 = vpow.pop %v994
      %v996 = vmul.f32 %v877, 1.442695
      %v997 = vpow.pop %v996
      %v998 = vmul.f32 %v878, 1.442695
      %v999 = vpow.pop %v998
      %v1000 = vmul.f32 %v879, 1.442695
      %v1001 = vpow.pop %v1000
      %v1002 = vmul.f32 %v880, 1.442695
      %v1003 = vpow.pop %v1002
      %v1004 = vmul.f32 %v881, 1.442695
      %v1005 = vpow.pop %v1004
      %v1006 = vmul.f32 %v882, 1.442695
      %v1007 = vpow.pop %v1006
      %v1008 = vmul.f32 %v883, 1.442695
      %v1009 = vpow.pop %v1008
      %v1010 = vmul.f32 %v884, 1.442695
      %v1011 = vpow.pop %v1010
      %v1012 = vmul.f32 %v885, 1.442695
      %v1013 = vpow.pop %v1012
      %v1014 = vadd.f32 %v887, %v889
      %1015 = vadd.xlane.f32.xlu0 %v1014
      %v1016 = vpop.xlane.xlu0 %1015
      %v1017 = vadd.f32 %v891, %v893
      %1018 = vadd.xlane.f32.xlu0 %v1017
      %v1019 = vpop.xlane.xlu0 %1018
      %v1020 = vadd.f32 %v895, %v897
      %1021 = vadd.xlane.f32.xlu0 %v1020
      %v1022 = vpop.xlane.xlu0 %1021
      %v1023 = vadd.f32 %v899, %v901
      %1024 = vadd.xlane.f32.xlu0 %v1023
      %v1025 = vpop.xlane.xlu0 %1024
      %v1026 = vadd.f32 %v903, %v905
      %1027 = vadd.xlane.f32.xlu0 %v1026
      %v1028 = vpop.xlane.xlu0 %1027
      %v1029 = vadd.f32 %v907, %v909
      %1030 = vadd.xlane.f32.xlu0 %v1029
      %v1031 = vpop.xlane.xlu0 %1030
      %v1032 = vadd.f32 %v911, %v913
      %1033 = vadd.xlane.f32.xlu0 %v1032
      %v1034 = vpop.xlane.xlu0 %1033
      %v1035 = vadd.f32 %v915, %v917
      %1036 = vadd.xlane.f32.xlu0 %v1035
      %v1037 = vpop.xlane.xlu0 %1036
      %v1038 = vadd.f32 %v919, %v921
      %1039 = vadd.xlane.f32.xlu0 %v1038
      %v1040 = vpop.xlane.xlu0 %1039
      %v1041 = vadd.f32 %v923, %v925
      %1042 = vadd.xlane.f32.xlu0 %v1041
      %v1043 = vpop.xlane.xlu0 %1042
      %v1044 = vadd.f32 %v927, %v929
      %1045 = vadd.xlane.f32.xlu0 %v1044
      %v1046 = vpop.xlane.xlu0 %1045
      %v1047 = vadd.f32 %v931, %v933
      %1048 = vadd.xlane.f32.xlu0 %v1047
      %v1049 = vpop.xlane.xlu0 %1048
      %v1050 = vadd.f32 %v935, %v937
      %1051 = vadd.xlane.f32.xlu0 %v1050
      %v1052 = vpop.xlane.xlu0 %1051
      %v1053 = vadd.f32 %v939, %v941
      %1054 = vadd.xlane.f32.xlu0 %v1053
      %v1055 = vpop.xlane.xlu0 %1054
      %v1056 = vadd.f32 %v943, %v945
      %1057 = vadd.xlane.f32.xlu0 %v1056
      %v1058 = vpop.xlane.xlu0 %1057
      %v1059 = vadd.f32 %v947, %v949
      %1060 = vadd.xlane.f32.xlu0 %v1059
      %v1061 = vpop.xlane.xlu0 %1060
      %v1062 = vadd.f32 %v951, %v953
      %1063 = vadd.xlane.f32.xlu0 %v1062
      %v1064 = vpop.xlane.xlu0 %1063
      %v1065 = vadd.f32 %v955, %v957
      %1066 = vadd.xlane.f32.xlu0 %v1065
      %v1067 = vpop.xlane.xlu0 %1066
      %v1068 = vadd.f32 %v959, %v961
      %1069 = vadd.xlane.f32.xlu0 %v1068
      %v1070 = vpop.xlane.xlu0 %1069
      %v1071 = vadd.f32 %v963, %v965
      %1072 = vadd.xlane.f32.xlu0 %v1071
      %v1073 = vpop.xlane.xlu0 %1072
      %v1074 = vadd.f32 %v967, %v969
      %1075 = vadd.xlane.f32.xlu0 %v1074
      %v1076 = vpop.xlane.xlu0 %1075
      %v1077 = vadd.f32 %v971, %v973
      %1078 = vadd.xlane.f32.xlu0 %v1077
      %v1079 = vpop.xlane.xlu0 %1078
      %v1080 = vadd.f32 %v975, %v977
      %1081 = vadd.xlane.f32.xlu0 %v1080
      %v1082 = vpop.xlane.xlu0 %1081
      %v1083 = vadd.f32 %v979, %v981
      %1084 = vadd.xlane.f32.xlu0 %v1083
      %v1085 = vpop.xlane.xlu0 %1084
      %v1086 = vadd.f32 %v983, %v985
      %1087 = vadd.xlane.f32.xlu0 %v1086
      %v1088 = vpop.xlane.xlu0 %1087
      %v1089 = vadd.f32 %v987, %v989
      %1090 = vadd.xlane.f32.xlu0 %v1089
      %v1091 = vpop.xlane.xlu0 %1090
      %v1092 = vadd.f32 %v991, %v993
      %1093 = vadd.xlane.f32.xlu0 %v1092
      %v1094 = vpop.xlane.xlu0 %1093
      %v1095 = vadd.f32 %v995, %v997
      %1096 = vadd.xlane.f32.xlu0 %v1095
      %v1097 = vpop.xlane.xlu0 %1096
      %v1098 = vadd.f32 %v999, %v1001
      %1099 = vadd.xlane.f32.xlu0 %v1098
      %v1100 = vpop.xlane.xlu0 %1099
      %v1101 = vadd.f32 %v1003, %v1005
      %1102 = vadd.xlane.f32.xlu0 %v1101
      %v1103 = vpop.xlane.xlu0 %1102
      %v1104 = vadd.f32 %v1007, %v1009
      %1105 = vadd.xlane.f32.xlu0 %v1104
      %v1106 = vpop.xlane.xlu0 %1105
      %v1107 = vadd.f32 %v1011, %v1013
      %1108 = vadd.xlane.f32.xlu0 %v1107
      %v1109 = vpop.xlane.xlu0 %1108
      %v1110 = vrcp.pop %v1016
      %v1111 = vrcp.pop %v1019
      %v1112 = vrcp.pop %v1022
      %v1113 = vrcp.pop %v1025
      %v1114 = vrcp.pop %v1028
      %v1115 = vrcp.pop %v1031
      %v1116 = vrcp.pop %v1034
      %v1117 = vrcp.pop %v1037
      %v1118 = vrcp.pop %v1040
      %v1119 = vrcp.pop %v1043
      %v1120 = vrcp.pop %v1046
      %v1121 = vrcp.pop %v1049
      %v1122 = vrcp.pop %v1052
      %v1123 = vrcp.pop %v1055
      %v1124 = vrcp.pop %v1058
      %v1125 = vrcp.pop %v1061
      %v1126 = vrcp.pop %v1064
      %v1127 = vrcp.pop %v1067
      %v1128 = vrcp.pop %v1070
      %v1129 = vrcp.pop %v1073
      %v1130 = vrcp.pop %v1076
      %v1131 = vrcp.pop %v1079
      %v1132 = vrcp.pop %v1082
      %v1133 = vrcp.pop %v1085
      %v1134 = vrcp.pop %v1088
      %v1135 = vrcp.pop %v1091
      %v1136 = vrcp.pop %v1094
      %v1137 = vrcp.pop %v1097
      %v1138 = vrcp.pop %v1100
      %v1139 = vrcp.pop %v1103
      %v1140 = vrcp.pop %v1106
      %v1141 = vrcp.pop %v1109
      %v1142 = vmul.f32 %v887, %v1110
      %v1143 = vmul.f32 %v889, %v1110
      %v1144 = vmul.f32 %v891, %v1111
      %v1145 = vmul.f32 %v893, %v1111
      %v1146 = vmul.f32 %v895, %v1112
      %v1147 = vmul.f32 %v897, %v1112
      %v1148 = vmul.f32 %v899, %v1113
      %v1149 = vmul.f32 %v901, %v1113
      %v1150 = vmul.f32 %v903, %v1114
      %v1151 = vmul.f32 %v905, %v1114
      %v1152 = vmul.f32 %v907, %v1115
      %v1153 = vmul.f32 %v909, %v1115
      %v1154 = vmul.f32 %v911, %v1116
      %v1155 = vmul.f32 %v913, %v1116
      %v1156 = vmul.f32 %v915, %v1117
      %v1157 = vmul.f32 %v917, %v1117
      %v1158 = vmul.f32 %v919, %v1118
      %v1159 = vmul.f32 %v921, %v1118
      %v1160 = vmul.f32 %v923, %v1119
      %v1161 = vmul.f32 %v925, %v1119
      %v1162 = vmul.f32 %v927, %v1120
      %v1163 = vmul.f32 %v929, %v1120
      %v1164 = vmul.f32 %v931, %v1121
      %v1165 = vmul.f32 %v933, %v1121
      %v1166 = vmul.f32 %v935, %v1122
      %v1167 = vmul.f32 %v937, %v1122
      %v1168 = vmul.f32 %v939, %v1123
      %v1169 = vmul.f32 %v941, %v1123
      %v1170 = vmul.f32 %v943, %v1124
      %v1171 = vmul.f32 %v945, %v1124
      %v1172 = vmul.f32 %v947, %v1125
      %v1173 = vmul.f32 %v949, %v1125
      %v1174 = vmul.f32 %v951, %v1126
      %v1175 = vmul.f32 %v953, %v1126
      %v1176 = vmul.f32 %v955, %v1127
      %v1177 = vmul.f32 %v957, %v1127
      %v1178 = vmul.f32 %v959, %v1128
      %v1179 = vmul.f32 %v961, %v1128
      %v1180 = vmul.f32 %v963, %v1129
      %v1181 = vmul.f32 %v965, %v1129
      %v1182 = vmul.f32 %v967, %v1130
      %v1183 = vmul.f32 %v969, %v1130
      %v1184 = vmul.f32 %v971, %v1131
      %v1185 = vmul.f32 %v973, %v1131
      %v1186 = vmul.f32 %v975, %v1132
      %v1187 = vmul.f32 %v977, %v1132
      %v1188 = vmul.f32 %v979, %v1133
      %v1189 = vmul.f32 %v981, %v1133
      %v1190 = vmul.f32 %v983, %v1134
      %v1191 = vmul.f32 %v985, %v1134
      %v1192 = vmul.f32 %v987, %v1135
      %v1193 = vmul.f32 %v989, %v1135
      %v1194 = vmul.f32 %v991, %v1136
      %v1195 = vmul.f32 %v993, %v1136
      %v1196 = vmul.f32 %v995, %v1137
      %v1197 = vmul.f32 %v997, %v1137
      %v1198 = vmul.f32 %v999, %v1138
      %v1199 = vmul.f32 %v1001, %v1138
      %v1200 = vmul.f32 %v1003, %v1139
      %v1201 = vmul.f32 %v1005, %v1139
      %v1202 = vmul.f32 %v1007, %v1140
      %v1203 = vmul.f32 %v1009, %v1140
      %v1204 = vmul.f32 %v1011, %v1141
      %v1205 = vmul.f32 %v1013, %v1141
      %v1206 = vpack.c.bf16 %v1144, %v1142
      %v1207 = vpack.c.bf16 %v1145, %v1143
      %v1208 = vpack.c.bf16 %v1148, %v1146
      %v1209 = vpack.c.bf16 %v1149, %v1147
      %v1210 = vpack.c.bf16 %v1152, %v1150
      %v1211 = vpack.c.bf16 %v1153, %v1151
      %v1212 = vpack.c.bf16 %v1156, %v1154
      %v1213 = vpack.c.bf16 %v1157, %v1155
      %v1214 = vpack.c.bf16 %v1160, %v1158
      %v1215 = vpack.c.bf16 %v1161, %v1159
      %v1216 = vpack.c.bf16 %v1164, %v1162
      %v1217 = vpack.c.bf16 %v1165, %v1163
      %v1218 = vpack.c.bf16 %v1168, %v1166
      %v1219 = vpack.c.bf16 %v1169, %v1167
      %v1220 = vpack.c.bf16 %v1172, %v1170
      %v1221 = vpack.c.bf16 %v1173, %v1171
      %v1222 = vpack.c.bf16 %v1176, %v1174
      %v1223 = vpack.c.bf16 %v1177, %v1175
      %v1224 = vpack.c.bf16 %v1180, %v1178
      %v1225 = vpack.c.bf16 %v1181, %v1179
      %v1226 = vpack.c.bf16 %v1184, %v1182
      %v1227 = vpack.c.bf16 %v1185, %v1183
      %v1228 = vpack.c.bf16 %v1188, %v1186
      %v1229 = vpack.c.bf16 %v1189, %v1187
      %v1230 = vpack.c.bf16 %v1192, %v1190
      %v1231 = vpack.c.bf16 %v1193, %v1191
      %v1232 = vpack.c.bf16 %v1196, %v1194
      %v1233 = vpack.c.bf16 %v1197, %v1195
      %v1234 = vpack.c.bf16 %v1200, %v1198
      %v1235 = vpack.c.bf16 %v1201, %v1199
      %v1236 = vpack.c.bf16 %v1204, %v1202
      %v1237 = vpack.c.bf16 %v1205, %v1203
      %v1238 = vld [vmem:[%s205] sm:$0xf]
      %v1239 = vld [vmem:[%s205 + $0x4] sm:$0xf]
      %v1240 = vld [vmem:[%s205 + $0x8] sm:$0xf]
      %v1241 = vld [vmem:[%s205 + $0xc] sm:$0xf]
      %v1242 = vld [vmem:[%s205 + $0x10] sm:$0xf]
      %v1243 = vld [vmem:[%s205 + $0x14] sm:$0xf]
      %v1244 = vld [vmem:[%s205 + $0x18] sm:$0xf]
      %v1245 = vld [vmem:[%s205 + $0x1c] sm:$0xf]
      %v1246 = vld [vmem:[%s205 + $0x20] sm:$0xf]
      %v1247 = vld [vmem:[%s205 + $0x24] sm:$0xf]
      %v1248 = vld [vmem:[%s205 + $0x28] sm:$0xf]
      %v1249 = vld [vmem:[%s205 + $0x2c] sm:$0xf]
      %v1250 = vld [vmem:[%s205 + $0x30] sm:$0xf]
      %v1251 = vld [vmem:[%s205 + $0x34] sm:$0xf]
      %v1252 = vld [vmem:[%s205 + $0x38] sm:$0xf]
      %v1253 = vld [vmem:[%s205 + $0x3c] sm:$0xf]
      %v1254 = vld [vmem:[%s205 + $0x40] sm:$0xf]
      %v1255 = vld [vmem:[%s205 + $0x44] sm:$0xf]
      %v1256 = vld [vmem:[%s205 + $0x48] sm:$0xf]
      %v1257 = vld [vmem:[%s205 + $0x4c] sm:$0xf]
      %v1258 = vld [vmem:[%s205 + $0x50] sm:$0xf]
      %v1259 = vld [vmem:[%s205 + $0x54] sm:$0xf]
      %v1260 = vld [vmem:[%s205 + $0x58] sm:$0xf]
      %v1261 = vld [vmem:[%s205 + $0x5c] sm:$0xf]
      %v1262 = vld [vmem:[%s205 + $0x60] sm:$0xf]
      %v1263 = vld [vmem:[%s205 + $0x64] sm:$0xf]
      %v1264 = vld [vmem:[%s205 + $0x68] sm:$0xf]
      %v1265 = vld [vmem:[%s205 + $0x6c] sm:$0xf]
      %v1266 = vld [vmem:[%s205 + $0x70] sm:$0xf]
      %v1267 = vld [vmem:[%s205 + $0x74] sm:$0xf]
      %v1268 = vld [vmem:[%s205 + $0x78] sm:$0xf]
      %v1269 = vld [vmem:[%s205 + $0x7c] sm:$0xf]
      %v1302 = vunpack.c.l.b16 %v1238
      %v1303 = vunpack.c.l.b16 %v1239
      %v1304 = vunpack.c.l.b16 %v1240
      %v1305 = vunpack.c.l.b16 %v1241
      %v1306 = vunpack.c.l.b16 %v1242
      %v1307 = vunpack.c.l.b16 %v1243
      %v1308 = vunpack.c.l.b16 %v1244
      %v1309 = vunpack.c.l.b16 %v1245
      %v1310 = vunpack.c.l.b16 %v1246
      %v1311 = vunpack.c.l.b16 %v1247
      %v1312 = vunpack.c.l.b16 %v1248
      %v1313 = vunpack.c.l.b16 %v1249
      %v1314 = vunpack.c.l.b16 %v1250
      %v1315 = vunpack.c.l.b16 %v1251
      %v1316 = vunpack.c.l.b16 %v1252
      %v1317 = vunpack.c.l.b16 %v1253
      %v1318 = vunpack.c.l.b16 %v1254
      %v1319 = vunpack.c.l.b16 %v1255
      %v1320 = vunpack.c.l.b16 %v1256
      %v1321 = vunpack.c.l.b16 %v1257
      %v1322 = vunpack.c.l.b16 %v1258
      %v1323 = vunpack.c.l.b16 %v1259
      %v1324 = vunpack.c.l.b16 %v1260
      %v1325 = vunpack.c.l.b16 %v1261
      %v1326 = vunpack.c.l.b16 %v1262
      %v1327 = vunpack.c.l.b16 %v1263
      %v1328 = vunpack.c.l.b16 %v1264
      %v1329 = vunpack.c.l.b16 %v1265
      %v1330 = vunpack.c.l.b16 %v1266
      %v1331 = vunpack.c.l.b16 %v1267
      %v1332 = vunpack.c.l.b16 %v1268
      %v1333 = vunpack.c.l.b16 %v1269
      %v1334 = vpack.c.b16 %v1303, %v1302
      %v1335 = vpack.c.b16 %v1305, %v1304
      %v1336 = vpack.c.b16 %v1307, %v1306
      %v1337 = vpack.c.b16 %v1309, %v1308
      %v1338 = vpack.c.b16 %v1311, %v1310
      %v1339 = vpack.c.b16 %v1313, %v1312
      %v1340 = vpack.c.b16 %v1315, %v1314
      %v1341 = vpack.c.b16 %v1317, %v1316
      %v1342 = vpack.c.b16 %v1319, %v1318
      %v1343 = vpack.c.b16 %v1321, %v1320
      %v1344 = vpack.c.b16 %v1323, %v1322
      %v1345 = vpack.c.b16 %v1325, %v1324
      %v1346 = vpack.c.b16 %v1327, %v1326
      %v1347 = vpack.c.b16 %v1329, %v1328
      %v1348 = vpack.c.b16 %v1331, %v1330
      %v1349 = vpack.c.b16 %v1333, %v1332
      %1366 = vmatprep.subr.bf16.mxu0 0
      %1367 = vmatpush1.bf16.msra.mxu0 %v1334
      %1368 = vmatprep.subr.bf16.mxu0 0
      %1369 = vmatpush1.bf16.msra.mxu0 %v1335
      %1370 = vmatprep.subr.bf16.mxu0 0
      %1371 = vmatpush1.bf16.msra.mxu0 %v1336
      %1372 = vmatprep.subr.bf16.mxu0 0
      %1373 = vmatpush1.bf16.msra.mxu0 %v1337
      %1374 = vmatprep.subr.bf16.mxu0 0
      %1375 = vmatpush1.bf16.msra.mxu0 %v1338
      %1376 = vmatprep.subr.bf16.mxu0 0
      %1377 = vmatpush1.bf16.msra.mxu0 %v1339
      %1378 = vmatprep.subr.bf16.mxu0 0
      %1379 = vmatpush1.bf16.msra.mxu0 %v1340
      %1380 = vmatprep.subr.bf16.mxu0 0
      %1381 = vmatpush1.bf16.msra.mxu0 %v1341
      %1382 = vmatprep.subr.bf16.mxu0 0
      %1383 = vmatpush1.bf16.msra.mxu0 %v1342
      %1384 = vmatprep.subr.bf16.mxu0 0
      %1385 = vmatpush1.bf16.msra.mxu0 %v1343
      %1386 = vmatprep.subr.bf16.mxu0 0
      %1387 = vmatpush1.bf16.msra.mxu0 %v1344
      %1388 = vmatprep.subr.bf16.mxu0 0
      %1389 = vmatpush1.bf16.msra.mxu0 %v1345
      %1390 = vmatprep.subr.bf16.mxu0 0
      %1391 = vmatpush1.bf16.msra.mxu0 %v1346
      %1392 = vmatprep.subr.bf16.mxu0 0
      %1393 = vmatpush1.bf16.msra.mxu0 %v1347
      %1394 = vmatprep.subr.bf16.mxu0 0
      %1395 = vmatpush1.bf16.msra.mxu0 %v1348
      %1396 = vmatprep.subr.bf16.mxu0 0
      %1397 = vmatpush1.bf16.msra.mxu0 %v1349
      %1398 = vmatprep.mubr.bf16.mxu0 %v1207
      %1399 = vmatmul.mubr.bf16.gmra.mrb[0].mxu0 %v1206
      %v1400 = vpop.f32.mrb[0].mxu0
      %v1401 = vadd.f32 0.0, %v1400
      %v1402 = vpop.f32.mrb[0].mxu0
      %v1403 = vpop.f32.mrb[0].mxu0
      %v1404 = vadd.f32 0.0, %v1403
      %v1405 = vpop.f32.mrb[0].mxu0
      %1406 = vmatprep.mubr.bf16.mxu0 %v1209
      %1407 = vmatmul.mubr.bf16.gmra.mrb[0].mxu0 %v1208
      %v1408 = vpop.f32.mrb[0].mxu0
      %v1409 = vadd.f32 0.0, %v1408
      %v1410 = vpop.f32.mrb[0].mxu0
      %v1411 = vpop.f32.mrb[0].mxu0
      %v1412 = vadd.f32 0.0, %v1411
      %v1413 = vpop.f32.mrb[0].mxu0
      %1414 = vmatprep.mubr.bf16.mxu0 %v1211
      %1415 = vmatmul.mubr.bf16.gmra.mrb[0].mxu0 %v1210
      %v1416 = vpop.f32.mrb[0].mxu0
      %v1417 = vadd.f32 0.0, %v1416
      %v1418 = vpop.f32.mrb[0].mxu0
      %v1419 = vpop.f32.mrb[0].mxu0
      %v1420 = vadd.f32 0.0, %v1419
      %v1421 = vpop.f32.mrb[0].mxu0
      %1422 = vmatprep.mubr.bf16.mxu0 %v1213
      %1423 = vmatmul.mubr.bf16.gmra.mrb[0].mxu0 %v1212
      %v1424 = vpop.f32.mrb[0].mxu0
      %v1425 = vadd.f32 0.0, %v1424
      %v1426 = vpop.f32.mrb[0].mxu0
      %v1427 = vpop.f32.mrb[0].mxu0
      %v1428 = vadd.f32 0.0, %v1427
      %v1429 = vpop.f32.mrb[0].mxu0
      %1430 = vmatprep.mubr.bf16.mxu0 %v1215
      %1431 = vmatmul.mubr.bf16.gmra.mrb[0].mxu0 %v1214
      %v1432 = vpop.f32.mrb[0].mxu0
      %v1433 = vadd.f32 0.0, %v1432
      %v1434 = vpop.f32.mrb[0].mxu0
      %v1435 = vpop.f32.mrb[0].mxu0
      %v1436 = vadd.f32 0.0, %v1435
      %v1437 = vpop.f32.mrb[0].mxu0
      %1438 = vmatprep.mubr.bf16.mxu0 %v1217
      %1439 = vmatmul.mubr.bf16.gmra.mrb[0].mxu0 %v1216
      %v1440 = vpop.f32.mrb[0].mxu0
      %v1441 = vadd.f32 0.0, %v1440
      %v1442 = vpop.f32.mrb[0].mxu0
      %v1443 = vpop.f32.mrb[0].mxu0
      %v1444 = vadd.f32 0.0, %v1443
      %v1445 = vpop.f32.mrb[0].mxu0
      %1446 = vmatprep.mubr.bf16.mxu0 %v1219
      %1447 = vmatmul.mubr.bf16.gmra.mrb[0].mxu0 %v1218
      %v1448 = vpop.f32.mrb[0].mxu0
      %v1449 = vadd.f32 0.0, %v1448
      %v1450 = vpop.f32.mrb[0].mxu0
      %v1451 = vpop.f32.mrb[0].mxu0
      %v1452 = vadd.f32 0.0, %v1451
      %v1453 = vpop.f32.mrb[0].mxu0
      %1454 = vmatprep.mubr.bf16.mxu0 %v1221
      %1455 = vmatmul.mubr.bf16.gmra.mrb[0].mxu0 %v1220
      %v1456 = vpop.f32.mrb[0].mxu0
      %v1457 = vadd.f32 0.0, %v1456
      %v1458 = vpop.f32.mrb[0].mxu0
      %v1459 = vpop.f32.mrb[0].mxu0
      %v1460 = vadd.f32 0.0, %v1459
      %v1461 = vpop.f32.mrb[0].mxu0
      %1462 = vmatprep.mubr.bf16.mxu0 %v1223
      %1463 = vmatmul.mubr.bf16.gmra.mrb[0].mxu0 %v1222
      %v1464 = vpop.f32.mrb[0].mxu0
      %v1465 = vadd.f32 0.0, %v1464
      %v1466 = vpop.f32.mrb[0].mxu0
      %v1467 = vpop.f32.mrb[0].mxu0
      %v1468 = vadd.f32 0.0, %v1467
      %v1469 = vpop.f32.mrb[0].mxu0
      %1470 = vmatprep.mubr.bf16.mxu0 %v1225
      %1471 = vmatmul.mubr.bf16.gmra.mrb[0].mxu0 %v1224
      %v1472 = vpop.f32.mrb[0].mxu0
      %v1473 = vadd.f32 0.0, %v1472
      %v1474 = vpop.f32.mrb[0].mxu0
      %v1475 = vpop.f32.mrb[0].mxu0
      %v1476 = vadd.f32 0.0, %v1475
      %v1477 = vpop.f32.mrb[0].mxu0
      %1478 = vmatprep.mubr.bf16.mxu0 %v1227
      %1479 = vmatmul.mubr.bf16.gmra.mrb[0].mxu0 %v1226
      %v1480 = vpop.f32.mrb[0].mxu0
      %v1481 = vadd.f32 0.0, %v1480
      %v1482 = vpop.f32.mrb[0].mxu0
      %v1483 = vpop.f32.mrb[0].mxu0
      %v1484 = vadd.f32 0.0, %v1483
      %v1485 = vpop.f32.mrb[0].mxu0
      %1486 = vmatprep.mubr.bf16.mxu0 %v1229
      %1487 = vmatmul.mubr.bf16.gmra.mrb[0].mxu0 %v1228
      %v1488 = vpop.f32.mrb[0].mxu0
      %v1489 = vadd.f32 0.0, %v1488
      %v1490 = vpop.f32.mrb[0].mxu0
      %v1491 = vpop.f32.mrb[0].mxu0
      %v1492 = vadd.f32 0.0, %v1491
      %v1493 = vpop.f32.mrb[0].mxu0
      %1494 = vmatprep.mubr.bf16.mxu0 %v1231
      %1495 = vmatmul.mubr.bf16.gmra.mrb[0].mxu0 %v1230
      %v1496 = vpop.f32.mrb[0].mxu0
      %v1497 = vadd.f32 0.0, %v1496
      %v1498 = vpop.f32.mrb[0].mxu0
      %v1499 = vpop.f32.mrb[0].mxu0
      %v1500 = vadd.f32 0.0, %v1499
      %v1501 = vpop.f32.mrb[0].mxu0
      %1502 = vmatprep.mubr.bf16.mxu0 %v1233
      %1503 = vmatmul.mubr.bf16.gmra.mrb[0].mxu0 %v1232
      %v1504 = vpop.f32.mrb[0].mxu0
      %v1505 = vadd.f32 0.0, %v1504
      %v1506 = vpop.f32.mrb[0].mxu0
      %v1507 = vpop.f32.mrb[0].mxu0
      %v1508 = vadd.f32 0.0, %v1507
      %v1509 = vpop.f32.mrb[0].mxu0
      %1510 = vmatprep.mubr.bf16.mxu0 %v1235
      %1511 = vmatmul.mubr.bf16.gmra.mrb[0].mxu0 %v1234
      %v1512 = vpop.f32.mrb[0].mxu0
      %v1513 = vadd.f32 0.0, %v1512
      %v1514 = vpop.f32.mrb[0].mxu0
      %v1515 = vpop.f32.mrb[0].mxu0
      %v1516 = vadd.f32 0.0, %v1515
      %v1517 = vpop.f32.mrb[0].mxu0
      %1518 = vmatprep.mubr.bf16.mxu0 %v1237
      %1519 = vmatmul.mubr.bf16.gmra.mrb[0].mxu0 %v1236
      %v1520 = vpop.f32.mrb[0].mxu0
      %v1521 = vadd.f32 0.0, %v1520
      %v1522 = vpop.f32.mrb[0].mxu0
      %v1523 = vpop.f32.mrb[0].mxu0
      %v1524 = vadd.f32 0.0, %v1523
      %v1525 = vpop.f32.mrb[0].mxu0
      %1526 = vdwg.mxu0
      %v1527 = vpack.c.bf16 %v1404, %v1401
      %v1528 = vpack.c.bf16 %v1412, %v1409
      %v1529 = vpack.c.bf16 %v1420, %v1417
      %v1530 = vpack.c.bf16 %v1428, %v1425
      %v1531 = vpack.c.bf16 %v1436, %v1433
      %v1532 = vpack.c.bf16 %v1444, %v1441
      %v1533 = vpack.c.bf16 %v1452, %v1449
      %v1534 = vpack.c.bf16 %v1460, %v1457
      %v1535 = vpack.c.bf16 %v1468, %v1465
      %v1536 = vpack.c.bf16 %v1476, %v1473
      %v1537 = vpack.c.bf16 %v1484, %v1481
      %v1538 = vpack.c.bf16 %v1492, %v1489
      %v1539 = vpack.c.bf16 %v1500, %v1497
      %v1540 = vpack.c.bf16 %v1508, %v1505
      %v1541 = vpack.c.bf16 %v1516, %v1513
      %v1542 = vpack.c.bf16 %v1524, %v1521
      %v1559 = vunpack.c.l.b16 %v1527
      %v1560 = vunpack.c.h.b16 %v1527
      %v1561 = vunpack.c.l.b16 %v1528
      %v1562 = vunpack.c.h.b16 %v1528
      %v1563 = vunpack.c.l.b16 %v1529
      %v1564 = vunpack.c.h.b16 %v1529
      %v1565 = vunpack.c.l.b16 %v1530
      %v1566 = vunpack.c.h.b16 %v1530
      %v1567 = vunpack.c.l.b16 %v1531
      %v1568 = vunpack.c.h.b16 %v1531
      %v1569 = vunpack.c.l.b16 %v1532
      %v1570 = vunpack.c.h.b16 %v1532
      %v1571 = vunpack.c.l.b16 %v1533
      %v1572 = vunpack.c.h.b16 %v1533
      %v1573 = vunpack.c.l.b16 %v1534
      %v1574 = vunpack.c.h.b16 %v1534
      %v1575 = vunpack.c.l.b16 %v1535
      %v1576 = vunpack.c.h.b16 %v1535
      %v1577 = vunpack.c.l.b16 %v1536
      %v1578 = vunpack.c.h.b16 %v1536
      %v1579 = vunpack.c.l.b16 %v1537
      %v1580 = vunpack.c.h.b16 %v1537
      %v1581 = vunpack.c.l.b16 %v1538
      %v1582 = vunpack.c.h.b16 %v1538
      %v1583 = vunpack.c.l.b16 %v1539
      %v1584 = vunpack.c.h.b16 %v1539
      %v1585 = vunpack.c.l.b16 %v1540
      %v1586 = vunpack.c.h.b16 %v1540
      %v1587 = vunpack.c.l.b16 %v1541
      %v1588 = vunpack.c.h.b16 %v1541
      %v1589 = vunpack.c.l.b16 %v1542
      %v1590 = vunpack.c.h.b16 %v1542
      %v1591 = vpack.c.b16 %v1559, %v1559
      %v1592 = vpack.c.b16 %v1560, %v1560
      %v1593 = vpack.c.b16 %v1561, %v1561
      %v1594 = vpack.c.b16 %v1562, %v1562
      %v1595 = vpack.c.b16 %v1563, %v1563
      %v1596 = vpack.c.b16 %v1564, %v1564
      %v1597 = vpack.c.b16 %v1565, %v1565
      %v1598 = vpack.c.b16 %v1566, %v1566
      %v1599 = vpack.c.b16 %v1567, %v1567
      %v1600 = vpack.c.b16 %v1568, %v1568
      %v1601 = vpack.c.b16 %v1569, %v1569
      %v1602 = vpack.c.b16 %v1570, %v1570
      %v1603 = vpack.c.b16 %v1571, %v1571
      %v1604 = vpack.c.b16 %v1572, %v1572
      %v1605 = vpack.c.b16 %v1573, %v1573
      %v1606 = vpack.c.b16 %v1574, %v1574
      %v1607 = vpack.c.b16 %v1575, %v1575
      %v1608 = vpack.c.b16 %v1576, %v1576
      %v1609 = vpack.c.b16 %v1577, %v1577
      %v1610 = vpack.c.b16 %v1578, %v1578
      %v1611 = vpack.c.b16 %v1579, %v1579
      %v1612 = vpack.c.b16 %v1580, %v1580
      %v1613 = vpack.c.b16 %v1581, %v1581
      %v1614 = vpack.c.b16 %v1582, %v1582
      %v1615 = vpack.c.b16 %v1583, %v1583
      %v1616 = vpack.c.b16 %v1584, %v1584
      %v1617 = vpack.c.b16 %v1585, %v1585
      %v1618 = vpack.c.b16 %v1586, %v1586
      %v1619 = vpack.c.b16 %v1587, %v1587
      %v1620 = vpack.c.b16 %v1588, %v1588
      %v1621 = vpack.c.b16 %v1589, %v1589
      %v1622 = vpack.c.b16 %v1590, %v1590
      %vm1655 = vcmask 158720
      %1656 = vst.msk [vmem:[%s210] sm:$0xf] %vm1655, %v1591
      %1657 = vst.msk [vmem:[%s210 + $0x4] sm:$0xf] %vm1655, %v1592
      %1658 = vst.msk [vmem:[%s210 + $0x8] sm:$0xf] %vm1655, %v1593
      %1659 = vst.msk [vmem:[%s210 + $0xc] sm:$0xf] %vm1655, %v1594
      %1660 = vst.msk [vmem:[%s210 + $0x10] sm:$0xf] %vm1655, %v1595
      %1661 = vst.msk [vmem:[%s210 + $0x14] sm:$0xf] %vm1655, %v1596
      %1662 = vst.msk [vmem:[%s210 + $0x18] sm:$0xf] %vm1655, %v1597
      %1663 = vst.msk [vmem:[%s210 + $0x1c] sm:$0xf] %vm1655, %v1598
      %1664 = vst.msk [vmem:[%s210 + $0x20] sm:$0xf] %vm1655, %v1599
      %1665 = vst.msk [vmem:[%s210 + $0x24] sm:$0xf] %vm1655, %v1600
      %1666 = vst.msk [vmem:[%s210 + $0x28] sm:$0xf] %vm1655, %v1601
      %1667 = vst.msk [vmem:[%s210 + $0x2c] sm:$0xf] %vm1655, %v1602
      %1668 = vst.msk [vmem:[%s210 + $0x30] sm:$0xf] %vm1655, %v1603
      %1669 = vst.msk [vmem:[%s210 + $0x34] sm:$0xf] %vm1655, %v1604
      %1670 = vst.msk [vmem:[%s210 + $0x38] sm:$0xf] %vm1655, %v1605
      %1671 = vst.msk [vmem:[%s210 + $0x3c] sm:$0xf] %vm1655, %v1606
      %1672 = vst.msk [vmem:[%s210 + $0x40] sm:$0xf] %vm1655, %v1607
      %1673 = vst.msk [vmem:[%s210 + $0x44] sm:$0xf] %vm1655, %v1608
      %1674 = vst.msk [vmem:[%s210 + $0x48] sm:$0xf] %vm1655, %v1609
      %1675 = vst.msk [vmem:[%s210 + $0x4c] sm:$0xf] %vm1655, %v1610
      %1676 = vst.msk [vmem:[%s210 + $0x50] sm:$0xf] %vm1655, %v1611
      %1677 = vst.msk [vmem:[%s210 + $0x54] sm:$0xf] %vm1655, %v1612
      %1678 = vst.msk [vmem:[%s210 + $0x58] sm:$0xf] %vm1655, %v1613
      %1679 = vst.msk [vmem:[%s210 + $0x5c] sm:$0xf] %vm1655, %v1614
      %1680 = vst.msk [vmem:[%s210 + $0x60] sm:$0xf] %vm1655, %v1615
      %1681 = vst.msk [vmem:[%s210 + $0x64] sm:$0xf] %vm1655, %v1616
      %1682 = vst.msk [vmem:[%s210 + $0x68] sm:$0xf] %vm1655, %v1617
      %1683 = vst.msk [vmem:[%s210 + $0x6c] sm:$0xf] %vm1655, %v1618
      %1684 = vst.msk [vmem:[%s210 + $0x70] sm:$0xf] %vm1655, %v1619
      %1685 = vst.msk [vmem:[%s210 + $0x74] sm:$0xf] %vm1655, %v1620
      %1686 = vst.msk [vmem:[%s210 + $0x78] sm:$0xf] %vm1655, %v1621
      %1687 = vst.msk [vmem:[%s210 + $0x7c] sm:$0xf] %vm1655, %v1622
      %p1688 = scmp.lt.s32.totalorder %s14, 1
      %s1689 = scalar_select %p1688, %s14, 1
      %s1690 = smul.addr %s1689, 32
      %s1691 = smul.addr %s1690, 4
      %s1692 = scalar_lea.vmem %s3, %s1691
      // Predicated region
      $region33: #{elcs_forward.12} parent=31 // pred_check
        %p1693 = pneg %p110
      $region34: #{elcs_forward.12} parent=31 // pred_check_branch
        %1695 = sbr.rel (%p1693) target = $region36
      $region35: #{elcs_forward.12} parent=31 // pred_region
        _
      $region36: #{elcs_forward.12} parent=31 // pred_fallthru
        _
    $region32: #{elcs_forward.12} parent=5 // pred_fallthru
      _
    %p1696 = scmp.le.s32.totalorder 2, %s9
    // Predicated region
    $region37: #{elcs_forward.12} parent=5 // pred_check
      %p1697 = pneg %p1696
    $region38: #{elcs_forward.12} parent=5 // pred_check_branch
      %1699 = sbr.rel (%p1697) target = $region40
    $region39: #{elcs_forward.12} parent=5 // pred_region
      %s1700 = ssub.s32 %s9, 2
      // Predicated region
      $region41: #{elcs_forward.12} parent=39 // pred_check
        %p1701 = pneg %p116
      $region42: #{elcs_forward.12} parent=39 // pred_check_branch
        %1703 = sbr.rel (%p1701) target = $region44
      $region43: #{elcs_forward.12} parent=39 // pred_region
        %p1704 = scmp.lt.s32.totalorder %s15, 1
        %s1705 = scalar_select %p1704, %s15, 1
        %s1706 = smul.addr %s1705, 32
        %s1707 = smul.addr %s1706, 4
        %s1708 = scalar_lea.vmem %s3, %s1707
      $region44: #{elcs_forward.12} parent=39 // pred_fallthru
        _
    $region40: #{elcs_forward.12} parent=5 // pred_fallthru
      _
  $region6: #{elcs_forward.12} parent=0 // loop_footer
    %s13 = sadd.s32 1, %s9
  $region7: #{elcs_forward.12} parent=0 // loop_footer_branch
    %8 = sbr.rel target = $region3
  $region8: #{elcs_forward.12} parent=0 // loop_exit
    _

// kernel: elcs_forward.11
$region0: #{elcs_forward.11}
  #allocation0 [shape = 'u32[]', space=smem, size = 0x4, offset = 0x4, fixed_abs, tag = 'smem constant byte address 0x4 - core index']
  #allocation1 [shape = 'u32[144,128]{1,0:T(1,128)}', space=vmem, size = 0x12000, scoped, tag = 'internal scratch']
  %s0 = inlined_call_operand.vmem [shape: bf16[8,64,20], index: 0, kind: input, shape index: {}]
  %s1 = inlined_call_operand.vmem [shape: bf16[8,64,20], index: 1, kind: input, shape index: {}]
  %s2 = inlined_call_operand.vmem [shape: bf16[8,64,20], index: 2, kind: input, shape index: {}]
  %s3 = inlined_call_operand.vmem [shape: bf16[8,64,20], index: 3, kind: output, shape index: {}]
  %s4 = sld [smem:[#allocation0]]
  $region45: #{elcs_forward.11} parent=0
    _
  %s6 = ssub.s32 1, %s4
  %s7 = scalar_select 0, %s6, %s4
  loop: start=0, step=1, limit=4
  $region2: #{elcs_forward.11} parent=0 // loop_pre_header
    _
  $region3: #{elcs_forward.11} parent=0 // loop_header
    %s9 = sphi 0, %s13
    %p10 = scmp.ge.s32.totalorder %s9, 4
    %s19 = sphi 0, %s21
    %s22 = sphi 0, %s19
    %s23 = sphi 0, %s22
    %s39 = sphi 0, %s23
    %s45 = sphi 0, %s47
    %s48 = sphi 0, %s45
    %s49 = sphi 0, %s48
    %s65 = sphi 0, %s49
    %s71 = sphi 0, %s73
    %s74 = sphi 0, %s71
    %s75 = sphi 0, %s74
    %s91 = sphi 0, %s75
    %s97 = sphi 0, %s99
    %s100 = sphi 0, %s97
    %s101 = sphi 0, %s100
    %s117 = sphi 0, %s101
  $region4: #{elcs_forward.11} parent=0 // loop_header_branch
    %12 = sbr.rel (%p10) target = $region8
  $region5: #{elcs_forward.11} parent=0 // loop_body
    %s14 = ssub.s32 %s9, 1
    %s15 = ssub.s32 %s9, 2
    %s16 = sadd.s32 %s9, 1
    %s17 = ssub.s32 %s9, %s16
    %p18 = scmp.eq.s32.totalorder %s17, 0
    %s20 = sadd.s32 %s19, 1
    %s21 = scalar_select %p18, %s19, %s20
    %p24 = pneg %p18
    %p25 = scmp.eq.s32.totalorder %s9, 1
    %p26 = por %p24, %p25
    %p27 = scmp.ne.s32.totalorder %s19, %s22
    %p28 = scmp.eq.s32.totalorder %s9, 0
    %p29 = por %p27, %p28
    %p30 = scmp.ne.s32.totalorder %s19, %s22
    %p31 = scmp.eq.s32.totalorder %s14, 1
    %p32 = por %p30, %p31
    %p33 = scmp.ne.s32.totalorder %s22, %s23
    %p34 = scmp.eq.s32.totalorder %s14, 0
    %p35 = por %p33, %p34
    %p36 = scmp.ne.s32.totalorder %s22, %s23
    %p37 = scmp.eq.s32.totalorder %s15, 1
    %p38 = por %p36, %p37
    %p40 = scmp.ne.s32.totalorder %s23, %s39
    %p41 = scmp.eq.s32.totalorder %s15, 0
    %p42 = por %p40, %p41
    %s43 = ssub.s32 %s9, %s16
    %p44 = scmp.eq.s32.totalorder %s43, 0
    %s46 = sadd.s32 %s45, 1
    %s47 = scalar_select %p44, %s45, %s46
    %p50 = pneg %p44
    %p51 = scmp.eq.s32.totalorder %s9, 1
    %p52 = por %p50, %p51
    %p53 = scmp.ne.s32.totalorder %s45, %s48
    %p54 = scmp.eq.s32.totalorder %s9, 0
    %p55 = por %p53, %p54
    %p56 = scmp.ne.s32.totalorder %s45, %s48
    %p57 = scmp.eq.s32.totalorder %s14, 1
    %p58 = por %p56, %p57
    %p59 = scmp.ne.s32.totalorder %s48, %s49
    %p60 = scmp.eq.s32.totalorder %s14, 0
    %p61 = por %p59, %p60
    %p62 = scmp.ne.s32.totalorder %s48, %s49
    %p63 = scmp.eq.s32.totalorder %s15, 1
    %p64 = por %p62, %p63
    %p66 = scmp.ne.s32.totalorder %s49, %s65
    %p67 = scmp.eq.s32.totalorder %s15, 0
    %p68 = por %p66, %p67
    %s69 = ssub.s32 %s9, %s16
    %p70 = scmp.eq.s32.totalorder %s69, 0
    %s72 = sadd.s32 %s71, 1
    %s73 = scalar_select %p70, %s71, %s72
    %p76 = pneg %p70
    %p77 = scmp.eq.s32.totalorder %s9, 1
    %p78 = por %p76, %p77
    %p79 = scmp.ne.s32.totalorder %s71, %s74
    %p80 = scmp.eq.s32.totalorder %s9, 0
    %p81 = por %p79, %p80
    %p82 = scmp.ne.s32.totalorder %s71, %s74
    %p83 = scmp.eq.s32.totalorder %s14, 1
    %p84 = por %p82, %p83
    %p85 = scmp.ne.s32.totalorder %s74, %s75
    %p86 = scmp.eq.s32.totalorder %s14, 0
    %p87 = por %p85, %p86
    %p88 = scmp.ne.s32.totalorder %s74, %s75
    %p89 = scmp.eq.s32.totalorder %s15, 1
    %p90 = por %p88, %p89
    %p92 = scmp.ne.s32.totalorder %s75, %s91
    %p93 = scmp.eq.s32.totalorder %s15, 0
    %p94 = por %p92, %p93
    %s95 = ssub.s32 %s9, %s16
    %p96 = scmp.eq.s32.totalorder %s95, 0
    %s98 = sadd.s32 %s97, 1
    %s99 = scalar_select %p96, %s97, %s98
    %p102 = pneg %p96
    %p103 = scmp.eq.s32.totalorder %s9, 1
    %p104 = por %p102, %p103
    %p105 = scmp.ne.s32.totalorder %s97, %s100
    %p106 = scmp.eq.s32.totalorder %s9, 0
    %p107 = por %p105, %p106
    %p108 = scmp.ne.s32.totalorder %s97, %s100
    %p109 = scmp.eq.s32.totalorder %s14, 1
    %p110 = por %p108, %p109
    %p111 = scmp.ne.s32.totalorder %s100, %s101
    %p112 = scmp.eq.s32.totalorder %s14, 0
    %p113 = por %p111, %p112
    %p114 = scmp.ne.s32.totalorder %s100, %s101
    %p115 = scmp.eq.s32.totalorder %s15, 1
    %p116 = por %p114, %p115
    %p118 = scmp.ne.s32.totalorder %s101, %s117
    %p119 = scmp.eq.s32.totalorder %s15, 0
    %p120 = por %p118, %p119
    %p121 = scmp.le.s32.totalorder 1, %s9
    %p122 = scmp.lt.s32.totalorder %s9, 3
    %p123 = pnand %p121, %p122
    %p124 = pneg %p123
    // Predicated region
    $region9: #{elcs_forward.11} parent=5 // pred_check
      _
    $region10: #{elcs_forward.11} parent=5 // pred_check_branch
      %126 = sbr.rel (%p123) target = $region12
    $region11: #{elcs_forward.11} parent=5 // pred_region
      %s127 = ssub.s32 %s9, 1
    $region12: #{elcs_forward.11} parent=5 // pred_fallthru
      _
    %p128 = scmp.lt.s32.totalorder %s9, 2
    // Predicated region
    $region13: #{elcs_forward.11} parent=5 // pred_check
      %p129 = pneg %p128
    $region14: #{elcs_forward.11} parent=5 // pred_check_branch
      %131 = sbr.rel (%p129) target = $region16
    $region15: #{elcs_forward.11} parent=5 // pred_region
      // Predicated region
      $region17: #{elcs_forward.11} parent=15 // pred_check
        %p132 = pneg %p29
      $region18: #{elcs_forward.11} parent=15 // pred_check_branch
        %134 = sbr.rel (%p132) target = $region20
      $region19: #{elcs_forward.11} parent=15 // pred_region
        %s135 = smul.u32 4, %s9
        %p136 = scmp.lt.s32.totalorder %s135, 7
        %s137 = scalar_select %p136, %s135, 7
        %s138 = smul.addr %s137, 8
        %s139 = smul.addr %s138, 4
        %s140 = scalar_lea.vmem %s0, %s139
        %s141 = smul.u32 4, %s9
      $region20: #{elcs_forward.11} parent=15 // pred_fallthru
        _
      // Predicated region
      $region21: #{elcs_forward.11} parent=15 // pred_check
        %p142 = pneg %p55
      $region22: #{elcs_forward.11} parent=15 // pred_check_branch
        %144 = sbr.rel (%p142) target = $region24
      $region23: #{elcs_forward.11} parent=15 // pred_region
        %s145 = smul.u32 4, %s9
        %p146 = scmp.lt.s32.totalorder %s145, 7
        %s147 = scalar_select %p146, %s145, 7
        %s148 = smul.addr %s147, 8
        %s149 = smul.addr %s148, 4
        %s150 = scalar_lea.vmem %s1, %s149
        %s151 = smul.u32 4, %s9
      $region24: #{elcs_forward.11} parent=15 // pred_fallthru
        _
      // Predicated region
      $region25: #{elcs_forward.11} parent=15 // pred_check
        %p152 = pneg %p81
      $region26: #{elcs_forward.11} parent=15 // pred_check_branch
        %154 = sbr.rel (%p152) target = $region28
      $region27: #{elcs_forward.11} parent=15 // pred_region
        %s155 = smul.u32 4, %s9
        %p156 = scmp.lt.s32.totalorder %s155, 7
        %s157 = scalar_select %p156, %s155, 7
        %s158 = smul.addr %s157, 8
        %s159 = smul.addr %s158, 4
        %s160 = scalar_lea.vmem %s2, %s159
        %s161 = smul.u32 4, %s9
      $region28: #{elcs_forward.11} parent=15 // pred_fallthru
        _
    $region16: #{elcs_forward.11} parent=5 // pred_fallthru
      _
    %p162 = scmp.le.s32.totalorder 1, %s9
    %p163 = scmp.lt.s32.totalorder %s9, 3
    %p164 = pnand %p162, %p163
    %p165 = pneg %p164
    // Predicated region
    $region29: #{elcs_forward.11} parent=5 // pred_check
      _
    $region30: #{elcs_forward.11} parent=5 // pred_check_branch
      %167 = sbr.rel (%p164) target = $region32
    $region31: #{elcs_forward.11} parent=5 // pred_region
      %s168 = ssub.s32 %s9, 1
      %s169 = smul.u32 4, %s14
      %p170 = scmp.lt.s32.totalorder %s169, 7
      %s171 = scalar_select %p170, %s169, 7
      %s172 = smul.addr %s171, 8
      %s173 = smul.addr %s172, 4
      %s174 = scalar_lea.vmem %s0, %s173
      %p175 = pneg %p35
      %p176 = pneg %p32
      %s177 = smul.u32 4, %s14
      %p178 = scmp.lt.s32.totalorder %s177, 7
      %s179 = scalar_select %p178, %s177, 7
      %s180 = smul.addr %s179, 8
      %s181 = smul.addr %s180, 4
      %s182 = scalar_lea.vmem %s1, %s181
      %p183 = pneg %p61
      %p184 = pneg %p58
      %s185 = smul.u32 4, %s14
      %p186 = scmp.lt.s32.totalorder %s185, 7
      %s187 = scalar_select %p186, %s185, 7
      %s188 = smul.addr %s187, 8
      %s189 = smul.addr %s188, 4
      %s190 = scalar_lea.vmem %s2, %s189
      %p191 = pneg %p87
      %p192 = pneg %p84
      %p193 = pneg %p113
      %p194 = pneg %p110
      %s195 = smul.u32 4, %s14
      %p196 = scmp.lt.s32.totalorder %s195, 7
      %s197 = scalar_select %p196, %s195, 7
      %s198 = smul.addr %s197, 8
      %s199 = smul.addr %s198, 4
      %s200 = scalar_lea.vmem %s3, %s199
      %s201 = smul.u32 4, %s14
      %p202 = scmp.lt.s32.totalorder %s201, 7
      %s203 = scalar_select %p202, %s201, 7
      %s204 = smul.addr %s203, 8
      %s205 = smul.addr %s204, 4
      %s206 = scalar_lea.vmem %s0, %s205
      %s207 = smul.u32 4, %s14
      %s208 = smul.u32 4, %s14
      %p209 = scmp.lt.s32.totalorder %s208, 7
      %s210 = scalar_select %p209, %s208, 7
      %s211 = smul.addr %s210, 8
      %s212 = smul.addr %s211, 4
      %s213 = scalar_lea.vmem %s1, %s212
      %s214 = smul.u32 4, %s14
      %s215 = smul.u32 4, %s14
      %p216 = scmp.lt.s32.totalorder %s215, 7
      %s217 = scalar_select %p216, %s215, 7
      %s218 = smul.addr %s217, 8
      %s219 = smul.addr %s218, 4
      %s220 = scalar_lea.vmem %s2, %s219
      %s221 = smul.u32 4, %s14
      %s222 = smul.u32 4, %s14
      %p223 = scmp.lt.s32.totalorder %s222, 7
      %s224 = scalar_select %p223, %s222, 7
      %s225 = smul.addr %s224, 8
      %s226 = smul.addr %s225, 4
      %s227 = scalar_lea.vmem %s3, %s226
      %s228 = smul.u32 4, %s14
      %v230 = vld [vmem:[%s206] sm:$0xf]
      %v231 = vld [vmem:[%s206 + $0x4] sm:$0xf]
      %v232 = vld [vmem:[%s206 + $0x8] sm:$0xf]
      %v233 = vld [vmem:[%s206 + $0xc] sm:$0xf]
      %v234 = vld [vmem:[%s206 + $0x10] sm:$0xf]
      %v235 = vld [vmem:[%s206 + $0x14] sm:$0xf]
      %v236 = vld [vmem:[%s206 + $0x18] sm:$0xf]
      %v237 = vld [vmem:[%s206 + $0x1c] sm:$0xf]
      %v238 = vld [vmem:[%s206 + $0x20] sm:$0xf]
      %v239 = vld [vmem:[%s206 + $0x24] sm:$0xf]
      %v240 = vld [vmem:[%s206 + $0x28] sm:$0xf]
      %v241 = vld [vmem:[%s206 + $0x2c] sm:$0xf]
      %v242 = vld [vmem:[%s206 + $0x30] sm:$0xf]
      %v243 = vld [vmem:[%s206 + $0x34] sm:$0xf]
      %v244 = vld [vmem:[%s206 + $0x38] sm:$0xf]
      %v245 = vld [vmem:[%s206 + $0x3c] sm:$0xf]
      %v246 = vld [vmem:[%s206 + $0x40] sm:$0xf]
      %v247 = vld [vmem:[%s206 + $0x44] sm:$0xf]
      %v248 = vld [vmem:[%s206 + $0x48] sm:$0xf]
      %v249 = vld [vmem:[%s206 + $0x4c] sm:$0xf]
      %v250 = vld [vmem:[%s206 + $0x50] sm:$0xf]
      %v251 = vld [vmem:[%s206 + $0x54] sm:$0xf]
      %v252 = vld [vmem:[%s206 + $0x58] sm:$0xf]
      %v253 = vld [vmem:[%s206 + $0x5c] sm:$0xf]
      %v254 = vld [vmem:[%s206 + $0x60] sm:$0xf]
      %v255 = vld [vmem:[%s206 + $0x64] sm:$0xf]
      %v256 = vld [vmem:[%s206 + $0x68] sm:$0xf]
      %v257 = vld [vmem:[%s206 + $0x6c] sm:$0xf]
      %v258 = vld [vmem:[%s206 + $0x70] sm:$0xf]
      %v259 = vld [vmem:[%s206 + $0x74] sm:$0xf]
      %v260 = vld [vmem:[%s206 + $0x78] sm:$0xf]
      %v261 = vld [vmem:[%s206 + $0x7c] sm:$0xf]
      %v262 = vld [vmem:[%s213] sm:$0xf]
      %v263 = vld [vmem:[%s213 + $0x4] sm:$0xf]
      %v264 = vld [vmem:[%s213 + $0x8] sm:$0xf]
      %v265 = vld [vmem:[%s213 + $0xc] sm:$0xf]
      %v266 = vld [vmem:[%s213 + $0x10] sm:$0xf]
      %v267 = vld [vmem:[%s213 + $0x14] sm:$0xf]
      %v268 = vld [vmem:[%s213 + $0x18] sm:$0xf]
      %v269 = vld [vmem:[%s213 + $0x1c] sm:$0xf]
      %v270 = vld [vmem:[%s213 + $0x20] sm:$0xf]
      %v271 = vld [vmem:[%s213 + $0x24] sm:$0xf]
      %v272 = vld [vmem:[%s213 + $0x28] sm:$0xf]
      %v273 = vld [vmem:[%s213 + $0x2c] sm:$0xf]
      %v274 = vld [vmem:[%s213 + $0x30] sm:$0xf]
      %v275 = vld [vmem:[%s213 + $0x34] sm:$0xf]
      %v276 = vld [vmem:[%s213 + $0x38] sm:$0xf]
      %v277 = vld [vmem:[%s213 + $0x3c] sm:$0xf]
      %v278 = vld [vmem:[%s213 + $0x40] sm:$0xf]
      %v279 = vld [vmem:[%s213 + $0x44] sm:$0xf]
      %v280 = vld [vmem:[%s213 + $0x48] sm:$0xf]
      %v281 = vld [vmem:[%s213 + $0x4c] sm:$0xf]
      %v282 = vld [vmem:[%s213 + $0x50] sm:$0xf]
      %v283 = vld [vmem:[%s213 + $0x54] sm:$0xf]
      %v284 = vld [vmem:[%s213 + $0x58] sm:$0xf]
      %v285 = vld [vmem:[%s213 + $0x5c] sm:$0xf]
      %v286 = vld [vmem:[%s213 + $0x60] sm:$0xf]
      %v287 = vld [vmem:[%s213 + $0x64] sm:$0xf]
      %v288 = vld [vmem:[%s213 + $0x68] sm:$0xf]
      %v289 = vld [vmem:[%s213 + $0x6c] sm:$0xf]
      %v290 = vld [vmem:[%s213 + $0x70] sm:$0xf]
      %v291 = vld [vmem:[%s213 + $0x74] sm:$0xf]
      %v292 = vld [vmem:[%s213 + $0x78] sm:$0xf]
      %v293 = vld [vmem:[%s213 + $0x7c] sm:$0xf]
      %v302 = vunpack.c.l.b16 %v230
      %v303 = vunpack.c.l.b16 %v231
      %v304 = vunpack.c.l.b16 %v232
      %v305 = vunpack.c.l.b16 %v233
      %v306 = vunpack.c.l.b16 %v234
      %v307 = vunpack.c.l.b16 %v235
      %v308 = vunpack.c.l.b16 %v236
      %v309 = vunpack.c.l.b16 %v237
      %v310 = vpack.c.b16 %v303, %v302
      %v311 = vpack.c.b16 %v305, %v304
      %v312 = vpack.c.b16 %v307, %v306
      %v313 = vpack.c.b16 %v309, %v308
      %v322 = vunpack.c.l.b16 %v262
      %v323 = vunpack.c.l.b16 %v263
      %v324 = vunpack.c.l.b16 %v264
      %v325 = vunpack.c.l.b16 %v265
      %v326 = vunpack.c.l.b16 %v266
      %v327 = vunpack.c.l.b16 %v267
      %v328 = vunpack.c.l.b16 %v268
      %v329 = vunpack.c.l.b16 %v269
      %v330 = vpack.c.b16 %v323, %v322
      %v331 = vpack.c.b16 %v325, %v324
      %v332 = vpack.c.b16 %v327, %v326
      %v333 = vpack.c.b16 %v329, %v328
      %vm334 = vcmask 162816
      %v336 = vsel %vm334, %v310, 0
      %v339 = vsel %vm334, %v311, 0
      %v342 = vsel %vm334, %v312, 0
      %v345 = vsel %vm334, %v313, 0
      %v348 = vsel %vm334, %v330, 0
      %v351 = vsel %vm334, %v331, 0
      %v354 = vsel %vm334, %v332, 0
      %v357 = vsel %vm334, %v333, 0
      %359 = vmatprep.subr.bf16.mxu0 0
      %360 = vmatpush1.bf16.xpose.msra.mxu0 %v348
      %361 = vmatprep.subr.bf16.mxu0 0
      %362 = vmatpush1.bf16.xpose.msra.mxu0 %v351
      %363 = vmatprep.subr.bf16.mxu0 0
      %364 = vmatpush1.bf16.xpose.msra.mxu0 %v354
      %365 = vmatprep.subr.bf16.mxu0 0
      %366 = vmatpush1.bf16.xpose.msra.mxu0 %v357
      %367 = vmatprep.subr.bf16.mxu0 0
      %368 = vmatpush1.bf16.xpose.msra.mxu0 0
      %369 = vmatprep.subr.bf16.mxu0 0
      %370 = vmatpush1.bf16.xpose.msra.mxu0 0
      %371 = vmatprep.subr.bf16.mxu0 0
      %372 = vmatpush1.bf16.xpose.msra.mxu0 0
      %373 = vmatprep.subr.bf16.mxu0 0
      %374 = vmatpush1.bf16.xpose.msra.mxu0 0
      %375 = vmatprep.subr.bf16.mxu0 0
      %376 = vmatpush1.bf16.xpose.msra.mxu0 0
      %377 = vmatprep.subr.bf16.mxu0 0
      %378 = vmatpush1.bf16.xpose.msra.mxu0 0
      %379 = vmatprep.subr.bf16.mxu0 0
      %380 = vmatpush1.bf16.xpose.msra.mxu0 0
      %381 = vmatprep.subr.bf16.mxu0 0
      %382 = vmatpush1.bf16.xpose.msra.mxu0 0
      %383 = vmatprep.subr.bf16.mxu0 0
      %384 = vmatpush1.bf16.xpose.msra.mxu0 0
      %385 = vmatprep.subr.bf16.mxu0 0
      %386 = vmatpush1.bf16.xpose.msra.mxu0 0
      %387 = vmatprep.subr.bf16.mxu0 0
      %388 = vmatpush1.bf16.xpose.msra.mxu0 0
      %389 = vmatprep.subr.bf16.mxu0 0
      %390 = vmatpush1.bf16.xpose.msra.mxu0 0
      %391 = vmatprep.mubr.bf16.mxu0 0
      %392 = vmatmul.mubr.bf16.gmra.mrb[0].mxu0 %v336
      %v393 = vpop.f32.mrb[0].mxu0
      %v394 = vadd.f32 0.0, %v393
      %v395 = vpop.f32.mrb[0].mxu0
      %v396 = vpop.f32.mrb[0].mxu0
      %v397 = vadd.f32 0.0, %v396
      %v398 = vpop.f32.mrb[0].mxu0
      %399 = vmatprep.mubr.bf16.mxu0 0
      %400 = vmatmul.mubr.bf16.gmra.mrb[0].mxu0 %v339
      %v401 = vpop.f32.mrb[0].mxu0
      %v402 = vadd.f32 0.0, %v401
      %v403 = vpop.f32.mrb[0].mxu0
      %v404 = vpop.f32.mrb[0].mxu0
      %v405 = vadd.f32 0.0, %v404
      %v406 = vpop.f32.mrb[0].mxu0
      %407 = vmatprep.mubr.bf16.mxu0 0
      %408 = vmatmul.mubr.bf16.gmra.mrb[0].mxu0 %v342
      %v409 = vpop.f32.mrb[0].mxu0
      %v410 = vadd.f32 0.0, %v409
      %v411 = vpop.f32.mrb[0].mxu0
      %v412 = vpop.f32.mrb[0].mxu0
      %v413 = vadd.f32 0.0, %v412
      %v414 = vpop.f32.mrb[0].mxu0
      %415 = vmatprep.mubr.bf16.mxu0 0
      %416 = vmatmul.mubr.bf16.gmra.mrb[0].mxu0 %v345
      %v417 = vpop.f32.mrb[0].mxu0
      %v418 = vadd.f32 0.0, %v417
      %v419 = vpop.f32.mrb[0].mxu0
      %v420 = vpop.f32.mrb[0].mxu0
      %v421 = vadd.f32 0.0, %v420
      %v422 = vpop.f32.mrb[0].mxu0
      %423 = vdwg.mxu0
      %v432 = vunpack.c.l.b16 %v238
      %v433 = vunpack.c.l.b16 %v239
      %v434 = vunpack.c.l.b16 %v240
      %v435 = vunpack.c.l.b16 %v241
      %v436 = vunpack.c.l.b16 %v242
      %v437 = vunpack.c.l.b16 %v243
      %v438 = vunpack.c.l.b16 %v244
      %v439 = vunpack.c.l.b16 %v245
      %v440 = vpack.c.b16 %v433, %v432
      %v441 = vpack.c.b16 %v435, %v434
      %v442 = vpack.c.b16 %v437, %v436
      %v443 = vpack.c.b16 %v439, %v438
      %v452 = vunpack.c.l.b16 %v270
      %v453 = vunpack.c.l.b16 %v271
      %v454 = vunpack.c.l.b16 %v272
      %v455 = vunpack.c.l.b16 %v273
      %v456 = vunpack.c.l.b16 %v274
      %v457 = vunpack.c.l.b16 %v275
      %v458 = vunpack.c.l.b16 %v276
      %v459 = vunpack.c.l.b16 %v277
      %v460 = vpack.c.b16 %v453, %v452
      %v461 = vpack.c.b16 %v455, %v454
      %v462 = vpack.c.b16 %v457, %v456
      %v463 = vpack.c.b16 %v459, %v458
      %v465 = vsel %vm334, %v440, 0
      %v468 = vsel %vm334, %v441, 0
      %v471 = vsel %vm334, %v442, 0
      %v474 = vsel %vm334, %v443, 0
      %v477 = vsel %vm334, %v460, 0
      %v480 = vsel %vm334, %v461, 0
      %v483 = vsel %vm334, %v462, 0
      %v486 = vsel %vm334, %v463, 0
      %488 = vmatprep.subr.bf16.mxu0 0
      %489 = vmatpush1.bf16.xpose.msra.mxu0 %v477
      %490 = vmatprep.subr.bf16.mxu0 0
      %491 = vmatpush1.bf16.xpose.msra.mxu0 %v480
      %492 = vmatprep.subr.bf16.mxu0 0
      %493 = vmatpush1.bf16.xpose.msra.mxu0 %v483
      %494 = vmatprep.subr.bf16.mxu0 0
      %495 = vmatpush1.bf16.xpose.msra.mxu0 %v486
      %496 = vmatprep.subr.bf16.mxu0 0
      %497 = vmatpush1.bf16.xpose.msra.mxu0 0
      %498 = vmatprep.subr.bf16.mxu0 0
      %499 = vmatpush1.bf16.xpose.msra.mxu0 0
      %500 = vmatprep.subr.bf16.mxu0 0
      %501 = vmatpush1.bf16.xpose.msra.mxu0 0
      %502 = vmatprep.subr.bf16.mxu0 0
      %503 = vmatpush1.bf16.xpose.msra.mxu0 0
      %504 = vmatprep.subr.bf16.mxu0 0
      %505 = vmatpush1.bf16.xpose.msra.mxu0 0
      %506 = vmatprep.subr.bf16.mxu0 0
      %507 = vmatpush1.bf16.xpose.msra.mxu0 0
      %508 = vmatprep.subr.bf16.mxu0 0
      %509 = vmatpush1.bf16.xpose.msra.mxu0 0
      %510 = vmatprep.subr.bf16.mxu0 0
      %511 = vmatpush1.bf16.xpose.msra.mxu0 0
      %512 = vmatprep.subr.bf16.mxu0 0
      %513 = vmatpush1.bf16.xpose.msra.mxu0 0
      %514 = vmatprep.subr.bf16.mxu0 0
      %515 = vmatpush1.bf16.xpose.msra.mxu0 0
      %516 = vmatprep.subr.bf16.mxu0 0
      %517 = vmatpush1.bf16.xpose.msra.mxu0 0
      %518 = vmatprep.subr.bf16.mxu0 0
      %519 = vmatpush1.bf16.xpose.msra.mxu0 0
      %520 = vmatprep.mubr.bf16.mxu0 0
      %521 = vmatmul.mubr.bf16.gmra.mrb[0].mxu0 %v465
      %v522 = vpop.f32.mrb[0].mxu0
      %v523 = vadd.f32 0.0, %v522
      %v524 = vpop.f32.mrb[0].mxu0
      %v525 = vpop.f32.mrb[0].mxu0
      %v526 = vadd.f32 0.0, %v525
      %v527 = vpop.f32.mrb[0].mxu0
      %528 = vmatprep.mubr.bf16.mxu0 0
      %529 = vmatmul.mubr.bf16.gmra.mrb[0].mxu0 %v468
      %v530 = vpop.f32.mrb[0].mxu0
      %v531 = vadd.f32 0.0, %v530
      %v532 = vpop.f32.mrb[0].mxu0
      %v533 = vpop.f32.mrb[0].mxu0
      %v534 = vadd.f32 0.0, %v533
      %v535 = vpop.f32.mrb[0].mxu0
      %536 = vmatprep.mubr.bf16.mxu0 0
      %537 = vmatmul.mubr.bf16.gmra.mrb[0].mxu0 %v471
      %v538 = vpop.f32.mrb[0].mxu0
      %v539 = vadd.f32 0.0, %v538
      %v540 = vpop.f32.mrb[0].mxu0
      %v541 = vpop.f32.mrb[0].mxu0
      %v542 = vadd.f32 0.0, %v541
      %v543 = vpop.f32.mrb[0].mxu0
      %544 = vmatprep.mubr.bf16.mxu0 0
      %545 = vmatmul.mubr.bf16.gmra.mrb[0].mxu0 %v474
      %v546 = vpop.f32.mrb[0].mxu0
      %v547 = vadd.f32 0.0, %v546
      %v548 = vpop.f32.mrb[0].mxu0
      %v549 = vpop.f32.mrb[0].mxu0
      %v550 = vadd.f32 0.0, %v549
      %v551 = vpop.f32.mrb[0].mxu0
      %552 = vdwg.mxu0
      %v561 = vunpack.c.l.b16 %v246
      %v562 = vunpack.c.l.b16 %v247
      %v563 = vunpack.c.l.b16 %v248
      %v564 = vunpack.c.l.b16 %v249
      %v565 = vunpack.c.l.b16 %v250
      %v566 = vunpack.c.l.b16 %v251
      %v567 = vunpack.c.l.b16 %v252
      %v568 = vunpack.c.l.b16 %v253
      %v569 = vpack.c.b16 %v562, %v561
      %v570 = vpack.c.b16 %v564, %v563
      %v571 = vpack.c.b16 %v566, %v565
      %v572 = vpack.c.b16 %v568, %v567
      %v581 = vunpack.c.l.b16 %v278
      %v582 = vunpack.c.l.b16 %v279
      %v583 = vunpack.c.l.b16 %v280
      %v584 = vunpack.c.l.b16 %v281
      %v585 = vunpack.c.l.b16 %v282
      %v586 = vunpack.c.l.b16 %v283
      %v587 = vunpack.c.l.b16 %v284
      %v588 = vunpack.c.l.b16 %v285
      %v589 = vpack.c.b16 %v582, %v581
      %v590 = vpack.c.b16 %v584, %v583
      %v591 = vpack.c.b16 %v586, %v585
      %v592 = vpack.c.b16 %v588, %v587
      %v594 = vsel %vm334, %v569, 0
      %v597 = vsel %vm334, %v570, 0
      %v600 = vsel %vm334, %v571, 0
      %v603 = vsel %vm334, %v572, 0
      %v606 = vsel %vm334, %v589, 0
      %v609 = vsel %vm334, %v590, 0
      %v612 = vsel %vm334, %v591, 0
      %v615 = vsel %vm334, %v592, 0
      %617 = vmatprep.subr.bf16.mxu0 0
      %618 = vmatpush1.bf16.xpose.msra.mxu0 %v606
      %619 = vmatprep.subr.bf16.mxu0 0
      %620 = vmatpush1.bf16.xpose.msra.mxu0 %v609
      %621 = vmatprep.subr.bf16.mxu0 0
      %622 = vmatpush1.bf16.xpose.msra.mxu0 %v612
      %623 = vmatprep.subr.bf16.mxu0 0
      %624 = vmatpush1.bf16.xpose.msra.mxu0 %v615
      %625 = vmatprep.subr.bf16.mxu0 0
      %626 = vmatpush1.bf16.xpose.msra.mxu0 0
      %627 = vmatprep.subr.bf16.mxu0 0
      %628 = vmatpush1.bf16.xpose.msra.mxu0 0
      %629 = vmatprep.subr.bf16.mxu0 0
      %630 = vmatpush1.bf16.xpose.msra.mxu0 0
      %631 = vmatprep.subr.bf16.mxu0 0
      %632 = vmatpush1.bf16.xpose.msra.mxu0 0
      %633 = vmatprep.subr.bf16.mxu0 0
      %634 = vmatpush1.bf16.xpose.msra.mxu0 0
      %635 = vmatprep.subr.bf16.mxu0 0
      %636 = vmatpush1.bf16.xpose.msra.mxu0 0
      %637 = vmatprep.subr.bf16.mxu0 0
      %638 = vmatpush1.bf16.xpose.msra.mxu0 0
      %639 = vmatprep.subr.bf16.mxu0 0
      %640 = vmatpush1.bf16.xpose.msra.mxu0 0
      %641 = vmatprep.subr.bf16.mxu0 0
      %642 = vmatpush1.bf16.xpose.msra.mxu0 0
      %643 = vmatprep.subr.bf16.mxu0 0
      %644 = vmatpush1.bf16.xpose.msra.mxu0 0
      %645 = vmatprep.subr.bf16.mxu0 0
      %646 = vmatpush1.bf16.xpose.msra.mxu0 0
      %647 = vmatprep.subr.bf16.mxu0 0
      %648 = vmatpush1.bf16.xpose.msra.mxu0 0
      %649 = vmatprep.mubr.bf16.mxu0 0
      %650 = vmatmul.mubr.bf16.gmra.mrb[0].mxu0 %v594
      %v651 = vpop.f32.mrb[0].mxu0
      %v652 = vadd.f32 0.0, %v651
      %v653 = vpop.f32.mrb[0].mxu0
      %v654 = vpop.f32.mrb[0].mxu0
      %v655 = vadd.f32 0.0, %v654
      %v656 = vpop.f32.mrb[0].mxu0
      %657 = vmatprep.mubr.bf16.mxu0 0
      %658 = vmatmul.mubr.bf16.gmra.mrb[0].mxu0 %v597
      %v659 = vpop.f32.mrb[0].mxu0
      %v660 = vadd.f32 0.0, %v659
      %v661 = vpop.f32.mrb[0].mxu0
      %v662 = vpop.f32.mrb[0].mxu0
      %v663 = vadd.f32 0.0, %v662
      %v664 = vpop.f32.mrb[0].mxu0
      %665 = vmatprep.mubr.bf16.mxu0 0
      %666 = vmatmul.mubr.bf16.gmra.mrb[0].mxu0 %v600
      %v667 = vpop.f32.mrb[0].mxu0
      %v668 = vadd.f32 0.0, %v667
      %v669 = vpop.f32.mrb[0].mxu0
      %v670 = vpop.f32.mrb[0].mxu0
      %v671 = vadd.f32 0.0, %v670
      %v672 = vpop.f32.mrb[0].mxu0
      %673 = vmatprep.mubr.bf16.mxu0 0
      %674 = vmatmul.mubr.bf16.gmra.mrb[0].mxu0 %v603
      %v675 = vpop.f32.mrb[0].mxu0
      %v676 = vadd.f32 0.0, %v675
      %v677 = vpop.f32.mrb[0].mxu0
      %v678 = vpop.f32.mrb[0].mxu0
      %v679 = vadd.f32 0.0, %v678
      %v680 = vpop.f32.mrb[0].mxu0
      %681 = vdwg.mxu0
      %v690 = vunpack.c.l.b16 %v254
      %v691 = vunpack.c.l.b16 %v255
      %v692 = vunpack.c.l.b16 %v256
      %v693 = vunpack.c.l.b16 %v257
      %v694 = vunpack.c.l.b16 %v258
      %v695 = vunpack.c.l.b16 %v259
      %v696 = vunpack.c.l.b16 %v260
      %v697 = vunpack.c.l.b16 %v261
      %v698 = vpack.c.b16 %v691, %v690
      %v699 = vpack.c.b16 %v693, %v692
      %v700 = vpack.c.b16 %v695, %v694
      %v701 = vpack.c.b16 %v697, %v696
      %v710 = vunpack.c.l.b16 %v286
      %v711 = vunpack.c.l.b16 %v287
      %v712 = vunpack.c.l.b16 %v288
      %v713 = vunpack.c.l.b16 %v289
      %v714 = vunpack.c.l.b16 %v290
      %v715 = vunpack.c.l.b16 %v291
      %v716 = vunpack.c.l.b16 %v292
      %v717 = vunpack.c.l.b16 %v293
      %v718 = vpack.c.b16 %v711, %v710
      %v719 = vpack.c.b16 %v713, %v712
      %v720 = vpack.c.b16 %v715, %v714
      %v721 = vpack.c.b16 %v717, %v716
      %v723 = vsel %vm334, %v698, 0
      %v726 = vsel %vm334, %v699, 0
      %v729 = vsel %vm334, %v700, 0
      %v732 = vsel %vm334, %v701, 0
      %v735 = vsel %vm334, %v718, 0
      %v738 = vsel %vm334, %v719, 0
      %v741 = vsel %vm334, %v720, 0
      %v744 = vsel %vm334, %v721, 0
      %746 = vmatprep.subr.bf16.mxu0 0
      %747 = vmatpush1.bf16.xpose.msra.mxu0 %v735
      %748 = vmatprep.subr.bf16.mxu0 0
      %749 = vmatpush1.bf16.xpose.msra.mxu0 %v738
      %750 = vmatprep.subr.bf16.mxu0 0
      %751 = vmatpush1.bf16.xpose.msra.mxu0 %v741
      %752 = vmatprep.subr.bf16.mxu0 0
      %753 = vmatpush1.bf16.xpose.msra.mxu0 %v744
      %754 = vmatprep.subr.bf16.mxu0 0
      %755 = vmatpush1.bf16.xpose.msra.mxu0 0
      %756 = vmatprep.subr.bf16.mxu0 0
      %757 = vmatpush1.bf16.xpose.msra.mxu0 0
      %758 = vmatprep.subr.bf16.mxu0 0
      %759 = vmatpush1.bf16.xpose.msra.mxu0 0
      %760 = vmatprep.subr.bf16.mxu0 0
      %761 = vmatpush1.bf16.xpose.msra.mxu0 0
      %762 = vmatprep.subr.bf16.mxu0 0
      %763 = vmatpush1.bf16.xpose.msra.mxu0 0
      %764 = vmatprep.subr.bf16.mxu0 0
      %765 = vmatpush1.bf16.xpose.msra.mxu0 0
      %766 = vmatprep.subr.bf16.mxu0 0
      %767 = vmatpush1.bf16.xpose.msra.mxu0 0
      %768 = vmatprep.subr.bf16.mxu0 0
      %769 = vmatpush1.bf16.xpose.msra.mxu0 0
      %770 = vmatprep.subr.bf16.mxu0 0
      %771 = vmatpush1.bf16.xpose.msra.mxu0 0
      %772 = vmatprep.subr.bf16.mxu0 0
      %773 = vmatpush1.bf16.xpose.msra.mxu0 0
      %774 = vmatprep.subr.bf16.mxu0 0
      %775 = vmatpush1.bf16.xpose.msra.mxu0 0
      %776 = vmatprep.subr.bf16.mxu0 0
      %777 = vmatpush1.bf16.xpose.msra.mxu0 0
      %778 = vmatprep.mubr.bf16.mxu0 0
      %779 = vmatmul.mubr.bf16.gmra.mrb[0].mxu0 %v723
      %v780 = vpop.f32.mrb[0].mxu0
      %v781 = vadd.f32 0.0, %v780
      %v782 = vpop.f32.mrb[0].mxu0
      %v783 = vpop.f32.mrb[0].mxu0
      %v784 = vadd.f32 0.0, %v783
      %v785 = vpop.f32.mrb[0].mxu0
      %786 = vmatprep.mubr.bf16.mxu0 0
      %787 = vmatmul.mubr.bf16.gmra.mrb[0].mxu0 %v726
      %v788 = vpop.f32.mrb[0].mxu0
      %v789 = vadd.f32 0.0, %v788
      %v790 = vpop.f32.mrb[0].mxu0
      %v791 = vpop.f32.mrb[0].mxu0
      %v792 = vadd.f32 0.0, %v791
      %v793 = vpop.f32.mrb[0].mxu0
      %794 = vmatprep.mubr.bf16.mxu0 0
      %795 = vmatmul.mubr.bf16.gmra.mrb[0].mxu0 %v729
      %v796 = vpop.f32.mrb[0].mxu0
      %v797 = vadd.f32 0.0, %v796
      %v798 = vpop.f32.mrb[0].mxu0
      %v799 = vpop.f32.mrb[0].mxu0
      %v800 = vadd.f32 0.0, %v799
      %v801 = vpop.f32.mrb[0].mxu0
      %802 = vmatprep.mubr.bf16.mxu0 0
      %803 = vmatmul.mubr.bf16.gmra.mrb[0].mxu0 %v732
      %v804 = vpop.f32.mrb[0].mxu0
      %v805 = vadd.f32 0.0, %v804
      %v806 = vpop.f32.mrb[0].mxu0
      %v807 = vpop.f32.mrb[0].mxu0
      %v808 = vadd.f32 0.0, %v807
      %v809 = vpop.f32.mrb[0].mxu0
      %810 = vdwg.mxu0
      %vm811 = vcmask 523264
      %v812 = vsel %vm811, %v394, -inf
      %813 = vmax.xlane.f32.xlu0 %v812
      %v814 = vpop.xlane.xlu0 %813
      %v815 = vsel %vm811, %v397, -inf
      %816 = vmax.xlane.f32.xlu0 %v815
      %v817 = vpop.xlane.xlu0 %816
      %v818 = vsel %vm811, %v402, -inf
      %819 = vmax.xlane.f32.xlu0 %v818
      %v820 = vpop.xlane.xlu0 %819
      %v821 = vsel %vm811, %v405, -inf
      %822 = vmax.xlane.f32.xlu0 %v821
      %v823 = vpop.xlane.xlu0 %822
      %v824 = vsel %vm811, %v410, -inf
      %825 = vmax.xlane.f32.xlu0 %v824
      %v826 = vpop.xlane.xlu0 %825
      %v827 = vsel %vm811, %v413, -inf
      %828 = vmax.xlane.f32.xlu0 %v827
      %v829 = vpop.xlane.xlu0 %828
      %v830 = vsel %vm811, %v418, -inf
      %831 = vmax.xlane.f32.xlu0 %v830
      %v832 = vpop.xlane.xlu0 %831
      %v833 = vsel %vm811, %v421, -inf
      %834 = vmax.xlane.f32.xlu0 %v833
      %v835 = vpop.xlane.xlu0 %834
      %v836 = vsel %vm811, %v523, -inf
      %837 = vmax.xlane.f32.xlu0 %v836
      %v838 = vpop.xlane.xlu0 %837
      %v839 = vsel %vm811, %v526, -inf
      %840 = vmax.xlane.f32.xlu0 %v839
      %v841 = vpop.xlane.xlu0 %840
      %v842 = vsel %vm811, %v531, -inf
      %843 = vmax.xlane.f32.xlu0 %v842
      %v844 = vpop.xlane.xlu0 %843
      %v845 = vsel %vm811, %v534, -inf
      %846 = vmax.xlane.f32.xlu0 %v845
      %v847 = vpop.xlane.xlu0 %846
      %v848 = vsel %vm811, %v539, -inf
      %849 = vmax.xlane.f32.xlu0 %v848
      %v850 = vpop.xlane.xlu0 %849
      %v851 = vsel %vm811, %v542, -inf
      %852 = vmax.xlane.f32.xlu0 %v851
      %v853 = vpop.xlane.xlu0 %852
      %v854 = vsel %vm811, %v547, -inf
      %855 = vmax.xlane.f32.xlu0 %v854
      %v856 = vpop.xlane.xlu0 %855
      %v857 = vsel %vm811, %v550, -inf
      %858 = vmax.xlane.f32.xlu0 %v857
      %v859 = vpop.xlane.xlu0 %858
      %v860 = vsel %vm811, %v652, -inf
      %861 = vmax.xlane.f32.xlu0 %v860
      %v862 = vpop.xlane.xlu0 %861
      %v863 = vsel %vm811, %v655, -inf
      %864 = vmax.xlane.f32.xlu0 %v863
      %v865 = vpop.xlane.xlu0 %864
      %v866 = vsel %vm811, %v660, -inf
      %867 = vmax.xlane.f32.xlu0 %v866
      %v868 = vpop.xlane.xlu0 %867
      %v869 = vsel %vm811, %v663, -inf
      %870 = vmax.xlane.f32.xlu0 %v869
      %v871 = vpop.xlane.xlu0 %870
      %v872 = vsel %vm811, %v668, -inf
      %873 = vmax.xlane.f32.xlu0 %v872
      %v874 = vpop.xlane.xlu0 %873
      %v875 = vsel %vm811, %v671, -inf
      %876 = vmax.xlane.f32.xlu0 %v875
      %v877 = vpop.xlane.xlu0 %876
      %v878 = vsel %vm811, %v676, -inf
      %879 = vmax.xlane.f32.xlu0 %v878
      %v880 = vpop.xlane.xlu0 %879
      %v881 = vsel %vm811, %v679, -inf
      %882 = vmax.xlane.f32.xlu0 %v881
      %v883 = vpop.xlane.xlu0 %882
      %v884 = vsel %vm811, %v781, -inf
      %885 = vmax.xlane.f32.xlu0 %v884
      %v886 = vpop.xlane.xlu0 %885
      %v887 = vsel %vm811, %v784, -inf
      %888 = vmax.xlane.f32.xlu0 %v887
      %v889 = vpop.xlane.xlu0 %888
      %v890 = vsel %vm811, %v789, -inf
      %891 = vmax.xlane.f32.xlu0 %v890
      %v892 = vpop.xlane.xlu0 %891
      %v893 = vsel %vm811, %v792, -inf
      %894 = vmax.xlane.f32.xlu0 %v893
      %v895 = vpop.xlane.xlu0 %894
      %v896 = vsel %vm811, %v797, -inf
      %897 = vmax.xlane.f32.xlu0 %v896
      %v898 = vpop.xlane.xlu0 %897
      %v899 = vsel %vm811, %v800, -inf
      %900 = vmax.xlane.f32.xlu0 %v899
      %v901 = vpop.xlane.xlu0 %900
      %v902 = vsel %vm811, %v805, -inf
      %903 = vmax.xlane.f32.xlu0 %v902
      %v904 = vpop.xlane.xlu0 %903
      %v905 = vsel %vm811, %v808, -inf
      %906 = vmax.xlane.f32.xlu0 %v905
      %v907 = vpop.xlane.xlu0 %906
      %v908 = vsub.f32 %v394, %v814
      %v909 = vsub.f32 %v397, %v817
      %v910 = vsub.f32 %v402, %v820
      %v911 = vsub.f32 %v405, %v823
      %v912 = vsub.f32 %v410, %v826
      %v913 = vsub.f32 %v413, %v829
      %v914 = vsub.f32 %v418, %v832
      %v915 = vsub.f32 %v421, %v835
      %v916 = vsub.f32 %v523, %v838
      %v917 = vsub.f32 %v526, %v841
      %v918 = vsub.f32 %v531, %v844
      %v919 = vsub.f32 %v534, %v847
      %v920 = vsub.f32 %v539, %v850
      %v921 = vsub.f32 %v542, %v853
      %v922 = vsub.f32 %v547, %v856
      %v923 = vsub.f32 %v550, %v859
      %v924 = vsub.f32 %v652, %v862
      %v925 = vsub.f32 %v655, %v865
      %v926 = vsub.f32 %v660, %v868
      %v927 = vsub.f32 %v663, %v871
      %v928 = vsub.f32 %v668, %v874
      %v929 = vsub.f32 %v671, %v877
      %v930 = vsub.f32 %v676, %v880
      %v931 = vsub.f32 %v679, %v883
      %v932 = vsub.f32 %v781, %v886
      %v933 = vsub.f32 %v784, %v889
      %v934 = vsub.f32 %v789, %v892
      %v935 = vsub.f32 %v792, %v895
      %v936 = vsub.f32 %v797, %v898
      %v937 = vsub.f32 %v800, %v901
      %v938 = vsub.f32 %v805, %v904
      %v939 = vsub.f32 %v808, %v907
      %v940 = vmul.f32 %v908, 1.442695
      %v941 = vpow.pop %v940
      %v942 = vmul.f32 %v909, 1.442695
      %v943 = vpow.pop %v942
      %v944 = vmul.f32 %v910, 1.442695
      %v945 = vpow.pop %v944
      %v946 = vmul.f32 %v911, 1.442695
      %v947 = vpow.pop %v946
      %v948 = vmul.f32 %v912, 1.442695
      %v949 = vpow.pop %v948
      %v950 = vmul.f32 %v913, 1.442695
      %v951 = vpow.pop %v950
      %v952 = vmul.f32 %v914, 1.442695
      %v953 = vpow.pop %v952
      %v954 = vmul.f32 %v915, 1.442695
      %v955 = vpow.pop %v954
      %v956 = vmul.f32 %v916, 1.442695
      %v957 = vpow.pop %v956
      %v958 = vmul.f32 %v917, 1.442695
      %v959 = vpow.pop %v958
      %v960 = vmul.f32 %v918, 1.442695
      %v961 = vpow.pop %v960
      %v962 = vmul.f32 %v919, 1.442695
      %v963 = vpow.pop %v962
      %v964 = vmul.f32 %v920, 1.442695
      %v965 = vpow.pop %v964
      %v966 = vmul.f32 %v921, 1.442695
      %v967 = vpow.pop %v966
      %v968 = vmul.f32 %v922, 1.442695
      %v969 = vpow.pop %v968
      %v970 = vmul.f32 %v923, 1.442695
      %v971 = vpow.pop %v970
      %v972 = vmul.f32 %v924, 1.442695
      %v973 = vpow.pop %v972
      %v974 = vmul.f32 %v925, 1.442695
      %v975 = vpow.pop %v974
      %v976 = vmul.f32 %v926, 1.442695
      %v977 = vpow.pop %v976
      %v978 = vmul.f32 %v927, 1.442695
      %v979 = vpow.pop %v978
      %v980 = vmul.f32 %v928, 1.442695
      %v981 = vpow.pop %v980
      %v982 = vmul.f32 %v929, 1.442695
      %v983 = vpow.pop %v982
      %v984 = vmul.f32 %v930, 1.442695
      %v985 = vpow.pop %v984
      %v986 = vmul.f32 %v931, 1.442695
      %v987 = vpow.pop %v986
      %v988 = vmul.f32 %v932, 1.442695
      %v989 = vpow.pop %v988
      %v990 = vmul.f32 %v933, 1.442695
      %v991 = vpow.pop %v990
      %v992 = vmul.f32 %v934, 1.442695
      %v993 = vpow.pop %v992
      %v994 = vmul.f32 %v935, 1.442695
      %v995 = vpow.pop %v994
      %v996 = vmul.f32 %v936, 1.442695
      %v997 = vpow.pop %v996
      %v998 = vmul.f32 %v937, 1.442695
      %v999 = vpow.pop %v998
      %v1000 = vmul.f32 %v938, 1.442695
      %v1001 = vpow.pop %v1000
      %v1002 = vmul.f32 %v939, 1.442695
      %v1003 = vpow.pop %v1002
      %v1004 = vsel %vm811, %v941, 0.0
      %1005 = vadd.xlane.f32.xlu0 %v1004
      %v1006 = vpop.xlane.xlu0 %1005
      %v1007 = vsel %vm811, %v943, 0.0
      %1008 = vadd.xlane.f32.xlu0 %v1007
      %v1009 = vpop.xlane.xlu0 %1008
      %v1010 = vsel %vm811, %v945, 0.0
      %1011 = vadd.xlane.f32.xlu0 %v1010
      %v1012 = vpop.xlane.xlu0 %1011
      %v1013 = vsel %vm811, %v947, 0.0
      %1014 = vadd.xlane.f32.xlu0 %v1013
      %v1015 = vpop.xlane.xlu0 %1014
      %v1016 = vsel %vm811, %v949, 0.0
      %1017 = vadd.xlane.f32.xlu0 %v1016
      %v1018 = vpop.xlane.xlu0 %1017
      %v1019 = vsel %vm811, %v951, 0.0
      %1020 = vadd.xlane.f32.xlu0 %v1019
      %v1021 = vpop.xlane.xlu0 %1020
      %v1022 = vsel %vm811, %v953, 0.0
      %1023 = vadd.xlane.f32.xlu0 %v1022
      %v1024 = vpop.xlane.xlu0 %1023
      %v1025 = vsel %vm811, %v955, 0.0
      %1026 = vadd.xlane.f32.xlu0 %v1025
      %v1027 = vpop.xlane.xlu0 %1026
      %v1028 = vsel %vm811, %v957, 0.0
      %1029 = vadd.xlane.f32.xlu0 %v1028
      %v1030 = vpop.xlane.xlu0 %1029
      %v1031 = vsel %vm811, %v959, 0.0
      %1032 = vadd.xlane.f32.xlu0 %v1031
      %v1033 = vpop.xlane.xlu0 %1032
      %v1034 = vsel %vm811, %v961, 0.0
      %1035 = vadd.xlane.f32.xlu0 %v1034
      %v1036 = vpop.xlane.xlu0 %1035
      %v1037 = vsel %vm811, %v963, 0.0
      %1038 = vadd.xlane.f32.xlu0 %v1037
      %v1039 = vpop.xlane.xlu0 %1038
      %v1040 = vsel %vm811, %v965, 0.0
      %1041 = vadd.xlane.f32.xlu0 %v1040
      %v1042 = vpop.xlane.xlu0 %1041
      %v1043 = vsel %vm811, %v967, 0.0
      %1044 = vadd.xlane.f32.xlu0 %v1043
      %v1045 = vpop.xlane.xlu0 %1044
      %v1046 = vsel %vm811, %v969, 0.0
      %1047 = vadd.xlane.f32.xlu0 %v1046
      %v1048 = vpop.xlane.xlu0 %1047
      %v1049 = vsel %vm811, %v971, 0.0
      %1050 = vadd.xlane.f32.xlu0 %v1049
      %v1051 = vpop.xlane.xlu0 %1050
      %v1052 = vsel %vm811, %v973, 0.0
      %1053 = vadd.xlane.f32.xlu0 %v1052
      %v1054 = vpop.xlane.xlu0 %1053
      %v1055 = vsel %vm811, %v975, 0.0
      %1056 = vadd.xlane.f32.xlu0 %v1055
      %v1057 = vpop.xlane.xlu0 %1056
      %v1058 = vsel %vm811, %v977, 0.0
      %1059 = vadd.xlane.f32.xlu0 %v1058
      %v1060 = vpop.xlane.xlu0 %1059
      %v1061 = vsel %vm811, %v979, 0.0
      %1062 = vadd.xlane.f32.xlu0 %v1061
      %v1063 = vpop.xlane.xlu0 %1062
      %v1064 = vsel %vm811, %v981, 0.0
      %1065 = vadd.xlane.f32.xlu0 %v1064
      %v1066 = vpop.xlane.xlu0 %1065
      %v1067 = vsel %vm811, %v983, 0.0
      %1068 = vadd.xlane.f32.xlu0 %v1067
      %v1069 = vpop.xlane.xlu0 %1068
      %v1070 = vsel %vm811, %v985, 0.0
      %1071 = vadd.xlane.f32.xlu0 %v1070
      %v1072 = vpop.xlane.xlu0 %1071
      %v1073 = vsel %vm811, %v987, 0.0
      %1074 = vadd.xlane.f32.xlu0 %v1073
      %v1075 = vpop.xlane.xlu0 %1074
      %v1076 = vsel %vm811, %v989, 0.0
      %1077 = vadd.xlane.f32.xlu0 %v1076
      %v1078 = vpop.xlane.xlu0 %1077
      %v1079 = vsel %vm811, %v991, 0.0
      %1080 = vadd.xlane.f32.xlu0 %v1079
      %v1081 = vpop.xlane.xlu0 %1080
      %v1082 = vsel %vm811, %v993, 0.0
      %1083 = vadd.xlane.f32.xlu0 %v1082
      %v1084 = vpop.xlane.xlu0 %1083
      %v1085 = vsel %vm811, %v995, 0.0
      %1086 = vadd.xlane.f32.xlu0 %v1085
      %v1087 = vpop.xlane.xlu0 %1086
      %v1088 = vsel %vm811, %v997, 0.0
      %1089 = vadd.xlane.f32.xlu0 %v1088
      %v1090 = vpop.xlane.xlu0 %1089
      %v1091 = vsel %vm811, %v999, 0.0
      %1092 = vadd.xlane.f32.xlu0 %v1091
      %v1093 = vpop.xlane.xlu0 %1092
      %v1094 = vsel %vm811, %v1001, 0.0
      %1095 = vadd.xlane.f32.xlu0 %v1094
      %v1096 = vpop.xlane.xlu0 %1095
      %v1097 = vsel %vm811, %v1003, 0.0
      %1098 = vadd.xlane.f32.xlu0 %v1097
      %v1099 = vpop.xlane.xlu0 %1098
      %v1100 = vrcp.pop %v1006
      %v1101 = vrcp.pop %v1009
      %v1102 = vrcp.pop %v1012
      %v1103 = vrcp.pop %v1015
      %v1104 = vrcp.pop %v1018
      %v1105 = vrcp.pop %v1021
      %v1106 = vrcp.pop %v1024
      %v1107 = vrcp.pop %v1027
      %v1108 = vrcp.pop %v1030
      %v1109 = vrcp.pop %v1033
      %v1110 = vrcp.pop %v1036
      %v1111 = vrcp.pop %v1039
      %v1112 = vrcp.pop %v1042
      %v1113 = vrcp.pop %v1045
      %v1114 = vrcp.pop %v1048
      %v1115 = vrcp.pop %v1051
      %v1116 = vrcp.pop %v1054
      %v1117 = vrcp.pop %v1057
      %v1118 = vrcp.pop %v1060
      %v1119 = vrcp.pop %v1063
      %v1120 = vrcp.pop %v1066
      %v1121 = vrcp.pop %v1069
      %v1122 = vrcp.pop %v1072
      %v1123 = vrcp.pop %v1075
      %v1124 = vrcp.pop %v1078
      %v1125 = vrcp.pop %v1081
      %v1126 = vrcp.pop %v1084
      %v1127 = vrcp.pop %v1087
      %v1128 = vrcp.pop %v1090
      %v1129 = vrcp.pop %v1093
      %v1130 = vrcp.pop %v1096
      %v1131 = vrcp.pop %v1099
      %v1132 = vmul.f32 %v941, %v1100
      %v1133 = vmul.f32 %v943, %v1101
      %v1134 = vmul.f32 %v945, %v1102
      %v1135 = vmul.f32 %v947, %v1103
      %v1136 = vmul.f32 %v949, %v1104
      %v1137 = vmul.f32 %v951, %v1105
      %v1138 = vmul.f32 %v953, %v1106
      %v1139 = vmul.f32 %v955, %v1107
      %v1140 = vmul.f32 %v957, %v1108
      %v1141 = vmul.f32 %v959, %v1109
      %v1142 = vmul.f32 %v961, %v1110
      %v1143 = vmul.f32 %v963, %v1111
      %v1144 = vmul.f32 %v965, %v1112
      %v1145 = vmul.f32 %v967, %v1113
      %v1146 = vmul.f32 %v969, %v1114
      %v1147 = vmul.f32 %v971, %v1115
      %v1148 = vmul.f32 %v973, %v1116
      %v1149 = vmul.f32 %v975, %v1117
      %v1150 = vmul.f32 %v977, %v1118
      %v1151 = vmul.f32 %v979, %v1119
      %v1152 = vmul.f32 %v981, %v1120
      %v1153 = vmul.f32 %v983, %v1121
      %v1154 = vmul.f32 %v985, %v1122
      %v1155 = vmul.f32 %v987, %v1123
      %v1156 = vmul.f32 %v989, %v1124
      %v1157 = vmul.f32 %v991, %v1125
      %v1158 = vmul.f32 %v993, %v1126
      %v1159 = vmul.f32 %v995, %v1127
      %v1160 = vmul.f32 %v997, %v1128
      %v1161 = vmul.f32 %v999, %v1129
      %v1162 = vmul.f32 %v1001, %v1130
      %v1163 = vmul.f32 %v1003, %v1131
      %v1164 = vpack.c.bf16 %v1133, %v1132
      %v1165 = vpack.c.bf16 %v1135, %v1134
      %v1166 = vpack.c.bf16 %v1137, %v1136
      %v1167 = vpack.c.bf16 %v1139, %v1138
      %v1168 = vpack.c.bf16 %v1141, %v1140
      %v1169 = vpack.c.bf16 %v1143, %v1142
      %v1170 = vpack.c.bf16 %v1145, %v1144
      %v1171 = vpack.c.bf16 %v1147, %v1146
      %v1172 = vpack.c.bf16 %v1149, %v1148
      %v1173 = vpack.c.bf16 %v1151, %v1150
      %v1174 = vpack.c.bf16 %v1153, %v1152
      %v1175 = vpack.c.bf16 %v1155, %v1154
      %v1176 = vpack.c.bf16 %v1157, %v1156
      %v1177 = vpack.c.bf16 %v1159, %v1158
      %v1178 = vpack.c.bf16 %v1161, %v1160
      %v1179 = vpack.c.bf16 %v1163, %v1162
      %v1180 = vld [vmem:[%s220] sm:$0xf]
      %v1181 = vld [vmem:[%s220 + $0x4] sm:$0xf]
      %v1182 = vld [vmem:[%s220 + $0x8] sm:$0xf]
      %v1183 = vld [vmem:[%s220 + $0xc] sm:$0xf]
      %v1184 = vld [vmem:[%s220 + $0x10] sm:$0xf]
      %v1185 = vld [vmem:[%s220 + $0x14] sm:$0xf]
      %v1186 = vld [vmem:[%s220 + $0x18] sm:$0xf]
      %v1187 = vld [vmem:[%s220 + $0x1c] sm:$0xf]
      %v1188 = vld [vmem:[%s220 + $0x20] sm:$0xf]
      %v1189 = vld [vmem:[%s220 + $0x24] sm:$0xf]
      %v1190 = vld [vmem:[%s220 + $0x28] sm:$0xf]
      %v1191 = vld [vmem:[%s220 + $0x2c] sm:$0xf]
      %v1192 = vld [vmem:[%s220 + $0x30] sm:$0xf]
      %v1193 = vld [vmem:[%s220 + $0x34] sm:$0xf]
      %v1194 = vld [vmem:[%s220 + $0x38] sm:$0xf]
      %v1195 = vld [vmem:[%s220 + $0x3c] sm:$0xf]
      %v1196 = vld [vmem:[%s220 + $0x40] sm:$0xf]
      %v1197 = vld [vmem:[%s220 + $0x44] sm:$0xf]
      %v1198 = vld [vmem:[%s220 + $0x48] sm:$0xf]
      %v1199 = vld [vmem:[%s220 + $0x4c] sm:$0xf]
      %v1200 = vld [vmem:[%s220 + $0x50] sm:$0xf]
      %v1201 = vld [vmem:[%s220 + $0x54] sm:$0xf]
      %v1202 = vld [vmem:[%s220 + $0x58] sm:$0xf]
      %v1203 = vld [vmem:[%s220 + $0x5c] sm:$0xf]
      %v1204 = vld [vmem:[%s220 + $0x60] sm:$0xf]
      %v1205 = vld [vmem:[%s220 + $0x64] sm:$0xf]
      %v1206 = vld [vmem:[%s220 + $0x68] sm:$0xf]
      %v1207 = vld [vmem:[%s220 + $0x6c] sm:$0xf]
      %v1208 = vld [vmem:[%s220 + $0x70] sm:$0xf]
      %v1209 = vld [vmem:[%s220 + $0x74] sm:$0xf]
      %v1210 = vld [vmem:[%s220 + $0x78] sm:$0xf]
      %v1211 = vld [vmem:[%s220 + $0x7c] sm:$0xf]
      %v1220 = vunpack.c.l.b16 %v1180
      %v1221 = vunpack.c.l.b16 %v1181
      %v1222 = vunpack.c.l.b16 %v1182
      %v1223 = vunpack.c.l.b16 %v1183
      %v1224 = vunpack.c.l.b16 %v1184
      %v1225 = vunpack.c.l.b16 %v1185
      %v1226 = vunpack.c.l.b16 %v1186
      %v1227 = vunpack.c.l.b16 %v1187
      %v1228 = vpack.c.b16 %v1221, %v1220
      %v1229 = vpack.c.b16 %v1223, %v1222
      %v1230 = vpack.c.b16 %v1225, %v1224
      %v1231 = vpack.c.b16 %v1227, %v1226
      %v1237 = vsel %vm811, %v1164, 0
      %v1240 = vsel %vm811, %v1165, 0
      %v1243 = vsel %vm811, %v1166, 0
      %v1246 = vsel %vm811, %v1167, 0
      %1248 = vmatprep.subr.bf16.mxu0 0
      %1249 = vmatpush1.bf16.msra.mxu0 %v1228
      %1250 = vmatprep.subr.bf16.mxu0 0
      %1251 = vmatpush1.bf16.msra.mxu0 %v1229
      %1252 = vmatprep.subr.bf16.mxu0 0
      %1253 = vmatpush1.bf16.msra.mxu0 %v1230
      %1254 = vmatprep.subr.bf16.mxu0 0
      %1255 = vmatpush1.bf16.msra.mxu0 %v1231
      %1256 = vmatprep.subr.bf16.mxu0 0
      %1257 = vmatpush1.bf16.msra.mxu0 0
      %1258 = vmatprep.subr.bf16.mxu0 0
      %1259 = vmatpush1.bf16.msra.mxu0 0
      %1260 = vmatprep.subr.bf16.mxu0 0
      %1261 = vmatpush1.bf16.msra.mxu0 0
      %1262 = vmatprep.subr.bf16.mxu0 0
      %1263 = vmatpush1.bf16.msra.mxu0 0
      %1264 = vmatprep.subr.bf16.mxu0 0
      %1265 = vmatpush1.bf16.msra.mxu0 0
      %1266 = vmatprep.subr.bf16.mxu0 0
      %1267 = vmatpush1.bf16.msra.mxu0 0
      %1268 = vmatprep.subr.bf16.mxu0 0
      %1269 = vmatpush1.bf16.msra.mxu0 0
      %1270 = vmatprep.subr.bf16.mxu0 0
      %1271 = vmatpush1.bf16.msra.mxu0 0
      %1272 = vmatprep.subr.bf16.mxu0 0
      %1273 = vmatpush1.bf16.msra.mxu0 0
      %1274 = vmatprep.subr.bf16.mxu0 0
      %1275 = vmatpush1.bf16.msra.mxu0 0
      %1276 = vmatprep.subr.bf16.mxu0 0
      %1277 = vmatpush1.bf16.msra.mxu0 0
      %1278 = vmatprep.subr.bf16.mxu0 0
      %1279 = vmatpush1.bf16.msra.mxu0 0
      %1280 = vmatprep.mubr.bf16.mxu0 0
      %1281 = vmatmul.mubr.bf16.gmra.mrb[0].mxu0 %v1237
      %v1282 = vpop.f32.mrb[0].mxu0
      %v1283 = vadd.f32 0.0, %v1282
      %v1284 = vpop.f32.mrb[0].mxu0
      %v1285 = vpop.f32.mrb[0].mxu0
      %v1286 = vadd.f32 0.0, %v1285
      %v1287 = vpop.f32.mrb[0].mxu0
      %1288 = vmatprep.mubr.bf16.mxu0 0
      %1289 = vmatmul.mubr.bf16.gmra.mrb[0].mxu0 %v1240
      %v1290 = vpop.f32.mrb[0].mxu0
      %v1291 = vadd.f32 0.0, %v1290
      %v1292 = vpop.f32.mrb[0].mxu0
      %v1293 = vpop.f32.mrb[0].mxu0
      %v1294 = vadd.f32 0.0, %v1293
      %v1295 = vpop.f32.mrb[0].mxu0
      %1296 = vmatprep.mubr.bf16.mxu0 0
      %1297 = vmatmul.mubr.bf16.gmra.mrb[0].mxu0 %v1243
      %v1298 = vpop.f32.mrb[0].mxu0
      %v1299 = vadd.f32 0.0, %v1298
      %v1300 = vpop.f32.mrb[0].mxu0
      %v1301 = vpop.f32.mrb[0].mxu0
      %v1302 = vadd.f32 0.0, %v1301
      %v1303 = vpop.f32.mrb[0].mxu0
      %1304 = vmatprep.mubr.bf16.mxu0 0
      %1305 = vmatmul.mubr.bf16.gmra.mrb[0].mxu0 %v1246
      %v1306 = vpop.f32.mrb[0].mxu0
      %v1307 = vadd.f32 0.0, %v1306
      %v1308 = vpop.f32.mrb[0].mxu0
      %v1309 = vpop.f32.mrb[0].mxu0
      %v1310 = vadd.f32 0.0, %v1309
      %v1311 = vpop.f32.mrb[0].mxu0
      %1312 = vdwg.mxu0
      %v1321 = vunpack.c.l.b16 %v1188
      %v1322 = vunpack.c.l.b16 %v1189
      %v1323 = vunpack.c.l.b16 %v1190
      %v1324 = vunpack.c.l.b16 %v1191
      %v1325 = vunpack.c.l.b16 %v1192
      %v1326 = vunpack.c.l.b16 %v1193
      %v1327 = vunpack.c.l.b16 %v1194
      %v1328 = vunpack.c.l.b16 %v1195
      %v1329 = vpack.c.b16 %v1322, %v1321
      %v1330 = vpack.c.b16 %v1324, %v1323
      %v1331 = vpack.c.b16 %v1326, %v1325
      %v1332 = vpack.c.b16 %v1328, %v1327
      %v1338 = vsel %vm811, %v1168, 0
      %v1341 = vsel %vm811, %v1169, 0
      %v1344 = vsel %vm811, %v1170, 0
      %v1347 = vsel %vm811, %v1171, 0
      %1349 = vmatprep.subr.bf16.mxu0 0
      %1350 = vmatpush1.bf16.msra.mxu0 %v1329
      %1351 = vmatprep.subr.bf16.mxu0 0
      %1352 = vmatpush1.bf16.msra.mxu0 %v1330
      %1353 = vmatprep.subr.bf16.mxu0 0
      %1354 = vmatpush1.bf16.msra.mxu0 %v1331
      %1355 = vmatprep.subr.bf16.mxu0 0
      %1356 = vmatpush1.bf16.msra.mxu0 %v1332
      %1357 = vmatprep.subr.bf16.mxu0 0
      %1358 = vmatpush1.bf16.msra.mxu0 0
      %1359 = vmatprep.subr.bf16.mxu0 0
      %1360 = vmatpush1.bf16.msra.mxu0 0
      %1361 = vmatprep.subr.bf16.mxu0 0
      %1362 = vmatpush1.bf16.msra.mxu0 0
      %1363 = vmatprep.subr.bf16.mxu0 0
      %1364 = vmatpush1.bf16.msra.mxu0 0
      %1365 = vmatprep.subr.bf16.mxu0 0
      %1366 = vmatpush1.bf16.msra.mxu0 0
      %1367 = vmatprep.subr.bf16.mxu0 0
      %1368 = vmatpush1.bf16.msra.mxu0 0
      %1369 = vmatprep.subr.bf16.mxu0 0
      %1370 = vmatpush1.bf16.msra.mxu0 0
      %1371 = vmatprep.subr.bf16.mxu0 0
      %1372 = vmatpush1.bf16.msra.mxu0 0
      %1373 = vmatprep.subr.bf16.mxu0 0
      %1374 = vmatpush1.bf16.msra.mxu0 0
      %1375 = vmatprep.subr.bf16.mxu0 0
      %1376 = vmatpush1.bf16.msra.mxu0 0
      %1377 = vmatprep.subr.bf16.mxu0 0
      %1378 = vmatpush1.bf16.msra.mxu0 0
      %1379 = vmatprep.subr.bf16.mxu0 0
      %1380 = vmatpush1.bf16.msra.mxu0 0
      %1381 = vmatprep.mubr.bf16.mxu0 0
      %1382 = vmatmul.mubr.bf16.gmra.mrb[0].mxu0 %v1338
      %v1383 = vpop.f32.mrb[0].mxu0
      %v1384 = vadd.f32 0.0, %v1383
      %v1385 = vpop.f32.mrb[0].mxu0
      %v1386 = vpop.f32.mrb[0].mxu0
      %v1387 = vadd.f32 0.0, %v1386
      %v1388 = vpop.f32.mrb[0].mxu0
      %1389 = vmatprep.mubr.bf16.mxu0 0
      %1390 = vmatmul.mubr.bf16.gmra.mrb[0].mxu0 %v1341
      %v1391 = vpop.f32.mrb[0].mxu0
      %v1392 = vadd.f32 0.0, %v1391
      %v1393 = vpop.f32.mrb[0].mxu0
      %v1394 = vpop.f32.mrb[0].mxu0
      %v1395 = vadd.f32 0.0, %v1394
      %v1396 = vpop.f32.mrb[0].mxu0
      %1397 = vmatprep.mubr.bf16.mxu0 0
      %1398 = vmatmul.mubr.bf16.gmra.mrb[0].mxu0 %v1344
      %v1399 = vpop.f32.mrb[0].mxu0
      %v1400 = vadd.f32 0.0, %v1399
      %v1401 = vpop.f32.mrb[0].mxu0
      %v1402 = vpop.f32.mrb[0].mxu0
      %v1403 = vadd.f32 0.0, %v1402
      %v1404 = vpop.f32.mrb[0].mxu0
      %1405 = vmatprep.mubr.bf16.mxu0 0
      %1406 = vmatmul.mubr.bf16.gmra.mrb[0].mxu0 %v1347
      %v1407 = vpop.f32.mrb[0].mxu0
      %v1408 = vadd.f32 0.0, %v1407
      %v1409 = vpop.f32.mrb[0].mxu0
      %v1410 = vpop.f32.mrb[0].mxu0
      %v1411 = vadd.f32 0.0, %v1410
      %v1412 = vpop.f32.mrb[0].mxu0
      %1413 = vdwg.mxu0
      %v1422 = vunpack.c.l.b16 %v1196
      %v1423 = vunpack.c.l.b16 %v1197
      %v1424 = vunpack.c.l.b16 %v1198
      %v1425 = vunpack.c.l.b16 %v1199
      %v1426 = vunpack.c.l.b16 %v1200
      %v1427 = vunpack.c.l.b16 %v1201
      %v1428 = vunpack.c.l.b16 %v1202
      %v1429 = vunpack.c.l.b16 %v1203
      %v1430 = vpack.c.b16 %v1423, %v1422
      %v1431 = vpack.c.b16 %v1425, %v1424
      %v1432 = vpack.c.b16 %v1427, %v1426
      %v1433 = vpack.c.b16 %v1429, %v1428
      %v1439 = vsel %vm811, %v1172, 0
      %v1442 = vsel %vm811, %v1173, 0
      %v1445 = vsel %vm811, %v1174, 0
      %v1448 = vsel %vm811, %v1175, 0
      %1450 = vmatprep.subr.bf16.mxu0 0
      %1451 = vmatpush1.bf16.msra.mxu0 %v1430
      %1452 = vmatprep.subr.bf16.mxu0 0
      %1453 = vmatpush1.bf16.msra.mxu0 %v1431
      %1454 = vmatprep.subr.bf16.mxu0 0
      %1455 = vmatpush1.bf16.msra.mxu0 %v1432
      %1456 = vmatprep.subr.bf16.mxu0 0
      %1457 = vmatpush1.bf16.msra.mxu0 %v1433
      %1458 = vmatprep.subr.bf16.mxu0 0
      %1459 = vmatpush1.bf16.msra.mxu0 0
      %1460 = vmatprep.subr.bf16.mxu0 0
      %1461 = vmatpush1.bf16.msra.mxu0 0
      %1462 = vmatprep.subr.bf16.mxu0 0
      %1463 = vmatpush1.bf16.msra.mxu0 0
      %1464 = vmatprep.subr.bf16.mxu0 0
      %1465 = vmatpush1.bf16.msra.mxu0 0
      %1466 = vmatprep.subr.bf16.mxu0 0
      %1467 = vmatpush1.bf16.msra.mxu0 0
      %1468 = vmatprep.subr.bf16.mxu0 0
      %1469 = vmatpush1.bf16.msra.mxu0 0
      %1470 = vmatprep.subr.bf16.mxu0 0
      %1471 = vmatpush1.bf16.msra.mxu0 0
      %1472 = vmatprep.subr.bf16.mxu0 0
      %1473 = vmatpush1.bf16.msra.mxu0 0
      %1474 = vmatprep.subr.bf16.mxu0 0
      %1475 = vmatpush1.bf16.msra.mxu0 0
      %1476 = vmatprep.subr.bf16.mxu0 0
      %1477 = vmatpush1.bf16.msra.mxu0 0
      %1478 = vmatprep.subr.bf16.mxu0 0
      %1479 = vmatpush1.bf16.msra.mxu0 0
      %1480 = vmatprep.subr.bf16.mxu0 0
      %1481 = vmatpush1.bf16.msra.mxu0 0
      %1482 = vmatprep.mubr.bf16.mxu0 0
      %1483 = vmatmul.mubr.bf16.gmra.mrb[0].mxu0 %v1439
      %v1484 = vpop.f32.mrb[0].mxu0
      %v1485 = vadd.f32 0.0, %v1484
      %v1486 = vpop.f32.mrb[0].mxu0
      %v1487 = vpop.f32.mrb[0].mxu0
      %v1488 = vadd.f32 0.0, %v1487
      %v1489 = vpop.f32.mrb[0].mxu0
      %1490 = vmatprep.mubr.bf16.mxu0 0
      %1491 = vmatmul.mubr.bf16.gmra.mrb[0].mxu0 %v1442
      %v1492 = vpop.f32.mrb[0].mxu0
      %v1493 = vadd.f32 0.0, %v1492
      %v1494 = vpop.f32.mrb[0].mxu0
      %v1495 = vpop.f32.mrb[0].mxu0
      %v1496 = vadd.f32 0.0, %v1495
      %v1497 = vpop.f32.mrb[0].mxu0
      %1498 = vmatprep.mubr.bf16.mxu0 0
      %1499 = vmatmul.mubr.bf16.gmra.mrb[0].mxu0 %v1445
      %v1500 = vpop.f32.mrb[0].mxu0
      %v1501 = vadd.f32 0.0, %v1500
      %v1502 = vpop.f32.mrb[0].mxu0
      %v1503 = vpop.f32.mrb[0].mxu0
      %v1504 = vadd.f32 0.0, %v1503
      %v1505 = vpop.f32.mrb[0].mxu0
      %1506 = vmatprep.mubr.bf16.mxu0 0
      %1507 = vmatmul.mubr.bf16.gmra.mrb[0].mxu0 %v1448
      %v1508 = vpop.f32.mrb[0].mxu0
      %v1509 = vadd.f32 0.0, %v1508
      %v1510 = vpop.f32.mrb[0].mxu0
      %v1511 = vpop.f32.mrb[0].mxu0
      %v1512 = vadd.f32 0.0, %v1511
      %v1513 = vpop.f32.mrb[0].mxu0
      %1514 = vdwg.mxu0
      %v1523 = vunpack.c.l.b16 %v1204
      %v1524 = vunpack.c.l.b16 %v1205
      %v1525 = vunpack.c.l.b16 %v1206
      %v1526 = vunpack.c.l.b16 %v1207
      %v1527 = vunpack.c.l.b16 %v1208
      %v1528 = vunpack.c.l.b16 %v1209
      %v1529 = vunpack.c.l.b16 %v1210
      %v1530 = vunpack.c.l.b16 %v1211
      %v1531 = vpack.c.b16 %v1524, %v1523
      %v1532 = vpack.c.b16 %v1526, %v1525
      %v1533 = vpack.c.b16 %v1528, %v1527
      %v1534 = vpack.c.b16 %v1530, %v1529
      %v1540 = vsel %vm811, %v1176, 0
      %v1543 = vsel %vm811, %v1177, 0
      %v1546 = vsel %vm811, %v1178, 0
      %v1549 = vsel %vm811, %v1179, 0
      %1551 = vmatprep.subr.bf16.mxu0 0
      %1552 = vmatpush1.bf16.msra.mxu0 %v1531
      %1553 = vmatprep.subr.bf16.mxu0 0
      %1554 = vmatpush1.bf16.msra.mxu0 %v1532
      %1555 = vmatprep.subr.bf16.mxu0 0
      %1556 = vmatpush1.bf16.msra.mxu0 %v1533
      %1557 = vmatprep.subr.bf16.mxu0 0
      %1558 = vmatpush1.bf16.msra.mxu0 %v1534
      %1559 = vmatprep.subr.bf16.mxu0 0
      %1560 = vmatpush1.bf16.msra.mxu0 0
      %1561 = vmatprep.subr.bf16.mxu0 0
      %1562 = vmatpush1.bf16.msra.mxu0 0
      %1563 = vmatprep.subr.bf16.mxu0 0
      %1564 = vmatpush1.bf16.msra.mxu0 0
      %1565 = vmatprep.subr.bf16.mxu0 0
      %1566 = vmatpush1.bf16.msra.mxu0 0
      %1567 = vmatprep.subr.bf16.mxu0 0
      %1568 = vmatpush1.bf16.msra.mxu0 0
      %1569 = vmatprep.subr.bf16.mxu0 0
      %1570 = vmatpush1.bf16.msra.mxu0 0
      %1571 = vmatprep.subr.bf16.mxu0 0
      %1572 = vmatpush1.bf16.msra.mxu0 0
      %1573 = vmatprep.subr.bf16.mxu0 0
      %1574 = vmatpush1.bf16.msra.mxu0 0
      %1575 = vmatprep.subr.bf16.mxu0 0
      %1576 = vmatpush1.bf16.msra.mxu0 0
      %1577 = vmatprep.subr.bf16.mxu0 0
      %1578 = vmatpush1.bf16.msra.mxu0 0
      %1579 = vmatprep.subr.bf16.mxu0 0
      %1580 = vmatpush1.bf16.msra.mxu0 0
      %1581 = vmatprep.subr.bf16.mxu0 0
      %1582 = vmatpush1.bf16.msra.mxu0 0
      %1583 = vmatprep.mubr.bf16.mxu0 0
      %1584 = vmatmul.mubr.bf16.gmra.mrb[0].mxu0 %v1540
      %v1585 = vpop.f32.mrb[0].mxu0
      %v1586 = vadd.f32 0.0, %v1585
      %v1587 = vpop.f32.mrb[0].mxu0
      %v1588 = vpop.f32.mrb[0].mxu0
      %v1589 = vadd.f32 0.0, %v1588
      %v1590 = vpop.f32.mrb[0].mxu0
      %1591 = vmatprep.mubr.bf16.mxu0 0
      %1592 = vmatmul.mubr.bf16.gmra.mrb[0].mxu0 %v1543
      %v1593 = vpop.f32.mrb[0].mxu0
      %v1594 = vadd.f32 0.0, %v1593
      %v1595 = vpop.f32.mrb[0].mxu0
      %v1596 = vpop.f32.mrb[0].mxu0
      %v1597 = vadd.f32 0.0, %v1596
      %v1598 = vpop.f32.mrb[0].mxu0
      %1599 = vmatprep.mubr.bf16.mxu0 0
      %1600 = vmatmul.mubr.bf16.gmra.mrb[0].mxu0 %v1546
      %v1601 = vpop.f32.mrb[0].mxu0
      %v1602 = vadd.f32 0.0, %v1601
      %v1603 = vpop.f32.mrb[0].mxu0
      %v1604 = vpop.f32.mrb[0].mxu0
      %v1605 = vadd.f32 0.0, %v1604
      %v1606 = vpop.f32.mrb[0].mxu0
      %1607 = vmatprep.mubr.bf16.mxu0 0
      %1608 = vmatmul.mubr.bf16.gmra.mrb[0].mxu0 %v1549
      %v1609 = vpop.f32.mrb[0].mxu0
      %v1610 = vadd.f32 0.0, %v1609
      %v1611 = vpop.f32.mrb[0].mxu0
      %v1612 = vpop.f32.mrb[0].mxu0
      %v1613 = vadd.f32 0.0, %v1612
      %v1614 = vpop.f32.mrb[0].mxu0
      %1615 = vdwg.mxu0
      %v1616 = vpack.c.bf16 %v1286, %v1283
      %v1617 = vpack.c.bf16 %v1294, %v1291
      %v1618 = vpack.c.bf16 %v1302, %v1299
      %v1619 = vpack.c.bf16 %v1310, %v1307
      %v1620 = vpack.c.bf16 %v1387, %v1384
      %v1621 = vpack.c.bf16 %v1395, %v1392
      %v1622 = vpack.c.bf16 %v1403, %v1400
      %v1623 = vpack.c.bf16 %v1411, %v1408
      %v1624 = vpack.c.bf16 %v1488, %v1485
      %v1625 = vpack.c.bf16 %v1496, %v1493
      %v1626 = vpack.c.bf16 %v1504, %v1501
      %v1627 = vpack.c.bf16 %v1512, %v1509
      %v1628 = vpack.c.bf16 %v1589, %v1586
      %v1629 = vpack.c.bf16 %v1597, %v1594
      %v1630 = vpack.c.bf16 %v1605, %v1602
      %v1631 = vpack.c.bf16 %v1613, %v1610
      %v1648 = vunpack.c.l.b16 %v1616
      %v1649 = vunpack.c.h.b16 %v1616
      %v1650 = vunpack.c.l.b16 %v1617
      %v1651 = vunpack.c.h.b16 %v1617
      %v1652 = vunpack.c.l.b16 %v1618
      %v1653 = vunpack.c.h.b16 %v1618
      %v1654 = vunpack.c.l.b16 %v1619
      %v1655 = vunpack.c.h.b16 %v1619
      %v1656 = vunpack.c.l.b16 %v1620
      %v1657 = vunpack.c.h.b16 %v1620
      %v1658 = vunpack.c.l.b16 %v1621
      %v1659 = vunpack.c.h.b16 %v1621
      %v1660 = vunpack.c.l.b16 %v1622
      %v1661 = vunpack.c.h.b16 %v1622
      %v1662 = vunpack.c.l.b16 %v1623
      %v1663 = vunpack.c.h.b16 %v1623
      %v1664 = vunpack.c.l.b16 %v1624
      %v1665 = vunpack.c.h.b16 %v1624
      %v1666 = vunpack.c.l.b16 %v1625
      %v1667 = vunpack.c.h.b16 %v1625
      %v1668 = vunpack.c.l.b16 %v1626
      %v1669 = vunpack.c.h.b16 %v1626
      %v1670 = vunpack.c.l.b16 %v1627
      %v1671 = vunpack.c.h.b16 %v1627
      %v1672 = vunpack.c.l.b16 %v1628
      %v1673 = vunpack.c.h.b16 %v1628
      %v1674 = vunpack.c.l.b16 %v1629
      %v1675 = vunpack.c.h.b16 %v1629
      %v1676 = vunpack.c.l.b16 %v1630
      %v1677 = vunpack.c.h.b16 %v1630
      %v1678 = vunpack.c.l.b16 %v1631
      %v1679 = vunpack.c.h.b16 %v1631
      %v1680 = vpack.c.b16 %v1648, %v1648
      %v1681 = vpack.c.b16 %v1649, %v1649
      %v1682 = vpack.c.b16 %v1650, %v1650
      %v1683 = vpack.c.b16 %v1651, %v1651
      %v1684 = vpack.c.b16 %v1652, %v1652
      %v1685 = vpack.c.b16 %v1653, %v1653
      %v1686 = vpack.c.b16 %v1654, %v1654
      %v1687 = vpack.c.b16 %v1655, %v1655
      %v1688 = vpack.c.b16 %v1656, %v1656
      %v1689 = vpack.c.b16 %v1657, %v1657
      %v1690 = vpack.c.b16 %v1658, %v1658
      %v1691 = vpack.c.b16 %v1659, %v1659
      %v1692 = vpack.c.b16 %v1660, %v1660
      %v1693 = vpack.c.b16 %v1661, %v1661
      %v1694 = vpack.c.b16 %v1662, %v1662
      %v1695 = vpack.c.b16 %v1663, %v1663
      %v1696 = vpack.c.b16 %v1664, %v1664
      %v1697 = vpack.c.b16 %v1665, %v1665
      %v1698 = vpack.c.b16 %v1666, %v1666
      %v1699 = vpack.c.b16 %v1667, %v1667
      %v1700 = vpack.c.b16 %v1668, %v1668
      %v1701 = vpack.c.b16 %v1669, %v1669
      %v1702 = vpack.c.b16 %v1670, %v1670
      %v1703 = vpack.c.b16 %v1671, %v1671
      %v1704 = vpack.c.b16 %v1672, %v1672
      %v1705 = vpack.c.b16 %v1673, %v1673
      %v1706 = vpack.c.b16 %v1674, %v1674
      %v1707 = vpack.c.b16 %v1675, %v1675
      %v1708 = vpack.c.b16 %v1676, %v1676
      %v1709 = vpack.c.b16 %v1677, %v1677
      %v1710 = vpack.c.b16 %v1678, %v1678
      %v1711 = vpack.c.b16 %v1679, %v1679
      %vm1744 = vcmask 158720
      %1745 = vst.msk [vmem:[%s227] sm:$0xf] %vm1744, %v1680
      %1746 = vst.msk [vmem:[%s227 + $0x4] sm:$0xf] %vm1744, %v1681
      %1747 = vst.msk [vmem:[%s227 + $0x8] sm:$0xf] %vm1744, %v1682
      %1748 = vst.msk [vmem:[%s227 + $0xc] sm:$0xf] %vm1744, %v1683
      %1749 = vst.msk [vmem:[%s227 + $0x10] sm:$0xf] %vm1744, %v1684
      %1750 = vst.msk [vmem:[%s227 + $0x14] sm:$0xf] %vm1744, %v1685
      %1751 = vst.msk [vmem:[%s227 + $0x18] sm:$0xf] %vm1744, %v1686
      %1752 = vst.msk [vmem:[%s227 + $0x1c] sm:$0xf] %vm1744, %v1687
      %1753 = vst.msk [vmem:[%s227 + $0x20] sm:$0xf] %vm1744, %v1688
      %1754 = vst.msk [vmem:[%s227 + $0x24] sm:$0xf] %vm1744, %v1689
      %1755 = vst.msk [vmem:[%s227 + $0x28] sm:$0xf] %vm1744, %v1690
      %1756 = vst.msk [vmem:[%s227 + $0x2c] sm:$0xf] %vm1744, %v1691
      %1757 = vst.msk [vmem:[%s227 + $0x30] sm:$0xf] %vm1744, %v1692
      %1758 = vst.msk [vmem:[%s227 + $0x34] sm:$0xf] %vm1744, %v1693
      %1759 = vst.msk [vmem:[%s227 + $0x38] sm:$0xf] %vm1744, %v1694
      %1760 = vst.msk [vmem:[%s227 + $0x3c] sm:$0xf] %vm1744, %v1695
      %1761 = vst.msk [vmem:[%s227 + $0x40] sm:$0xf] %vm1744, %v1696
      %1762 = vst.msk [vmem:[%s227 + $0x44] sm:$0xf] %vm1744, %v1697
      %1763 = vst.msk [vmem:[%s227 + $0x48] sm:$0xf] %vm1744, %v1698
      %1764 = vst.msk [vmem:[%s227 + $0x4c] sm:$0xf] %vm1744, %v1699
      %1765 = vst.msk [vmem:[%s227 + $0x50] sm:$0xf] %vm1744, %v1700
      %1766 = vst.msk [vmem:[%s227 + $0x54] sm:$0xf] %vm1744, %v1701
      %1767 = vst.msk [vmem:[%s227 + $0x58] sm:$0xf] %vm1744, %v1702
      %1768 = vst.msk [vmem:[%s227 + $0x5c] sm:$0xf] %vm1744, %v1703
      %1769 = vst.msk [vmem:[%s227 + $0x60] sm:$0xf] %vm1744, %v1704
      %1770 = vst.msk [vmem:[%s227 + $0x64] sm:$0xf] %vm1744, %v1705
      %1771 = vst.msk [vmem:[%s227 + $0x68] sm:$0xf] %vm1744, %v1706
      %1772 = vst.msk [vmem:[%s227 + $0x6c] sm:$0xf] %vm1744, %v1707
      %1773 = vst.msk [vmem:[%s227 + $0x70] sm:$0xf] %vm1744, %v1708
      %1774 = vst.msk [vmem:[%s227 + $0x74] sm:$0xf] %vm1744, %v1709
      %1775 = vst.msk [vmem:[%s227 + $0x78] sm:$0xf] %vm1744, %v1710
      %1776 = vst.msk [vmem:[%s227 + $0x7c] sm:$0xf] %vm1744, %v1711
      %s1777 = smul.u32 4, %s14
      %p1778 = scmp.lt.s32.totalorder %s1777, 7
      %s1779 = scalar_select %p1778, %s1777, 7
      %s1780 = smul.addr %s1779, 8
      %s1781 = smul.addr %s1780, 4
      %s1782 = scalar_lea.vmem %s3, %s1781
      // Predicated region
      $region33: #{elcs_forward.11} parent=31 // pred_check
        %p1783 = pneg %p110
      $region34: #{elcs_forward.11} parent=31 // pred_check_branch
        %1785 = sbr.rel (%p1783) target = $region36
      $region35: #{elcs_forward.11} parent=31 // pred_region
        %s1786 = smul.u32 4, %s14
      $region36: #{elcs_forward.11} parent=31 // pred_fallthru
        _
    $region32: #{elcs_forward.11} parent=5 // pred_fallthru
      _
    %p1787 = scmp.le.s32.totalorder 2, %s9
    // Predicated region
    $region37: #{elcs_forward.11} parent=5 // pred_check
      %p1788 = pneg %p1787
    $region38: #{elcs_forward.11} parent=5 // pred_check_branch
      %1790 = sbr.rel (%p1788) target = $region40
    $region39: #{elcs_forward.11} parent=5 // pred_region
      %s1791 = ssub.s32 %s9, 2
      // Predicated region
      $region41: #{elcs_forward.11} parent=39 // pred_check
        %p1792 = pneg %p116
      $region42: #{elcs_forward.11} parent=39 // pred_check_branch
        %1794 = sbr.rel (%p1792) target = $region44
      $region43: #{elcs_forward.11} parent=39 // pred_region
        %s1795 = smul.u32 4, %s15
        %p1796 = scmp.lt.s32.totalorder %s1795, 7
        %s1797 = scalar_select %p1796, %s1795, 7
        %s1798 = smul.addr %s1797, 8
        %s1799 = smul.addr %s1798, 4
        %s1800 = scalar_lea.vmem %s3, %s1799
      $region44: #{elcs_forward.11} parent=39 // pred_fallthru
        _
    $region40: #{elcs_forward.11} parent=5 // pred_fallthru
      _
  $region6: #{elcs_forward.11} parent=0 // loop_footer
    %s13 = sadd.s32 1, %s9
  $region7: #{elcs_forward.11} parent=0 // loop_footer_branch
    %8 = sbr.rel target = $region3
  $region8: #{elcs_forward.11} parent=0 // loop_exit
    _

// kernel: elcs_forward.13
$region0: #{elcs_forward.13}
  #allocation0 [shape = 'u32[]', space=smem, size = 0x4, offset = 0x4, fixed_abs, tag = 'smem constant byte address 0x4 - core index']
  #allocation1 [shape = 'u32[144,128]{1,0:T(1,128)}', space=vmem, size = 0x12000, scoped, tag = 'internal scratch']
  %s0 = inlined_call_operand.vmem [shape: bf16[512,60], index: 0, kind: input, shape index: {}]
  %s1 = inlined_call_operand.vmem [shape: f32[512,60], index: 1, kind: input, shape index: {}]
  %s2 = inlined_call_operand.vmem [shape: bf16[60,60], index: 2, kind: input, shape index: {}]
  %s3 = inlined_call_operand.vmem [shape: f32[1,60], index: 3, kind: input, shape index: {}]
  %s4 = inlined_call_operand.hbm [shape: f32[512,60], index: 4, kind: output, shape index: {}]
  %s5 = sld [smem:[#allocation0]]
  $region49: #{elcs_forward.13} parent=0
    _
  %s7 = ssub.s32 1, %s5
  %s8 = scalar_select 0, %s7, %s5
  $region1: #{elcs_forward.13} parent=0
    #allocation2 [shape = 'u8[131072]{0}', space=vmem, size = 0x20000, scoped, tag = 'output window, operand 0']
    #allocation3 [shape = 's32[2]{0}', space=sflag, size = 0x8, scoped, tag = 'scoped memory for elcs_forward.13']
    %9 = vsyncpa [#allocation3], 0
    %s10 = scalar_lea.sflag [#allocation3], 1
    %11 = vsyncpa %s10, 0
    loop: start=0, step=1, limit=6
    $region2: #{elcs_forward.13} parent=1 // loop_pre_header
      _
    $region3: #{elcs_forward.13} parent=1 // loop_header
      %s13 = sphi 0, %s17
      %p14 = scmp.ge.s32.totalorder %s13, 6
      %s23 = sphi 0, %s25
      %s26 = sphi 0, %s23
      %s27 = sphi 0, %s26
      %s43 = sphi 0, %s27
      %s49 = sphi 0, %s51
      %s52 = sphi 0, %s49
      %s53 = sphi 0, %s52
      %s69 = sphi 0, %s53
      %s73 = sphi 0, %s73
      %s75 = sphi 0, %s73
      %s76 = sphi 0, %s75
      %s90 = sphi 0, %s76
      %s94 = sphi 0, %s94
      %s96 = sphi 0, %s94
      %s97 = sphi 0, %s96
      %s111 = sphi 0, %s97
      %s117 = sphi 0, %s119
      %s120 = sphi 0, %s117
      %s121 = sphi 0, %s120
      %s137 = sphi 0, %s121
    $region4: #{elcs_forward.13} parent=1 // loop_header_branch
      %16 = sbr.rel (%p14) target = $region8
    $region5: #{elcs_forward.13} parent=1 // loop_body
      %s18 = ssub.s32 %s13, 1
      %s19 = ssub.s32 %s13, 2
      %s20 = sadd.s32 %s13, 1
      %s21 = ssub.s32 %s13, %s20
      %p22 = scmp.eq.s32.totalorder %s21, 0
      %s24 = sadd.s32 %s23, 1
      %s25 = scalar_select %p22, %s23, %s24
      %p28 = pneg %p22
      %p29 = scmp.eq.s32.totalorder %s13, 3
      %p30 = por %p28, %p29
      %p31 = scmp.ne.s32.totalorder %s23, %s26
      %p32 = scmp.eq.s32.totalorder %s13, 0
      %p33 = por %p31, %p32
      %p34 = scmp.ne.s32.totalorder %s23, %s26
      %p35 = scmp.eq.s32.totalorder %s18, 3
      %p36 = por %p34, %p35
      %p37 = scmp.ne.s32.totalorder %s26, %s27
      %p38 = scmp.eq.s32.totalorder %s18, 0
      %p39 = por %p37, %p38
      %p40 = scmp.ne.s32.totalorder %s26, %s27
      %p41 = scmp.eq.s32.totalorder %s19, 3
      %p42 = por %p40, %p41
      %p44 = scmp.ne.s32.totalorder %s27, %s43
      %p45 = scmp.eq.s32.totalorder %s19, 0
      %p46 = por %p44, %p45
      %s47 = ssub.s32 %s13, %s20
      %p48 = scmp.eq.s32.totalorder %s47, 0
      %s50 = sadd.s32 %s49, 1
      %s51 = scalar_select %p48, %s49, %s50
      %p54 = pneg %p48
      %p55 = scmp.eq.s32.totalorder %s13, 3
      %p56 = por %p54, %p55
      %p57 = scmp.ne.s32.totalorder %s49, %s52
      %p58 = scmp.eq.s32.totalorder %s13, 0
      %p59 = por %p57, %p58
      %p60 = scmp.ne.s32.totalorder %s49, %s52
      %p61 = scmp.eq.s32.totalorder %s18, 3
      %p62 = por %p60, %p61
      %p63 = scmp.ne.s32.totalorder %s52, %s53
      %p64 = scmp.eq.s32.totalorder %s18, 0
      %p65 = por %p63, %p64
      %p66 = scmp.ne.s32.totalorder %s52, %s53
      %p67 = scmp.eq.s32.totalorder %s19, 3
      %p68 = por %p66, %p67
      %p70 = scmp.ne.s32.totalorder %s53, %s69
      %p71 = scmp.eq.s32.totalorder %s19, 0
      %p72 = por %p70, %p71
      %s74 = sadd.s32 %s73, 1
      %p77 = scmp.eq.s32.totalorder %s13, 3
      %p78 = scmp.ne.s32.totalorder %s73, %s75
      %p79 = scmp.eq.s32.totalorder %s13, 0
      %p80 = por %p78, %p79
      %p81 = scmp.ne.s32.totalorder %s73, %s75
      %p82 = scmp.eq.s32.totalorder %s18, 3
      %p83 = por %p81, %p82
      %p84 = scmp.ne.s32.totalorder %s75, %s76
      %p85 = scmp.eq.s32.totalorder %s18, 0
      %p86 = por %p84, %p85
      %p87 = scmp.ne.s32.totalorder %s75, %s76
      %p88 = scmp.eq.s32.totalorder %s19, 3
      %p89 = por %p87, %p88
      %p91 = scmp.ne.s32.totalorder %s76, %s90
      %p92 = scmp.eq.s32.totalorder %s19, 0
      %p93 = por %p91, %p92
      %s95 = sadd.s32 %s94, 1
      %p98 = scmp.eq.s32.totalorder %s13, 3
      %p99 = scmp.ne.s32.totalorder %s94, %s96
      %p100 = scmp.eq.s32.totalorder %s13, 0
      %p101 = por %p99, %p100
      %p102 = scmp.ne.s32.totalorder %s94, %s96
      %p103 = scmp.eq.s32.totalorder %s18, 3
      %p104 = por %p102, %p103
      %p105 = scmp.ne.s32.totalorder %s96, %s97
      %p106 = scmp.eq.s32.totalorder %s18, 0
      %p107 = por %p105, %p106
      %p108 = scmp.ne.s32.totalorder %s96, %s97
      %p109 = scmp.eq.s32.totalorder %s19, 3
      %p110 = por %p108, %p109
      %p112 = scmp.ne.s32.totalorder %s97, %s111
      %p113 = scmp.eq.s32.totalorder %s19, 0
      %p114 = por %p112, %p113
      %s115 = ssub.s32 %s13, %s20
      %p116 = scmp.eq.s32.totalorder %s115, 0
      %s118 = sadd.s32 %s117, 1
      %s119 = scalar_select %p116, %s117, %s118
      %p122 = pneg %p116
      %p123 = scmp.eq.s32.totalorder %s13, 3
      %p124 = por %p122, %p123
      %p125 = scmp.ne.s32.totalorder %s117, %s120
      %p126 = scmp.eq.s32.totalorder %s13, 0
      %p127 = por %p125, %p126
      %p128 = scmp.ne.s32.totalorder %s117, %s120
      %p129 = scmp.eq.s32.totalorder %s18, 3
      %p130 = por %p128, %p129
      %p131 = scmp.ne.s32.totalorder %s120, %s121
      %p132 = scmp.eq.s32.totalorder %s18, 0
      %p133 = por %p131, %p132
      %p134 = scmp.ne.s32.totalorder %s120, %s121
      %p135 = scmp.eq.s32.totalorder %s19, 3
      %p136 = por %p134, %p135
      %p138 = scmp.ne.s32.totalorder %s121, %s137
      %p139 = scmp.eq.s32.totalorder %s19, 0
      %p140 = por %p138, %p139
      %p141 = scmp.le.s32.totalorder 1, %s13
      %p142 = scmp.lt.s32.totalorder %s13, 5
      %p143 = pnand %p141, %p142
      %p144 = pneg %p143
      // Predicated region
      $region9: #{elcs_forward.13} parent=5 // pred_check
        _
      $region10: #{elcs_forward.13} parent=5 // pred_check_branch
        %146 = sbr.rel (%p143) target = $region12
      $region11: #{elcs_forward.13} parent=5 // pred_region
        %s147 = ssub.s32 %s13, 1
        // Predicated region
        $region13: #{elcs_forward.13} parent=11 // pred_check
          %p148 = pneg %p86
        $region14: #{elcs_forward.13} parent=11 // pred_check_branch
          %150 = sbr.rel (%p148) target = $region16
        $region15: #{elcs_forward.13} parent=11 // pred_region
          _
        $region16: #{elcs_forward.13} parent=11 // pred_fallthru
          _
        // Predicated region
        $region17: #{elcs_forward.13} parent=11 // pred_check
          %p151 = pneg %p107
        $region18: #{elcs_forward.13} parent=11 // pred_check_branch
          %153 = sbr.rel (%p151) target = $region20
        $region19: #{elcs_forward.13} parent=11 // pred_region
          _
        $region20: #{elcs_forward.13} parent=11 // pred_fallthru
          _
      $region12: #{elcs_forward.13} parent=5 // pred_fallthru
        _
      %p154 = scmp.lt.s32.totalorder %s13, 4
      // Predicated region
      $region21: #{elcs_forward.13} parent=5 // pred_check
        %p155 = pneg %p154
      $region22: #{elcs_forward.13} parent=5 // pred_check_branch
        %157 = sbr.rel (%p155) target = $region24
      $region23: #{elcs_forward.13} parent=5 // pred_region
        // Predicated region
        $region25: #{elcs_forward.13} parent=23 // pred_check
          %p158 = pneg %p33
        $region26: #{elcs_forward.13} parent=23 // pred_check_branch
          %160 = sbr.rel (%p158) target = $region28
        $region27: #{elcs_forward.13} parent=23 // pred_region
          %s161 = smul.u32 16, %s13
          %p162 = scmp.lt.s32.totalorder %s161, 63
          %s163 = scalar_select %p162, %s161, 63
          %s164 = smul.addr %s163, 4
          %s165 = scalar_lea.vmem %s0, %s164
          %s166 = smul.u32 16, %s13
        $region28: #{elcs_forward.13} parent=23 // pred_fallthru
          _
        // Predicated region
        $region29: #{elcs_forward.13} parent=23 // pred_check
          %p167 = pneg %p59
        $region30: #{elcs_forward.13} parent=23 // pred_check_branch
          %169 = sbr.rel (%p167) target = $region32
        $region31: #{elcs_forward.13} parent=23 // pred_region
          %s170 = smul.u32 16, %s13
          %p171 = scmp.lt.s32.totalorder %s170, 63
          %s172 = scalar_select %p171, %s170, 63
          %s173 = smul.addr %s172, 8
          %s174 = scalar_lea.vmem %s1, %s173
          %s175 = smul.u32 16, %s13
        $region32: #{elcs_forward.13} parent=23 // pred_fallthru
          _
      $region24: #{elcs_forward.13} parent=5 // pred_fallthru
        _
      %p176 = scmp.le.s32.totalorder 1, %s13
      %p177 = scmp.lt.s32.totalorder %s13, 5
      %p178 = pnand %p176, %p177
      %p179 = pneg %p178
      // Predicated region
      $region33: #{elcs_forward.13} parent=5 // pred_check
        _
      $region34: #{elcs_forward.13} parent=5 // pred_check_branch
        %181 = sbr.rel (%p178) target = $region36
      $region35: #{elcs_forward.13} parent=5 // pred_region
        %s182 = ssub.s32 %s13, 1
        %s183 = smul.u32 16, %s18
        %p184 = scmp.lt.s32.totalorder %s183, 63
        %s185 = scalar_select %p184, %s183, 63
        %s186 = smul.addr %s185, 4
        %s187 = scalar_lea.vmem %s0, %s186
        %p188 = pneg %p39
        %p189 = pneg %p36
        %s190 = smul.u32 16, %s18
        %p191 = scmp.lt.s32.totalorder %s190, 63
        %s192 = scalar_select %p191, %s190, 63
        %s193 = smul.addr %s192, 8
        %s194 = scalar_lea.vmem %s1, %s193
        %p195 = pneg %p65
        %p196 = pneg %p62
        %p197 = pneg %p86
        %p198 = pneg %p83
        %p199 = pneg %p107
        %p200 = pneg %p104
        %p201 = pneg %p133
        %p202 = pneg %p130
        %s203 = sand.u32 %s120, 1
        %s204 = scalar_lea.sflag [#allocation3], %s203
        %s205 = sand.u32 %s120, 1
        %s206 = smul.addr %s205, 128
        %s207 = scalar_lea.vmem [#allocation2], %s206
        %s208 = smul.u32 16, %s18
        %p209 = scmp.lt.s32.totalorder %s208, 63
        %s210 = scalar_select %p209, %s208, 63
        %s211 = smul.addr %s210, 4
        %s212 = scalar_lea.vmem %s0, %s211
        %s213 = smul.u32 16, %s18
        %s214 = smul.u32 16, %s18
        %p215 = scmp.lt.s32.totalorder %s214, 63
        %s216 = scalar_select %p215, %s214, 63
        %s217 = smul.addr %s216, 8
        %s218 = scalar_lea.vmem %s1, %s217
        %s219 = smul.u32 16, %s18
        %s220 = smul.u32 16, %s18
        %v222 = vld [vmem:[%s212] sm:$0xf]
        %v223 = vld [vmem:[%s212 + $0x4] sm:$0xf]
        %v224 = vld [vmem:[%s212 + $0x8] sm:$0xf]
        %v225 = vld [vmem:[%s212 + $0xc] sm:$0xf]
        %v226 = vld [vmem:[%s212 + $0x10] sm:$0xf]
        %v227 = vld [vmem:[%s212 + $0x14] sm:$0xf]
        %v228 = vld [vmem:[%s212 + $0x18] sm:$0xf]
        %v229 = vld [vmem:[%s212 + $0x1c] sm:$0xf]
        %v230 = vld [vmem:[%s212 + $0x20] sm:$0xf]
        %v231 = vld [vmem:[%s212 + $0x24] sm:$0xf]
        %v232 = vld [vmem:[%s212 + $0x28] sm:$0xf]
        %v233 = vld [vmem:[%s212 + $0x2c] sm:$0xf]
        %v234 = vld [vmem:[%s212 + $0x30] sm:$0xf]
        %v235 = vld [vmem:[%s212 + $0x34] sm:$0xf]
        %v236 = vld [vmem:[%s212 + $0x38] sm:$0xf]
        %v237 = vld [vmem:[%s212 + $0x3c] sm:$0xf]
        %v238 = vld [vmem:[%s2] sm:$0xf]
        %v239 = vld [vmem:[%s2 + $0x4] sm:$0xf]
        %v240 = vld [vmem:[%s2 + $0x8] sm:$0xf]
        %v241 = vld [vmem:[%s2 + $0xc] sm:$0xf]
        %v242 = vld [vmem:[%s2 + $0x10] sm:$0xf]
        %v243 = vld [vmem:[%s2 + $0x14] sm:$0xf]
        %v244 = vld [vmem:[%s2 + $0x18] sm:$0xf]
        %v245 = vld [vmem:[%s2 + $0x1c] sm:$0x3]
        %v246 = vld [vmem:[%s3] sm:$0x1]
        %v248 = vlaneseq
        %v249 = vshrl.u32 %v248, 7
        %v250 = vsub.s32 0, %v249
        %v251 = vrot.slane %v246, %v250
        %v269 = vunpack.c.l.b16 %v222
        %v270 = vunpack.c.l.b16 %v223
        %v271 = vunpack.c.l.b16 %v224
        %v272 = vunpack.c.l.b16 %v225
        %v273 = vunpack.c.l.b16 %v226
        %v274 = vunpack.c.l.b16 %v227
        %v275 = vunpack.c.l.b16 %v228
        %v276 = vunpack.c.l.b16 %v229
        %v277 = vunpack.c.l.b16 %v230
        %v278 = vunpack.c.l.b16 %v231
        %v279 = vunpack.c.l.b16 %v232
        %v280 = vunpack.c.l.b16 %v233
        %v281 = vunpack.c.l.b16 %v234
        %v282 = vunpack.c.l.b16 %v235
        %v283 = vunpack.c.l.b16 %v236
        %v284 = vunpack.c.l.b16 %v237
        %v285 = vpack.c.b16 %v270, %v269
        %v286 = vpack.c.b16 %v272, %v271
        %v287 = vpack.c.b16 %v274, %v273
        %v288 = vpack.c.b16 %v276, %v275
        %v289 = vpack.c.b16 %v278, %v277
        %v290 = vpack.c.b16 %v280, %v279
        %v291 = vpack.c.b16 %v282, %v281
        %v292 = vpack.c.b16 %v284, %v283
        %v301 = vunpack.c.l.b16 %v238
        %v302 = vunpack.c.l.b16 %v239
        %v303 = vunpack.c.l.b16 %v240
        %v304 = vunpack.c.l.b16 %v241
        %v305 = vunpack.c.l.b16 %v242
        %v306 = vunpack.c.l.b16 %v243
        %v307 = vunpack.c.l.b16 %v244
        %v308 = vunpack.c.l.b16 %v245
        %v309 = vpack.c.b16 %v302, %v301
        %v310 = vpack.c.b16 %v304, %v303
        %v311 = vpack.c.b16 %v306, %v305
        %v312 = vpack.c.b16 %v308, %v307
        %vm316 = vcmask 490496
        %v318 = vsel %vm316, %v285, 0
        %v321 = vsel %vm316, %v286, 0
        %v324 = vsel %vm316, %v287, 0
        %v327 = vsel %vm316, %v288, 0
        %v330 = vsel %vm316, %v289, 0
        %v333 = vsel %vm316, %v290, 0
        %v336 = vsel %vm316, %v291, 0
        %v339 = vsel %vm316, %v292, 0
        %vm341 = vcmask 1045504
        %v343 = vsel %vm341, %v312, 0
        %345 = vmatprep.subr.bf16.mxu0 0
        %346 = vmatpush1.bf16.msra.mxu0 %v309
        %347 = vmatprep.subr.bf16.mxu0 0
        %348 = vmatpush1.bf16.msra.mxu0 %v310
        %349 = vmatprep.subr.bf16.mxu0 0
        %350 = vmatpush1.bf16.msra.mxu0 %v311
        %351 = vmatprep.subr.bf16.mxu0 0
        %352 = vmatpush1.bf16.msra.mxu0 %v343
        %353 = vmatprep.subr.bf16.mxu0 0
        %354 = vmatpush1.bf16.msra.mxu0 0
        %355 = vmatprep.subr.bf16.mxu0 0
        %356 = vmatpush1.bf16.msra.mxu0 0
        %357 = vmatprep.subr.bf16.mxu0 0
        %358 = vmatpush1.bf16.msra.mxu0 0
        %359 = vmatprep.subr.bf16.mxu0 0
        %360 = vmatpush1.bf16.msra.mxu0 0
        %361 = vmatprep.subr.bf16.mxu0 0
        %362 = vmatpush1.bf16.msra.mxu0 0
        %363 = vmatprep.subr.bf16.mxu0 0
        %364 = vmatpush1.bf16.msra.mxu0 0
        %365 = vmatprep.subr.bf16.mxu0 0
        %366 = vmatpush1.bf16.msra.mxu0 0
        %367 = vmatprep.subr.bf16.mxu0 0
        %368 = vmatpush1.bf16.msra.mxu0 0
        %369 = vmatprep.subr.bf16.mxu0 0
        %370 = vmatpush1.bf16.msra.mxu0 0
        %371 = vmatprep.subr.bf16.mxu0 0
        %372 = vmatpush1.bf16.msra.mxu0 0
        %373 = vmatprep.subr.bf16.mxu0 0
        %374 = vmatpush1.bf16.msra.mxu0 0
        %375 = vmatprep.subr.bf16.mxu0 0
        %376 = vmatpush1.bf16.msra.mxu0 0
        %377 = vmatprep.mubr.bf16.mxu0 0
        %378 = vmatmul.mubr.bf16.gmra.mrb[0].mxu0 %v318
        %v379 = vpop.f32.mrb[0].mxu0
        %v380 = vadd.f32 %v251, %v379
        %v381 = vpop.f32.mrb[0].mxu0
        %v382 = vpop.f32.mrb[0].mxu0
        %v383 = vadd.f32 %v251, %v382
        %v384 = vpop.f32.mrb[0].mxu0
        %385 = vmatprep.mubr.bf16.mxu0 0
        %386 = vmatmul.mubr.bf16.gmra.mrb[0].mxu0 %v321
        %v387 = vpop.f32.mrb[0].mxu0
        %v388 = vadd.f32 %v251, %v387
        %v389 = vpop.f32.mrb[0].mxu0
        %v390 = vpop.f32.mrb[0].mxu0
        %v391 = vadd.f32 %v251, %v390
        %v392 = vpop.f32.mrb[0].mxu0
        %393 = vmatprep.mubr.bf16.mxu0 0
        %394 = vmatmul.mubr.bf16.gmra.mrb[0].mxu0 %v324
        %v395 = vpop.f32.mrb[0].mxu0
        %v396 = vadd.f32 %v251, %v395
        %v397 = vpop.f32.mrb[0].mxu0
        %v398 = vpop.f32.mrb[0].mxu0
        %v399 = vadd.f32 %v251, %v398
        %v400 = vpop.f32.mrb[0].mxu0
        %401 = vmatprep.mubr.bf16.mxu0 0
        %402 = vmatmul.mubr.bf16.gmra.mrb[0].mxu0 %v327
        %v403 = vpop.f32.mrb[0].mxu0
        %v404 = vadd.f32 %v251, %v403
        %v405 = vpop.f32.mrb[0].mxu0
        %v406 = vpop.f32.mrb[0].mxu0
        %v407 = vadd.f32 %v251, %v406
        %v408 = vpop.f32.mrb[0].mxu0
        %409 = vmatprep.mubr.bf16.mxu0 0
        %410 = vmatmul.mubr.bf16.gmra.mrb[0].mxu0 %v330
        %v411 = vpop.f32.mrb[0].mxu0
        %v412 = vadd.f32 %v251, %v411
        %v413 = vpop.f32.mrb[0].mxu0
        %v414 = vpop.f32.mrb[0].mxu0
        %v415 = vadd.f32 %v251, %v414
        %v416 = vpop.f32.mrb[0].mxu0
        %417 = vmatprep.mubr.bf16.mxu0 0
        %418 = vmatmul.mubr.bf16.gmra.mrb[0].mxu0 %v333
        %v419 = vpop.f32.mrb[0].mxu0
        %v420 = vadd.f32 %v251, %v419
        %v421 = vpop.f32.mrb[0].mxu0
        %v422 = vpop.f32.mrb[0].mxu0
        %v423 = vadd.f32 %v251, %v422
        %v424 = vpop.f32.mrb[0].mxu0
        %425 = vmatprep.mubr.bf16.mxu0 0
        %426 = vmatmul.mubr.bf16.gmra.mrb[0].mxu0 %v336
        %v427 = vpop.f32.mrb[0].mxu0
        %v428 = vadd.f32 %v251, %v427
        %v429 = vpop.f32.mrb[0].mxu0
        %v430 = vpop.f32.mrb[0].mxu0
        %v431 = vadd.f32 %v251, %v430
        %v432 = vpop.f32.mrb[0].mxu0
        %433 = vmatprep.mubr.bf16.mxu0 0
        %434 = vmatmul.mubr.bf16.gmra.mrb[0].mxu0 %v339
        %v435 = vpop.f32.mrb[0].mxu0
        %v436 = vadd.f32 %v251, %v435
        %v437 = vpop.f32.mrb[0].mxu0
        %v438 = vpop.f32.mrb[0].mxu0
        %v439 = vadd.f32 %v251, %v438
        %v440 = vpop.f32.mrb[0].mxu0
        %441 = vdwg.mxu0
        %v442 = vld [vmem:[%s218] sm:$0xff]
        %v443 = vld [vmem:[%s218 + $0x8] sm:$0xff]
        %v444 = vld [vmem:[%s218 + $0x10] sm:$0xff]
        %v445 = vld [vmem:[%s218 + $0x18] sm:$0xff]
        %v446 = vld [vmem:[%s218 + $0x20] sm:$0xff]
        %v447 = vld [vmem:[%s218 + $0x28] sm:$0xff]
        %v448 = vld [vmem:[%s218 + $0x30] sm:$0xff]
        %v449 = vld [vmem:[%s218 + $0x38] sm:$0xff]
        %v450 = vld [vmem:[%s218 + $0x40] sm:$0xff]
        %v451 = vld [vmem:[%s218 + $0x48] sm:$0xff]
        %v452 = vld [vmem:[%s218 + $0x50] sm:$0xff]
        %v453 = vld [vmem:[%s218 + $0x58] sm:$0xff]
        %v454 = vld [vmem:[%s218 + $0x60] sm:$0xff]
        %v455 = vld [vmem:[%s218 + $0x68] sm:$0xff]
        %v456 = vld [vmem:[%s218 + $0x70] sm:$0xff]
        %v457 = vld [vmem:[%s218 + $0x78] sm:$0xff]
        %v458 = vadd.f32 %v442, %v380
        %v459 = vadd.f32 %v443, %v383
        %v460 = vadd.f32 %v444, %v388
        %v461 = vadd.f32 %v445, %v391
        %v462 = vadd.f32 %v446, %v396
        %v463 = vadd.f32 %v447, %v399
        %v464 = vadd.f32 %v448, %v404
        %v465 = vadd.f32 %v449, %v407
        %v466 = vadd.f32 %v450, %v412
        %v467 = vadd.f32 %v451, %v415
        %v468 = vadd.f32 %v452, %v420
        %v469 = vadd.f32 %v453, %v423
        %v470 = vadd.f32 %v454, %v428
        %v471 = vadd.f32 %v455, %v431
        %v472 = vadd.f32 %v456, %v436
        %v473 = vadd.f32 %v457, %v439
        %474 = vst.msk [vmem:[%s207] sm:$0xff] %vm316, %v458
        %475 = vst.msk [vmem:[%s207 + $0x8] sm:$0xff] %vm316, %v459
        %476 = vst.msk [vmem:[%s207 + $0x10] sm:$0xff] %vm316, %v460
        %477 = vst.msk [vmem:[%s207 + $0x18] sm:$0xff] %vm316, %v461
        %478 = vst.msk [vmem:[%s207 + $0x20] sm:$0xff] %vm316, %v462
        %479 = vst.msk [vmem:[%s207 + $0x28] sm:$0xff] %vm316, %v463
        %480 = vst.msk [vmem:[%s207 + $0x30] sm:$0xff] %vm316, %v464
        %481 = vst.msk [vmem:[%s207 + $0x38] sm:$0xff] %vm316, %v465
        %482 = vst.msk [vmem:[%s207 + $0x40] sm:$0xff] %vm316, %v466
        %483 = vst.msk [vmem:[%s207 + $0x48] sm:$0xff] %vm316, %v467
        %484 = vst.msk [vmem:[%s207 + $0x50] sm:$0xff] %vm316, %v468
        %485 = vst.msk [vmem:[%s207 + $0x58] sm:$0xff] %vm316, %v469
        %486 = vst.msk [vmem:[%s207 + $0x60] sm:$0xff] %vm316, %v470
        %487 = vst.msk [vmem:[%s207 + $0x68] sm:$0xff] %vm316, %v471
        %488 = vst.msk [vmem:[%s207 + $0x70] sm:$0xff] %vm316, %v472
        %489 = vst.msk [vmem:[%s207 + $0x78] sm:$0xff] %vm316, %v473
        %s490 = sand.u32 %s120, 1
        %s491 = scalar_lea.sflag [#allocation3], %s490
        %s492 = sand.u32 %s120, 1
        %s493 = smul.addr %s492, 128
        %s494 = scalar_lea.vmem [#allocation2], %s493
        // Predicated region
        $region37: #{elcs_forward.13} parent=35 // pred_check
          %p495 = pneg %p130
        $region38: #{elcs_forward.13} parent=35 // pred_check_branch
          %497 = sbr.rel (%p495) target = $region40
        $region39: #{elcs_forward.13} parent=35 // pred_region
          %s498 = smul.u32 16, %s18
          %s500 = ssub.s32 2048, 2048
          %501 = vsyncadd %s491, %s500
          %s502 = smul.addr %s498, 128
          %s503 = scalar_lea.hbm %s4, %s502
          %s504 = sshll.u32 %s494, 4
          %s505 = int_to_ptr.vmem [resolvable:$true] %s504
          %510 = dma.vmem_to_hbm [thread:$0]  %s505, 2048, %s503, %s491, 128, 128, 8
        $region40: #{elcs_forward.13} parent=35 // pred_fallthru
          _
      $region36: #{elcs_forward.13} parent=5 // pred_fallthru
        _
      %p511 = scmp.le.s32.totalorder 2, %s13
      // Predicated region
      $region41: #{elcs_forward.13} parent=5 // pred_check
        %p512 = pneg %p511
      $region42: #{elcs_forward.13} parent=5 // pred_check_branch
        %514 = sbr.rel (%p512) target = $region44
      $region43: #{elcs_forward.13} parent=5 // pred_region
        %s515 = ssub.s32 %s13, 2
        // Predicated region
        $region45: #{elcs_forward.13} parent=43 // pred_check
          %p516 = pneg %p136
        $region46: #{elcs_forward.13} parent=43 // pred_check_branch
          %518 = sbr.rel (%p516) target = $region48
        $region47: #{elcs_forward.13} parent=43 // pred_region
          %s519 = sand.u32 %s121, 1
          %s520 = scalar_lea.sflag [#allocation3], %s519
          %s521 = sand.u32 %s121, 1
          %s522 = smul.addr %s521, 128
          %s523 = scalar_lea.vmem [#allocation2], %s522
          %524 = dma.done %s520, 2048
        $region48: #{elcs_forward.13} parent=43 // pred_fallthru
          _
      $region44: #{elcs_forward.13} parent=5 // pred_fallthru
        _
    $region6: #{elcs_forward.13} parent=1 // loop_footer
      %s17 = sadd.s32 1, %s13
    $region7: #{elcs_forward.13} parent=1 // loop_footer_branch
      %12 = sbr.rel target = $region3
    $region8: #{elcs_forward.13} parent=1 // loop_exit
      _
    %525 = vsyncpa [#allocation3], 1
    %s526 = scalar_lea.sflag [#allocation3], 1
    %527 = vsyncpa %s526, 1

// kernel: elcs_forward.10
$region0: #{elcs_forward.10}
  #allocation0 [shape = 'u32[]', space=smem, size = 0x4, offset = 0x4, fixed_abs, tag = 'smem constant byte address 0x4 - core index']
  #allocation1 [shape = 'u32[144,128]{1,0:T(1,128)}', space=vmem, size = 0x12000, scoped, tag = 'internal scratch']
  %s0 = inlined_call_operand.vmem [shape: bf16[32,16,20], index: 0, kind: input, shape index: {}]
  %s1 = inlined_call_operand.vmem [shape: bf16[32,16,20], index: 1, kind: input, shape index: {}]
  %s2 = inlined_call_operand.vmem [shape: bf16[32,16,20], index: 2, kind: input, shape index: {}]
  %s3 = inlined_call_operand.vmem [shape: bf16[32,16,20], index: 3, kind: output, shape index: {}]
  %s4 = sld [smem:[#allocation0]]
  $region45: #{elcs_forward.10} parent=0
    _
  %s6 = ssub.s32 1, %s4
  %s7 = scalar_select 0, %s6, %s4
  loop: start=0, step=1, limit=4
  $region2: #{elcs_forward.10} parent=0 // loop_pre_header
    _
  $region3: #{elcs_forward.10} parent=0 // loop_header
    %s9 = sphi 0, %s13
    %p10 = scmp.ge.s32.totalorder %s9, 4
    %s19 = sphi 0, %s21
    %s22 = sphi 0, %s19
    %s23 = sphi 0, %s22
    %s39 = sphi 0, %s23
    %s45 = sphi 0, %s47
    %s48 = sphi 0, %s45
    %s49 = sphi 0, %s48
    %s65 = sphi 0, %s49
    %s71 = sphi 0, %s73
    %s74 = sphi 0, %s71
    %s75 = sphi 0, %s74
    %s91 = sphi 0, %s75
    %s97 = sphi 0, %s99
    %s100 = sphi 0, %s97
    %s101 = sphi 0, %s100
    %s117 = sphi 0, %s101
  $region4: #{elcs_forward.10} parent=0 // loop_header_branch
    %12 = sbr.rel (%p10) target = $region8
  $region5: #{elcs_forward.10} parent=0 // loop_body
    %s14 = ssub.s32 %s9, 1
    %s15 = ssub.s32 %s9, 2
    %s16 = sadd.s32 %s9, 1
    %s17 = ssub.s32 %s9, %s16
    %p18 = scmp.eq.s32.totalorder %s17, 0
    %s20 = sadd.s32 %s19, 1
    %s21 = scalar_select %p18, %s19, %s20
    %p24 = pneg %p18
    %p25 = scmp.eq.s32.totalorder %s9, 1
    %p26 = por %p24, %p25
    %p27 = scmp.ne.s32.totalorder %s19, %s22
    %p28 = scmp.eq.s32.totalorder %s9, 0
    %p29 = por %p27, %p28
    %p30 = scmp.ne.s32.totalorder %s19, %s22
    %p31 = scmp.eq.s32.totalorder %s14, 1
    %p32 = por %p30, %p31
    %p33 = scmp.ne.s32.totalorder %s22, %s23
    %p34 = scmp.eq.s32.totalorder %s14, 0
    %p35 = por %p33, %p34
    %p36 = scmp.ne.s32.totalorder %s22, %s23
    %p37 = scmp.eq.s32.totalorder %s15, 1
    %p38 = por %p36, %p37
    %p40 = scmp.ne.s32.totalorder %s23, %s39
    %p41 = scmp.eq.s32.totalorder %s15, 0
    %p42 = por %p40, %p41
    %s43 = ssub.s32 %s9, %s16
    %p44 = scmp.eq.s32.totalorder %s43, 0
    %s46 = sadd.s32 %s45, 1
    %s47 = scalar_select %p44, %s45, %s46
    %p50 = pneg %p44
    %p51 = scmp.eq.s32.totalorder %s9, 1
    %p52 = por %p50, %p51
    %p53 = scmp.ne.s32.totalorder %s45, %s48
    %p54 = scmp.eq.s32.totalorder %s9, 0
    %p55 = por %p53, %p54
    %p56 = scmp.ne.s32.totalorder %s45, %s48
    %p57 = scmp.eq.s32.totalorder %s14, 1
    %p58 = por %p56, %p57
    %p59 = scmp.ne.s32.totalorder %s48, %s49
    %p60 = scmp.eq.s32.totalorder %s14, 0
    %p61 = por %p59, %p60
    %p62 = scmp.ne.s32.totalorder %s48, %s49
    %p63 = scmp.eq.s32.totalorder %s15, 1
    %p64 = por %p62, %p63
    %p66 = scmp.ne.s32.totalorder %s49, %s65
    %p67 = scmp.eq.s32.totalorder %s15, 0
    %p68 = por %p66, %p67
    %s69 = ssub.s32 %s9, %s16
    %p70 = scmp.eq.s32.totalorder %s69, 0
    %s72 = sadd.s32 %s71, 1
    %s73 = scalar_select %p70, %s71, %s72
    %p76 = pneg %p70
    %p77 = scmp.eq.s32.totalorder %s9, 1
    %p78 = por %p76, %p77
    %p79 = scmp.ne.s32.totalorder %s71, %s74
    %p80 = scmp.eq.s32.totalorder %s9, 0
    %p81 = por %p79, %p80
    %p82 = scmp.ne.s32.totalorder %s71, %s74
    %p83 = scmp.eq.s32.totalorder %s14, 1
    %p84 = por %p82, %p83
    %p85 = scmp.ne.s32.totalorder %s74, %s75
    %p86 = scmp.eq.s32.totalorder %s14, 0
    %p87 = por %p85, %p86
    %p88 = scmp.ne.s32.totalorder %s74, %s75
    %p89 = scmp.eq.s32.totalorder %s15, 1
    %p90 = por %p88, %p89
    %p92 = scmp.ne.s32.totalorder %s75, %s91
    %p93 = scmp.eq.s32.totalorder %s15, 0
    %p94 = por %p92, %p93
    %s95 = ssub.s32 %s9, %s16
    %p96 = scmp.eq.s32.totalorder %s95, 0
    %s98 = sadd.s32 %s97, 1
    %s99 = scalar_select %p96, %s97, %s98
    %p102 = pneg %p96
    %p103 = scmp.eq.s32.totalorder %s9, 1
    %p104 = por %p102, %p103
    %p105 = scmp.ne.s32.totalorder %s97, %s100
    %p106 = scmp.eq.s32.totalorder %s9, 0
    %p107 = por %p105, %p106
    %p108 = scmp.ne.s32.totalorder %s97, %s100
    %p109 = scmp.eq.s32.totalorder %s14, 1
    %p110 = por %p108, %p109
    %p111 = scmp.ne.s32.totalorder %s100, %s101
    %p112 = scmp.eq.s32.totalorder %s14, 0
    %p113 = por %p111, %p112
    %p114 = scmp.ne.s32.totalorder %s100, %s101
    %p115 = scmp.eq.s32.totalorder %s15, 1
    %p116 = por %p114, %p115
    %p118 = scmp.ne.s32.totalorder %s101, %s117
    %p119 = scmp.eq.s32.totalorder %s15, 0
    %p120 = por %p118, %p119
    %p121 = scmp.le.s32.totalorder 1, %s9
    %p122 = scmp.lt.s32.totalorder %s9, 3
    %p123 = pnand %p121, %p122
    %p124 = pneg %p123
    // Predicated region
    $region9: #{elcs_forward.10} parent=5 // pred_check
      _
    $region10: #{elcs_forward.10} parent=5 // pred_check_branch
      %126 = sbr.rel (%p123) target = $region12
    $region11: #{elcs_forward.10} parent=5 // pred_region
      %s127 = ssub.s32 %s9, 1
    $region12: #{elcs_forward.10} parent=5 // pred_fallthru
      _
    %p128 = scmp.lt.s32.totalorder %s9, 2
    // Predicated region
    $region13: #{elcs_forward.10} parent=5 // pred_check
      %p129 = pneg %p128
    $region14: #{elcs_forward.10} parent=5 // pred_check_branch
      %131 = sbr.rel (%p129) target = $region16
    $region15: #{elcs_forward.10} parent=5 // pred_region
      // Predicated region
      $region17: #{elcs_forward.10} parent=15 // pred_check
        %p132 = pneg %p29
      $region18: #{elcs_forward.10} parent=15 // pred_check_branch
        %134 = sbr.rel (%p132) target = $region20
      $region19: #{elcs_forward.10} parent=15 // pred_region
        %s135 = smul.u32 16, %s9
        %p136 = scmp.lt.s32.totalorder %s135, 31
        %s137 = scalar_select %p136, %s135, 31
        %s138 = smul.addr %s137, 2
        %s139 = smul.addr %s138, 4
        %s140 = scalar_lea.vmem %s0, %s139
        %s141 = smul.u32 16, %s9
      $region20: #{elcs_forward.10} parent=15 // pred_fallthru
        _
      // Predicated region
      $region21: #{elcs_forward.10} parent=15 // pred_check
        %p142 = pneg %p55
      $region22: #{elcs_forward.10} parent=15 // pred_check_branch
        %144 = sbr.rel (%p142) target = $region24
      $region23: #{elcs_forward.10} parent=15 // pred_region
        %s145 = smul.u32 16, %s9
        %p146 = scmp.lt.s32.totalorder %s145, 31
        %s147 = scalar_select %p146, %s145, 31
        %s148 = smul.addr %s147, 2
        %s149 = smul.addr %s148, 4
        %s150 = scalar_lea.vmem %s1, %s149
        %s151 = smul.u32 16, %s9
      $region24: #{elcs_forward.10} parent=15 // pred_fallthru
        _
      // Predicated region
      $region25: #{elcs_forward.10} parent=15 // pred_check
        %p152 = pneg %p81
      $region26: #{elcs_forward.10} parent=15 // pred_check_branch
        %154 = sbr.rel (%p152) target = $region28
      $region27: #{elcs_forward.10} parent=15 // pred_region
        %s155 = smul.u32 16, %s9
        %p156 = scmp.lt.s32.totalorder %s155, 31
        %s157 = scalar_select %p156, %s155, 31
        %s158 = smul.addr %s157, 2
        %s159 = smul.addr %s158, 4
        %s160 = scalar_lea.vmem %s2, %s159
        %s161 = smul.u32 16, %s9
      $region28: #{elcs_forward.10} parent=15 // pred_fallthru
        _
    $region16: #{elcs_forward.10} parent=5 // pred_fallthru
      _
    %p162 = scmp.le.s32.totalorder 1, %s9
    %p163 = scmp.lt.s32.totalorder %s9, 3
    %p164 = pnand %p162, %p163
    %p165 = pneg %p164
    // Predicated region
    $region29: #{elcs_forward.10} parent=5 // pred_check
      _
    $region30: #{elcs_forward.10} parent=5 // pred_check_branch
      %167 = sbr.rel (%p164) target = $region32
    $region31: #{elcs_forward.10} parent=5 // pred_region
      %s168 = ssub.s32 %s9, 1
      %s169 = smul.u32 16, %s14
      %p170 = scmp.lt.s32.totalorder %s169, 31
      %s171 = scalar_select %p170, %s169, 31
      %s172 = smul.addr %s171, 2
      %s173 = smul.addr %s172, 4
      %s174 = scalar_lea.vmem %s0, %s173
      %p175 = pneg %p35
      %p176 = pneg %p32
      %s177 = smul.u32 16, %s14
      %p178 = scmp.lt.s32.totalorder %s177, 31
      %s179 = scalar_select %p178, %s177, 31
      %s180 = smul.addr %s179, 2
      %s181 = smul.addr %s180, 4
      %s182 = scalar_lea.vmem %s1, %s181
      %p183 = pneg %p61
      %p184 = pneg %p58
      %s185 = smul.u32 16, %s14
      %p186 = scmp.lt.s32.totalorder %s185, 31
      %s187 = scalar_select %p186, %s185, 31
      %s188 = smul.addr %s187, 2
      %s189 = smul.addr %s188, 4
      %s190 = scalar_lea.vmem %s2, %s189
      %p191 = pneg %p87
      %p192 = pneg %p84
      %p193 = pneg %p113
      %p194 = pneg %p110
      %s195 = smul.u32 16, %s14
      %p196 = scmp.lt.s32.totalorder %s195, 31
      %s197 = scalar_select %p196, %s195, 31
      %s198 = smul.addr %s197, 2
      %s199 = smul.addr %s198, 4
      %s200 = scalar_lea.vmem %s3, %s199
      %s201 = smul.u32 16, %s14
      %p202 = scmp.lt.s32.totalorder %s201, 31
      %s203 = scalar_select %p202, %s201, 31
      %s204 = smul.addr %s203, 2
      %s205 = smul.addr %s204, 4
      %s206 = scalar_lea.vmem %s0, %s205
      %s207 = smul.u32 16, %s14
      %s208 = smul.u32 16, %s14
      %p209 = scmp.lt.s32.totalorder %s208, 31
      %s210 = scalar_select %p209, %s208, 31
      %s211 = smul.addr %s210, 2
      %s212 = smul.addr %s211, 4
      %s213 = scalar_lea.vmem %s1, %s212
      %s214 = smul.u32 16, %s14
      %s215 = smul.u32 16, %s14
      %p216 = scmp.lt.s32.totalorder %s215, 31
      %s217 = scalar_select %p216, %s215, 31
      %s218 = smul.addr %s217, 2
      %s219 = smul.addr %s218, 4
      %s220 = scalar_lea.vmem %s2, %s219
      %s221 = smul.u32 16, %s14
      %s222 = smul.u32 16, %s14
      %p223 = scmp.lt.s32.totalorder %s222, 31
      %s224 = scalar_select %p223, %s222, 31
      %s225 = smul.addr %s224, 2
      %s226 = smul.addr %s225, 4
      %s227 = scalar_lea.vmem %s3, %s226
      %s228 = smul.u32 16, %s14
      %v230 = vld [vmem:[%s206] sm:$0xf]
      %v231 = vld [vmem:[%s206 + $0x4] sm:$0xf]
      %v232 = vld [vmem:[%s206 + $0x8] sm:$0xf]
      %v233 = vld [vmem:[%s206 + $0xc] sm:$0xf]
      %v234 = vld [vmem:[%s206 + $0x10] sm:$0xf]
      %v235 = vld [vmem:[%s206 + $0x14] sm:$0xf]
      %v236 = vld [vmem:[%s206 + $0x18] sm:$0xf]
      %v237 = vld [vmem:[%s206 + $0x1c] sm:$0xf]
      %v238 = vld [vmem:[%s206 + $0x20] sm:$0xf]
      %v239 = vld [vmem:[%s206 + $0x24] sm:$0xf]
      %v240 = vld [vmem:[%s206 + $0x28] sm:$0xf]
      %v241 = vld [vmem:[%s206 + $0x2c] sm:$0xf]
      %v242 = vld [vmem:[%s206 + $0x30] sm:$0xf]
      %v243 = vld [vmem:[%s206 + $0x34] sm:$0xf]
      %v244 = vld [vmem:[%s206 + $0x38] sm:$0xf]
      %v245 = vld [vmem:[%s206 + $0x3c] sm:$0xf]
      %v246 = vld [vmem:[%s206 + $0x40] sm:$0xf]
      %v247 = vld [vmem:[%s206 + $0x44] sm:$0xf]
      %v248 = vld [vmem:[%s206 + $0x48] sm:$0xf]
      %v249 = vld [vmem:[%s206 + $0x4c] sm:$0xf]
      %v250 = vld [vmem:[%s206 + $0x50] sm:$0xf]
      %v251 = vld [vmem:[%s206 + $0x54] sm:$0xf]
      %v252 = vld [vmem:[%s206 + $0x58] sm:$0xf]
      %v253 = vld [vmem:[%s206 + $0x5c] sm:$0xf]
      %v254 = vld [vmem:[%s206 + $0x60] sm:$0xf]
      %v255 = vld [vmem:[%s206 + $0x64] sm:$0xf]
      %v256 = vld [vmem:[%s206 + $0x68] sm:$0xf]
      %v257 = vld [vmem:[%s206 + $0x6c] sm:$0xf]
      %v258 = vld [vmem:[%s206 + $0x70] sm:$0xf]
      %v259 = vld [vmem:[%s206 + $0x74] sm:$0xf]
      %v260 = vld [vmem:[%s206 + $0x78] sm:$0xf]
      %v261 = vld [vmem:[%s206 + $0x7c] sm:$0xf]
      %v262 = vld [vmem:[%s213] sm:$0xf]
      %v263 = vld [vmem:[%s213 + $0x4] sm:$0xf]
      %v264 = vld [vmem:[%s213 + $0x8] sm:$0xf]
      %v265 = vld [vmem:[%s213 + $0xc] sm:$0xf]
      %v266 = vld [vmem:[%s213 + $0x10] sm:$0xf]
      %v267 = vld [vmem:[%s213 + $0x14] sm:$0xf]
      %v268 = vld [vmem:[%s213 + $0x18] sm:$0xf]
      %v269 = vld [vmem:[%s213 + $0x1c] sm:$0xf]
      %v270 = vld [vmem:[%s213 + $0x20] sm:$0xf]
      %v271 = vld [vmem:[%s213 + $0x24] sm:$0xf]
      %v272 = vld [vmem:[%s213 + $0x28] sm:$0xf]
      %v273 = vld [vmem:[%s213 + $0x2c] sm:$0xf]
      %v274 = vld [vmem:[%s213 + $0x30] sm:$0xf]
      %v275 = vld [vmem:[%s213 + $0x34] sm:$0xf]
      %v276 = vld [vmem:[%s213 + $0x38] sm:$0xf]
      %v277 = vld [vmem:[%s213 + $0x3c] sm:$0xf]
      %v278 = vld [vmem:[%s213 + $0x40] sm:$0xf]
      %v279 = vld [vmem:[%s213 + $0x44] sm:$0xf]
      %v280 = vld [vmem:[%s213 + $0x48] sm:$0xf]
      %v281 = vld [vmem:[%s213 + $0x4c] sm:$0xf]
      %v282 = vld [vmem:[%s213 + $0x50] sm:$0xf]
      %v283 = vld [vmem:[%s213 + $0x54] sm:$0xf]
      %v284 = vld [vmem:[%s213 + $0x58] sm:$0xf]
      %v285 = vld [vmem:[%s213 + $0x5c] sm:$0xf]
      %v286 = vld [vmem:[%s213 + $0x60] sm:$0xf]
      %v287 = vld [vmem:[%s213 + $0x64] sm:$0xf]
      %v288 = vld [vmem:[%s213 + $0x68] sm:$0xf]
      %v289 = vld [vmem:[%s213 + $0x6c] sm:$0xf]
      %v290 = vld [vmem:[%s213 + $0x70] sm:$0xf]
      %v291 = vld [vmem:[%s213 + $0x74] sm:$0xf]
      %v292 = vld [vmem:[%s213 + $0x78] sm:$0xf]
      %v293 = vld [vmem:[%s213 + $0x7c] sm:$0xf]
      %v296 = vunpack.c.l.b16 %v230
      %v297 = vunpack.c.l.b16 %v231
      %v298 = vpack.c.b16 %v297, %v296
      %v301 = vunpack.c.l.b16 %v262
      %v302 = vunpack.c.l.b16 %v263
      %v303 = vpack.c.b16 %v302, %v301
      %vm304 = vcmask 162816
      %v306 = vsel %vm304, %v298, 0
      %v309 = vsel %vm304, %v303, 0
      %311 = vmatprep.subr.bf16.mxu0 0
      %312 = vmatpush1.bf16.xpose.msra.mxu0 %v309
      %313 = vmatprep.subr.bf16.mxu0 0
      %314 = vmatpush1.bf16.xpose.msra.mxu0 0
      %315 = vmatprep.subr.bf16.mxu0 0
      %316 = vmatpush1.bf16.xpose.msra.mxu0 0
      %317 = vmatprep.subr.bf16.mxu0 0
      %318 = vmatpush1.bf16.xpose.msra.mxu0 0
      %319 = vmatprep.subr.bf16.mxu0 0
      %320 = vmatpush1.bf16.xpose.msra.mxu0 0
      %321 = vmatprep.subr.bf16.mxu0 0
      %322 = vmatpush1.bf16.xpose.msra.mxu0 0
      %323 = vmatprep.subr.bf16.mxu0 0
      %324 = vmatpush1.bf16.xpose.msra.mxu0 0
      %325 = vmatprep.subr.bf16.mxu0 0
      %326 = vmatpush1.bf16.xpose.msra.mxu0 0
      %327 = vmatprep.subr.bf16.mxu0 0
      %328 = vmatpush1.bf16.xpose.msra.mxu0 0
      %329 = vmatprep.subr.bf16.mxu0 0
      %330 = vmatpush1.bf16.xpose.msra.mxu0 0
      %331 = vmatprep.subr.bf16.mxu0 0
      %332 = vmatpush1.bf16.xpose.msra.mxu0 0
      %333 = vmatprep.subr.bf16.mxu0 0
      %334 = vmatpush1.bf16.xpose.msra.mxu0 0
      %335 = vmatprep.subr.bf16.mxu0 0
      %336 = vmatpush1.bf16.xpose.msra.mxu0 0
      %337 = vmatprep.subr.bf16.mxu0 0
      %338 = vmatpush1.bf16.xpose.msra.mxu0 0
      %339 = vmatprep.subr.bf16.mxu0 0
      %340 = vmatpush1.bf16.xpose.msra.mxu0 0
      %341 = vmatprep.subr.bf16.mxu0 0
      %342 = vmatpush1.bf16.xpose.msra.mxu0 0
      %343 = vmatprep.mubr.bf16.mxu0 0
      %344 = vmatmul.mubr.bf16.gmra.mrb[0].mxu0 %v306
      %v345 = vpop.f32.mrb[0].mxu0
      %v346 = vadd.f32 0.0, %v345
      %v347 = vpop.f32.mrb[0].mxu0
      %v348 = vpop.f32.mrb[0].mxu0
      %v349 = vadd.f32 0.0, %v348
      %v350 = vpop.f32.mrb[0].mxu0
      %351 = vdwg.mxu0
      %v354 = vunpack.c.l.b16 %v232
      %v355 = vunpack.c.l.b16 %v233
      %v356 = vpack.c.b16 %v355, %v354
      %v359 = vunpack.c.l.b16 %v264
      %v360 = vunpack.c.l.b16 %v265
      %v361 = vpack.c.b16 %v360, %v359
      %v363 = vsel %vm304, %v356, 0
      %v366 = vsel %vm304, %v361, 0
      %368 = vmatprep.subr.bf16.mxu0 0
      %369 = vmatpush1.bf16.xpose.msra.mxu0 %v366
      %370 = vmatprep.subr.bf16.mxu0 0
      %371 = vmatpush1.bf16.xpose.msra.mxu0 0
      %372 = vmatprep.subr.bf16.mxu0 0
      %373 = vmatpush1.bf16.xpose.msra.mxu0 0
      %374 = vmatprep.subr.bf16.mxu0 0
      %375 = vmatpush1.bf16.xpose.msra.mxu0 0
      %376 = vmatprep.subr.bf16.mxu0 0
      %377 = vmatpush1.bf16.xpose.msra.mxu0 0
      %378 = vmatprep.subr.bf16.mxu0 0
      %379 = vmatpush1.bf16.xpose.msra.mxu0 0
      %380 = vmatprep.subr.bf16.mxu0 0
      %381 = vmatpush1.bf16.xpose.msra.mxu0 0
      %382 = vmatprep.subr.bf16.mxu0 0
      %383 = vmatpush1.bf16.xpose.msra.mxu0 0
      %384 = vmatprep.subr.bf16.mxu0 0
      %385 = vmatpush1.bf16.xpose.msra.mxu0 0
      %386 = vmatprep.subr.bf16.mxu0 0
      %387 = vmatpush1.bf16.xpose.msra.mxu0 0
      %388 = vmatprep.subr.bf16.mxu0 0
      %389 = vmatpush1.bf16.xpose.msra.mxu0 0
      %390 = vmatprep.subr.bf16.mxu0 0
      %391 = vmatpush1.bf16.xpose.msra.mxu0 0
      %392 = vmatprep.subr.bf16.mxu0 0
      %393 = vmatpush1.bf16.xpose.msra.mxu0 0
      %394 = vmatprep.subr.bf16.mxu0 0
      %395 = vmatpush1.bf16.xpose.msra.mxu0 0
      %396 = vmatprep.subr.bf16.mxu0 0
      %397 = vmatpush1.bf16.xpose.msra.mxu0 0
      %398 = vmatprep.subr.bf16.mxu0 0
      %399 = vmatpush1.bf16.xpose.msra.mxu0 0
      %400 = vmatprep.mubr.bf16.mxu0 0
      %401 = vmatmul.mubr.bf16.gmra.mrb[0].mxu0 %v363
      %v402 = vpop.f32.mrb[0].mxu0
      %v403 = vadd.f32 0.0, %v402
      %v404 = vpop.f32.mrb[0].mxu0
      %v405 = vpop.f32.mrb[0].mxu0
      %v406 = vadd.f32 0.0, %v405
      %v407 = vpop.f32.mrb[0].mxu0
      %408 = vdwg.mxu0
      %v411 = vunpack.c.l.b16 %v234
      %v412 = vunpack.c.l.b16 %v235
      %v413 = vpack.c.b16 %v412, %v411
      %v416 = vunpack.c.l.b16 %v266
      %v417 = vunpack.c.l.b16 %v267
      %v418 = vpack.c.b16 %v417, %v416
      %v420 = vsel %vm304, %v413, 0
      %v423 = vsel %vm304, %v418, 0
      %425 = vmatprep.subr.bf16.mxu0 0
      %426 = vmatpush1.bf16.xpose.msra.mxu0 %v423
      %427 = vmatprep.subr.bf16.mxu0 0
      %428 = vmatpush1.bf16.xpose.msra.mxu0 0
      %429 = vmatprep.subr.bf16.mxu0 0
      %430 = vmatpush1.bf16.xpose.msra.mxu0 0
      %431 = vmatprep.subr.bf16.mxu0 0
      %432 = vmatpush1.bf16.xpose.msra.mxu0 0
      %433 = vmatprep.subr.bf16.mxu0 0
      %434 = vmatpush1.bf16.xpose.msra.mxu0 0
      %435 = vmatprep.subr.bf16.mxu0 0
      %436 = vmatpush1.bf16.xpose.msra.mxu0 0
      %437 = vmatprep.subr.bf16.mxu0 0
      %438 = vmatpush1.bf16.xpose.msra.mxu0 0
      %439 = vmatprep.subr.bf16.mxu0 0
      %440 = vmatpush1.bf16.xpose.msra.mxu0 0
      %441 = vmatprep.subr.bf16.mxu0 0
      %442 = vmatpush1.bf16.xpose.msra.mxu0 0
      %443 = vmatprep.subr.bf16.mxu0 0
      %444 = vmatpush1.bf16.xpose.msra.mxu0 0
      %445 = vmatprep.subr.bf16.mxu0 0
      %446 = vmatpush1.bf16.xpose.msra.mxu0 0
      %447 = vmatprep.subr.bf16.mxu0 0
      %448 = vmatpush1.bf16.xpose.msra.mxu0 0
      %449 = vmatprep.subr.bf16.mxu0 0
      %450 = vmatpush1.bf16.xpose.msra.mxu0 0
      %451 = vmatprep.subr.bf16.mxu0 0
      %452 = vmatpush1.bf16.xpose.msra.mxu0 0
      %453 = vmatprep.subr.bf16.mxu0 0
      %454 = vmatpush1.bf16.xpose.msra.mxu0 0
      %455 = vmatprep.subr.bf16.mxu0 0
      %456 = vmatpush1.bf16.xpose.msra.mxu0 0
      %457 = vmatprep.mubr.bf16.mxu0 0
      %458 = vmatmul.mubr.bf16.gmra.mrb[0].mxu0 %v420
      %v459 = vpop.f32.mrb[0].mxu0
      %v460 = vadd.f32 0.0, %v459
      %v461 = vpop.f32.mrb[0].mxu0
      %v462 = vpop.f32.mrb[0].mxu0
      %v463 = vadd.f32 0.0, %v462
      %v464 = vpop.f32.mrb[0].mxu0
      %465 = vdwg.mxu0
      %v468 = vunpack.c.l.b16 %v236
      %v469 = vunpack.c.l.b16 %v237
      %v470 = vpack.c.b16 %v469, %v468
      %v473 = vunpack.c.l.b16 %v268
      %v474 = vunpack.c.l.b16 %v269
      %v475 = vpack.c.b16 %v474, %v473
      %v477 = vsel %vm304, %v470, 0
      %v480 = vsel %vm304, %v475, 0
      %482 = vmatprep.subr.bf16.mxu0 0
      %483 = vmatpush1.bf16.xpose.msra.mxu0 %v480
      %484 = vmatprep.subr.bf16.mxu0 0
      %485 = vmatpush1.bf16.xpose.msra.mxu0 0
      %486 = vmatprep.subr.bf16.mxu0 0
      %487 = vmatpush1.bf16.xpose.msra.mxu0 0
      %488 = vmatprep.subr.bf16.mxu0 0
      %489 = vmatpush1.bf16.xpose.msra.mxu0 0
      %490 = vmatprep.subr.bf16.mxu0 0
      %491 = vmatpush1.bf16.xpose.msra.mxu0 0
      %492 = vmatprep.subr.bf16.mxu0 0
      %493 = vmatpush1.bf16.xpose.msra.mxu0 0
      %494 = vmatprep.subr.bf16.mxu0 0
      %495 = vmatpush1.bf16.xpose.msra.mxu0 0
      %496 = vmatprep.subr.bf16.mxu0 0
      %497 = vmatpush1.bf16.xpose.msra.mxu0 0
      %498 = vmatprep.subr.bf16.mxu0 0
      %499 = vmatpush1.bf16.xpose.msra.mxu0 0
      %500 = vmatprep.subr.bf16.mxu0 0
      %501 = vmatpush1.bf16.xpose.msra.mxu0 0
      %502 = vmatprep.subr.bf16.mxu0 0
      %503 = vmatpush1.bf16.xpose.msra.mxu0 0
      %504 = vmatprep.subr.bf16.mxu0 0
      %505 = vmatpush1.bf16.xpose.msra.mxu0 0
      %506 = vmatprep.subr.bf16.mxu0 0
      %507 = vmatpush1.bf16.xpose.msra.mxu0 0
      %508 = vmatprep.subr.bf16.mxu0 0
      %509 = vmatpush1.bf16.xpose.msra.mxu0 0
      %510 = vmatprep.subr.bf16.mxu0 0
      %511 = vmatpush1.bf16.xpose.msra.mxu0 0
      %512 = vmatprep.subr.bf16.mxu0 0
      %513 = vmatpush1.bf16.xpose.msra.mxu0 0
      %514 = vmatprep.mubr.bf16.mxu0 0
      %515 = vmatmul.mubr.bf16.gmra.mrb[0].mxu0 %v477
      %v516 = vpop.f32.mrb[0].mxu0
      %v517 = vadd.f32 0.0, %v516
      %v518 = vpop.f32.mrb[0].mxu0
      %v519 = vpop.f32.mrb[0].mxu0
      %v520 = vadd.f32 0.0, %v519
      %v521 = vpop.f32.mrb[0].mxu0
      %522 = vdwg.mxu0
      %v525 = vunpack.c.l.b16 %v238
      %v526 = vunpack.c.l.b16 %v239
      %v527 = vpack.c.b16 %v526, %v525
      %v530 = vunpack.c.l.b16 %v270
      %v531 = vunpack.c.l.b16 %v271
      %v532 = vpack.c.b16 %v531, %v530
      %v534 = vsel %vm304, %v527, 0
      %v537 = vsel %vm304, %v532, 0
      %539 = vmatprep.subr.bf16.mxu0 0
      %540 = vmatpush1.bf16.xpose.msra.mxu0 %v537
      %541 = vmatprep.subr.bf16.mxu0 0
      %542 = vmatpush1.bf16.xpose.msra.mxu0 0
      %543 = vmatprep.subr.bf16.mxu0 0
      %544 = vmatpush1.bf16.xpose.msra.mxu0 0
      %545 = vmatprep.subr.bf16.mxu0 0
      %546 = vmatpush1.bf16.xpose.msra.mxu0 0
      %547 = vmatprep.subr.bf16.mxu0 0
      %548 = vmatpush1.bf16.xpose.msra.mxu0 0
      %549 = vmatprep.subr.bf16.mxu0 0
      %550 = vmatpush1.bf16.xpose.msra.mxu0 0
      %551 = vmatprep.subr.bf16.mxu0 0
      %552 = vmatpush1.bf16.xpose.msra.mxu0 0
      %553 = vmatprep.subr.bf16.mxu0 0
      %554 = vmatpush1.bf16.xpose.msra.mxu0 0
      %555 = vmatprep.subr.bf16.mxu0 0
      %556 = vmatpush1.bf16.xpose.msra.mxu0 0
      %557 = vmatprep.subr.bf16.mxu0 0
      %558 = vmatpush1.bf16.xpose.msra.mxu0 0
      %559 = vmatprep.subr.bf16.mxu0 0
      %560 = vmatpush1.bf16.xpose.msra.mxu0 0
      %561 = vmatprep.subr.bf16.mxu0 0
      %562 = vmatpush1.bf16.xpose.msra.mxu0 0
      %563 = vmatprep.subr.bf16.mxu0 0
      %564 = vmatpush1.bf16.xpose.msra.mxu0 0
      %565 = vmatprep.subr.bf16.mxu0 0
      %566 = vmatpush1.bf16.xpose.msra.mxu0 0
      %567 = vmatprep.subr.bf16.mxu0 0
      %568 = vmatpush1.bf16.xpose.msra.mxu0 0
      %569 = vmatprep.subr.bf16.mxu0 0
      %570 = vmatpush1.bf16.xpose.msra.mxu0 0
      %571 = vmatprep.mubr.bf16.mxu0 0
      %572 = vmatmul.mubr.bf16.gmra.mrb[0].mxu0 %v534
      %v573 = vpop.f32.mrb[0].mxu0
      %v574 = vadd.f32 0.0, %v573
      %v575 = vpop.f32.mrb[0].mxu0
      %v576 = vpop.f32.mrb[0].mxu0
      %v577 = vadd.f32 0.0, %v576
      %v578 = vpop.f32.mrb[0].mxu0
      %579 = vdwg.mxu0
      %v582 = vunpack.c.l.b16 %v240
      %v583 = vunpack.c.l.b16 %v241
      %v584 = vpack.c.b16 %v583, %v582
      %v587 = vunpack.c.l.b16 %v272
      %v588 = vunpack.c.l.b16 %v273
      %v589 = vpack.c.b16 %v588, %v587
      %v591 = vsel %vm304, %v584, 0
      %v594 = vsel %vm304, %v589, 0
      %596 = vmatprep.subr.bf16.mxu0 0
      %597 = vmatpush1.bf16.xpose.msra.mxu0 %v594
      %598 = vmatprep.subr.bf16.mxu0 0
      %599 = vmatpush1.bf16.xpose.msra.mxu0 0
      %600 = vmatprep.subr.bf16.mxu0 0
      %601 = vmatpush1.bf16.xpose.msra.mxu0 0
      %602 = vmatprep.subr.bf16.mxu0 0
      %603 = vmatpush1.bf16.xpose.msra.mxu0 0
      %604 = vmatprep.subr.bf16.mxu0 0
      %605 = vmatpush1.bf16.xpose.msra.mxu0 0
      %606 = vmatprep.subr.bf16.mxu0 0
      %607 = vmatpush1.bf16.xpose.msra.mxu0 0
      %608 = vmatprep.subr.bf16.mxu0 0
      %609 = vmatpush1.bf16.xpose.msra.mxu0 0
      %610 = vmatprep.subr.bf16.mxu0 0
      %611 = vmatpush1.bf16.xpose.msra.mxu0 0
      %612 = vmatprep.subr.bf16.mxu0 0
      %613 = vmatpush1.bf16.xpose.msra.mxu0 0
      %614 = vmatprep.subr.bf16.mxu0 0
      %615 = vmatpush1.bf16.xpose.msra.mxu0 0
      %616 = vmatprep.subr.bf16.mxu0 0
      %617 = vmatpush1.bf16.xpose.msra.mxu0 0
      %618 = vmatprep.subr.bf16.mxu0 0
      %619 = vmatpush1.bf16.xpose.msra.mxu0 0
      %620 = vmatprep.subr.bf16.mxu0 0
      %621 = vmatpush1.bf16.xpose.msra.mxu0 0
      %622 = vmatprep.subr.bf16.mxu0 0
      %623 = vmatpush1.bf16.xpose.msra.mxu0 0
      %624 = vmatprep.subr.bf16.mxu0 0
      %625 = vmatpush1.bf16.xpose.msra.mxu0 0
      %626 = vmatprep.subr.bf16.mxu0 0
      %627 = vmatpush1.bf16.xpose.msra.mxu0 0
      %628 = vmatprep.mubr.bf16.mxu0 0
      %629 = vmatmul.mubr.bf16.gmra.mrb[0].mxu0 %v591
      %v630 = vpop.f32.mrb[0].mxu0
      %v631 = vadd.f32 0.0, %v630
      %v632 = vpop.f32.mrb[0].mxu0
      %v633 = vpop.f32.mrb[0].mxu0
      %v634 = vadd.f32 0.0, %v633
      %v635 = vpop.f32.mrb[0].mxu0
      %636 = vdwg.mxu0
      %v639 = vunpack.c.l.b16 %v242
      %v640 = vunpack.c.l.b16 %v243
      %v641 = vpack.c.b16 %v640, %v639
      %v644 = vunpack.c.l.b16 %v274
      %v645 = vunpack.c.l.b16 %v275
      %v646 = vpack.c.b16 %v645, %v644
      %v648 = vsel %vm304, %v641, 0
      %v651 = vsel %vm304, %v646, 0
      %653 = vmatprep.subr.bf16.mxu0 0
      %654 = vmatpush1.bf16.xpose.msra.mxu0 %v651
      %655 = vmatprep.subr.bf16.mxu0 0
      %656 = vmatpush1.bf16.xpose.msra.mxu0 0
      %657 = vmatprep.subr.bf16.mxu0 0
      %658 = vmatpush1.bf16.xpose.msra.mxu0 0
      %659 = vmatprep.subr.bf16.mxu0 0
      %660 = vmatpush1.bf16.xpose.msra.mxu0 0
      %661 = vmatprep.subr.bf16.mxu0 0
      %662 = vmatpush1.bf16.xpose.msra.mxu0 0
      %663 = vmatprep.subr.bf16.mxu0 0
      %664 = vmatpush1.bf16.xpose.msra.mxu0 0
      %665 = vmatprep.subr.bf16.mxu0 0
      %666 = vmatpush1.bf16.xpose.msra.mxu0 0
      %667 = vmatprep.subr.bf16.mxu0 0
      %668 = vmatpush1.bf16.xpose.msra.mxu0 0
      %669 = vmatprep.subr.bf16.mxu0 0
      %670 = vmatpush1.bf16.xpose.msra.mxu0 0
      %671 = vmatprep.subr.bf16.mxu0 0
      %672 = vmatpush1.bf16.xpose.msra.mxu0 0
      %673 = vmatprep.subr.bf16.mxu0 0
      %674 = vmatpush1.bf16.xpose.msra.mxu0 0
      %675 = vmatprep.subr.bf16.mxu0 0
      %676 = vmatpush1.bf16.xpose.msra.mxu0 0
      %677 = vmatprep.subr.bf16.mxu0 0
      %678 = vmatpush1.bf16.xpose.msra.mxu0 0
      %679 = vmatprep.subr.bf16.mxu0 0
      %680 = vmatpush1.bf16.xpose.msra.mxu0 0
      %681 = vmatprep.subr.bf16.mxu0 0
      %682 = vmatpush1.bf16.xpose.msra.mxu0 0
      %683 = vmatprep.subr.bf16.mxu0 0
      %684 = vmatpush1.bf16.xpose.msra.mxu0 0
      %685 = vmatprep.mubr.bf16.mxu0 0
      %686 = vmatmul.mubr.bf16.gmra.mrb[0].mxu0 %v648
      %v687 = vpop.f32.mrb[0].mxu0
      %v688 = vadd.f32 0.0, %v687
      %v689 = vpop.f32.mrb[0].mxu0
      %v690 = vpop.f32.mrb[0].mxu0
      %v691 = vadd.f32 0.0, %v690
      %v692 = vpop.f32.mrb[0].mxu0
      %693 = vdwg.mxu0
      %v696 = vunpack.c.l.b16 %v244
      %v697 = vunpack.c.l.b16 %v245
      %v698 = vpack.c.b16 %v697, %v696
      %v701 = vunpack.c.l.b16 %v276
      %v702 = vunpack.c.l.b16 %v277
      %v703 = vpack.c.b16 %v702, %v701
      %v705 = vsel %vm304, %v698, 0
      %v708 = vsel %vm304, %v703, 0
      %710 = vmatprep.subr.bf16.mxu0 0
      %711 = vmatpush1.bf16.xpose.msra.mxu0 %v708
      %712 = vmatprep.subr.bf16.mxu0 0
      %713 = vmatpush1.bf16.xpose.msra.mxu0 0
      %714 = vmatprep.subr.bf16.mxu0 0
      %715 = vmatpush1.bf16.xpose.msra.mxu0 0
      %716 = vmatprep.subr.bf16.mxu0 0
      %717 = vmatpush1.bf16.xpose.msra.mxu0 0
      %718 = vmatprep.subr.bf16.mxu0 0
      %719 = vmatpush1.bf16.xpose.msra.mxu0 0
      %720 = vmatprep.subr.bf16.mxu0 0
      %721 = vmatpush1.bf16.xpose.msra.mxu0 0
      %722 = vmatprep.subr.bf16.mxu0 0
      %723 = vmatpush1.bf16.xpose.msra.mxu0 0
      %724 = vmatprep.subr.bf16.mxu0 0
      %725 = vmatpush1.bf16.xpose.msra.mxu0 0
      %726 = vmatprep.subr.bf16.mxu0 0
      %727 = vmatpush1.bf16.xpose.msra.mxu0 0
      %728 = vmatprep.subr.bf16.mxu0 0
      %729 = vmatpush1.bf16.xpose.msra.mxu0 0
      %730 = vmatprep.subr.bf16.mxu0 0
      %731 = vmatpush1.bf16.xpose.msra.mxu0 0
      %732 = vmatprep.subr.bf16.mxu0 0
      %733 = vmatpush1.bf16.xpose.msra.mxu0 0
      %734 = vmatprep.subr.bf16.mxu0 0
      %735 = vmatpush1.bf16.xpose.msra.mxu0 0
      %736 = vmatprep.subr.bf16.mxu0 0
      %737 = vmatpush1.bf16.xpose.msra.mxu0 0
      %738 = vmatprep.subr.bf16.mxu0 0
      %739 = vmatpush1.bf16.xpose.msra.mxu0 0
      %740 = vmatprep.subr.bf16.mxu0 0
      %741 = vmatpush1.bf16.xpose.msra.mxu0 0
      %742 = vmatprep.mubr.bf16.mxu0 0
      %743 = vmatmul.mubr.bf16.gmra.mrb[0].mxu0 %v705
      %v744 = vpop.f32.mrb[0].mxu0
      %v745 = vadd.f32 0.0, %v744
      %v746 = vpop.f32.mrb[0].mxu0
      %v747 = vpop.f32.mrb[0].mxu0
      %v748 = vadd.f32 0.0, %v747
      %v749 = vpop.f32.mrb[0].mxu0
      %750 = vdwg.mxu0
      %v753 = vunpack.c.l.b16 %v246
      %v754 = vunpack.c.l.b16 %v247
      %v755 = vpack.c.b16 %v754, %v753
      %v758 = vunpack.c.l.b16 %v278
      %v759 = vunpack.c.l.b16 %v279
      %v760 = vpack.c.b16 %v759, %v758
      %v762 = vsel %vm304, %v755, 0
      %v765 = vsel %vm304, %v760, 0
      %767 = vmatprep.subr.bf16.mxu0 0
      %768 = vmatpush1.bf16.xpose.msra.mxu0 %v765
      %769 = vmatprep.subr.bf16.mxu0 0
      %770 = vmatpush1.bf16.xpose.msra.mxu0 0
      %771 = vmatprep.subr.bf16.mxu0 0
      %772 = vmatpush1.bf16.xpose.msra.mxu0 0
      %773 = vmatprep.subr.bf16.mxu0 0
      %774 = vmatpush1.bf16.xpose.msra.mxu0 0
      %775 = vmatprep.subr.bf16.mxu0 0
      %776 = vmatpush1.bf16.xpose.msra.mxu0 0
      %777 = vmatprep.subr.bf16.mxu0 0
      %778 = vmatpush1.bf16.xpose.msra.mxu0 0
      %779 = vmatprep.subr.bf16.mxu0 0
      %780 = vmatpush1.bf16.xpose.msra.mxu0 0
      %781 = vmatprep.subr.bf16.mxu0 0
      %782 = vmatpush1.bf16.xpose.msra.mxu0 0
      %783 = vmatprep.subr.bf16.mxu0 0
      %784 = vmatpush1.bf16.xpose.msra.mxu0 0
      %785 = vmatprep.subr.bf16.mxu0 0
      %786 = vmatpush1.bf16.xpose.msra.mxu0 0
      %787 = vmatprep.subr.bf16.mxu0 0
      %788 = vmatpush1.bf16.xpose.msra.mxu0 0
      %789 = vmatprep.subr.bf16.mxu0 0
      %790 = vmatpush1.bf16.xpose.msra.mxu0 0
      %791 = vmatprep.subr.bf16.mxu0 0
      %792 = vmatpush1.bf16.xpose.msra.mxu0 0
      %793 = vmatprep.subr.bf16.mxu0 0
      %794 = vmatpush1.bf16.xpose.msra.mxu0 0
      %795 = vmatprep.subr.bf16.mxu0 0
      %796 = vmatpush1.bf16.xpose.msra.mxu0 0
      %797 = vmatprep.subr.bf16.mxu0 0
      %798 = vmatpush1.bf16.xpose.msra.mxu0 0
      %799 = vmatprep.mubr.bf16.mxu0 0
      %800 = vmatmul.mubr.bf16.gmra.mrb[0].mxu0 %v762
      %v801 = vpop.f32.mrb[0].mxu0
      %v802 = vadd.f32 0.0, %v801
      %v803 = vpop.f32.mrb[0].mxu0
      %v804 = vpop.f32.mrb[0].mxu0
      %v805 = vadd.f32 0.0, %v804
      %v806 = vpop.f32.mrb[0].mxu0
      %807 = vdwg.mxu0
      %v810 = vunpack.c.l.b16 %v248
      %v811 = vunpack.c.l.b16 %v249
      %v812 = vpack.c.b16 %v811, %v810
      %v815 = vunpack.c.l.b16 %v280
      %v816 = vunpack.c.l.b16 %v281
      %v817 = vpack.c.b16 %v816, %v815
      %v819 = vsel %vm304, %v812, 0
      %v822 = vsel %vm304, %v817, 0
      %824 = vmatprep.subr.bf16.mxu0 0
      %825 = vmatpush1.bf16.xpose.msra.mxu0 %v822
      %826 = vmatprep.subr.bf16.mxu0 0
      %827 = vmatpush1.bf16.xpose.msra.mxu0 0
      %828 = vmatprep.subr.bf16.mxu0 0
      %829 = vmatpush1.bf16.xpose.msra.mxu0 0
      %830 = vmatprep.subr.bf16.mxu0 0
      %831 = vmatpush1.bf16.xpose.msra.mxu0 0
      %832 = vmatprep.subr.bf16.mxu0 0
      %833 = vmatpush1.bf16.xpose.msra.mxu0 0
      %834 = vmatprep.subr.bf16.mxu0 0
      %835 = vmatpush1.bf16.xpose.msra.mxu0 0
      %836 = vmatprep.subr.bf16.mxu0 0
      %837 = vmatpush1.bf16.xpose.msra.mxu0 0
      %838 = vmatprep.subr.bf16.mxu0 0
      %839 = vmatpush1.bf16.xpose.msra.mxu0 0
      %840 = vmatprep.subr.bf16.mxu0 0
      %841 = vmatpush1.bf16.xpose.msra.mxu0 0
      %842 = vmatprep.subr.bf16.mxu0 0
      %843 = vmatpush1.bf16.xpose.msra.mxu0 0
      %844 = vmatprep.subr.bf16.mxu0 0
      %845 = vmatpush1.bf16.xpose.msra.mxu0 0
      %846 = vmatprep.subr.bf16.mxu0 0
      %847 = vmatpush1.bf16.xpose.msra.mxu0 0
      %848 = vmatprep.subr.bf16.mxu0 0
      %849 = vmatpush1.bf16.xpose.msra.mxu0 0
      %850 = vmatprep.subr.bf16.mxu0 0
      %851 = vmatpush1.bf16.xpose.msra.mxu0 0
      %852 = vmatprep.subr.bf16.mxu0 0
      %853 = vmatpush1.bf16.xpose.msra.mxu0 0
      %854 = vmatprep.subr.bf16.mxu0 0
      %855 = vmatpush1.bf16.xpose.msra.mxu0 0
      %856 = vmatprep.mubr.bf16.mxu0 0
      %857 = vmatmul.mubr.bf16.gmra.mrb[0].mxu0 %v819
      %v858 = vpop.f32.mrb[0].mxu0
      %v859 = vadd.f32 0.0, %v858
      %v860 = vpop.f32.mrb[0].mxu0
      %v861 = vpop.f32.mrb[0].mxu0
      %v862 = vadd.f32 0.0, %v861
      %v863 = vpop.f32.mrb[0].mxu0
      %864 = vdwg.mxu0
      %v867 = vunpack.c.l.b16 %v250
      %v868 = vunpack.c.l.b16 %v251
      %v869 = vpack.c.b16 %v868, %v867
      %v872 = vunpack.c.l.b16 %v282
      %v873 = vunpack.c.l.b16 %v283
      %v874 = vpack.c.b16 %v873, %v872
      %v876 = vsel %vm304, %v869, 0
      %v879 = vsel %vm304, %v874, 0
      %881 = vmatprep.subr.bf16.mxu0 0
      %882 = vmatpush1.bf16.xpose.msra.mxu0 %v879
      %883 = vmatprep.subr.bf16.mxu0 0
      %884 = vmatpush1.bf16.xpose.msra.mxu0 0
      %885 = vmatprep.subr.bf16.mxu0 0
      %886 = vmatpush1.bf16.xpose.msra.mxu0 0
      %887 = vmatprep.subr.bf16.mxu0 0
      %888 = vmatpush1.bf16.xpose.msra.mxu0 0
      %889 = vmatprep.subr.bf16.mxu0 0
      %890 = vmatpush1.bf16.xpose.msra.mxu0 0
      %891 = vmatprep.subr.bf16.mxu0 0
      %892 = vmatpush1.bf16.xpose.msra.mxu0 0
      %893 = vmatprep.subr.bf16.mxu0 0
      %894 = vmatpush1.bf16.xpose.msra.mxu0 0
      %895 = vmatprep.subr.bf16.mxu0 0
      %896 = vmatpush1.bf16.xpose.msra.mxu0 0
      %897 = vmatprep.subr.bf16.mxu0 0
      %898 = vmatpush1.bf16.xpose.msra.mxu0 0
      %899 = vmatprep.subr.bf16.mxu0 0
      %900 = vmatpush1.bf16.xpose.msra.mxu0 0
      %901 = vmatprep.subr.bf16.mxu0 0
      %902 = vmatpush1.bf16.xpose.msra.mxu0 0
      %903 = vmatprep.subr.bf16.mxu0 0
      %904 = vmatpush1.bf16.xpose.msra.mxu0 0
      %905 = vmatprep.subr.bf16.mxu0 0
      %906 = vmatpush1.bf16.xpose.msra.mxu0 0
      %907 = vmatprep.subr.bf16.mxu0 0
      %908 = vmatpush1.bf16.xpose.msra.mxu0 0
      %909 = vmatprep.subr.bf16.mxu0 0
      %910 = vmatpush1.bf16.xpose.msra.mxu0 0
      %911 = vmatprep.subr.bf16.mxu0 0
      %912 = vmatpush1.bf16.xpose.msra.mxu0 0
      %913 = vmatprep.mubr.bf16.mxu0 0
      %914 = vmatmul.mubr.bf16.gmra.mrb[0].mxu0 %v876
      %v915 = vpop.f32.mrb[0].mxu0
      %v916 = vadd.f32 0.0, %v915
      %v917 = vpop.f32.mrb[0].mxu0
      %v918 = vpop.f32.mrb[0].mxu0
      %v919 = vadd.f32 0.0, %v918
      %v920 = vpop.f32.mrb[0].mxu0
      %921 = vdwg.mxu0
      %v924 = vunpack.c.l.b16 %v252
      %v925 = vunpack.c.l.b16 %v253
      %v926 = vpack.c.b16 %v925, %v924
      %v929 = vunpack.c.l.b16 %v284
      %v930 = vunpack.c.l.b16 %v285
      %v931 = vpack.c.b16 %v930, %v929
      %v933 = vsel %vm304, %v926, 0
      %v936 = vsel %vm304, %v931, 0
      %938 = vmatprep.subr.bf16.mxu0 0
      %939 = vmatpush1.bf16.xpose.msra.mxu0 %v936
      %940 = vmatprep.subr.bf16.mxu0 0
      %941 = vmatpush1.bf16.xpose.msra.mxu0 0
      %942 = vmatprep.subr.bf16.mxu0 0
      %943 = vmatpush1.bf16.xpose.msra.mxu0 0
      %944 = vmatprep.subr.bf16.mxu0 0
      %945 = vmatpush1.bf16.xpose.msra.mxu0 0
      %946 = vmatprep.subr.bf16.mxu0 0
      %947 = vmatpush1.bf16.xpose.msra.mxu0 0
      %948 = vmatprep.subr.bf16.mxu0 0
      %949 = vmatpush1.bf16.xpose.msra.mxu0 0
      %950 = vmatprep.subr.bf16.mxu0 0
      %951 = vmatpush1.bf16.xpose.msra.mxu0 0
      %952 = vmatprep.subr.bf16.mxu0 0
      %953 = vmatpush1.bf16.xpose.msra.mxu0 0
      %954 = vmatprep.subr.bf16.mxu0 0
      %955 = vmatpush1.bf16.xpose.msra.mxu0 0
      %956 = vmatprep.subr.bf16.mxu0 0
      %957 = vmatpush1.bf16.xpose.msra.mxu0 0
      %958 = vmatprep.subr.bf16.mxu0 0
      %959 = vmatpush1.bf16.xpose.msra.mxu0 0
      %960 = vmatprep.subr.bf16.mxu0 0
      %961 = vmatpush1.bf16.xpose.msra.mxu0 0
      %962 = vmatprep.subr.bf16.mxu0 0
      %963 = vmatpush1.bf16.xpose.msra.mxu0 0
      %964 = vmatprep.subr.bf16.mxu0 0
      %965 = vmatpush1.bf16.xpose.msra.mxu0 0
      %966 = vmatprep.subr.bf16.mxu0 0
      %967 = vmatpush1.bf16.xpose.msra.mxu0 0
      %968 = vmatprep.subr.bf16.mxu0 0
      %969 = vmatpush1.bf16.xpose.msra.mxu0 0
      %970 = vmatprep.mubr.bf16.mxu0 0
      %971 = vmatmul.mubr.bf16.gmra.mrb[0].mxu0 %v933
      %v972 = vpop.f32.mrb[0].mxu0
      %v973 = vadd.f32 0.0, %v972
      %v974 = vpop.f32.mrb[0].mxu0
      %v975 = vpop.f32.mrb[0].mxu0
      %v976 = vadd.f32 0.0, %v975
      %v977 = vpop.f32.mrb[0].mxu0
      %978 = vdwg.mxu0
      %v981 = vunpack.c.l.b16 %v254
      %v982 = vunpack.c.l.b16 %v255
      %v983 = vpack.c.b16 %v982, %v981
      %v986 = vunpack.c.l.b16 %v286
      %v987 = vunpack.c.l.b16 %v287
      %v988 = vpack.c.b16 %v987, %v986
      %v990 = vsel %vm304, %v983, 0
      %v993 = vsel %vm304, %v988, 0
      %995 = vmatprep.subr.bf16.mxu0 0
      %996 = vmatpush1.bf16.xpose.msra.mxu0 %v993
      %997 = vmatprep.subr.bf16.mxu0 0
      %998 = vmatpush1.bf16.xpose.msra.mxu0 0
      %999 = vmatprep.subr.bf16.mxu0 0
      %1000 = vmatpush1.bf16.xpose.msra.mxu0 0
      %1001 = vmatprep.subr.bf16.mxu0 0
      %1002 = vmatpush1.bf16.xpose.msra.mxu0 0
      %1003 = vmatprep.subr.bf16.mxu0 0
      %1004 = vmatpush1.bf16.xpose.msra.mxu0 0
      %1005 = vmatprep.subr.bf16.mxu0 0
      %1006 = vmatpush1.bf16.xpose.msra.mxu0 0
      %1007 = vmatprep.subr.bf16.mxu0 0
      %1008 = vmatpush1.bf16.xpose.msra.mxu0 0
      %1009 = vmatprep.subr.bf16.mxu0 0
      %1010 = vmatpush1.bf16.xpose.msra.mxu0 0
      %1011 = vmatprep.subr.bf16.mxu0 0
      %1012 = vmatpush1.bf16.xpose.msra.mxu0 0
      %1013 = vmatprep.subr.bf16.mxu0 0
      %1014 = vmatpush1.bf16.xpose.msra.mxu0 0
      %1015 = vmatprep.subr.bf16.mxu0 0
      %1016 = vmatpush1.bf16.xpose.msra.mxu0 0
      %1017 = vmatprep.subr.bf16.mxu0 0
      %1018 = vmatpush1.bf16.xpose.msra.mxu0 0
      %1019 = vmatprep.subr.bf16.mxu0 0
      %1020 = vmatpush1.bf16.xpose.msra.mxu0 0
      %1021 = vmatprep.subr.bf16.mxu0 0
      %1022 = vmatpush1.bf16.xpose.msra.mxu0 0
      %1023 = vmatprep.subr.bf16.mxu0 0
      %1024 = vmatpush1.bf16.xpose.msra.mxu0 0
      %1025 = vmatprep.subr.bf16.mxu0 0
      %1026 = vmatpush1.bf16.xpose.msra.mxu0 0
      %1027 = vmatprep.mubr.bf16.mxu0 0
      %1028 = vmatmul.mubr.bf16.gmra.mrb[0].mxu0 %v990
      %v1029 = vpop.f32.mrb[0].mxu0
      %v1030 = vadd.f32 0.0, %v1029
      %v1031 = vpop.f32.mrb[0].mxu0
      %v1032 = vpop.f32.mrb[0].mxu0
      %v1033 = vadd.f32 0.0, %v1032
      %v1034 = vpop.f32.mrb[0].mxu0
      %1035 = vdwg.mxu0
      %v1038 = vunpack.c.l.b16 %v256
      %v1039 = vunpack.c.l.b16 %v257
      %v1040 = vpack.c.b16 %v1039, %v1038
      %v1043 = vunpack.c.l.b16 %v288
      %v1044 = vunpack.c.l.b16 %v289
      %v1045 = vpack.c.b16 %v1044, %v1043
      %v1047 = vsel %vm304, %v1040, 0
      %v1050 = vsel %vm304, %v1045, 0
      %1052 = vmatprep.subr.bf16.mxu0 0
      %1053 = vmatpush1.bf16.xpose.msra.mxu0 %v1050
      %1054 = vmatprep.subr.bf16.mxu0 0
      %1055 = vmatpush1.bf16.xpose.msra.mxu0 0
      %1056 = vmatprep.subr.bf16.mxu0 0
      %1057 = vmatpush1.bf16.xpose.msra.mxu0 0
      %1058 = vmatprep.subr.bf16.mxu0 0
      %1059 = vmatpush1.bf16.xpose.msra.mxu0 0
      %1060 = vmatprep.subr.bf16.mxu0 0
      %1061 = vmatpush1.bf16.xpose.msra.mxu0 0
      %1062 = vmatprep.subr.bf16.mxu0 0
      %1063 = vmatpush1.bf16.xpose.msra.mxu0 0
      %1064 = vmatprep.subr.bf16.mxu0 0
      %1065 = vmatpush1.bf16.xpose.msra.mxu0 0
      %1066 = vmatprep.subr.bf16.mxu0 0
      %1067 = vmatpush1.bf16.xpose.msra.mxu0 0
      %1068 = vmatprep.subr.bf16.mxu0 0
      %1069 = vmatpush1.bf16.xpose.msra.mxu0 0
      %1070 = vmatprep.subr.bf16.mxu0 0
      %1071 = vmatpush1.bf16.xpose.msra.mxu0 0
      %1072 = vmatprep.subr.bf16.mxu0 0
      %1073 = vmatpush1.bf16.xpose.msra.mxu0 0
      %1074 = vmatprep.subr.bf16.mxu0 0
      %1075 = vmatpush1.bf16.xpose.msra.mxu0 0
      %1076 = vmatprep.subr.bf16.mxu0 0
      %1077 = vmatpush1.bf16.xpose.msra.mxu0 0
      %1078 = vmatprep.subr.bf16.mxu0 0
      %1079 = vmatpush1.bf16.xpose.msra.mxu0 0
      %1080 = vmatprep.subr.bf16.mxu0 0
      %1081 = vmatpush1.bf16.xpose.msra.mxu0 0
      %1082 = vmatprep.subr.bf16.mxu0 0
      %1083 = vmatpush1.bf16.xpose.msra.mxu0 0
      %1084 = vmatprep.mubr.bf16.mxu0 0
      %1085 = vmatmul.mubr.bf16.gmra.mrb[0].mxu0 %v1047
      %v1086 = vpop.f32.mrb[0].mxu0
      %v1087 = vadd.f32 0.0, %v1086
      %v1088 = vpop.f32.mrb[0].mxu0
      %v1089 = vpop.f32.mrb[0].mxu0
      %v1090 = vadd.f32 0.0, %v1089
      %v1091 = vpop.f32.mrb[0].mxu0
      %1092 = vdwg.mxu0
      %v1095 = vunpack.c.l.b16 %v258
      %v1096 = vunpack.c.l.b16 %v259
      %v1097 = vpack.c.b16 %v1096, %v1095
      %v1100 = vunpack.c.l.b16 %v290
      %v1101 = vunpack.c.l.b16 %v291
      %v1102 = vpack.c.b16 %v1101, %v1100
      %v1104 = vsel %vm304, %v1097, 0
      %v1107 = vsel %vm304, %v1102, 0
      %1109 = vmatprep.subr.bf16.mxu0 0
      %1110 = vmatpush1.bf16.xpose.msra.mxu0 %v1107
      %1111 = vmatprep.subr.bf16.mxu0 0
      %1112 = vmatpush1.bf16.xpose.msra.mxu0 0
      %1113 = vmatprep.subr.bf16.mxu0 0
      %1114 = vmatpush1.bf16.xpose.msra.mxu0 0
      %1115 = vmatprep.subr.bf16.mxu0 0
      %1116 = vmatpush1.bf16.xpose.msra.mxu0 0
      %1117 = vmatprep.subr.bf16.mxu0 0
      %1118 = vmatpush1.bf16.xpose.msra.mxu0 0
      %1119 = vmatprep.subr.bf16.mxu0 0
      %1120 = vmatpush1.bf16.xpose.msra.mxu0 0
      %1121 = vmatprep.subr.bf16.mxu0 0
      %1122 = vmatpush1.bf16.xpose.msra.mxu0 0
      %1123 = vmatprep.subr.bf16.mxu0 0
      %1124 = vmatpush1.bf16.xpose.msra.mxu0 0
      %1125 = vmatprep.subr.bf16.mxu0 0
      %1126 = vmatpush1.bf16.xpose.msra.mxu0 0
      %1127 = vmatprep.subr.bf16.mxu0 0
      %1128 = vmatpush1.bf16.xpose.msra.mxu0 0
      %1129 = vmatprep.subr.bf16.mxu0 0
      %1130 = vmatpush1.bf16.xpose.msra.mxu0 0
      %1131 = vmatprep.subr.bf16.mxu0 0
      %1132 = vmatpush1.bf16.xpose.msra.mxu0 0
      %1133 = vmatprep.subr.bf16.mxu0 0
      %1134 = vmatpush1.bf16.xpose.msra.mxu0 0
      %1135 = vmatprep.subr.bf16.mxu0 0
      %1136 = vmatpush1.bf16.xpose.msra.mxu0 0
      %1137 = vmatprep.subr.bf16.mxu0 0
      %1138 = vmatpush1.bf16.xpose.msra.mxu0 0
      %1139 = vmatprep.subr.bf16.mxu0 0
      %1140 = vmatpush1.bf16.xpose.msra.mxu0 0
      %1141 = vmatprep.mubr.bf16.mxu0 0
      %1142 = vmatmul.mubr.bf16.gmra.mrb[0].mxu0 %v1104
      %v1143 = vpop.f32.mrb[0].mxu0
      %v1144 = vadd.f32 0.0, %v1143
      %v1145 = vpop.f32.mrb[0].mxu0
      %v1146 = vpop.f32.mrb[0].mxu0
      %v1147 = vadd.f32 0.0, %v1146
      %v1148 = vpop.f32.mrb[0].mxu0
      %1149 = vdwg.mxu0
      %v1152 = vunpack.c.l.b16 %v260
      %v1153 = vunpack.c.l.b16 %v261
      %v1154 = vpack.c.b16 %v1153, %v1152
      %v1157 = vunpack.c.l.b16 %v292
      %v1158 = vunpack.c.l.b16 %v293
      %v1159 = vpack.c.b16 %v1158, %v1157
      %v1161 = vsel %vm304, %v1154, 0
      %v1164 = vsel %vm304, %v1159, 0
      %1166 = vmatprep.subr.bf16.mxu0 0
      %1167 = vmatpush1.bf16.xpose.msra.mxu0 %v1164
      %1168 = vmatprep.subr.bf16.mxu0 0
      %1169 = vmatpush1.bf16.xpose.msra.mxu0 0
      %1170 = vmatprep.subr.bf16.mxu0 0
      %1171 = vmatpush1.bf16.xpose.msra.mxu0 0
      %1172 = vmatprep.subr.bf16.mxu0 0
      %1173 = vmatpush1.bf16.xpose.msra.mxu0 0
      %1174 = vmatprep.subr.bf16.mxu0 0
      %1175 = vmatpush1.bf16.xpose.msra.mxu0 0
      %1176 = vmatprep.subr.bf16.mxu0 0
      %1177 = vmatpush1.bf16.xpose.msra.mxu0 0
      %1178 = vmatprep.subr.bf16.mxu0 0
      %1179 = vmatpush1.bf16.xpose.msra.mxu0 0
      %1180 = vmatprep.subr.bf16.mxu0 0
      %1181 = vmatpush1.bf16.xpose.msra.mxu0 0
      %1182 = vmatprep.subr.bf16.mxu0 0
      %1183 = vmatpush1.bf16.xpose.msra.mxu0 0
      %1184 = vmatprep.subr.bf16.mxu0 0
      %1185 = vmatpush1.bf16.xpose.msra.mxu0 0
      %1186 = vmatprep.subr.bf16.mxu0 0
      %1187 = vmatpush1.bf16.xpose.msra.mxu0 0
      %1188 = vmatprep.subr.bf16.mxu0 0
      %1189 = vmatpush1.bf16.xpose.msra.mxu0 0
      %1190 = vmatprep.subr.bf16.mxu0 0
      %1191 = vmatpush1.bf16.xpose.msra.mxu0 0
      %1192 = vmatprep.subr.bf16.mxu0 0
      %1193 = vmatpush1.bf16.xpose.msra.mxu0 0
      %1194 = vmatprep.subr.bf16.mxu0 0
      %1195 = vmatpush1.bf16.xpose.msra.mxu0 0
      %1196 = vmatprep.subr.bf16.mxu0 0
      %1197 = vmatpush1.bf16.xpose.msra.mxu0 0
      %1198 = vmatprep.mubr.bf16.mxu0 0
      %1199 = vmatmul.mubr.bf16.gmra.mrb[0].mxu0 %v1161
      %v1200 = vpop.f32.mrb[0].mxu0
      %v1201 = vadd.f32 0.0, %v1200
      %v1202 = vpop.f32.mrb[0].mxu0
      %v1203 = vpop.f32.mrb[0].mxu0
      %v1204 = vadd.f32 0.0, %v1203
      %v1205 = vpop.f32.mrb[0].mxu0
      %1206 = vdwg.mxu0
      %vm1207 = vcmask 130048
      %v1208 = vsel %vm1207, %v346, -inf
      %1209 = vmax.xlane.f32.xlu0 %v1208
      %v1210 = vpop.xlane.xlu0 %1209
      %v1211 = vsel %vm1207, %v349, -inf
      %1212 = vmax.xlane.f32.xlu0 %v1211
      %v1213 = vpop.xlane.xlu0 %1212
      %v1214 = vsel %vm1207, %v403, -inf
      %1215 = vmax.xlane.f32.xlu0 %v1214
      %v1216 = vpop.xlane.xlu0 %1215
      %v1217 = vsel %vm1207, %v406, -inf
      %1218 = vmax.xlane.f32.xlu0 %v1217
      %v1219 = vpop.xlane.xlu0 %1218
      %v1220 = vsel %vm1207, %v460, -inf
      %1221 = vmax.xlane.f32.xlu0 %v1220
      %v1222 = vpop.xlane.xlu0 %1221
      %v1223 = vsel %vm1207, %v463, -inf
      %1224 = vmax.xlane.f32.xlu0 %v1223
      %v1225 = vpop.xlane.xlu0 %1224
      %v1226 = vsel %vm1207, %v517, -inf
      %1227 = vmax.xlane.f32.xlu0 %v1226
      %v1228 = vpop.xlane.xlu0 %1227
      %v1229 = vsel %vm1207, %v520, -inf
      %1230 = vmax.xlane.f32.xlu0 %v1229
      %v1231 = vpop.xlane.xlu0 %1230
      %v1232 = vsel %vm1207, %v574, -inf
      %1233 = vmax.xlane.f32.xlu0 %v1232
      %v1234 = vpop.xlane.xlu0 %1233
      %v1235 = vsel %vm1207, %v577, -inf
      %1236 = vmax.xlane.f32.xlu0 %v1235
      %v1237 = vpop.xlane.xlu0 %1236
      %v1238 = vsel %vm1207, %v631, -inf
      %1239 = vmax.xlane.f32.xlu0 %v1238
      %v1240 = vpop.xlane.xlu0 %1239
      %v1241 = vsel %vm1207, %v634, -inf
      %1242 = vmax.xlane.f32.xlu0 %v1241
      %v1243 = vpop.xlane.xlu0 %1242
      %v1244 = vsel %vm1207, %v688, -inf
      %1245 = vmax.xlane.f32.xlu0 %v1244
      %v1246 = vpop.xlane.xlu0 %1245
      %v1247 = vsel %vm1207, %v691, -inf
      %1248 = vmax.xlane.f32.xlu0 %v1247
      %v1249 = vpop.xlane.xlu0 %1248
      %v1250 = vsel %vm1207, %v745, -inf
      %1251 = vmax.xlane.f32.xlu0 %v1250
      %v1252 = vpop.xlane.xlu0 %1251
      %v1253 = vsel %vm1207, %v748, -inf
      %1254 = vmax.xlane.f32.xlu0 %v1253
      %v1255 = vpop.xlane.xlu0 %1254
      %v1256 = vsel %vm1207, %v802, -inf
      %1257 = vmax.xlane.f32.xlu0 %v1256
      %v1258 = vpop.xlane.xlu0 %1257
      %v1259 = vsel %vm1207, %v805, -inf
      %1260 = vmax.xlane.f32.xlu0 %v1259
      %v1261 = vpop.xlane.xlu0 %1260
      %v1262 = vsel %vm1207, %v859, -inf
      %1263 = vmax.xlane.f32.xlu0 %v1262
      %v1264 = vpop.xlane.xlu0 %1263
      %v1265 = vsel %vm1207, %v862, -inf
      %1266 = vmax.xlane.f32.xlu0 %v1265
      %v1267 = vpop.xlane.xlu0 %1266
      %v1268 = vsel %vm1207, %v916, -inf
      %1269 = vmax.xlane.f32.xlu0 %v1268
      %v1270 = vpop.xlane.xlu0 %1269
      %v1271 = vsel %vm1207, %v919, -inf
      %1272 = vmax.xlane.f32.xlu0 %v1271
      %v1273 = vpop.xlane.xlu0 %1272
      %v1274 = vsel %vm1207, %v973, -inf
      %1275 = vmax.xlane.f32.xlu0 %v1274
      %v1276 = vpop.xlane.xlu0 %1275
      %v1277 = vsel %vm1207, %v976, -inf
      %1278 = vmax.xlane.f32.xlu0 %v1277
      %v1279 = vpop.xlane.xlu0 %1278
      %v1280 = vsel %vm1207, %v1030, -inf
      %1281 = vmax.xlane.f32.xlu0 %v1280
      %v1282 = vpop.xlane.xlu0 %1281
      %v1283 = vsel %vm1207, %v1033, -inf
      %1284 = vmax.xlane.f32.xlu0 %v1283
      %v1285 = vpop.xlane.xlu0 %1284
      %v1286 = vsel %vm1207, %v1087, -inf
      %1287 = vmax.xlane.f32.xlu0 %v1286
      %v1288 = vpop.xlane.xlu0 %1287
      %v1289 = vsel %vm1207, %v1090, -inf
      %1290 = vmax.xlane.f32.xlu0 %v1289
      %v1291 = vpop.xlane.xlu0 %1290
      %v1292 = vsel %vm1207, %v1144, -inf
      %1293 = vmax.xlane.f32.xlu0 %v1292
      %v1294 = vpop.xlane.xlu0 %1293
      %v1295 = vsel %vm1207, %v1147, -inf
      %1296 = vmax.xlane.f32.xlu0 %v1295
      %v1297 = vpop.xlane.xlu0 %1296
      %v1298 = vsel %vm1207, %v1201, -inf
      %1299 = vmax.xlane.f32.xlu0 %v1298
      %v1300 = vpop.xlane.xlu0 %1299
      %v1301 = vsel %vm1207, %v1204, -inf
      %1302 = vmax.xlane.f32.xlu0 %v1301
      %v1303 = vpop.xlane.xlu0 %1302
      %v1304 = vsub.f32 %v346, %v1210
      %v1305 = vsub.f32 %v349, %v1213
      %v1306 = vsub.f32 %v403, %v1216
      %v1307 = vsub.f32 %v406, %v1219
      %v1308 = vsub.f32 %v460, %v1222
      %v1309 = vsub.f32 %v463, %v1225
      %v1310 = vsub.f32 %v517, %v1228
      %v1311 = vsub.f32 %v520, %v1231
      %v1312 = vsub.f32 %v574, %v1234
      %v1313 = vsub.f32 %v577, %v1237
      %v1314 = vsub.f32 %v631, %v1240
      %v1315 = vsub.f32 %v634, %v1243
      %v1316 = vsub.f32 %v688, %v1246
      %v1317 = vsub.f32 %v691, %v1249
      %v1318 = vsub.f32 %v745, %v1252
      %v1319 = vsub.f32 %v748, %v1255
      %v1320 = vsub.f32 %v802, %v1258
      %v1321 = vsub.f32 %v805, %v1261
      %v1322 = vsub.f32 %v859, %v1264
      %v1323 = vsub.f32 %v862, %v1267
      %v1324 = vsub.f32 %v916, %v1270
      %v1325 = vsub.f32 %v919, %v1273
      %v1326 = vsub.f32 %v973, %v1276
      %v1327 = vsub.f32 %v976, %v1279
      %v1328 = vsub.f32 %v1030, %v1282
      %v1329 = vsub.f32 %v1033, %v1285
      %v1330 = vsub.f32 %v1087, %v1288
      %v1331 = vsub.f32 %v1090, %v1291
      %v1332 = vsub.f32 %v1144, %v1294
      %v1333 = vsub.f32 %v1147, %v1297
      %v1334 = vsub.f32 %v1201, %v1300
      %v1335 = vsub.f32 %v1204, %v1303
      %v1336 = vmul.f32 %v1304, 1.442695
      %v1337 = vpow.pop %v1336
      %v1338 = vmul.f32 %v1305, 1.442695
      %v1339 = vpow.pop %v1338
      %v1340 = vmul.f32 %v1306, 1.442695
      %v1341 = vpow.pop %v1340
      %v1342 = vmul.f32 %v1307, 1.442695
      %v1343 = vpow.pop %v1342
      %v1344 = vmul.f32 %v1308, 1.442695
      %v1345 = vpow.pop %v1344
      %v1346 = vmul.f32 %v1309, 1.442695
      %v1347 = vpow.pop %v1346
      %v1348 = vmul.f32 %v1310, 1.442695
      %v1349 = vpow.pop %v1348
      %v1350 = vmul.f32 %v1311, 1.442695
      %v1351 = vpow.pop %v1350
      %v1352 = vmul.f32 %v1312, 1.442695
      %v1353 = vpow.pop %v1352
      %v1354 = vmul.f32 %v1313, 1.442695
      %v1355 = vpow.pop %v1354
      %v1356 = vmul.f32 %v1314, 1.442695
      %v1357 = vpow.pop %v1356
      %v1358 = vmul.f32 %v1315, 1.442695
      %v1359 = vpow.pop %v1358
      %v1360 = vmul.f32 %v1316, 1.442695
      %v1361 = vpow.pop %v1360
      %v1362 = vmul.f32 %v1317, 1.442695
      %v1363 = vpow.pop %v1362
      %v1364 = vmul.f32 %v1318, 1.442695
      %v1365 = vpow.pop %v1364
      %v1366 = vmul.f32 %v1319, 1.442695
      %v1367 = vpow.pop %v1366
      %v1368 = vmul.f32 %v1320, 1.442695
      %v1369 = vpow.pop %v1368
      %v1370 = vmul.f32 %v1321, 1.442695
      %v1371 = vpow.pop %v1370
      %v1372 = vmul.f32 %v1322, 1.442695
      %v1373 = vpow.pop %v1372
      %v1374 = vmul.f32 %v1323, 1.442695
      %v1375 = vpow.pop %v1374
      %v1376 = vmul.f32 %v1324, 1.442695
      %v1377 = vpow.pop %v1376
      %v1378 = vmul.f32 %v1325, 1.442695
      %v1379 = vpow.pop %v1378
      %v1380 = vmul.f32 %v1326, 1.442695
      %v1381 = vpow.pop %v1380
      %v1382 = vmul.f32 %v1327, 1.442695
      %v1383 = vpow.pop %v1382
      %v1384 = vmul.f32 %v1328, 1.442695
      %v1385 = vpow.pop %v1384
      %v1386 = vmul.f32 %v1329, 1.442695
      %v1387 = vpow.pop %v1386
      %v1388 = vmul.f32 %v1330, 1.442695
      %v1389 = vpow.pop %v1388
      %v1390 = vmul.f32 %v1331, 1.442695
      %v1391 = vpow.pop %v1390
      %v1392 = vmul.f32 %v1332, 1.442695
      %v1393 = vpow.pop %v1392
      %v1394 = vmul.f32 %v1333, 1.442695
      %v1395 = vpow.pop %v1394
      %v1396 = vmul.f32 %v1334, 1.442695
      %v1397 = vpow.pop %v1396
      %v1398 = vmul.f32 %v1335, 1.442695
      %v1399 = vpow.pop %v1398
      %v1400 = vsel %vm1207, %v1337, 0.0
      %1401 = vadd.xlane.f32.xlu0 %v1400
      %v1402 = vpop.xlane.xlu0 %1401
      %v1403 = vsel %vm1207, %v1339, 0.0
      %1404 = vadd.xlane.f32.xlu0 %v1403
      %v1405 = vpop.xlane.xlu0 %1404
      %v1406 = vsel %vm1207, %v1341, 0.0
      %1407 = vadd.xlane.f32.xlu0 %v1406
      %v1408 = vpop.xlane.xlu0 %1407
      %v1409 = vsel %vm1207, %v1343, 0.0
      %1410 = vadd.xlane.f32.xlu0 %v1409
      %v1411 = vpop.xlane.xlu0 %1410
      %v1412 = vsel %vm1207, %v1345, 0.0
      %1413 = vadd.xlane.f32.xlu0 %v1412
      %v1414 = vpop.xlane.xlu0 %1413
      %v1415 = vsel %vm1207, %v1347, 0.0
      %1416 = vadd.xlane.f32.xlu0 %v1415
      %v1417 = vpop.xlane.xlu0 %1416
      %v1418 = vsel %vm1207, %v1349, 0.0
      %1419 = vadd.xlane.f32.xlu0 %v1418
      %v1420 = vpop.xlane.xlu0 %1419
      %v1421 = vsel %vm1207, %v1351, 0.0
      %1422 = vadd.xlane.f32.xlu0 %v1421
      %v1423 = vpop.xlane.xlu0 %1422
      %v1424 = vsel %vm1207, %v1353, 0.0
      %1425 = vadd.xlane.f32.xlu0 %v1424
      %v1426 = vpop.xlane.xlu0 %1425
      %v1427 = vsel %vm1207, %v1355, 0.0
      %1428 = vadd.xlane.f32.xlu0 %v1427
      %v1429 = vpop.xlane.xlu0 %1428
      %v1430 = vsel %vm1207, %v1357, 0.0
      %1431 = vadd.xlane.f32.xlu0 %v1430
      %v1432 = vpop.xlane.xlu0 %1431
      %v1433 = vsel %vm1207, %v1359, 0.0
      %1434 = vadd.xlane.f32.xlu0 %v1433
      %v1435 = vpop.xlane.xlu0 %1434
      %v1436 = vsel %vm1207, %v1361, 0.0
      %1437 = vadd.xlane.f32.xlu0 %v1436
      %v1438 = vpop.xlane.xlu0 %1437
      %v1439 = vsel %vm1207, %v1363, 0.0
      %1440 = vadd.xlane.f32.xlu0 %v1439
      %v1441 = vpop.xlane.xlu0 %1440
      %v1442 = vsel %vm1207, %v1365, 0.0
      %1443 = vadd.xlane.f32.xlu0 %v1442
      %v1444 = vpop.xlane.xlu0 %1443
      %v1445 = vsel %vm1207, %v1367, 0.0
      %1446 = vadd.xlane.f32.xlu0 %v1445
      %v1447 = vpop.xlane.xlu0 %1446
      %v1448 = vsel %vm1207, %v1369, 0.0
      %1449 = vadd.xlane.f32.xlu0 %v1448
      %v1450 = vpop.xlane.xlu0 %1449
      %v1451 = vsel %vm1207, %v1371, 0.0
      %1452 = vadd.xlane.f32.xlu0 %v1451
      %v1453 = vpop.xlane.xlu0 %1452
      %v1454 = vsel %vm1207, %v1373, 0.0
      %1455 = vadd.xlane.f32.xlu0 %v1454
      %v1456 = vpop.xlane.xlu0 %1455
      %v1457 = vsel %vm1207, %v1375, 0.0
      %1458 = vadd.xlane.f32.xlu0 %v1457
      %v1459 = vpop.xlane.xlu0 %1458
      %v1460 = vsel %vm1207, %v1377, 0.0
      %1461 = vadd.xlane.f32.xlu0 %v1460
      %v1462 = vpop.xlane.xlu0 %1461
      %v1463 = vsel %vm1207, %v1379, 0.0
      %1464 = vadd.xlane.f32.xlu0 %v1463
      %v1465 = vpop.xlane.xlu0 %1464
      %v1466 = vsel %vm1207, %v1381, 0.0
      %1467 = vadd.xlane.f32.xlu0 %v1466
      %v1468 = vpop.xlane.xlu0 %1467
      %v1469 = vsel %vm1207, %v1383, 0.0
      %1470 = vadd.xlane.f32.xlu0 %v1469
      %v1471 = vpop.xlane.xlu0 %1470
      %v1472 = vsel %vm1207, %v1385, 0.0
      %1473 = vadd.xlane.f32.xlu0 %v1472
      %v1474 = vpop.xlane.xlu0 %1473
      %v1475 = vsel %vm1207, %v1387, 0.0
      %1476 = vadd.xlane.f32.xlu0 %v1475
      %v1477 = vpop.xlane.xlu0 %1476
      %v1478 = vsel %vm1207, %v1389, 0.0
      %1479 = vadd.xlane.f32.xlu0 %v1478
      %v1480 = vpop.xlane.xlu0 %1479
      %v1481 = vsel %vm1207, %v1391, 0.0
      %1482 = vadd.xlane.f32.xlu0 %v1481
      %v1483 = vpop.xlane.xlu0 %1482
      %v1484 = vsel %vm1207, %v1393, 0.0
      %1485 = vadd.xlane.f32.xlu0 %v1484
      %v1486 = vpop.xlane.xlu0 %1485
      %v1487 = vsel %vm1207, %v1395, 0.0
      %1488 = vadd.xlane.f32.xlu0 %v1487
      %v1489 = vpop.xlane.xlu0 %1488
      %v1490 = vsel %vm1207, %v1397, 0.0
      %1491 = vadd.xlane.f32.xlu0 %v1490
      %v1492 = vpop.xlane.xlu0 %1491
      %v1493 = vsel %vm1207, %v1399, 0.0
      %1494 = vadd.xlane.f32.xlu0 %v1493
      %v1495 = vpop.xlane.xlu0 %1494
      %v1496 = vrcp.pop %v1402
      %v1497 = vrcp.pop %v1405
      %v1498 = vrcp.pop %v1408
      %v1499 = vrcp.pop %v1411
      %v1500 = vrcp.pop %v1414
      %v1501 = vrcp.pop %v1417
      %v1502 = vrcp.pop %v1420
      %v1503 = vrcp.pop %v1423
      %v1504 = vrcp.pop %v1426
      %v1505 = vrcp.pop %v1429
      %v1506 = vrcp.pop %v1432
      %v1507 = vrcp.pop %v1435
      %v1508 = vrcp.pop %v1438
      %v1509 = vrcp.pop %v1441
      %v1510 = vrcp.pop %v1444
      %v1511 = vrcp.pop %v1447
      %v1512 = vrcp.pop %v1450
      %v1513 = vrcp.pop %v1453
      %v1514 = vrcp.pop %v1456
      %v1515 = vrcp.pop %v1459
      %v1516 = vrcp.pop %v1462
      %v1517 = vrcp.pop %v1465
      %v1518 = vrcp.pop %v1468
      %v1519 = vrcp.pop %v1471
      %v1520 = vrcp.pop %v1474
      %v1521 = vrcp.pop %v1477
      %v1522 = vrcp.pop %v1480
      %v1523 = vrcp.pop %v1483
      %v1524 = vrcp.pop %v1486
      %v1525 = vrcp.pop %v1489
      %v1526 = vrcp.pop %v1492
      %v1527 = vrcp.pop %v1495
      %v1528 = vmul.f32 %v1337, %v1496
      %v1529 = vmul.f32 %v1339, %v1497
      %v1530 = vmul.f32 %v1341, %v1498
      %v1531 = vmul.f32 %v1343, %v1499
      %v1532 = vmul.f32 %v1345, %v1500
      %v1533 = vmul.f32 %v1347, %v1501
      %v1534 = vmul.f32 %v1349, %v1502
      %v1535 = vmul.f32 %v1351, %v1503
      %v1536 = vmul.f32 %v1353, %v1504
      %v1537 = vmul.f32 %v1355, %v1505
      %v1538 = vmul.f32 %v1357, %v1506
      %v1539 = vmul.f32 %v1359, %v1507
      %v1540 = vmul.f32 %v1361, %v1508
      %v1541 = vmul.f32 %v1363, %v1509
      %v1542 = vmul.f32 %v1365, %v1510
      %v1543 = vmul.f32 %v1367, %v1511
      %v1544 = vmul.f32 %v1369, %v1512
      %v1545 = vmul.f32 %v1371, %v1513
      %v1546 = vmul.f32 %v1373, %v1514
      %v1547 = vmul.f32 %v1375, %v1515
      %v1548 = vmul.f32 %v1377, %v1516
      %v1549 = vmul.f32 %v1379, %v1517
      %v1550 = vmul.f32 %v1381, %v1518
      %v1551 = vmul.f32 %v1383, %v1519
      %v1552 = vmul.f32 %v1385, %v1520
      %v1553 = vmul.f32 %v1387, %v1521
      %v1554 = vmul.f32 %v1389, %v1522
      %v1555 = vmul.f32 %v1391, %v1523
      %v1556 = vmul.f32 %v1393, %v1524
      %v1557 = vmul.f32 %v1395, %v1525
      %v1558 = vmul.f32 %v1397, %v1526
      %v1559 = vmul.f32 %v1399, %v1527
      %v1560 = vpack.c.bf16 %v1529, %v1528
      %v1561 = vpack.c.bf16 %v1531, %v1530
      %v1562 = vpack.c.bf16 %v1533, %v1532
      %v1563 = vpack.c.bf16 %v1535, %v1534
      %v1564 = vpack.c.bf16 %v1537, %v1536
      %v1565 = vpack.c.bf16 %v1539, %v1538
      %v1566 = vpack.c.bf16 %v1541, %v1540
      %v1567 = vpack.c.bf16 %v1543, %v1542
      %v1568 = vpack.c.bf16 %v1545, %v1544
      %v1569 = vpack.c.bf16 %v1547, %v1546
      %v1570 = vpack.c.bf16 %v1549, %v1548
      %v1571 = vpack.c.bf16 %v1551, %v1550
      %v1572 = vpack.c.bf16 %v1553, %v1552
      %v1573 = vpack.c.bf16 %v1555, %v1554
      %v1574 = vpack.c.bf16 %v1557, %v1556
      %v1575 = vpack.c.bf16 %v1559, %v1558
      %v1576 = vld [vmem:[%s220] sm:$0xf]
      %v1577 = vld [vmem:[%s220 + $0x4] sm:$0xf]
      %v1578 = vld [vmem:[%s220 + $0x8] sm:$0xf]
      %v1579 = vld [vmem:[%s220 + $0xc] sm:$0xf]
      %v1580 = vld [vmem:[%s220 + $0x10] sm:$0xf]
      %v1581 = vld [vmem:[%s220 + $0x14] sm:$0xf]
      %v1582 = vld [vmem:[%s220 + $0x18] sm:$0xf]
      %v1583 = vld [vmem:[%s220 + $0x1c] sm:$0xf]
      %v1584 = vld [vmem:[%s220 + $0x20] sm:$0xf]
      %v1585 = vld [vmem:[%s220 + $0x24] sm:$0xf]
      %v1586 = vld [vmem:[%s220 + $0x28] sm:$0xf]
      %v1587 = vld [vmem:[%s220 + $0x2c] sm:$0xf]
      %v1588 = vld [vmem:[%s220 + $0x30] sm:$0xf]
      %v1589 = vld [vmem:[%s220 + $0x34] sm:$0xf]
      %v1590 = vld [vmem:[%s220 + $0x38] sm:$0xf]
      %v1591 = vld [vmem:[%s220 + $0x3c] sm:$0xf]
      %v1592 = vld [vmem:[%s220 + $0x40] sm:$0xf]
      %v1593 = vld [vmem:[%s220 + $0x44] sm:$0xf]
      %v1594 = vld [vmem:[%s220 + $0x48] sm:$0xf]
      %v1595 = vld [vmem:[%s220 + $0x4c] sm:$0xf]
      %v1596 = vld [vmem:[%s220 + $0x50] sm:$0xf]
      %v1597 = vld [vmem:[%s220 + $0x54] sm:$0xf]
      %v1598 = vld [vmem:[%s220 + $0x58] sm:$0xf]
      %v1599 = vld [vmem:[%s220 + $0x5c] sm:$0xf]
      %v1600 = vld [vmem:[%s220 + $0x60] sm:$0xf]
      %v1601 = vld [vmem:[%s220 + $0x64] sm:$0xf]
      %v1602 = vld [vmem:[%s220 + $0x68] sm:$0xf]
      %v1603 = vld [vmem:[%s220 + $0x6c] sm:$0xf]
      %v1604 = vld [vmem:[%s220 + $0x70] sm:$0xf]
      %v1605 = vld [vmem:[%s220 + $0x74] sm:$0xf]
      %v1606 = vld [vmem:[%s220 + $0x78] sm:$0xf]
      %v1607 = vld [vmem:[%s220 + $0x7c] sm:$0xf]
      %v1610 = vunpack.c.l.b16 %v1576
      %v1611 = vunpack.c.l.b16 %v1577
      %v1612 = vpack.c.b16 %v1611, %v1610
      %v1615 = vsel %vm1207, %v1560, 0
      %1617 = vmatprep.subr.bf16.mxu0 0
      %1618 = vmatpush1.bf16.msra.mxu0 %v1612
      %1619 = vmatprep.subr.bf16.mxu0 0
      %1620 = vmatpush1.bf16.msra.mxu0 0
      %1621 = vmatprep.subr.bf16.mxu0 0
      %1622 = vmatpush1.bf16.msra.mxu0 0
      %1623 = vmatprep.subr.bf16.mxu0 0
      %1624 = vmatpush1.bf16.msra.mxu0 0
      %1625 = vmatprep.subr.bf16.mxu0 0
      %1626 = vmatpush1.bf16.msra.mxu0 0
      %1627 = vmatprep.subr.bf16.mxu0 0
      %1628 = vmatpush1.bf16.msra.mxu0 0
      %1629 = vmatprep.subr.bf16.mxu0 0
      %1630 = vmatpush1.bf16.msra.mxu0 0
      %1631 = vmatprep.subr.bf16.mxu0 0
      %1632 = vmatpush1.bf16.msra.mxu0 0
      %1633 = vmatprep.subr.bf16.mxu0 0
      %1634 = vmatpush1.bf16.msra.mxu0 0
      %1635 = vmatprep.subr.bf16.mxu0 0
      %1636 = vmatpush1.bf16.msra.mxu0 0
      %1637 = vmatprep.subr.bf16.mxu0 0
      %1638 = vmatpush1.bf16.msra.mxu0 0
      %1639 = vmatprep.subr.bf16.mxu0 0
      %1640 = vmatpush1.bf16.msra.mxu0 0
      %1641 = vmatprep.subr.bf16.mxu0 0
      %1642 = vmatpush1.bf16.msra.mxu0 0
      %1643 = vmatprep.subr.bf16.mxu0 0
      %1644 = vmatpush1.bf16.msra.mxu0 0
      %1645 = vmatprep.subr.bf16.mxu0 0
      %1646 = vmatpush1.bf16.msra.mxu0 0
      %1647 = vmatprep.subr.bf16.mxu0 0
      %1648 = vmatpush1.bf16.msra.mxu0 0
      %1649 = vmatprep.mubr.bf16.mxu0 0
      %1650 = vmatmul.mubr.bf16.gmra.mrb[0].mxu0 %v1615
      %v1651 = vpop.f32.mrb[0].mxu0
      %v1652 = vadd.f32 0.0, %v1651
      %v1653 = vpop.f32.mrb[0].mxu0
      %v1654 = vpop.f32.mrb[0].mxu0
      %v1655 = vadd.f32 0.0, %v1654
      %v1656 = vpop.f32.mrb[0].mxu0
      %1657 = vdwg.mxu0
      %v1660 = vunpack.c.l.b16 %v1578
      %v1661 = vunpack.c.l.b16 %v1579
      %v1662 = vpack.c.b16 %v1661, %v1660
      %v1665 = vsel %vm1207, %v1561, 0
      %1667 = vmatprep.subr.bf16.mxu0 0
      %1668 = vmatpush1.bf16.msra.mxu0 %v1662
      %1669 = vmatprep.subr.bf16.mxu0 0
      %1670 = vmatpush1.bf16.msra.mxu0 0
      %1671 = vmatprep.subr.bf16.mxu0 0
      %1672 = vmatpush1.bf16.msra.mxu0 0
      %1673 = vmatprep.subr.bf16.mxu0 0
      %1674 = vmatpush1.bf16.msra.mxu0 0
      %1675 = vmatprep.subr.bf16.mxu0 0
      %1676 = vmatpush1.bf16.msra.mxu0 0
      %1677 = vmatprep.subr.bf16.mxu0 0
      %1678 = vmatpush1.bf16.msra.mxu0 0
      %1679 = vmatprep.subr.bf16.mxu0 0
      %1680 = vmatpush1.bf16.msra.mxu0 0
      %1681 = vmatprep.subr.bf16.mxu0 0
      %1682 = vmatpush1.bf16.msra.mxu0 0
      %1683 = vmatprep.subr.bf16.mxu0 0
      %1684 = vmatpush1.bf16.msra.mxu0 0
      %1685 = vmatprep.subr.bf16.mxu0 0
      %1686 = vmatpush1.bf16.msra.mxu0 0
      %1687 = vmatprep.subr.bf16.mxu0 0
      %1688 = vmatpush1.bf16.msra.mxu0 0
      %1689 = vmatprep.subr.bf16.mxu0 0
      %1690 = vmatpush1.bf16.msra.mxu0 0
      %1691 = vmatprep.subr.bf16.mxu0 0
      %1692 = vmatpush1.bf16.msra.mxu0 0
      %1693 = vmatprep.subr.bf16.mxu0 0
      %1694 = vmatpush1.bf16.msra.mxu0 0
      %1695 = vmatprep.subr.bf16.mxu0 0
      %1696 = vmatpush1.bf16.msra.mxu0 0
      %1697 = vmatprep.subr.bf16.mxu0 0
      %1698 = vmatpush1.bf16.msra.mxu0 0
      %1699 = vmatprep.mubr.bf16.mxu0 0
      %1700 = vmatmul.mubr.bf16.gmra.mrb[0].mxu0 %v1665
      %v1701 = vpop.f32.mrb[0].mxu0
      %v1702 = vadd.f32 0.0, %v1701
      %v1703 = vpop.f32.mrb[0].mxu0
      %v1704 = vpop.f32.mrb[0].mxu0
      %v1705 = vadd.f32 0.0, %v1704
      %v1706 = vpop.f32.mrb[0].mxu0
      %1707 = vdwg.mxu0
      %v1710 = vunpack.c.l.b16 %v1580
      %v1711 = vunpack.c.l.b16 %v1581
      %v1712 = vpack.c.b16 %v1711, %v1710
      %v1715 = vsel %vm1207, %v1562, 0
      %1717 = vmatprep.subr.bf16.mxu0 0
      %1718 = vmatpush1.bf16.msra.mxu0 %v1712
      %1719 = vmatprep.subr.bf16.mxu0 0
      %1720 = vmatpush1.bf16.msra.mxu0 0
      %1721 = vmatprep.subr.bf16.mxu0 0
      %1722 = vmatpush1.bf16.msra.mxu0 0
      %1723 = vmatprep.subr.bf16.mxu0 0
      %1724 = vmatpush1.bf16.msra.mxu0 0
      %1725 = vmatprep.subr.bf16.mxu0 0
      %1726 = vmatpush1.bf16.msra.mxu0 0
      %1727 = vmatprep.subr.bf16.mxu0 0
      %1728 = vmatpush1.bf16.msra.mxu0 0
      %1729 = vmatprep.subr.bf16.mxu0 0
      %1730 = vmatpush1.bf16.msra.mxu0 0
      %1731 = vmatprep.subr.bf16.mxu0 0
      %1732 = vmatpush1.bf16.msra.mxu0 0
      %1733 = vmatprep.subr.bf16.mxu0 0
      %1734 = vmatpush1.bf16.msra.mxu0 0
      %1735 = vmatprep.subr.bf16.mxu0 0
      %1736 = vmatpush1.bf16.msra.mxu0 0
      %1737 = vmatprep.subr.bf16.mxu0 0
      %1738 = vmatpush1.bf16.msra.mxu0 0
      %1739 = vmatprep.subr.bf16.mxu0 0
      %1740 = vmatpush1.bf16.msra.mxu0 0
      %1741 = vmatprep.subr.bf16.mxu0 0
      %1742 = vmatpush1.bf16.msra.mxu0 0
      %1743 = vmatprep.subr.bf16.mxu0 0
      %1744 = vmatpush1.bf16.msra.mxu0 0
      %1745 = vmatprep.subr.bf16.mxu0 0
      %1746 = vmatpush1.bf16.msra.mxu0 0
      %1747 = vmatprep.subr.bf16.mxu0 0
      %1748 = vmatpush1.bf16.msra.mxu0 0
      %1749 = vmatprep.mubr.bf16.mxu0 0
      %1750 = vmatmul.mubr.bf16.gmra.mrb[0].mxu0 %v1715
      %v1751 = vpop.f32.mrb[0].mxu0
      %v1752 = vadd.f32 0.0, %v1751
      %v1753 = vpop.f32.mrb[0].mxu0
      %v1754 = vpop.f32.mrb[0].mxu0
      %v1755 = vadd.f32 0.0, %v1754
      %v1756 = vpop.f32.mrb[0].mxu0
      %1757 = vdwg.mxu0
      %v1760 = vunpack.c.l.b16 %v1582
      %v1761 = vunpack.c.l.b16 %v1583
      %v1762 = vpack.c.b16 %v1761, %v1760
      %v1765 = vsel %vm1207, %v1563, 0
      %1767 = vmatprep.subr.bf16.mxu0 0
      %1768 = vmatpush1.bf16.msra.mxu0 %v1762
      %1769 = vmatprep.subr.bf16.mxu0 0
      %1770 = vmatpush1.bf16.msra.mxu0 0
      %1771 = vmatprep.subr.bf16.mxu0 0
      %1772 = vmatpush1.bf16.msra.mxu0 0
      %1773 = vmatprep.subr.bf16.mxu0 0
      %1774 = vmatpush1.bf16.msra.mxu0 0
      %1775 = vmatprep.subr.bf16.mxu0 0
      %1776 = vmatpush1.bf16.msra.mxu0 0
      %1777 = vmatprep.subr.bf16.mxu0 0
      %1778 = vmatpush1.bf16.msra.mxu0 0
      %1779 = vmatprep.subr.bf16.mxu0 0
      %1780 = vmatpush1.bf16.msra.mxu0 0
      %1781 = vmatprep.subr.bf16.mxu0 0
      %1782 = vmatpush1.bf16.msra.mxu0 0
      %1783 = vmatprep.subr.bf16.mxu0 0
      %1784 = vmatpush1.bf16.msra.mxu0 0
      %1785 = vmatprep.subr.bf16.mxu0 0
      %1786 = vmatpush1.bf16.msra.mxu0 0
      %1787 = vmatprep.subr.bf16.mxu0 0
      %1788 = vmatpush1.bf16.msra.mxu0 0
      %1789 = vmatprep.subr.bf16.mxu0 0
      %1790 = vmatpush1.bf16.msra.mxu0 0
      %1791 = vmatprep.subr.bf16.mxu0 0
      %1792 = vmatpush1.bf16.msra.mxu0 0
      %1793 = vmatprep.subr.bf16.mxu0 0
      %1794 = vmatpush1.bf16.msra.mxu0 0
      %1795 = vmatprep.subr.bf16.mxu0 0
      %1796 = vmatpush1.bf16.msra.mxu0 0
      %1797 = vmatprep.subr.bf16.mxu0 0
      %1798 = vmatpush1.bf16.msra.mxu0 0
      %1799 = vmatprep.mubr.bf16.mxu0 0
      %1800 = vmatmul.mubr.bf16.gmra.mrb[0].mxu0 %v1765
      %v1801 = vpop.f32.mrb[0].mxu0
      %v1802 = vadd.f32 0.0, %v1801
      %v1803 = vpop.f32.mrb[0].mxu0
      %v1804 = vpop.f32.mrb[0].mxu0
      %v1805 = vadd.f32 0.0, %v1804
      %v1806 = vpop.f32.mrb[0].mxu0
      %1807 = vdwg.mxu0
      %v1810 = vunpack.c.l.b16 %v1584
      %v1811 = vunpack.c.l.b16 %v1585
      %v1812 = vpack.c.b16 %v1811, %v1810
      %v1815 = vsel %vm1207, %v1564, 0
      %1817 = vmatprep.subr.bf16.mxu0 0
      %1818 = vmatpush1.bf16.msra.mxu0 %v1812
      %1819 = vmatprep.subr.bf16.mxu0 0
      %1820 = vmatpush1.bf16.msra.mxu0 0
      %1821 = vmatprep.subr.bf16.mxu0 0
      %1822 = vmatpush1.bf16.msra.mxu0 0
      %1823 = vmatprep.subr.bf16.mxu0 0
      %1824 = vmatpush1.bf16.msra.mxu0 0
      %1825 = vmatprep.subr.bf16.mxu0 0
      %1826 = vmatpush1.bf16.msra.mxu0 0
      %1827 = vmatprep.subr.bf16.mxu0 0
      %1828 = vmatpush1.bf16.msra.mxu0 0
      %1829 = vmatprep.subr.bf16.mxu0 0
      %1830 = vmatpush1.bf16.msra.mxu0 0
      %1831 = vmatprep.subr.bf16.mxu0 0
      %1832 = vmatpush1.bf16.msra.mxu0 0
      %1833 = vmatprep.subr.bf16.mxu0 0
      %1834 = vmatpush1.bf16.msra.mxu0 0
      %1835 = vmatprep.subr.bf16.mxu0 0
      %1836 = vmatpush1.bf16.msra.mxu0 0
      %1837 = vmatprep.subr.bf16.mxu0 0
      %1838 = vmatpush1.bf16.msra.mxu0 0
      %1839 = vmatprep.subr.bf16.mxu0 0
      %1840 = vmatpush1.bf16.msra.mxu0 0
      %1841 = vmatprep.subr.bf16.mxu0 0
      %1842 = vmatpush1.bf16.msra.mxu0 0
      %1843 = vmatprep.subr.bf16.mxu0 0
      %1844 = vmatpush1.bf16.msra.mxu0 0
      %1845 = vmatprep.subr.bf16.mxu0 0
      %1846 = vmatpush1.bf16.msra.mxu0 0
      %1847 = vmatprep.subr.bf16.mxu0 0
      %1848 = vmatpush1.bf16.msra.mxu0 0
      %1849 = vmatprep.mubr.bf16.mxu0 0
      %1850 = vmatmul.mubr.bf16.gmra.mrb[0].mxu0 %v1815
      %v1851 = vpop.f32.mrb[0].mxu0
      %v1852 = vadd.f32 0.0, %v1851
      %v1853 = vpop.f32.mrb[0].mxu0
      %v1854 = vpop.f32.mrb[0].mxu0
      %v1855 = vadd.f32 0.0, %v1854
      %v1856 = vpop.f32.mrb[0].mxu0
      %1857 = vdwg.mxu0
      %v1860 = vunpack.c.l.b16 %v1586
      %v1861 = vunpack.c.l.b16 %v1587
      %v1862 = vpack.c.b16 %v1861, %v1860
      %v1865 = vsel %vm1207, %v1565, 0
      %1867 = vmatprep.subr.bf16.mxu0 0
      %1868 = vmatpush1.bf16.msra.mxu0 %v1862
      %1869 = vmatprep.subr.bf16.mxu0 0
      %1870 = vmatpush1.bf16.msra.mxu0 0
      %1871 = vmatprep.subr.bf16.mxu0 0
      %1872 = vmatpush1.bf16.msra.mxu0 0
      %1873 = vmatprep.subr.bf16.mxu0 0
      %1874 = vmatpush1.bf16.msra.mxu0 0
      %1875 = vmatprep.subr.bf16.mxu0 0
      %1876 = vmatpush1.bf16.msra.mxu0 0
      %1877 = vmatprep.subr.bf16.mxu0 0
      %1878 = vmatpush1.bf16.msra.mxu0 0
      %1879 = vmatprep.subr.bf16.mxu0 0
      %1880 = vmatpush1.bf16.msra.mxu0 0
      %1881 = vmatprep.subr.bf16.mxu0 0
      %1882 = vmatpush1.bf16.msra.mxu0 0
      %1883 = vmatprep.subr.bf16.mxu0 0
      %1884 = vmatpush1.bf16.msra.mxu0 0
      %1885 = vmatprep.subr.bf16.mxu0 0
      %1886 = vmatpush1.bf16.msra.mxu0 0
      %1887 = vmatprep.subr.bf16.mxu0 0
      %1888 = vmatpush1.bf16.msra.mxu0 0
      %1889 = vmatprep.subr.bf16.mxu0 0
      %1890 = vmatpush1.bf16.msra.mxu0 0
      %1891 = vmatprep.subr.bf16.mxu0 0
      %1892 = vmatpush1.bf16.msra.mxu0 0
      %1893 = vmatprep.subr.bf16.mxu0 0
      %1894 = vmatpush1.bf16.msra.mxu0 0
      %1895 = vmatprep.subr.bf16.mxu0 0
      %1896 = vmatpush1.bf16.msra.mxu0 0
      %1897 = vmatprep.subr.bf16.mxu0 0
      %1898 = vmatpush1.bf16.msra.mxu0 0
      %1899 = vmatprep.mubr.bf16.mxu0 0
      %1900 = vmatmul.mubr.bf16.gmra.mrb[0].mxu0 %v1865
      %v1901 = vpop.f32.mrb[0].mxu0
      %v1902 = vadd.f32 0.0, %v1901
      %v1903 = vpop.f32.mrb[0].mxu0
      %v1904 = vpop.f32.mrb[0].mxu0
      %v1905 = vadd.f32 0.0, %v1904
      %v1906 = vpop.f32.mrb[0].mxu0
      %1907 = vdwg.mxu0
      %v1910 = vunpack.c.l.b16 %v1588
      %v1911 = vunpack.c.l.b16 %v1589
      %v1912 = vpack.c.b16 %v1911, %v1910
      %v1915 = vsel %vm1207, %v1566, 0
      %1917 = vmatprep.subr.bf16.mxu0 0
      %1918 = vmatpush1.bf16.msra.mxu0 %v1912
      %1919 = vmatprep.subr.bf16.mxu0 0
      %1920 = vmatpush1.bf16.msra.mxu0 0
      %1921 = vmatprep.subr.bf16.mxu0 0
      %1922 = vmatpush1.bf16.msra.mxu0 0
      %1923 = vmatprep.subr.bf16.mxu0 0
      %1924 = vmatpush1.bf16.msra.mxu0 0
      %1925 = vmatprep.subr.bf16.mxu0 0
      %1926 = vmatpush1.bf16.msra.mxu0 0
      %1927 = vmatprep.subr.bf16.mxu0 0
      %1928 = vmatpush1.bf16.msra.mxu0 0
      %1929 = vmatprep.subr.bf16.mxu0 0
      %1930 = vmatpush1.bf16.msra.mxu0 0
      %1931 = vmatprep.subr.bf16.mxu0 0
      %1932 = vmatpush1.bf16.msra.mxu0 0
      %1933 = vmatprep.subr.bf16.mxu0 0
      %1934 = vmatpush1.bf16.msra.mxu0 0
      %1935 = vmatprep.subr.bf16.mxu0 0
      %1936 = vmatpush1.bf16.msra.mxu0 0
      %1937 = vmatprep.subr.bf16.mxu0 0
      %1938 = vmatpush1.bf16.msra.mxu0 0
      %1939 = vmatprep.subr.bf16.mxu0 0
      %1940 = vmatpush1.bf16.msra.mxu0 0
      %1941 = vmatprep.subr.bf16.mxu0 0
      %1942 = vmatpush1.bf16.msra.mxu0 0
      %1943 = vmatprep.subr.bf16.mxu0 0
      %1944 = vmatpush1.bf16.msra.mxu0 0
      %1945 = vmatprep.subr.bf16.mxu0 0
      %1946 = vmatpush1.bf16.msra.mxu0 0
      %1947 = vmatprep.subr.bf16.mxu0 0
      %1948 = vmatpush1.bf16.msra.mxu0 0
      %1949 = vmatprep.mubr.bf16.mxu0 0
      %1950 = vmatmul.mubr.bf16.gmra.mrb[0].mxu0 %v1915
      %v1951 = vpop.f32.mrb[0].mxu0
      %v1952 = vadd.f32 0.0, %v1951
      %v1953 = vpop.f32.mrb[0].mxu0
      %v1954 = vpop.f32.mrb[0].mxu0
      %v1955 = vadd.f32 0.0, %v1954
      %v1956 = vpop.f32.mrb[0].mxu0
      %1957 = vdwg.mxu0
      %v1960 = vunpack.c.l.b16 %v1590
      %v1961 = vunpack.c.l.b16 %v1591
      %v1962 = vpack.c.b16 %v1961, %v1960
      %v1965 = vsel %vm1207, %v1567, 0
      %1967 = vmatprep.subr.bf16.mxu0 0
      %1968 = vmatpush1.bf16.msra.mxu0 %v1962
      %1969 = vmatprep.subr.bf16.mxu0 0
      %1970 = vmatpush1.bf16.msra.mxu0 0
      %1971 = vmatprep.subr.bf16.mxu0 0
      %1972 = vmatpush1.bf16.msra.mxu0 0
      %1973 = vmatprep.subr.bf16.mxu0 0
      %1974 = vmatpush1.bf16.msra.mxu0 0
      %1975 = vmatprep.subr.bf16.mxu0 0
      %1976 = vmatpush1.bf16.msra.mxu0 0
      %1977 = vmatprep.subr.bf16.mxu0 0
      %1978 = vmatpush1.bf16.msra.mxu0 0
      %1979 = vmatprep.subr.bf16.mxu0 0
      %1980 = vmatpush1.bf16.msra.mxu0 0
      %1981 = vmatprep.subr.bf16.mxu0 0
      %1982 = vmatpush1.bf16.msra.mxu0 0
      %1983 = vmatprep.subr.bf16.mxu0 0
      %1984 = vmatpush1.bf16.msra.mxu0 0
      %1985 = vmatprep.subr.bf16.mxu0 0
      %1986 = vmatpush1.bf16.msra.mxu0 0
      %1987 = vmatprep.subr.bf16.mxu0 0
      %1988 = vmatpush1.bf16.msra.mxu0 0
      %1989 = vmatprep.subr.bf16.mxu0 0
      %1990 = vmatpush1.bf16.msra.mxu0 0
      %1991 = vmatprep.subr.bf16.mxu0 0
      %1992 = vmatpush1.bf16.msra.mxu0 0
      %1993 = vmatprep.subr.bf16.mxu0 0
      %1994 = vmatpush1.bf16.msra.mxu0 0
      %1995 = vmatprep.subr.bf16.mxu0 0
      %1996 = vmatpush1.bf16.msra.mxu0 0
      %1997 = vmatprep.subr.bf16.mxu0 0
      %1998 = vmatpush1.bf16.msra.mxu0 0
      %1999 = vmatprep.mubr.bf16.mxu0 0
      %2000 = vmatmul.mubr.bf16.gmra.mrb[0].mxu0 %v1965
      %v2001 = vpop.f32.mrb[0].mxu0
      %v2002 = vadd.f32 0.0, %v2001
      %v2003 = vpop.f32.mrb[0].mxu0
      %v2004 = vpop.f32.mrb[0].mxu0
      %v2005 = vadd.f32 0.0, %v2004
      %v2006 = vpop.f32.mrb[0].mxu0
      %2007 = vdwg.mxu0
      %v2010 = vunpack.c.l.b16 %v1592
      %v2011 = vunpack.c.l.b16 %v1593
      %v2012 = vpack.c.b16 %v2011, %v2010
      %v2015 = vsel %vm1207, %v1568, 0
      %2017 = vmatprep.subr.bf16.mxu0 0
      %2018 = vmatpush1.bf16.msra.mxu0 %v2012
      %2019 = vmatprep.subr.bf16.mxu0 0
      %2020 = vmatpush1.bf16.msra.mxu0 0
      %2021 = vmatprep.subr.bf16.mxu0 0
      %2022 = vmatpush1.bf16.msra.mxu0 0
      %2023 = vmatprep.subr.bf16.mxu0 0
      %2024 = vmatpush1.bf16.msra.mxu0 0
      %2025 = vmatprep.subr.bf16.mxu0 0
      %2026 = vmatpush1.bf16.msra.mxu0 0
      %2027 = vmatprep.subr.bf16.mxu0 0
      %2028 = vmatpush1.bf16.msra.mxu0 0
      %2029 = vmatprep.subr.bf16.mxu0 0
      %2030 = vmatpush1.bf16.msra.mxu0 0
      %2031 = vmatprep.subr.bf16.mxu0 0
      %2032 = vmatpush1.bf16.msra.mxu0 0
      %2033 = vmatprep.subr.bf16.mxu0 0
      %2034 = vmatpush1.bf16.msra.mxu0 0
      %2035 = vmatprep.subr.bf16.mxu0 0
      %2036 = vmatpush1.bf16.msra.mxu0 0
      %2037 = vmatprep.subr.bf16.mxu0 0
      %2038 = vmatpush1.bf16.msra.mxu0 0
      %2039 = vmatprep.subr.bf16.mxu0 0
      %2040 = vmatpush1.bf16.msra.mxu0 0
      %2041 = vmatprep.subr.bf16.mxu0 0
      %2042 = vmatpush1.bf16.msra.mxu0 0
      %2043 = vmatprep.subr.bf16.mxu0 0
      %2044 = vmatpush1.bf16.msra.mxu0 0
      %2045 = vmatprep.subr.bf16.mxu0 0
      %2046 = vmatpush1.bf16.msra.mxu0 0
      %2047 = vmatprep.subr.bf16.mxu0 0
      %2048 = vmatpush1.bf16.msra.mxu0 0
      %2049 = vmatprep.mubr.bf16.mxu0 0
      %2050 = vmatmul.mubr.bf16.gmra.mrb[0].mxu0 %v2015
      %v2051 = vpop.f32.mrb[0].mxu0
      %v2052 = vadd.f32 0.0, %v2051
      %v2053 = vpop.f32.mrb[0].mxu0
      %v2054 = vpop.f32.mrb[0].mxu0
      %v2055 = vadd.f32 0.0, %v2054
      %v2056 = vpop.f32.mrb[0].mxu0
      %2057 = vdwg.mxu0
      %v2060 = vunpack.c.l.b16 %v1594
      %v2061 = vunpack.c.l.b16 %v1595
      %v2062 = vpack.c.b16 %v2061, %v2060
      %v2065 = vsel %vm1207, %v1569, 0
      %2067 = vmatprep.subr.bf16.mxu0 0
      %2068 = vmatpush1.bf16.msra.mxu0 %v2062
      %2069 = vmatprep.subr.bf16.mxu0 0
      %2070 = vmatpush1.bf16.msra.mxu0 0
      %2071 = vmatprep.subr.bf16.mxu0 0
      %2072 = vmatpush1.bf16.msra.mxu0 0
      %2073 = vmatprep.subr.bf16.mxu0 0
      %2074 = vmatpush1.bf16.msra.mxu0 0
      %2075 = vmatprep.subr.bf16.mxu0 0
      %2076 = vmatpush1.bf16.msra.mxu0 0
      %2077 = vmatprep.subr.bf16.mxu0 0
      %2078 = vmatpush1.bf16.msra.mxu0 0
      %2079 = vmatprep.subr.bf16.mxu0 0
      %2080 = vmatpush1.bf16.msra.mxu0 0
      %2081 = vmatprep.subr.bf16.mxu0 0
      %2082 = vmatpush1.bf16.msra.mxu0 0
      %2083 = vmatprep.subr.bf16.mxu0 0
      %2084 = vmatpush1.bf16.msra.mxu0 0
      %2085 = vmatprep.subr.bf16.mxu0 0
      %2086 = vmatpush1.bf16.msra.mxu0 0
      %2087 = vmatprep.subr.bf16.mxu0 0
      %2088 = vmatpush1.bf16.msra.mxu0 0
      %2089 = vmatprep.subr.bf16.mxu0 0
      %2090 = vmatpush1.bf16.msra.mxu0 0
      %2091 = vmatprep.subr.bf16.mxu0 0
      %2092 = vmatpush1.bf16.msra.mxu0 0
      %2093 = vmatprep.subr.bf16.mxu0 0
      %2094 = vmatpush1.bf16.msra.mxu0 0
      %2095 = vmatprep.subr.bf16.mxu0 0
      %2096 = vmatpush1.bf16.msra.mxu0 0
      %2097 = vmatprep.subr.bf16.mxu0 0
      %2098 = vmatpush1.bf16.msra.mxu0 0
      %2099 = vmatprep.mubr.bf16.mxu0 0
      %2100 = vmatmul.mubr.bf16.gmra.mrb[0].mxu0 %v2065
      %v2101 = vpop.f32.mrb[0].mxu0
      %v2102 = vadd.f32 0.0, %v2101
      %v2103 = vpop.f32.mrb[0].mxu0
      %v2104 = vpop.f32.mrb[0].mxu0
      %v2105 = vadd.f32 0.0, %v2104
      %v2106 = vpop.f32.mrb[0].mxu0
      %2107 = vdwg.mxu0
      %v2110 = vunpack.c.l.b16 %v1596
      %v2111 = vunpack.c.l.b16 %v1597
      %v2112 = vpack.c.b16 %v2111, %v2110
      %v2115 = vsel %vm1207, %v1570, 0
      %2117 = vmatprep.subr.bf16.mxu0 0
      %2118 = vmatpush1.bf16.msra.mxu0 %v2112
      %2119 = vmatprep.subr.bf16.mxu0 0
      %2120 = vmatpush1.bf16.msra.mxu0 0
      %2121 = vmatprep.subr.bf16.mxu0 0
      %2122 = vmatpush1.bf16.msra.mxu0 0
      %2123 = vmatprep.subr.bf16.mxu0 0
      %2124 = vmatpush1.bf16.msra.mxu0 0
      %2125 = vmatprep.subr.bf16.mxu0 0
      %2126 = vmatpush1.bf16.msra.mxu0 0
      %2127 = vmatprep.subr.bf16.mxu0 0
      %2128 = vmatpush1.bf16.msra.mxu0 0
      %2129 = vmatprep.subr.bf16.mxu0 0
      %2130 = vmatpush1.bf16.msra.mxu0 0
      %2131 = vmatprep.subr.bf16.mxu0 0
      %2132 = vmatpush1.bf16.msra.mxu0 0
      %2133 = vmatprep.subr.bf16.mxu0 0
      %2134 = vmatpush1.bf16.msra.mxu0 0
      %2135 = vmatprep.subr.bf16.mxu0 0
      %2136 = vmatpush1.bf16.msra.mxu0 0
      %2137 = vmatprep.subr.bf16.mxu0 0
      %2138 = vmatpush1.bf16.msra.mxu0 0
      %2139 = vmatprep.subr.bf16.mxu0 0
      %2140 = vmatpush1.bf16.msra.mxu0 0
      %2141 = vmatprep.subr.bf16.mxu0 0
      %2142 = vmatpush1.bf16.msra.mxu0 0
      %2143 = vmatprep.subr.bf16.mxu0 0
      %2144 = vmatpush1.bf16.msra.mxu0 0
      %2145 = vmatprep.subr.bf16.mxu0 0
      %2146 = vmatpush1.bf16.msra.mxu0 0
      %2147 = vmatprep.subr.bf16.mxu0 0
      %2148 = vmatpush1.bf16.msra.mxu0 0
      %2149 = vmatprep.mubr.bf16.mxu0 0
      %2150 = vmatmul.mubr.bf16.gmra.mrb[0].mxu0 %v2115
      %v2151 = vpop.f32.mrb[0].mxu0
      %v2152 = vadd.f32 0.0, %v2151
      %v2153 = vpop.f32.mrb[0].mxu0
      %v2154 = vpop.f32.mrb[0].mxu0
      %v2155 = vadd.f32 0.0, %v2154
      %v2156 = vpop.f32.mrb[0].mxu0
      %2157 = vdwg.mxu0
      %v2160 = vunpack.c.l.b16 %v1598
      %v2161 = vunpack.c.l.b16 %v1599
      %v2162 = vpack.c.b16 %v2161, %v2160
      %v2165 = vsel %vm1207, %v1571, 0
      %2167 = vmatprep.subr.bf16.mxu0 0
      %2168 = vmatpush1.bf16.msra.mxu0 %v2162
      %2169 = vmatprep.subr.bf16.mxu0 0
      %2170 = vmatpush1.bf16.msra.mxu0 0
      %2171 = vmatprep.subr.bf16.mxu0 0
      %2172 = vmatpush1.bf16.msra.mxu0 0
      %2173 = vmatprep.subr.bf16.mxu0 0
      %2174 = vmatpush1.bf16.msra.mxu0 0
      %2175 = vmatprep.subr.bf16.mxu0 0
      %2176 = vmatpush1.bf16.msra.mxu0 0
      %2177 = vmatprep.subr.bf16.mxu0 0
      %2178 = vmatpush1.bf16.msra.mxu0 0
      %2179 = vmatprep.subr.bf16.mxu0 0
      %2180 = vmatpush1.bf16.msra.mxu0 0
      %2181 = vmatprep.subr.bf16.mxu0 0
      %2182 = vmatpush1.bf16.msra.mxu0 0
      %2183 = vmatprep.subr.bf16.mxu0 0
      %2184 = vmatpush1.bf16.msra.mxu0 0
      %2185 = vmatprep.subr.bf16.mxu0 0
      %2186 = vmatpush1.bf16.msra.mxu0 0
      %2187 = vmatprep.subr.bf16.mxu0 0
      %2188 = vmatpush1.bf16.msra.mxu0 0
      %2189 = vmatprep.subr.bf16.mxu0 0
      %2190 = vmatpush1.bf16.msra.mxu0 0
      %2191 = vmatprep.subr.bf16.mxu0 0
      %2192 = vmatpush1.bf16.msra.mxu0 0
      %2193 = vmatprep.subr.bf16.mxu0 0
      %2194 = vmatpush1.bf16.msra.mxu0 0
      %2195 = vmatprep.subr.bf16.mxu0 0
      %2196 = vmatpush1.bf16.msra.mxu0 0
      %2197 = vmatprep.subr.bf16.mxu0 0
      %2198 = vmatpush1.bf16.msra.mxu0 0
      %2199 = vmatprep.mubr.bf16.mxu0 0
      %2200 = vmatmul.mubr.bf16.gmra.mrb[0].mxu0 %v2165
      %v2201 = vpop.f32.mrb[0].mxu0
      %v2202 = vadd.f32 0.0, %v2201
      %v2203 = vpop.f32.mrb[0].mxu0
      %v2204 = vpop.f32.mrb[0].mxu0
      %v2205 = vadd.f32 0.0, %v2204
      %v2206 = vpop.f32.mrb[0].mxu0
      %2207 = vdwg.mxu0
      %v2210 = vunpack.c.l.b16 %v1600
      %v2211 = vunpack.c.l.b16 %v1601
      %v2212 = vpack.c.b16 %v2211, %v2210
      %v2215 = vsel %vm1207, %v1572, 0
      %2217 = vmatprep.subr.bf16.mxu0 0
      %2218 = vmatpush1.bf16.msra.mxu0 %v2212
      %2219 = vmatprep.subr.bf16.mxu0 0
      %2220 = vmatpush1.bf16.msra.mxu0 0
      %2221 = vmatprep.subr.bf16.mxu0 0
      %2222 = vmatpush1.bf16.msra.mxu0 0
      %2223 = vmatprep.subr.bf16.mxu0 0
      %2224 = vmatpush1.bf16.msra.mxu0 0
      %2225 = vmatprep.subr.bf16.mxu0 0
      %2226 = vmatpush1.bf16.msra.mxu0 0
      %2227 = vmatprep.subr.bf16.mxu0 0
      %2228 = vmatpush1.bf16.msra.mxu0 0
      %2229 = vmatprep.subr.bf16.mxu0 0
      %2230 = vmatpush1.bf16.msra.mxu0 0
      %2231 = vmatprep.subr.bf16.mxu0 0
      %2232 = vmatpush1.bf16.msra.mxu0 0
      %2233 = vmatprep.subr.bf16.mxu0 0
      %2234 = vmatpush1.bf16.msra.mxu0 0
      %2235 = vmatprep.subr.bf16.mxu0 0
      %2236 = vmatpush1.bf16.msra.mxu0 0
      %2237 = vmatprep.subr.bf16.mxu0 0
      %2238 = vmatpush1.bf16.msra.mxu0 0
      %2239 = vmatprep.subr.bf16.mxu0 0
      %2240 = vmatpush1.bf16.msra.mxu0 0
      %2241 = vmatprep.subr.bf16.mxu0 0
      %2242 = vmatpush1.bf16.msra.mxu0 0
      %2243 = vmatprep.subr.bf16.mxu0 0
      %2244 = vmatpush1.bf16.msra.mxu0 0
      %2245 = vmatprep.subr.bf16.mxu0 0
      %2246 = vmatpush1.bf16.msra.mxu0 0
      %2247 = vmatprep.subr.bf16.mxu0 0
      %2248 = vmatpush1.bf16.msra.mxu0 0
      %2249 = vmatprep.mubr.bf16.mxu0 0
      %2250 = vmatmul.mubr.bf16.gmra.mrb[0].mxu0 %v2215
      %v2251 = vpop.f32.mrb[0].mxu0
      %v2252 = vadd.f32 0.0, %v2251
      %v2253 = vpop.f32.mrb[0].mxu0
      %v2254 = vpop.f32.mrb[0].mxu0
      %v2255 = vadd.f32 0.0, %v2254
      %v2256 = vpop.f32.mrb[0].mxu0
      %2257 = vdwg.mxu0
      %v2260 = vunpack.c.l.b16 %v1602
      %v2261 = vunpack.c.l.b16 %v1603
      %v2262 = vpack.c.b16 %v2261, %v2260
      %v2265 = vsel %vm1207, %v1573, 0
      %2267 = vmatprep.subr.bf16.mxu0 0
      %2268 = vmatpush1.bf16.msra.mxu0 %v2262
      %2269 = vmatprep.subr.bf16.mxu0 0
      %2270 = vmatpush1.bf16.msra.mxu0 0
      %2271 = vmatprep.subr.bf16.mxu0 0
      %2272 = vmatpush1.bf16.msra.mxu0 0
      %2273 = vmatprep.subr.bf16.mxu0 0
      %2274 = vmatpush1.bf16.msra.mxu0 0
      %2275 = vmatprep.subr.bf16.mxu0 0
      %2276 = vmatpush1.bf16.msra.mxu0 0
      %2277 = vmatprep.subr.bf16.mxu0 0
      %2278 = vmatpush1.bf16.msra.mxu0 0
      %2279 = vmatprep.subr.bf16.mxu0 0
      %2280 = vmatpush1.bf16.msra.mxu0 0
      %2281 = vmatprep.subr.bf16.mxu0 0
      %2282 = vmatpush1.bf16.msra.mxu0 0
      %2283 = vmatprep.subr.bf16.mxu0 0
      %2284 = vmatpush1.bf16.msra.mxu0 0
      %2285 = vmatprep.subr.bf16.mxu0 0
      %2286 = vmatpush1.bf16.msra.mxu0 0
      %2287 = vmatprep.subr.bf16.mxu0 0
      %2288 = vmatpush1.bf16.msra.mxu0 0
      %2289 = vmatprep.subr.bf16.mxu0 0
      %2290 = vmatpush1.bf16.msra.mxu0 0
      %2291 = vmatprep.subr.bf16.mxu0 0
      %2292 = vmatpush1.bf16.msra.mxu0 0
      %2293 = vmatprep.subr.bf16.mxu0 0
      %2294 = vmatpush1.bf16.msra.mxu0 0
      %2295 = vmatprep.subr.bf16.mxu0 0
      %2296 = vmatpush1.bf16.msra.mxu0 0
      %2297 = vmatprep.subr.bf16.mxu0 0
      %2298 = vmatpush1.bf16.msra.mxu0 0
      %2299 = vmatprep.mubr.bf16.mxu0 0
      %2300 = vmatmul.mubr.bf16.gmra.mrb[0].mxu0 %v2265
      %v2301 = vpop.f32.mrb[0].mxu0
      %v2302 = vadd.f32 0.0, %v2301
      %v2303 = vpop.f32.mrb[0].mxu0
      %v2304 = vpop.f32.mrb[0].mxu0
      %v2305 = vadd.f32 0.0, %v2304
      %v2306 = vpop.f32.mrb[0].mxu0
      %2307 = vdwg.mxu0
      %v2310 = vunpack.c.l.b16 %v1604
      %v2311 = vunpack.c.l.b16 %v1605
      %v2312 = vpack.c.b16 %v2311, %v2310
      %v2315 = vsel %vm1207, %v1574, 0
      %2317 = vmatprep.subr.bf16.mxu0 0
      %2318 = vmatpush1.bf16.msra.mxu0 %v2312
      %2319 = vmatprep.subr.bf16.mxu0 0
      %2320 = vmatpush1.bf16.msra.mxu0 0
      %2321 = vmatprep.subr.bf16.mxu0 0
      %2322 = vmatpush1.bf16.msra.mxu0 0
      %2323 = vmatprep.subr.bf16.mxu0 0
      %2324 = vmatpush1.bf16.msra.mxu0 0
      %2325 = vmatprep.subr.bf16.mxu0 0
      %2326 = vmatpush1.bf16.msra.mxu0 0
      %2327 = vmatprep.subr.bf16.mxu0 0
      %2328 = vmatpush1.bf16.msra.mxu0 0
      %2329 = vmatprep.subr.bf16.mxu0 0
      %2330 = vmatpush1.bf16.msra.mxu0 0
      %2331 = vmatprep.subr.bf16.mxu0 0
      %2332 = vmatpush1.bf16.msra.mxu0 0
      %2333 = vmatprep.subr.bf16.mxu0 0
      %2334 = vmatpush1.bf16.msra.mxu0 0
      %2335 = vmatprep.subr.bf16.mxu0 0
      %2336 = vmatpush1.bf16.msra.mxu0 0
      %2337 = vmatprep.subr.bf16.mxu0 0
      %2338 = vmatpush1.bf16.msra.mxu0 0
      %2339 = vmatprep.subr.bf16.mxu0 0
      %2340 = vmatpush1.bf16.msra.mxu0 0
      %2341 = vmatprep.subr.bf16.mxu0 0
      %2342 = vmatpush1.bf16.msra.mxu0 0
      %2343 = vmatprep.subr.bf16.mxu0 0
      %2344 = vmatpush1.bf16.msra.mxu0 0
      %2345 = vmatprep.subr.bf16.mxu0 0
      %2346 = vmatpush1.bf16.msra.mxu0 0
      %2347 = vmatprep.subr.bf16.mxu0 0
      %2348 = vmatpush1.bf16.msra.mxu0 0
      %2349 = vmatprep.mubr.bf16.mxu0 0
      %2350 = vmatmul.mubr.bf16.gmra.mrb[0].mxu0 %v2315
      %v2351 = vpop.f32.mrb[0].mxu0
      %v2352 = vadd.f32 0.0, %v2351
      %v2353 = vpop.f32.mrb[0].mxu0
      %v2354 = vpop.f32.mrb[0].mxu0
      %v2355 = vadd.f32 0.0, %v2354
      %v2356 = vpop.f32.mrb[0].mxu0
      %2357 = vdwg.mxu0
      %v2360 = vunpack.c.l.b16 %v1606
      %v2361 = vunpack.c.l.b16 %v1607
      %v2362 = vpack.c.b16 %v2361, %v2360
      %v2365 = vsel %vm1207, %v1575, 0
      %2367 = vmatprep.subr.bf16.mxu0 0
      %2368 = vmatpush1.bf16.msra.mxu0 %v2362
      %2369 = vmatprep.subr.bf16.mxu0 0
      %2370 = vmatpush1.bf16.msra.mxu0 0
      %2371 = vmatprep.subr.bf16.mxu0 0
      %2372 = vmatpush1.bf16.msra.mxu0 0
      %2373 = vmatprep.subr.bf16.mxu0 0
      %2374 = vmatpush1.bf16.msra.mxu0 0
      %2375 = vmatprep.subr.bf16.mxu0 0
      %2376 = vmatpush1.bf16.msra.mxu0 0
      %2377 = vmatprep.subr.bf16.mxu0 0
      %2378 = vmatpush1.bf16.msra.mxu0 0
      %2379 = vmatprep.subr.bf16.mxu0 0
      %2380 = vmatpush1.bf16.msra.mxu0 0
      %2381 = vmatprep.subr.bf16.mxu0 0
      %2382 = vmatpush1.bf16.msra.mxu0 0
      %2383 = vmatprep.subr.bf16.mxu0 0
      %2384 = vmatpush1.bf16.msra.mxu0 0
      %2385 = vmatprep.subr.bf16.mxu0 0
      %2386 = vmatpush1.bf16.msra.mxu0 0
      %2387 = vmatprep.subr.bf16.mxu0 0
      %2388 = vmatpush1.bf16.msra.mxu0 0
      %2389 = vmatprep.subr.bf16.mxu0 0
      %2390 = vmatpush1.bf16.msra.mxu0 0
      %2391 = vmatprep.subr.bf16.mxu0 0
      %2392 = vmatpush1.bf16.msra.mxu0 0
      %2393 = vmatprep.subr.bf16.mxu0 0
      %2394 = vmatpush1.bf16.msra.mxu0 0
      %2395 = vmatprep.subr.bf16.mxu0 0
      %2396 = vmatpush1.bf16.msra.mxu0 0
      %2397 = vmatprep.subr.bf16.mxu0 0
      %2398 = vmatpush1.bf16.msra.mxu0 0
      %2399 = vmatprep.mubr.bf16.mxu0 0
      %2400 = vmatmul.mubr.bf16.gmra.mrb[0].mxu0 %v2365
      %v2401 = vpop.f32.mrb[0].mxu0
      %v2402 = vadd.f32 0.0, %v2401
      %v2403 = vpop.f32.mrb[0].mxu0
      %v2404 = vpop.f32.mrb[0].mxu0
      %v2405 = vadd.f32 0.0, %v2404
      %v2406 = vpop.f32.mrb[0].mxu0
      %2407 = vdwg.mxu0
      %v2408 = vpack.c.bf16 %v1655, %v1652
      %v2409 = vpack.c.bf16 %v1705, %v1702
      %v2410 = vpack.c.bf16 %v1755, %v1752
      %v2411 = vpack.c.bf16 %v1805, %v1802
      %v2412 = vpack.c.bf16 %v1855, %v1852
      %v2413 = vpack.c.bf16 %v1905, %v1902
      %v2414 = vpack.c.bf16 %v1955, %v1952
      %v2415 = vpack.c.bf16 %v2005, %v2002
      %v2416 = vpack.c.bf16 %v2055, %v2052
      %v2417 = vpack.c.bf16 %v2105, %v2102
      %v2418 = vpack.c.bf16 %v2155, %v2152
      %v2419 = vpack.c.bf16 %v2205, %v2202
      %v2420 = vpack.c.bf16 %v2255, %v2252
      %v2421 = vpack.c.bf16 %v2305, %v2302
      %v2422 = vpack.c.bf16 %v2355, %v2352
      %v2423 = vpack.c.bf16 %v2405, %v2402
      %v2440 = vunpack.c.l.b16 %v2408
      %v2441 = vunpack.c.h.b16 %v2408
      %v2442 = vunpack.c.l.b16 %v2409
      %v2443 = vunpack.c.h.b16 %v2409
      %v2444 = vunpack.c.l.b16 %v2410
      %v2445 = vunpack.c.h.b16 %v2410
      %v2446 = vunpack.c.l.b16 %v2411
      %v2447 = vunpack.c.h.b16 %v2411
      %v2448 = vunpack.c.l.b16 %v2412
      %v2449 = vunpack.c.h.b16 %v2412
      %v2450 = vunpack.c.l.b16 %v2413
      %v2451 = vunpack.c.h.b16 %v2413
      %v2452 = vunpack.c.l.b16 %v2414
      %v2453 = vunpack.c.h.b16 %v2414
      %v2454 = vunpack.c.l.b16 %v2415
      %v2455 = vunpack.c.h.b16 %v2415
      %v2456 = vunpack.c.l.b16 %v2416
      %v2457 = vunpack.c.h.b16 %v2416
      %v2458 = vunpack.c.l.b16 %v2417
      %v2459 = vunpack.c.h.b16 %v2417
      %v2460 = vunpack.c.l.b16 %v2418
      %v2461 = vunpack.c.h.b16 %v2418
      %v2462 = vunpack.c.l.b16 %v2419
      %v2463 = vunpack.c.h.b16 %v2419
      %v2464 = vunpack.c.l.b16 %v2420
      %v2465 = vunpack.c.h.b16 %v2420
      %v2466 = vunpack.c.l.b16 %v2421
      %v2467 = vunpack.c.h.b16 %v2421
      %v2468 = vunpack.c.l.b16 %v2422
      %v2469 = vunpack.c.h.b16 %v2422
      %v2470 = vunpack.c.l.b16 %v2423
      %v2471 = vunpack.c.h.b16 %v2423
      %v2472 = vpack.c.b16 %v2440, %v2440
      %v2473 = vpack.c.b16 %v2441, %v2441
      %v2474 = vpack.c.b16 %v2442, %v2442
      %v2475 = vpack.c.b16 %v2443, %v2443
      %v2476 = vpack.c.b16 %v2444, %v2444
      %v2477 = vpack.c.b16 %v2445, %v2445
      %v2478 = vpack.c.b16 %v2446, %v2446
      %v2479 = vpack.c.b16 %v2447, %v2447
      %v2480 = vpack.c.b16 %v2448, %v2448
      %v2481 = vpack.c.b16 %v2449, %v2449
      %v2482 = vpack.c.b16 %v2450, %v2450
      %v2483 = vpack.c.b16 %v2451, %v2451
      %v2484 = vpack.c.b16 %v2452, %v2452
      %v2485 = vpack.c.b16 %v2453, %v2453
      %v2486 = vpack.c.b16 %v2454, %v2454
      %v2487 = vpack.c.b16 %v2455, %v2455
      %v2488 = vpack.c.b16 %v2456, %v2456
      %v2489 = vpack.c.b16 %v2457, %v2457
      %v2490 = vpack.c.b16 %v2458, %v2458
      %v2491 = vpack.c.b16 %v2459, %v2459
      %v2492 = vpack.c.b16 %v2460, %v2460
      %v2493 = vpack.c.b16 %v2461, %v2461
      %v2494 = vpack.c.b16 %v2462, %v2462
      %v2495 = vpack.c.b16 %v2463, %v2463
      %v2496 = vpack.c.b16 %v2464, %v2464
      %v2497 = vpack.c.b16 %v2465, %v2465
      %v2498 = vpack.c.b16 %v2466, %v2466
      %v2499 = vpack.c.b16 %v2467, %v2467
      %v2500 = vpack.c.b16 %v2468, %v2468
      %v2501 = vpack.c.b16 %v2469, %v2469
      %v2502 = vpack.c.b16 %v2470, %v2470
      %v2503 = vpack.c.b16 %v2471, %v2471
      %vm2536 = vcmask 158720
      %2537 = vst.msk [vmem:[%s227] sm:$0xf] %vm2536, %v2472
      %2538 = vst.msk [vmem:[%s227 + $0x4] sm:$0xf] %vm2536, %v2473
      %2539 = vst.msk [vmem:[%s227 + $0x8] sm:$0xf] %vm2536, %v2474
      %2540 = vst.msk [vmem:[%s227 + $0xc] sm:$0xf] %vm2536, %v2475
      %2541 = vst.msk [vmem:[%s227 + $0x10] sm:$0xf] %vm2536, %v2476
      %2542 = vst.msk [vmem:[%s227 + $0x14] sm:$0xf] %vm2536, %v2477
      %2543 = vst.msk [vmem:[%s227 + $0x18] sm:$0xf] %vm2536, %v2478
      %2544 = vst.msk [vmem:[%s227 + $0x1c] sm:$0xf] %vm2536, %v2479
      %2545 = vst.msk [vmem:[%s227 + $0x20] sm:$0xf] %vm2536, %v2480
      %2546 = vst.msk [vmem:[%s227 + $0x24] sm:$0xf] %vm2536, %v2481
      %2547 = vst.msk [vmem:[%s227 + $0x28] sm:$0xf] %vm2536, %v2482
      %2548 = vst.msk [vmem:[%s227 + $0x2c] sm:$0xf] %vm2536, %v2483
      %2549 = vst.msk [vmem:[%s227 + $0x30] sm:$0xf] %vm2536, %v2484
      %2550 = vst.msk [vmem:[%s227 + $0x34] sm:$0xf] %vm2536, %v2485
      %2551 = vst.msk [vmem:[%s227 + $0x38] sm:$0xf] %vm2536, %v2486
      %2552 = vst.msk [vmem:[%s227 + $0x3c] sm:$0xf] %vm2536, %v2487
      %2553 = vst.msk [vmem:[%s227 + $0x40] sm:$0xf] %vm2536, %v2488
      %2554 = vst.msk [vmem:[%s227 + $0x44] sm:$0xf] %vm2536, %v2489
      %2555 = vst.msk [vmem:[%s227 + $0x48] sm:$0xf] %vm2536, %v2490
      %2556 = vst.msk [vmem:[%s227 + $0x4c] sm:$0xf] %vm2536, %v2491
      %2557 = vst.msk [vmem:[%s227 + $0x50] sm:$0xf] %vm2536, %v2492
      %2558 = vst.msk [vmem:[%s227 + $0x54] sm:$0xf] %vm2536, %v2493
      %2559 = vst.msk [vmem:[%s227 + $0x58] sm:$0xf] %vm2536, %v2494
      %2560 = vst.msk [vmem:[%s227 + $0x5c] sm:$0xf] %vm2536, %v2495
      %2561 = vst.msk [vmem:[%s227 + $0x60] sm:$0xf] %vm2536, %v2496
      %2562 = vst.msk [vmem:[%s227 + $0x64] sm:$0xf] %vm2536, %v2497
      %2563 = vst.msk [vmem:[%s227 + $0x68] sm:$0xf] %vm2536, %v2498
      %2564 = vst.msk [vmem:[%s227 + $0x6c] sm:$0xf] %vm2536, %v2499
      %2565 = vst.msk [vmem:[%s227 + $0x70] sm:$0xf] %vm2536, %v2500
      %2566 = vst.msk [vmem:[%s227 + $0x74] sm:$0xf] %vm2536, %v2501
      %2567 = vst.msk [vmem:[%s227 + $0x78] sm:$0xf] %vm2536, %v2502
      %2568 = vst.msk [vmem:[%s227 + $0x7c] sm:$0xf] %vm2536, %v2503
      %s2569 = smul.u32 16, %s14
      %p2570 = scmp.lt.s32.totalorder %s2569, 31
      %s2571 = scalar_select %p2570, %s2569, 31
      %s2572 = smul.addr %s2571, 2
      %s2573 = smul.addr %s2572, 4
      %s2574 = scalar_lea.vmem %s3, %s2573
      // Predicated region
      $region33: #{elcs_forward.10} parent=31 // pred_check
        %p2575 = pneg %p110
      $region34: #{elcs_forward.10} parent=31 // pred_check_branch
        %2577 = sbr.rel (%p2575) target = $region36
      $region35: #{elcs_forward.10} parent=31 // pred_region
        %s2578 = smul.u32 16, %s14
      $region36: #{elcs_forward.10} parent=31 // pred_fallthru
        _
    $region32: #{elcs_forward.10} parent=5 // pred_fallthru
      _
    %p2579 = scmp.le.s32.totalorder 2, %s9
    // Predicated region
    $region37: #{elcs_forward.10} parent=5 // pred_check
      %p2580 = pneg %p2579
    $region38: #{elcs_forward.10} parent=5 // pred_check_branch
      %2582 = sbr.rel (%p2580) target = $region40
    $region39: #{elcs_forward.10} parent=5 // pred_region
      %s2583 = ssub.s32 %s9, 2
      // Predicated region
      $region41: #{elcs_forward.10} parent=39 // pred_check
        %p2584 = pneg %p116
      $region42: #{elcs_forward.10} parent=39 // pred_check_branch
        %2586 = sbr.rel (%p2584) target = $region44
      $region43: #{elcs_forward.10} parent=39 // pred_region
        %s2587 = smul.u32 16, %s15
        %p2588 = scmp.lt.s32.totalorder %s2587, 31
        %s2589 = scalar_select %p2588, %s2587, 31
        %s2590 = smul.addr %s2589, 2
        %s2591 = smul.addr %s2590, 4
        %s2592 = scalar_lea.vmem %s3, %s2591
      $region44: #{elcs_forward.10} parent=39 // pred_fallthru
        _
    $region40: #{elcs_forward.10} parent=5 // pred_fallthru
      _
  $region6: #{elcs_forward.10} parent=0 // loop_footer
    %s13 = sadd.s32 1, %s9
  $region7: #{elcs_forward.10} parent=0 // loop_footer_branch
    %8 = sbr.rel target = $region3
  $region8: #{elcs_forward.10} parent=0 // loop_exit
    _

</llo_original>
